<compile_context>
chip_gen: v7x
topology: tpu7x:2x2x1
jax: 0.10.0
libtpu: 0.0.40
codegen_flags: <defaults>
</compile_context>

<pallas_src>
import math
import functools

import jax
import jax.numpy as jnp
from jax.experimental import pallas as pl
from jax.experimental.pallas import tpu as pltpu


def _round_up(x, m):
    return ((x + m - 1) // m) * m


def _tiles(n):
    """(n_pad, tm_attn, tk_attn, tm_stream).  Small graphs: one block.
    Large graphs: 128-row target tiles x 512-wide KV chunks (bounded VMEM),
    512-row tiles for the purely streaming kernels."""
    if n <= 512:
        n_pad = _round_up(max(n, 8), 8)
        return n_pad, n_pad, n_pad, n_pad
    n_pad = _round_up(n, 512)
    return n_pad, 128, 512, 512


_PAR = pltpu.CompilerParams(dimension_semantics=("parallel",))


# ----------------------------------------------------------------------------
# Kernel 1: row-tiled linear layer  out = x @ W + b   (bf16 matmul, f32 acc)
# ----------------------------------------------------------------------------
def linear_kernel(x_ref, w_ref, b_ref, o_ref):
    x = x_ref[...].astype(jnp.bfloat16)
    o_ref[...] = (jnp.dot(x, w_ref[...], preferred_element_type=jnp.float32)
                  + b_ref[...]).astype(o_ref.dtype)


def linear(x, w_bf16, b, tm, out_dtype=jnp.bfloat16):
    n, din = x.shape
    dout = w_bf16.shape[1]
    return pl.pallas_call(
        linear_kernel,
        out_shape=jax.ShapeDtypeStruct((n, dout), out_dtype),
        grid=(n // tm,),
        in_specs=[
            pl.BlockSpec((tm, din), lambda i: (i, 0)),
            pl.BlockSpec((din, dout), lambda i: (0, 0)),
            pl.BlockSpec((1, dout), lambda i: (0, 0)),
        ],
        out_specs=pl.BlockSpec((tm, dout), lambda i: (i, 0)),
        compiler_params=_PAR,
    )(x, w_bf16, b)


# ----------------------------------------------------------------------------
# Kernel 2: K/V projection.
#   K written transposed & head-major: [H, C, N]  (lane-dense [C, TM] stores,
#   directly consumable as the score-matmul RHS).
#   V written head-major: [H, N, C]  (aggregation RHS).
# ----------------------------------------------------------------------------
def kv_proj_kernel(h_ref, wkT_ref, bkT_ref, wv3_ref, bv3_ref, kT_ref, v_ref,
                   *, heads):
    h = h_ref[...].astype(jnp.bfloat16)                       # [TM, Din]
    for hh in range(heads):
        # K^T_h = Wk_h^T @ h^T  (A.B^T contraction, no materialized transpose)
        kT = jnp.einsum("cd,td->ct", wkT_ref[hh], h,
                        preferred_element_type=jnp.float32) + bkT_ref[hh]
        kT_ref[hh] = kT.astype(jnp.bfloat16)                  # [C, TM] lane-dense
        v = jnp.dot(h, wv3_ref[hh],
                    preferred_element_type=jnp.float32) + bv3_ref[hh]
        v_ref[hh] = v.astype(jnp.bfloat16)                    # [TM, C]


def kv_proj(h, lp, heads, c, tm):
    n, din = h.shape
    kern = functools.partial(kv_proj_kernel, heads=heads)
    return pl.pallas_call(
        kern,
        out_shape=(jax.ShapeDtypeStruct((heads, c, n), jnp.bfloat16),   # K^T
                   jax.ShapeDtypeStruct((heads, n, c), jnp.bfloat16)),  # V
        grid=(n // tm,),
        in_specs=[
            pl.BlockSpec((tm, din), lambda i: (i, 0)),
            pl.BlockSpec((heads, c, din), lambda i: (0, 0, 0)),
            pl.BlockSpec((heads, c, 1), lambda i: (0, 0, 0)),
            pl.BlockSpec((heads, din, c), lambda i: (0, 0, 0)),
            pl.BlockSpec((heads, 1, c), lambda i: (0, 0, 0)),
        ],
        out_specs=(pl.BlockSpec((heads, c, tm), lambda i: (0, 0, i)),
                   pl.BlockSpec((heads, tm, c), lambda i: (0, i, 0))),
        compiler_params=_PAR,
    )(h, lp["wkT"], lp["bkT"], lp["wv3"], lp["bv3"])


# ----------------------------------------------------------------------------
# Kernel 3: fused DeepTransformerConv attention.
#   Grid = (target row tiles [parallel], KV chunks [arbitrary]).
#   Online softmax over KV chunks; Q / skip projections computed once per row
#   tile at j == 0; per-chunk work skipped via a scalar-prefetched block-
#   sparsity table; unmasked running max + multiplicative mask after exp.
# ----------------------------------------------------------------------------
def attn_kernel(blk_ref, h_ref, mask_ref, kT_ref, v_ref,
                wq3_ref, bq3_ref, ws_ref, bs_ref, o_ref,
                q_sc, skip_sc, m_sc, l_sc, acc_sc,
                *, heads, c, apply_elu):
    i = pl.program_id(0)
    j = pl.program_id(1)
    nj = pl.num_programs(1)

    @pl.when(j == 0)
    def _init():
        h = h_ref[...].astype(jnp.bfloat16)                   # [TM, Din]
        for hh in range(heads):                               # Q, head-major
            q = (jnp.dot(h, wq3_ref[hh], preferred_element_type=jnp.float32)
                 + bq3_ref[hh])                               # scale pre-folded
            q_sc[hh] = q.astype(jnp.bfloat16)
        skip_sc[...] = (jnp.dot(h, ws_ref[...],
                                preferred_element_type=jnp.float32)
                        + bs_ref[...])                        # [TM, H*C]
        m_sc[...] = jnp.full(m_sc.shape, -1e30, jnp.float32)
        l_sc[...] = jnp.zeros(l_sc.shape, jnp.float32)
        acc_sc[...] = jnp.zeros(acc_sc.shape, jnp.float32)

    @pl.when(blk_ref[i * nj + j] != 0)                        # skip empty blocks
    def _chunk():
        maskf = mask_ref[...].astype(jnp.float32)             # [TM, TK] 0/1
        # scores: [H, TM, TK]; K already [H, C, TK] -> no relayout.
        scores = jnp.einsum("htc,hck->htk", q_sc[...], kT_ref[...],
                            preferred_element_type=jnp.float32)
        m_new = jnp.maximum(m_sc[...], jnp.max(scores, axis=-1, keepdims=True))
        alpha = jnp.exp(m_sc[...] - m_new)                    # [H, TM, 1]
        p = jnp.exp(scores - m_new) * maskf[None]             # masking (kept!)
        l_sc[...] = alpha * l_sc[...] + jnp.sum(p, axis=-1, keepdims=True)
        acc_sc[...] = alpha * acc_sc[...] + jnp.einsum(
            "htk,hkc->htc", p.astype(jnp.bfloat16), v_ref[...],
            preferred_element_type=jnp.float32)
        m_sc[...] = m_new

    @pl.when(j == nj - 1)
    def _final():
        recip = pl.reciprocal(jnp.maximum(l_sc[...], 1e-20), approx=True)
        msg = acc_sc[...] * recip                             # [H, TM, C]
        out = jnp.concatenate([msg[hh] for hh in range(heads)], axis=-1)
        out = out + skip_sc[...]                              # skip add
        if apply_elu:
            out = jnp.where(out > 0, out,
                            jnp.exp(jnp.minimum(out, 0.0)) - 1.0)
        o_ref[...] = out.astype(o_ref.dtype)                  # single wide store


def attn_layer(h, mask_i8, blk, kT, v, lp, heads, c, tm, tk, apply_elu):
    n, din = h.shape
    hc = heads * c
    kern = functools.partial(attn_kernel, heads=heads, c=c, apply_elu=apply_elu)
    return pl.pallas_call(
        kern,
        out_shape=jax.ShapeDtypeStruct((n, hc), jnp.bfloat16),
        grid_spec=pltpu.PrefetchScalarGridSpec(
            num_scalar_prefetch=1,
            grid=(n // tm, n // tk),
            in_specs=[
                pl.BlockSpec((tm, din), lambda i, j, b: (i, 0)),       # h rows
                pl.BlockSpec((tm, tk), lambda i, j, b: (i, j)),        # mask int8
                pl.BlockSpec((heads, c, tk), lambda i, j, b: (0, 0, j)),  # K^T chunk
                pl.BlockSpec((heads, tk, c), lambda i, j, b: (0, j, 0)),  # V chunk
                pl.BlockSpec((heads, din, c), lambda i, j, b: (0, 0, 0)),  # Wq (scaled)
                pl.BlockSpec((heads, 1, c), lambda i, j, b: (0, 0, 0)),    # bq (scaled)
                pl.BlockSpec((din, hc), lambda i, j, b: (0, 0)),           # Ws
                pl.BlockSpec((1, hc), lambda i, j, b: (0, 0)),             # bs
            ],
            out_specs=pl.BlockSpec((tm, hc), lambda i, j, b: (i, 0)),
            scratch_shapes=[
                pltpu.VMEM((heads, tm, c), jnp.bfloat16),   # Q (head-major)
                pltpu.VMEM((tm, hc), jnp.float32),          # skip projection
                pltpu.VMEM((heads, tm, 1), jnp.float32),    # running max m
                pltpu.VMEM((heads, tm, 1), jnp.float32),    # running denom l
                pltpu.VMEM((heads, tm, c), jnp.float32),    # accumulator
            ]),
        compiler_params=pltpu.CompilerParams(
            dimension_semantics=("parallel", "arbitrary"),
            vmem_limit_bytes=32 * 1024 * 1024),
    )(blk, h, mask_i8, kT, v, lp["wq3"], lp["bq3"], lp["ws"], lp["bs"])


# ----------------------------------------------------------------------------
# Kernel 4: classifier head  log_softmax(h @ W + b) into 128-lane padded buffer
# (padding columns carry bias -1e30 so they contribute exactly 0 to the sum).
# ----------------------------------------------------------------------------
def head_kernel(h_ref, w_ref, b_ref, o_ref):
    logits = (jnp.dot(h_ref[...].astype(jnp.bfloat16), w_ref[...],
                      preferred_element_type=jnp.float32) + b_ref[...])
    m = jnp.max(logits, axis=-1, keepdims=True)
    lse = jnp.log(jnp.sum(jnp.exp(logits - m), axis=-1, keepdims=True)) + m
    o_ref[...] = logits - lse


def head(h, w_pad, b_pad, tm):
    n, hc = h.shape
    opad = w_pad.shape[1]
    return pl.pallas_call(
        head_kernel,
        out_shape=jax.ShapeDtypeStruct((n, opad), jnp.float32),
        grid=(n // tm,),
        in_specs=[
            pl.BlockSpec((tm, hc), lambda i: (i, 0)),
            pl.BlockSpec((hc, opad), lambda i: (0, 0)),
            pl.BlockSpec((1, opad), lambda i: (0, 0)),
        ],
        out_specs=pl.BlockSpec((tm, opad), lambda i: (i, 0)),
        compiler_params=_PAR,
    )(h, w_pad, b_pad)


# ----------------------------------------------------------------------------
# Parameter init (deterministic, mimics torch.nn.Linear default init)
# ----------------------------------------------------------------------------
def init_linear(key, fan_in, fan_out):
    kw, kb = jax.random.split(key)
    bound = 1.0 / math.sqrt(fan_in)
    w = jax.random.uniform(kw, (fan_in, fan_out), jnp.float32, -bound, bound)
    b = jax.random.uniform(kb, (1, fan_out), jnp.float32, -bound, bound)
    return w, b


def init_deepgt(key, idim, hdim, odim, num_layers, heads):
    keys = jax.random.split(key, 2 + 4 * num_layers)
    params = {"lin": init_linear(keys[0], idim, hdim),
              "fc1": init_linear(keys[1], heads * hdim, odim),
              "layers": []}
    for i in range(num_layers):
        din = hdim if i == 0 else heads * hdim
        k0, k1, k2, k3 = keys[2 + 4 * i: 6 + 4 * i]
        wq, bq = init_linear(k0, din, heads * hdim)   # lin_query
        wk, bk = init_linear(k1, din, heads * hdim)   # lin_key
        wv, bv = init_linear(k2, din, heads * hdim)   # lin_value
        ws, bs = init_linear(k3, din, heads * hdim)   # lin_skip
        params["layers"].append(dict(wq=wq, bq=bq, wk=wk, bk=bk,
                                     wv=wv, bv=bv, ws=ws, bs=bs))
    return params


def prepare_params(raw, heads, hdim, odim):
    """Kernel-ready params: bf16 matmul weights, head-major Q/V weights
    [H,Din,C], transposed K weights [H,C,Din], 1/sqrt(C) folded into Wq/bq,
    classifier padded to a 128-lane output."""
    scale = 1.0 / math.sqrt(hdim)
    hc = heads * hdim
    opad = _round_up(max(odim, 128), 128)

    w_lin, b_lin = raw["lin"]
    w_fc, b_fc = raw["fc1"]
    w_fc_pad = jnp.zeros((hc, opad), jnp.float32).at[:, :odim].set(w_fc)
    b_fc_pad = jnp.full((1, opad), -1e30, jnp.float32).at[:, :odim].set(b_fc)

    def head_major(w, b, s=1.0):
        din = w.shape[0]
        w3 = (w * s).reshape(din, heads, hdim).transpose(1, 0, 2)   # [H,Din,C]
        b3 = (b * s).reshape(heads, 1, hdim)                        # [H,1,C]
        return w3.astype(jnp.bfloat16), b3.astype(jnp.float32)

    p = {"lin_w": w_lin.astype(jnp.bfloat16), "lin_b": b_lin,
         "fc1_w": w_fc_pad.astype(jnp.bfloat16), "fc1_b": b_fc_pad,
         "layers": []}
    for lp in raw["layers"]:
        din = lp["wk"].shape[0]
        wq3, bq3 = head_major(lp["wq"], lp["bq"], scale)
        wv3, bv3 = head_major(lp["wv"], lp["bv"])
        wkT = (lp["wk"].reshape(din, heads, hdim).transpose(1, 2, 0)
               .astype(jnp.bfloat16))                               # [H,C,Din]
        bkT = lp["bk"].reshape(heads, hdim)[:, :, None].astype(jnp.float32)
        p["layers"].append(dict(wq3=wq3, bq3=bq3, wkT=wkT, bkT=bkT,
                                wv3=wv3, bv3=bv3,
                                ws=lp["ws"].astype(jnp.bfloat16), bs=lp["bs"]))
    return p


# ----------------------------------------------------------------------------
# DeepGT forward (eval mode: all dropouts are identity)
# ----------------------------------------------------------------------------
@functools.partial(jax.jit, static_argnames=("heads", "hdim", "odim", "num_layers"))
def deepgt_forward(params, x, mask_i8, *, heads, hdim, odim, num_layers):
    n = x.shape[0]
    n_pad, tm_a, tk_a, tm_s = _tiles(n)
    if n_pad != n:
        x = jnp.pad(x, ((0, n_pad - n), (0, 0)))
        mask_i8 = jnp.pad(mask_i8, ((0, n_pad - n), (0, n_pad - n)))

    # Block-sparsity table: 1 iff any edge in (row-tile i, kv-chunk j).
    ni, nj = n_pad // tm_a, n_pad // tk_a
    blk = (mask_i8.reshape(ni, tm_a, nj, tk_a).astype(jnp.int32)
           .sum(axis=(1, 3)) > 0).astype(jnp.int32).reshape(-1)

    h = linear(x, params["lin_w"], params["lin_b"], tm_s)        # self.lin (bf16)
    for i in range(num_layers):
        lp = params["layers"][i]
        kT, v = kv_proj(h, lp, heads, hdim, tm_s)
        h = attn_layer(h, mask_i8, blk, kT, v, lp, heads, hdim,
                       tm_a, tk_a, apply_elu=(i < num_layers - 1))
    logits = head(h, params["fc1_w"], params["fc1_b"], tm_s)     # lane-padded
    return logits[:n, :odim]                                     # log_softmax rows


if __name__ == "__main__":
    # Small deterministic problem: 16 nodes, idim=16, hdim=32, odim=4,
    # 4 heads (heads*hdim = 128 -> lane-dense activations), 2 layers, 64 edges.
    N, IDIM, HDIM, ODIM, HEADS, NUM_LAYERS, E = 16, 16, 32, 4, 4, 2, 64

    key = jax.random.PRNGKey(0)
    kx, ke_src, ke_dst, kp = jax.random.split(key, 4)

    x = jax.random.normal(kx, (N, IDIM), jnp.float32)
    src = jax.random.randint(ke_src, (E,), 0, N)
    dst = jax.random.randint(ke_dst, (E,), 0, N)
    # dense adjacency mask (target x source), stored as int8 0/1.
    mask = jnp.zeros((N, N), jnp.int8).at[dst, src].set(1)

    raw = init_deepgt(kp, IDIM, HDIM, ODIM, NUM_LAYERS, HEADS)
    params = prepare_params(raw, HEADS, HDIM, ODIM)

    out = deepgt_forward(params, x, mask,
                         heads=HEADS, hdim=HDIM, odim=ODIM,
                         num_layers=NUM_LAYERS)
    out = jax.block_until_ready(out)

    assert out.shape == (N, ODIM)
    assert bool(jnp.all(jnp.isfinite(out)))
    # log_softmax rows must exponentiate-sum to 1 (exact in f32 regardless of
    # bf16 matmuls).
    assert bool(jnp.allclose(jnp.sum(jnp.exp(out), axis=1), 1.0, atol=1e-3))
    print("KERNEL_OK")
</pallas_src>

<mosaic_0001>
module attributes {stable_mosaic.version = 11 : i64} {
  func.func @linear_kernel(%arg0: i32, %arg1: memref<16x16xf32, #tpu.memory_space<vmem>>, %arg2: memref<16x32xbf16, #tpu.memory_space<vmem>>, %arg3: memref<1x32xf32, #tpu.memory_space<vmem>>, %arg4: memref<16x32xbf16, #tpu.memory_space<vmem>>) attributes {dimension_semantics = [#tpu.dimension_semantics<parallel>], iteration_bounds = array<i64: 1>, scalar_prefetch = 0 : i64, scratch_operands = 0 : i64, tpu.core_type = #tpu.core_type<tc>, window_params = [{transform_indices = @transform_0, window_bounds = array<i64: 16, 16>}, {pipeline_mode = #tpu.pipeline_mode<synchronous>, transform_indices = @transform_1, window_bounds = array<i64: 16, 32>}, {pipeline_mode = #tpu.pipeline_mode<synchronous>, transform_indices = @transform_2, window_bounds = array<i64: 1, 32>}, {transform_indices = @transform_3, window_bounds = array<i64: 16, 32>}]} {
    %c0 = arith.constant 0 : index
    %c0_0 = arith.constant 0 : index
    %0 = vector.load %arg1[%c0, %c0_0] : memref<16x16xf32, #tpu.memory_space<vmem>>, vector<16x16xf32>
    %1 = arith.truncf %0 : vector<16x16xf32> to vector<16x16xbf16>
    %c0_1 = arith.constant 0 : index
    %c0_2 = arith.constant 0 : index
    %2 = vector.load %arg2[%c0_1, %c0_2] : memref<16x32xbf16, #tpu.memory_space<vmem>>, vector<16x32xbf16>
    %cst = arith.constant dense<0.000000e+00> : vector<16x32xf32>
    %3 = tpu.matmul %1, %2, %cst {dimension_numbers = #tpu.dot_dimension_numbers<[1], [0], [0], [1], [0, 0, 1, 1], [], []>} : vector<16x16xbf16>, vector<16x32xbf16>, vector<16x32xf32> -> vector<16x32xf32>
    %c0_3 = arith.constant 0 : index
    %c0_4 = arith.constant 0 : index
    %4 = vector.load %arg3[%c0_3, %c0_4] : memref<1x32xf32, #tpu.memory_space<vmem>>, vector<1x32xf32>
    %5 = vector.broadcast %4 : vector<1x32xf32> to vector<16x32xf32>
    %6 = arith.addf %3, %5 : vector<16x32xf32>
    %7 = arith.truncf %6 : vector<16x32xf32> to vector<16x32xbf16>
    %c0_5 = arith.constant 0 : index
    %c0_6 = arith.constant 0 : index
    %8 = vector.load %arg4[%c0_5, %c0_6] : memref<16x32xbf16, #tpu.memory_space<vmem>>, vector<16x32xbf16>
    tpu.vector_store %arg4[%c0_5, %c0_6], %7 {strides = array<i32>} : memref<16x32xbf16, #tpu.memory_space<vmem>>, vector<16x32xbf16>,
    return
  }
  func.func @transform_0(%arg0: i32) -> (i32, i32) {
    %c0_i32 = arith.constant 0 : i32
    %c0_i32_0 = arith.constant 0 : i32
    return %arg0, %c0_i32 : i32, i32
  }
  func.func @transform_1(%arg0: i32) -> (i32, i32) {
    %c0_i32 = arith.constant 0 : i32
    %c0_i32_0 = arith.constant 0 : i32
    %c0_i32_1 = arith.constant 0 : i32
    return %c0_i32, %c0_i32_0 : i32, i32
  }
  func.func @transform_2(%arg0: i32) -> (i32, i32) {
    %c0_i32 = arith.constant 0 : i32
    %c0_i32_0 = arith.constant 0 : i32
    %c0_i32_1 = arith.constant 0 : i32
    return %c0_i32, %c0_i32_0 : i32, i32
  }
  func.func @transform_3(%arg0: i32) -> (i32, i32) {
    %c0_i32 = arith.constant 0 : i32
    %c0_i32_0 = arith.constant 0 : i32
    return %arg0, %c0_i32 : i32, i32
  }
}

module attributes {stable_mosaic.version = 11 : i64} {
  func.func @kv_proj_kernel(%arg0: i32, %arg1: memref<16x32xbf16, #tpu.memory_space<vmem>>, %arg2: memref<4x32x32xbf16, #tpu.memory_space<vmem>>, %arg3: memref<4x32x1xf32, #tpu.memory_space<vmem>>, %arg4: memref<4x32x32xbf16, #tpu.memory_space<vmem>>, %arg5: memref<4x1x32xf32, #tpu.memory_space<vmem>>, %arg6: memref<4x32x16xbf16, #tpu.memory_space<vmem>>, %arg7: memref<4x16x32xbf16, #tpu.memory_space<vmem>>) attributes {dimension_semantics = [#tpu.dimension_semantics<parallel>], iteration_bounds = array<i64: 1>, scalar_prefetch = 0 : i64, scratch_operands = 0 : i64, tpu.core_type = #tpu.core_type<tc>, window_params = [{transform_indices = @transform_0, window_bounds = array<i64: 16, 32>}, {pipeline_mode = #tpu.pipeline_mode<synchronous>, transform_indices = @transform_1, window_bounds = array<i64: 4, 32, 32>}, {pipeline_mode = #tpu.pipeline_mode<synchronous>, transform_indices = @transform_2, window_bounds = array<i64: 4, 32, 1>}, {pipeline_mode = #tpu.pipeline_mode<synchronous>, transform_indices = @transform_3, window_bounds = array<i64: 4, 32, 32>}, {pipeline_mode = #tpu.pipeline_mode<synchronous>, transform_indices = @transform_4, window_bounds = array<i64: 4, 1, 32>}, {transform_indices = @transform_5, window_bounds = array<i64: 4, 32, 16>}, {transform_indices = @transform_6, window_bounds = array<i64: 4, 16, 32>}]} {
    %c0 = arith.constant 0 : index
    %c0_0 = arith.constant 0 : index
    %0 = vector.load %arg1[%c0, %c0_0] : memref<16x32xbf16, #tpu.memory_space<vmem>>, vector<16x32xbf16>
    %c0_1 = arith.constant 0 : index
    %c0_2 = arith.constant 0 : index
    %c0_3 = arith.constant 0 : index
    %1 = vector.load %arg2[%c0_1, %c0_2, %c0_3] : memref<4x32x32xbf16, #tpu.memory_space<vmem>>, vector<1x32x32xbf16>
    %2 = vector.shape_cast %1 : vector<1x32x32xbf16> to vector<32x32xbf16>
    "tpu.trace_start"() <{level = 10 : i32, message = "cd,td->ct"}> : () -> ()
    %cst = arith.constant dense<0.000000e+00> : vector<32x16xf32>
    %3 = tpu.matmul %2, %0, %cst {dimension_numbers = #tpu.dot_dimension_numbers<[1], [1], [0], [0], [0, 0, 1, 0], [], []>} : vector<32x32xbf16>, vector<16x32xbf16>, vector<32x16xf32> -> vector<32x16xf32>
    "tpu.trace_stop"() : () -> ()
    %c0_4 = arith.constant 0 : index
    %c0_5 = arith.constant 0 : index
    %c0_6 = arith.constant 0 : index
    %4 = vector.load %arg3[%c0_4, %c0_5, %c0_6] : memref<4x32x1xf32, #tpu.memory_space<vmem>>, vector<1x32x1xf32>
    %5 = vector.shape_cast %4 : vector<1x32x1xf32> to vector<32x1xf32>
    %6 = vector.broadcast %5 : vector<32x1xf32> to vector<32x16xf32>
    %7 = arith.addf %3, %6 : vector<32x16xf32>
    %8 = arith.truncf %7 : vector<32x16xf32> to vector<32x16xbf16>
    %c0_7 = arith.constant 0 : index
    %c0_8 = arith.constant 0 : index
    %c0_9 = arith.constant 0 : index
    %9 = vector.load %arg6[%c0_7, %c0_8, %c0_9] : memref<4x32x16xbf16, #tpu.memory_space<vmem>>, vector<1x32x16xbf16>
    %10 = vector.shape_cast %9 : vector<1x32x16xbf16> to vector<32x16xbf16>
    %11 = vector.shape_cast %8 : vector<32x16xbf16> to vector<1x32x16xbf16>
    tpu.vector_store %arg6[%c0_7, %c0_8, %c0_9], %11 {strides = array<i32>} : memref<4x32x16xbf16, #tpu.memory_space<vmem>>, vector<1x32x16xbf16>,
    %c0_10 = arith.constant 0 : index
    %c0_11 = arith.constant 0 : index
    %c0_12 = arith.constant 0 : index
    %12 = vector.load %arg4[%c0_10, %c0_11, %c0_12] : memref<4x32x32xbf16, #tpu.memory_space<vmem>>, vector<1x32x32xbf16>
    %13 = vector.shape_cast %12 : vector<1x32x32xbf16> to vector<32x32xbf16>
    %cst_13 = arith.constant dense<0.000000e+00> : vector<16x32xf32>
    %14 = tpu.matmul %0, %13, %cst_13 {dimension_numbers = #tpu.dot_dimension_numbers<[1], [0], [0], [1], [0, 0, 1, 1], [], []>} : vector<16x32xbf16>, vector<32x32xbf16>, vector<16x32xf32> -> vector<16x32xf32>
    %c0_14 = arith.constant 0 : index
    %c0_15 = arith.constant 0 : index
    %c0_16 = arith.constant 0 : index
    %15 = vector.load %arg5[%c0_14, %c0_15, %c0_16] : memref<4x1x32xf32, #tpu.memory_space<vmem>>, vector<1x1x32xf32>
    %16 = vector.shape_cast %15 : vector<1x1x32xf32> to vector<1x32xf32>
    %17 = vector.broadcast %16 : vector<1x32xf32> to vector<16x32xf32>
    %18 = arith.addf %14, %17 : vector<16x32xf32>
    %19 = arith.truncf %18 : vector<16x32xf32> to vector<16x32xbf16>
    %c0_17 = arith.constant 0 : index
    %c0_18 = arith.constant 0 : index
    %c0_19 = arith.constant 0 : index
    %20 = vector.load %arg7[%c0_17, %c0_18, %c0_19] : memref<4x16x32xbf16, #tpu.memory_space<vmem>>, vector<1x16x32xbf16>
    %21 = vector.shape_cast %20 : vector<1x16x32xbf16> to vector<16x32xbf16>
    %22 = vector.shape_cast %19 : vector<16x32xbf16> to vector<1x16x32xbf16>
    tpu.vector_store %arg7[%c0_17, %c0_18, %c0_19], %22 {strides = array<i32>} : memref<4x16x32xbf16, #tpu.memory_space<vmem>>, vector<1x16x32xbf16>,
    %c1 = arith.constant 1 : index
    %c0_20 = arith.constant 0 : index
    %c0_21 = arith.constant 0 : index
    %23 = vector.load %arg2[%c1, %c0_20, %c0_21] : memref<4x32x32xbf16, #tpu.memory_space<vmem>>, vector<1x32x32xbf16>
    %24 = vector.shape_cast %23 : vector<1x32x32xbf16> to vector<32x32xbf16>
    "tpu.trace_start"() <{level = 10 : i32, message = "cd,td->ct"}> : () -> ()
    %cst_22 = arith.constant dense<0.000000e+00> : vector<32x16xf32>
    %25 = tpu.matmul %24, %0, %cst_22 {dimension_numbers = #tpu.dot_dimension_numbers<[1], [1], [0], [0], [0, 0, 1, 0], [], []>} : vector<32x32xbf16>, vector<16x32xbf16>, vector<32x16xf32> -> vector<32x16xf32>
    "tpu.trace_stop"() : () -> ()
    %c1_23 = arith.constant 1 : index
    %c0_24 = arith.constant 0 : index
    %c0_25 = arith.constant 0 : index
    %26 = vector.load %arg3[%c1_23, %c0_24, %c0_25] : memref<4x32x1xf32, #tpu.memory_space<vmem>>, vector<1x32x1xf32>
    %27 = vector.shape_cast %26 : vector<1x32x1xf32> to vector<32x1xf32>
    %28 = vector.broadcast %27 : vector<32x1xf32> to vector<32x16xf32>
    %29 = arith.addf %25, %28 : vector<32x16xf32>
    %30 = arith.truncf %29 : vector<32x16xf32> to vector<32x16xbf16>
    %c1_26 = arith.constant 1 : index
    %c0_27 = arith.constant 0 : index
    %c0_28 = arith.constant 0 : index
    %31 = vector.load %arg6[%c1_26, %c0_27, %c0_28] : memref<4x32x16xbf16, #tpu.memory_space<vmem>>, vector<1x32x16xbf16>
    %32 = vector.shape_cast %31 : vector<1x32x16xbf16> to vector<32x16xbf16>
    %33 = vector.shape_cast %30 : vector<32x16xbf16> to vector<1x32x16xbf16>
    tpu.vector_store %arg6[%c1_26, %c0_27, %c0_28], %33 {strides = array<i32>} : memref<4x32x16xbf16, #tpu.memory_space<vmem>>, vector<1x32x16xbf16>,
    %c1_29 = arith.constant 1 : index
    %c0_30 = arith.constant 0 : index
    %c0_31 = arith.constant 0 : index
    %34 = vector.load %arg4[%c1_29, %c0_30, %c0_31] : memref<4x32x32xbf16, #tpu.memory_space<vmem>>, vector<1x32x32xbf16>
    %35 = vector.shape_cast %34 : vector<1x32x32xbf16> to vector<32x32xbf16>
    %cst_32 = arith.constant dense<0.000000e+00> : vector<16x32xf32>
    %36 = tpu.matmul %0, %35, %cst_32 {dimension_numbers = #tpu.dot_dimension_numbers<[1], [0], [0], [1], [0, 0, 1, 1], [], []>} : vector<16x32xbf16>, vector<32x32xbf16>, vector<16x32xf32> -> vector<16x32xf32>
    %c1_33 = arith.constant 1 : index
    %c0_34 = arith.constant 0 : index
    %c0_35 = arith.constant 0 : index
    %37 = vector.load %arg5[%c1_33, %c0_34, %c0_35] : memref<4x1x32xf32, #tpu.memory_space<vmem>>, vector<1x1x32xf32>
    %38 = vector.shape_cast %37 : vector<1x1x32xf32> to vector<1x32xf32>
    %39 = vector.broadcast %38 : vector<1x32xf32> to vector<16x32xf32>
    %40 = arith.addf %36, %39 : vector<16x32xf32>
    %41 = arith.truncf %40 : vector<16x32xf32> to vector<16x32xbf16>
    %c1_36 = arith.constant 1 : index
    %c0_37 = arith.constant 0 : index
    %c0_38 = arith.constant 0 : index
    %42 = vector.load %arg7[%c1_36, %c0_37, %c0_38] : memref<4x16x32xbf16, #tpu.memory_space<vmem>>, vector<1x16x32xbf16>
    %43 = vector.shape_cast %42 : vector<1x16x32xbf16> to vector<16x32xbf16>
    %44 = vector.shape_cast %41 : vector<16x32xbf16> to vector<1x16x32xbf16>
    tpu.vector_store %arg7[%c1_36, %c0_37, %c0_38], %44 {strides = array<i32>} : memref<4x16x32xbf16, #tpu.memory_space<vmem>>, vector<1x16x32xbf16>,
    %c2 = arith.constant 2 : index
    %c0_39 = arith.constant 0 : index
    %c0_40 = arith.constant 0 : index
    %45 = vector.load %arg2[%c2, %c0_39, %c0_40] : memref<4x32x32xbf16, #tpu.memory_space<vmem>>, vector<1x32x32xbf16>
    %46 = vector.shape_cast %45 : vector<1x32x32xbf16> to vector<32x32xbf16>
    "tpu.trace_start"() <{level = 10 : i32, message = "cd,td->ct"}> : () -> ()
    %cst_41 = arith.constant dense<0.000000e+00> : vector<32x16xf32>
    %47 = tpu.matmul %46, %0, %cst_41 {dimension_numbers = #tpu.dot_dimension_numbers<[1], [1], [0], [0], [0, 0, 1, 0], [], []>} : vector<32x32xbf16>, vector<16x32xbf16>, vector<32x16xf32> -> vector<32x16xf32>
    "tpu.trace_stop"() : () -> ()
    %c2_42 = arith.constant 2 : index
    %c0_43 = arith.constant 0 : index
    %c0_44 = arith.constant 0 : index
    %48 = vector.load %arg3[%c2_42, %c0_43, %c0_44] : memref<4x32x1xf32, #tpu.memory_space<vmem>>, vector<1x32x1xf32>
    %49 = vector.shape_cast %48 : vector<1x32x1xf32> to vector<32x1xf32>
    %50 = vector.broadcast %49 : vector<32x1xf32> to vector<32x16xf32>
    %51 = arith.addf %47, %50 : vector<32x16xf32>
    %52 = arith.truncf %51 : vector<32x16xf32> to vector<32x16xbf16>
    %c2_45 = arith.constant 2 : index
    %c0_46 = arith.constant 0 : index
    %c0_47 = arith.constant 0 : index
    %53 = vector.load %arg6[%c2_45, %c0_46, %c0_47] : memref<4x32x16xbf16, #tpu.memory_space<vmem>>, vector<1x32x16xbf16>
    %54 = vector.shape_cast %53 : vector<1x32x16xbf16> to vector<32x16xbf16>
    %55 = vector.shape_cast %52 : vector<32x16xbf16> to vector<1x32x16xbf16>
    tpu.vector_store %arg6[%c2_45, %c0_46, %c0_47], %55 {strides = array<i32>} : memref<4x32x16xbf16, #tpu.memory_space<vmem>>, vector<1x32x16xbf16>,
    %c2_48 = arith.constant 2 : index
    %c0_49 = arith.constant 0 : index
    %c0_50 = arith.constant 0 : index
    %56 = vector.load %arg4[%c2_48, %c0_49, %c0_50] : memref<4x32x32xbf16, #tpu.memory_space<vmem>>, vector<1x32x32xbf16>
    %57 = vector.shape_cast %56 : vector<1x32x32xbf16> to vector<32x32xbf16>
    %cst_51 = arith.constant dense<0.000000e+00> : vector<16x32xf32>
    %58 = tpu.matmul %0, %57, %cst_51 {dimension_numbers = #tpu.dot_dimension_numbers<[1], [0], [0], [1], [0, 0, 1, 1], [], []>} : vector<16x32xbf16>, vector<32x32xbf16>, vector<16x32xf32> -> vector<16x32xf32>
    %c2_52 = arith.constant 2 : index
    %c0_53 = arith.constant 0 : index
    %c0_54 = arith.constant 0 : index
    %59 = vector.load %arg5[%c2_52, %c0_53, %c0_54] : memref<4x1x32xf32, #tpu.memory_space<vmem>>, vector<1x1x32xf32>
    %60 = vector.shape_cast %59 : vector<1x1x32xf32> to vector<1x32xf32>
    %61 = vector.broadcast %60 : vector<1x32xf32> to vector<16x32xf32>
    %62 = arith.addf %58, %61 : vector<16x32xf32>
    %63 = arith.truncf %62 : vector<16x32xf32> to vector<16x32xbf16>
    %c2_55 = arith.constant 2 : index
    %c0_56 = arith.constant 0 : index
    %c0_57 = arith.constant 0 : index
    %64 = vector.load %arg7[%c2_55, %c0_56, %c0_57] : memref<4x16x32xbf16, #tpu.memory_space<vmem>>, vector<1x16x32xbf16>
    %65 = vector.shape_cast %64 : vector<1x16x32xbf16> to vector<16x32xbf16>
    %66 = vector.shape_cast %63 : vector<16x32xbf16> to vector<1x16x32xbf16>
    tpu.vector_store %arg7[%c2_55, %c0_56, %c0_57], %66 {strides = array<i32>} : memref<4x16x32xbf16, #tpu.memory_space<vmem>>, vector<1x16x32xbf16>,
    %c3 = arith.constant 3 : index
    %c0_58 = arith.constant 0 : index
    %c0_59 = arith.constant 0 : index
    %67 = vector.load %arg2[%c3, %c0_58, %c0_59] : memref<4x32x32xbf16, #tpu.memory_space<vmem>>, vector<1x32x32xbf16>
    %68 = vector.shape_cast %67 : vector<1x32x32xbf16> to vector<32x32xbf16>
    "tpu.trace_start"() <{level = 10 : i32, message = "cd,td->ct"}> : () -> ()
    %cst_60 = arith.constant dense<0.000000e+00> : vector<32x16xf32>
    %69 = tpu.matmul %68, %0, %cst_60 {dimension_numbers = #tpu.dot_dimension_numbers<[1], [1], [0], [0], [0, 0, 1, 0], [], []>} : vector<32x32xbf16>, vector<16x32xbf16>, vector<32x16xf32> -> vector<32x16xf32>
    "tpu.trace_stop"() : () -> ()
    %c3_61 = arith.constant 3 : index
    %c0_62 = arith.constant 0 : index
    %c0_63 = arith.constant 0 : index
    %70 = vector.load %arg3[%c3_61, %c0_62, %c0_63] : memref<4x32x1xf32, #tpu.memory_space<vmem>>, vector<1x32x1xf32>
    %71 = vector.shape_cast %70 : vector<1x32x1xf32> to vector<32x1xf32>
    %72 = vector.broadcast %71 : vector<32x1xf32> to vector<32x16xf32>
    %73 = arith.addf %69, %72 : vector<32x16xf32>
    %74 = arith.truncf %73 : vector<32x16xf32> to vector<32x16xbf16>
    %c3_64 = arith.constant 3 : index
    %c0_65 = arith.constant 0 : index
    %c0_66 = arith.constant 0 : index
    %75 = vector.load %arg6[%c3_64, %c0_65, %c0_66] : memref<4x32x16xbf16, #tpu.memory_space<vmem>>, vector<1x32x16xbf16>
    %76 = vector.shape_cast %75 : vector<1x32x16xbf16> to vector<32x16xbf16>
    %77 = vector.shape_cast %74 : vector<32x16xbf16> to vector<1x32x16xbf16>
    tpu.vector_store %arg6[%c3_64, %c0_65, %c0_66], %77 {strides = array<i32>} : memref<4x32x16xbf16, #tpu.memory_space<vmem>>, vector<1x32x16xbf16>,
    %c3_67 = arith.constant 3 : index
    %c0_68 = arith.constant 0 : index
    %c0_69 = arith.constant 0 : index
    %78 = vector.load %arg4[%c3_67, %c0_68, %c0_69] : memref<4x32x32xbf16, #tpu.memory_space<vmem>>, vector<1x32x32xbf16>
    %79 = vector.shape_cast %78 : vector<1x32x32xbf16> to vector<32x32xbf16>
    %cst_70 = arith.constant dense<0.000000e+00> : vector<16x32xf32>
    %80 = tpu.matmul %0, %79, %cst_70 {dimension_numbers = #tpu.dot_dimension_numbers<[1], [0], [0], [1], [0, 0, 1, 1], [], []>} : vector<16x32xbf16>, vector<32x32xbf16>, vector<16x32xf32> -> vector<16x32xf32>
    %c3_71 = arith.constant 3 : index
    %c0_72 = arith.constant 0 : index
    %c0_73 = arith.constant 0 : index
    %81 = vector.load %arg5[%c3_71, %c0_72, %c0_73] : memref<4x1x32xf32, #tpu.memory_space<vmem>>, vector<1x1x32xf32>
    %82 = vector.shape_cast %81 : vector<1x1x32xf32> to vector<1x32xf32>
    %83 = vector.broadcast %82 : vector<1x32xf32> to vector<16x32xf32>
    %84 = arith.addf %80, %83 : vector<16x32xf32>
    %85 = arith.truncf %84 : vector<16x32xf32> to vector<16x32xbf16>
    %c3_74 = arith.constant 3 : index
    %c0_75 = arith.constant 0 : index
    %c0_76 = arith.constant 0 : index
    %86 = vector.load %arg7[%c3_74, %c0_75, %c0_76] : memref<4x16x32xbf16, #tpu.memory_space<vmem>>, vector<1x16x32xbf16>
    %87 = vector.shape_cast %86 : vector<1x16x32xbf16> to vector<16x32xbf16>
    %88 = vector.shape_cast %85 : vector<16x32xbf16> to vector<1x16x32xbf16>
    tpu.vector_store %arg7[%c3_74, %c0_75, %c0_76], %88 {strides = array<i32>} : memref<4x16x32xbf16, #tpu.memory_space<vmem>>, vector<1x16x32xbf16>,
    return
  }
  func.func @transform_0(%arg0: i32) -> (i32, i32) {
    %c0_i32 = arith.constant 0 : i32
    %c0_i32_0 = arith.constant 0 : i32
    return %arg0, %c0_i32 : i32, i32
  }
  func.func @transform_1(%arg0: i32) -> (i32, i32, i32) {
    %c0_i32 = arith.constant 0 : i32
    %c0_i32_0 = arith.constant 0 : i32
    %c0_i32_1 = arith.constant 0 : i32
    %c0_i32_2 = arith.constant 0 : i32
    return %c0_i32, %c0_i32_0, %c0_i32_1 : i32, i32, i32
  }
  func.func @transform_2(%arg0: i32) -> (i32, i32, i32) {
    %c0_i32 = arith.constant 0 : i32
    %c0_i32_0 = arith.constant 0 : i32
    %c0_i32_1 = arith.constant 0 : i32
    %c0_i32_2 = arith.constant 0 : i32
    return %c0_i32, %c0_i32_0, %c0_i32_1 : i32, i32, i32
  }
  func.func @transform_3(%arg0: i32) -> (i32, i32, i32) {
    %c0_i32 = arith.constant 0 : i32
    %c0_i32_0 = arith.constant 0 : i32
    %c0_i32_1 = arith.constant 0 : i32
    %c0_i32_2 = arith.constant 0 : i32
    return %c0_i32, %c0_i32_0, %c0_i32_1 : i32, i32, i32
  }
  func.func @transform_4(%arg0: i32) -> (i32, i32, i32) {
    %c0_i32 = arith.constant 0 : i32
    %c0_i32_0 = arith.constant 0 : i32
    %c0_i32_1 = arith.constant 0 : i32
    %c0_i32_2 = arith.constant 0 : i32
    return %c0_i32, %c0_i32_0, %c0_i32_1 : i32, i32, i32
  }
  func.func @transform_5(%arg0: i32) -> (i32, i32, i32) {
    %c0_i32 = arith.constant 0 : i32
    %c0_i32_0 = arith.constant 0 : i32
    %c0_i32_1 = arith.constant 0 : i32
    return %c0_i32, %c0_i32_0, %arg0 : i32, i32, i32
  }
  func.func @transform_6(%arg0: i32) -> (i32, i32, i32) {
    %c0_i32 = arith.constant 0 : i32
    %c0_i32_0 = arith.constant 0 : i32
    %c0_i32_1 = arith.constant 0 : i32
    return %c0_i32, %arg0, %c0_i32_0 : i32, i32, i32
  }
}

module attributes {stable_mosaic.version = 11 : i64} {
  func.func @attn_kernel(%arg0: i32, %arg1: i32, %arg2: memref<1xi32, #tpu.memory_space<smem>>, %arg3: memref<16x32xbf16, #tpu.memory_space<vmem>>, %arg4: memref<16x16xi8, #tpu.memory_space<vmem>>, %arg5: memref<4x32x16xbf16, #tpu.memory_space<vmem>>, %arg6: memref<4x16x32xbf16, #tpu.memory_space<vmem>>, %arg7: memref<4x32x32xbf16, #tpu.memory_space<vmem>>, %arg8: memref<4x1x32xf32, #tpu.memory_space<vmem>>, %arg9: memref<32x128xbf16, #tpu.memory_space<vmem>>, %arg10: memref<1x128xf32, #tpu.memory_space<vmem>>, %arg11: memref<16x128xbf16, #tpu.memory_space<vmem>>, %arg12: memref<4x16x32xbf16, #tpu.memory_space<vmem>>, %arg13: memref<16x128xf32, #tpu.memory_space<vmem>>, %arg14: memref<4x16x1xf32, #tpu.memory_space<vmem>>, %arg15: memref<4x16x1xf32, #tpu.memory_space<vmem>>, %arg16: memref<4x16x32xf32, #tpu.memory_space<vmem>>) attributes {dimension_semantics = [#tpu.dimension_semantics<parallel>, #tpu.dimension_semantics<arbitrary>], iteration_bounds = array<i64: 1, 1>, scalar_prefetch = 1 : i64, scratch_operands = 5 : i64, tpu.core_type = #tpu.core_type<tc>, window_params = [{transform_indices = @transform_0, window_bounds = array<i64: 16, 32>}, {transform_indices = @transform_1, window_bounds = array<i64: 16, 16>}, {transform_indices = @transform_2, window_bounds = array<i64: 4, 32, 16>}, {transform_indices = @transform_3, window_bounds = array<i64: 4, 16, 32>}, {pipeline_mode = #tpu.pipeline_mode<synchronous>, transform_indices = @transform_4, window_bounds = array<i64: 4, 32, 32>}, {pipeline_mode = #tpu.pipeline_mode<synchronous>, transform_indices = @transform_5, window_bounds = array<i64: 4, 1, 32>}, {pipeline_mode = #tpu.pipeline_mode<synchronous>, transform_indices = @transform_6, window_bounds = array<i64: 32, 128>}, {pipeline_mode = #tpu.pipeline_mode<synchronous>, transform_indices = @transform_7, window_bounds = array<i64: 1, 128>}, {transform_indices = @transform_8, window_bounds = array<i64: 16, 128>}]} {
    %c0_i32 = arith.constant 0 : i32
    %0 = arith.cmpi eq, %arg1, %c0_i32 : i32
    %1 = arith.extui %0 : i1 to i32
    %c0_i32_0 = arith.constant 0 : i32
    %2 = arith.cmpi ne, %1, %c0_i32_0 : i32
    scf.if %2 {
      %c0 = arith.constant 0 : index
      %c0_5 = arith.constant 0 : index
      %13 = vector.load %arg3[%c0, %c0_5] : memref<16x32xbf16, #tpu.memory_space<vmem>>, vector<16x32xbf16>
      %c0_6 = arith.constant 0 : index
      %c0_7 = arith.constant 0 : index
      %c0_8 = arith.constant 0 : index
      %14 = vector.load %arg7[%c0_6, %c0_7, %c0_8] : memref<4x32x32xbf16, #tpu.memory_space<vmem>>, vector<1x32x32xbf16>
      %15 = vector.shape_cast %14 : vector<1x32x32xbf16> to vector<32x32xbf16>
      %cst = arith.constant dense<0.000000e+00> : vector<16x32xf32>
      %16 = tpu.matmul %13, %15, %cst {dimension_numbers = #tpu.dot_dimension_numbers<[1], [0], [0], [1], [0, 0, 1, 1], [], []>} : vector<16x32xbf16>, vector<32x32xbf16>, vector<16x32xf32> -> vector<16x32xf32>
      %c0_9 = arith.constant 0 : index
      %c0_10 = arith.constant 0 : index
      %c0_11 = arith.constant 0 : index
      %17 = vector.load %arg8[%c0_9, %c0_10, %c0_11] : memref<4x1x32xf32, #tpu.memory_space<vmem>>, vector<1x1x32xf32>
      %18 = vector.shape_cast %17 : vector<1x1x32xf32> to vector<1x32xf32>
      %19 = vector.broadcast %18 : vector<1x32xf32> to vector<16x32xf32>
      %20 = arith.addf %16, %19 : vector<16x32xf32>
      %21 = arith.truncf %20 : vector<16x32xf32> to vector<16x32xbf16>
      %c0_12 = arith.constant 0 : index
      %c0_13 = arith.constant 0 : index
      %c0_14 = arith.constant 0 : index
      %22 = vector.load %arg12[%c0_12, %c0_13, %c0_14] : memref<4x16x32xbf16, #tpu.memory_space<vmem>>, vector<1x16x32xbf16>
      %23 = vector.shape_cast %22 : vector<1x16x32xbf16> to vector<16x32xbf16>
      %24 = vector.shape_cast %21 : vector<16x32xbf16> to vector<1x16x32xbf16>
      tpu.vector_store %arg12[%c0_12, %c0_13, %c0_14], %24 {strides = array<i32>} : memref<4x16x32xbf16, #tpu.memory_space<vmem>>, vector<1x16x32xbf16>,
      %c1 = arith.constant 1 : index
      %c0_15 = arith.constant 0 : index
      %c0_16 = arith.constant 0 : index
      %25 = vector.load %arg7[%c1, %c0_15, %c0_16] : memref<4x32x32xbf16, #tpu.memory_space<vmem>>, vector<1x32x32xbf16>
      %26 = vector.shape_cast %25 : vector<1x32x32xbf16> to vector<32x32xbf16>
      %cst_17 = arith.constant dense<0.000000e+00> : vector<16x32xf32>
      %27 = tpu.matmul %13, %26, %cst_17 {dimension_numbers = #tpu.dot_dimension_numbers<[1], [0], [0], [1], [0, 0, 1, 1], [], []>} : vector<16x32xbf16>, vector<32x32xbf16>, vector<16x32xf32> -> vector<16x32xf32>
      %c1_18 = arith.constant 1 : index
      %c0_19 = arith.constant 0 : index
      %c0_20 = arith.constant 0 : index
      %28 = vector.load %arg8[%c1_18, %c0_19, %c0_20] : memref<4x1x32xf32, #tpu.memory_space<vmem>>, vector<1x1x32xf32>
      %29 = vector.shape_cast %28 : vector<1x1x32xf32> to vector<1x32xf32>
      %30 = vector.broadcast %29 : vector<1x32xf32> to vector<16x32xf32>
      %31 = arith.addf %27, %30 : vector<16x32xf32>
      %32 = arith.truncf %31 : vector<16x32xf32> to vector<16x32xbf16>
      %c1_21 = arith.constant 1 : index
      %c0_22 = arith.constant 0 : index
      %c0_23 = arith.constant 0 : index
      %33 = vector.load %arg12[%c1_21, %c0_22, %c0_23] : memref<4x16x32xbf16, #tpu.memory_space<vmem>>, vector<1x16x32xbf16>
      %34 = vector.shape_cast %33 : vector<1x16x32xbf16> to vector<16x32xbf16>
      %35 = vector.shape_cast %32 : vector<16x32xbf16> to vector<1x16x32xbf16>
      tpu.vector_store %arg12[%c1_21, %c0_22, %c0_23], %35 {strides = array<i32>} : memref<4x16x32xbf16, #tpu.memory_space<vmem>>, vector<1x16x32xbf16>,
      %c2 = arith.constant 2 : index
      %c0_24 = arith.constant 0 : index
      %c0_25 = arith.constant 0 : index
      %36 = vector.load %arg7[%c2, %c0_24, %c0_25] : memref<4x32x32xbf16, #tpu.memory_space<vmem>>, vector<1x32x32xbf16>
      %37 = vector.shape_cast %36 : vector<1x32x32xbf16> to vector<32x32xbf16>
      %cst_26 = arith.constant dense<0.000000e+00> : vector<16x32xf32>
      %38 = tpu.matmul %13, %37, %cst_26 {dimension_numbers = #tpu.dot_dimension_numbers<[1], [0], [0], [1], [0, 0, 1, 1], [], []>} : vector<16x32xbf16>, vector<32x32xbf16>, vector<16x32xf32> -> vector<16x32xf32>
      %c2_27 = arith.constant 2 : index
      %c0_28 = arith.constant 0 : index
      %c0_29 = arith.constant 0 : index
      %39 = vector.load %arg8[%c2_27, %c0_28, %c0_29] : memref<4x1x32xf32, #tpu.memory_space<vmem>>, vector<1x1x32xf32>
      %40 = vector.shape_cast %39 : vector<1x1x32xf32> to vector<1x32xf32>
      %41 = vector.broadcast %40 : vector<1x32xf32> to vector<16x32xf32>
      %42 = arith.addf %38, %41 : vector<16x32xf32>
      %43 = arith.truncf %42 : vector<16x32xf32> to vector<16x32xbf16>
      %c2_30 = arith.constant 2 : index
      %c0_31 = arith.constant 0 : index
      %c0_32 = arith.constant 0 : index
      %44 = vector.load %arg12[%c2_30, %c0_31, %c0_32] : memref<4x16x32xbf16, #tpu.memory_space<vmem>>, vector<1x16x32xbf16>
      %45 = vector.shape_cast %44 : vector<1x16x32xbf16> to vector<16x32xbf16>
      %46 = vector.shape_cast %43 : vector<16x32xbf16> to vector<1x16x32xbf16>
      tpu.vector_store %arg12[%c2_30, %c0_31, %c0_32], %46 {strides = array<i32>} : memref<4x16x32xbf16, #tpu.memory_space<vmem>>, vector<1x16x32xbf16>,
      %c3 = arith.constant 3 : index
      %c0_33 = arith.constant 0 : index
      %c0_34 = arith.constant 0 : index
      %47 = vector.load %arg7[%c3, %c0_33, %c0_34] : memref<4x32x32xbf16, #tpu.memory_space<vmem>>, vector<1x32x32xbf16>
      %48 = vector.shape_cast %47 : vector<1x32x32xbf16> to vector<32x32xbf16>
      %cst_35 = arith.constant dense<0.000000e+00> : vector<16x32xf32>
      %49 = tpu.matmul %13, %48, %cst_35 {dimension_numbers = #tpu.dot_dimension_numbers<[1], [0], [0], [1], [0, 0, 1, 1], [], []>} : vector<16x32xbf16>, vector<32x32xbf16>, vector<16x32xf32> -> vector<16x32xf32>
      %c3_36 = arith.constant 3 : index
      %c0_37 = arith.constant 0 : index
      %c0_38 = arith.constant 0 : index
      %50 = vector.load %arg8[%c3_36, %c0_37, %c0_38] : memref<4x1x32xf32, #tpu.memory_space<vmem>>, vector<1x1x32xf32>
      %51 = vector.shape_cast %50 : vector<1x1x32xf32> to vector<1x32xf32>
      %52 = vector.broadcast %51 : vector<1x32xf32> to vector<16x32xf32>
      %53 = arith.addf %49, %52 : vector<16x32xf32>
      %54 = arith.truncf %53 : vector<16x32xf32> to vector<16x32xbf16>
      %c3_39 = arith.constant 3 : index
      %c0_40 = arith.constant 0 : index
      %c0_41 = arith.constant 0 : index
      %55 = vector.load %arg12[%c3_39, %c0_40, %c0_41] : memref<4x16x32xbf16, #tpu.memory_space<vmem>>, vector<1x16x32xbf16>
      %56 = vector.shape_cast %55 : vector<1x16x32xbf16> to vector<16x32xbf16>
      %57 = vector.shape_cast %54 : vector<16x32xbf16> to vector<1x16x32xbf16>
      tpu.vector_store %arg12[%c3_39, %c0_40, %c0_41], %57 {strides = array<i32>} : memref<4x16x32xbf16, #tpu.memory_space<vmem>>, vector<1x16x32xbf16>,
      %c0_42 = arith.constant 0 : index
      %c0_43 = arith.constant 0 : index
      %58 = vector.load %arg9[%c0_42, %c0_43] : memref<32x128xbf16, #tpu.memory_space<vmem>>, vector<32x128xbf16>
      %cst_44 = arith.constant dense<0.000000e+00> : vector<16x128xf32>
      %59 = tpu.matmul %13, %58, %cst_44 {dimension_numbers = #tpu.dot_dimension_numbers<[1], [0], [0], [1], [0, 0, 1, 1], [], []>} : vector<16x32xbf16>, vector<32x128xbf16>, vector<16x128xf32> -> vector<16x128xf32>
      %c0_45 = arith.constant 0 : index
      %c0_46 = arith.constant 0 : index
      %60 = vector.load %arg10[%c0_45, %c0_46] : memref<1x128xf32, #tpu.memory_space<vmem>>, vector<1x128xf32>
      %61 = vector.broadcast %60 : vector<1x128xf32> to vector<16x128xf32>
      %62 = arith.addf %59, %61 : vector<16x128xf32>
      %c0_47 = arith.constant 0 : index
      %c0_48 = arith.constant 0 : index
      %63 = vector.load %arg13[%c0_47, %c0_48] : memref<16x128xf32, #tpu.memory_space<vmem>>, vector<16x128xf32>
      tpu.vector_store %arg13[%c0_47, %c0_48], %62 {strides = array<i32>} : memref<16x128xf32, #tpu.memory_space<vmem>>, vector<16x128xf32>,
      %cst_49 = arith.constant -1.000000e+30 : f32
      %64 = vector.broadcast %cst_49 : f32 to vector<4x16x1xf32>
      %c0_50 = arith.constant 0 : index
      %c0_51 = arith.constant 0 : index
      %c0_52 = arith.constant 0 : index
      %65 = vector.load %arg14[%c0_50, %c0_51, %c0_52] : memref<4x16x1xf32, #tpu.memory_space<vmem>>, vector<4x16x1xf32>
      tpu.vector_store %arg14[%c0_50, %c0_51, %c0_52], %64 {strides = array<i32>} : memref<4x16x1xf32, #tpu.memory_space<vmem>>, vector<4x16x1xf32>,
      %cst_53 = arith.constant 0.000000e+00 : f32
      %66 = vector.broadcast %cst_53 : f32 to vector<4x16x1xf32>
      %c0_54 = arith.constant 0 : index
      %c0_55 = arith.constant 0 : index
      %c0_56 = arith.constant 0 : index
      %67 = vector.load %arg15[%c0_54, %c0_55, %c0_56] : memref<4x16x1xf32, #tpu.memory_space<vmem>>, vector<4x16x1xf32>
      tpu.vector_store %arg15[%c0_54, %c0_55, %c0_56], %66 {strides = array<i32>} : memref<4x16x1xf32, #tpu.memory_space<vmem>>, vector<4x16x1xf32>,
      %cst_57 = arith.constant 0.000000e+00 : f32
      %68 = vector.broadcast %cst_57 : f32 to vector<4x16x32xf32>
      %c0_58 = arith.constant 0 : index
      %c0_59 = arith.constant 0 : index
      %c0_60 = arith.constant 0 : index
      %69 = vector.load %arg16[%c0_58, %c0_59, %c0_60] : memref<4x16x32xf32, #tpu.memory_space<vmem>>, vector<4x16x32xf32>
      tpu.vector_store %arg16[%c0_58, %c0_59, %c0_60], %68 {strides = array<i32>} : memref<4x16x32xf32, #tpu.memory_space<vmem>>, vector<4x16x32xf32>,
    } else {
    }
    %c1_i32 = arith.constant 1 : i32
    %3 = arith.muli %arg0, %c1_i32 : i32
    %4 = arith.addi %3, %arg1 : i32
    %5 = arith.index_cast %4 : i32 to index
    %6 = memref.load %arg2[%5] : memref<1xi32, #tpu.memory_space<smem>>
    %c0_i32_1 = arith.constant 0 : i32
    %7 = arith.cmpi ne, %6, %c0_i32_1 : i32
    %8 = arith.extui %7 : i1 to i32
    %c0_i32_2 = arith.constant 0 : i32
    %9 = arith.cmpi ne, %8, %c0_i32_2 : i32
    scf.if %9 {
      %c0 = arith.constant 0 : index
      %c0_5 = arith.constant 0 : index
      %13 = vector.load %arg4[%c0, %c0_5] : memref<16x16xi8, #tpu.memory_space<vmem>>, vector<16x16xi8>
      %14 = arith.sitofp %13 : vector<16x16xi8> to vector<16x16xf32>
      %c0_6 = arith.constant 0 : index
      %c0_7 = arith.constant 0 : index
      %c0_8 = arith.constant 0 : index
      %15 = vector.load %arg12[%c0_6, %c0_7, %c0_8] : memref<4x16x32xbf16, #tpu.memory_space<vmem>>, vector<4x16x32xbf16>
      %c0_9 = arith.constant 0 : index
      %c0_10 = arith.constant 0 : index
      %c0_11 = arith.constant 0 : index
      %16 = vector.load %arg5[%c0_9, %c0_10, %c0_11] : memref<4x32x16xbf16, #tpu.memory_space<vmem>>, vector<4x32x16xbf16>
      "tpu.trace_start"() <{level = 10 : i32, message = "htc,hck->htk"}> : () -> ()
      %cst = arith.constant dense<0.000000e+00> : vector<4x16x16xf32>
      %17 = tpu.matmul %15, %16, %cst {dimension_numbers = #tpu.dot_dimension_numbers<[2], [1], [1], [2], [0, 0, 0, 1, 1, 2], [0], [0]>} : vector<4x16x32xbf16>, vector<4x32x16xbf16>, vector<4x16x16xf32> -> vector<4x16x16xf32>
      "tpu.trace_stop"() : () -> ()
      %c0_12 = arith.constant 0 : index
      %c0_13 = arith.constant 0 : index
      %c0_14 = arith.constant 0 : index
      %18 = vector.load %arg14[%c0_12, %c0_13, %c0_14] : memref<4x16x1xf32, #tpu.memory_space<vmem>>, vector<4x16x1xf32>
      %cst_15 = arith.constant dense<0xFF800000> : vector<4x16xf32>
      %19 = vector.multi_reduction <maximumf>, %17, %cst_15 [2] : vector<4x16x16xf32> to vector<4x16xf32>
      %20 = vector.shape_cast %19 : vector<4x16xf32> to vector<4x16x1xf32>
      %21 = arith.maximumf %18, %20 : vector<4x16x1xf32>
      %c0_16 = arith.constant 0 : index
      %c0_17 = arith.constant 0 : index
      %c0_18 = arith.constant 0 : index
      %22 = vector.load %arg14[%c0_16, %c0_17, %c0_18] : memref<4x16x1xf32, #tpu.memory_space<vmem>>, vector<4x16x1xf32>
      %23 = arith.subf %22, %21 : vector<4x16x1xf32>
      %24 = math.exp %23 : vector<4x16x1xf32>
      %25 = vector.broadcast %21 : vector<4x16x1xf32> to vector<4x16x16xf32>
      %26 = arith.subf %17, %25 : vector<4x16x16xf32>
      %27 = math.exp %26 : vector<4x16x16xf32>
      %28 = vector.shape_cast %14 : vector<16x16xf32> to vector<1x16x16xf32>
      %29 = vector.broadcast %28 : vector<1x16x16xf32> to vector<4x16x16xf32>
      %30 = arith.mulf %27, %29 : vector<4x16x16xf32>
      %c0_19 = arith.constant 0 : index
      %c0_20 = arith.constant 0 : index
      %c0_21 = arith.constant 0 : index
      %31 = vector.load %arg15[%c0_19, %c0_20, %c0_21] : memref<4x16x1xf32, #tpu.memory_space<vmem>>, vector<4x16x1xf32>
      %32 = arith.mulf %24, %31 : vector<4x16x1xf32>
      %cst_22 = arith.constant dense<0.000000e+00> : vector<4x16xf32>
      %33 = vector.multi_reduction <add>, %30, %cst_22 [2] : vector<4x16x16xf32> to vector<4x16xf32>
      %34 = vector.shape_cast %33 : vector<4x16xf32> to vector<4x16x1xf32>
      %35 = arith.addf %32, %34 : vector<4x16x1xf32>
      %c0_23 = arith.constant 0 : index
      %c0_24 = arith.constant 0 : index
      %c0_25 = arith.constant 0 : index
      %36 = vector.load %arg15[%c0_23, %c0_24, %c0_25] : memref<4x16x1xf32, #tpu.memory_space<vmem>>, vector<4x16x1xf32>
      tpu.vector_store %arg15[%c0_23, %c0_24, %c0_25], %35 {strides = array<i32>} : memref<4x16x1xf32, #tpu.memory_space<vmem>>, vector<4x16x1xf32>,
      %c0_26 = arith.constant 0 : index
      %c0_27 = arith.constant 0 : index
      %c0_28 = arith.constant 0 : index
      %37 = vector.load %arg16[%c0_26, %c0_27, %c0_28] : memref<4x16x32xf32, #tpu.memory_space<vmem>>, vector<4x16x32xf32>
      %38 = vector.broadcast %24 : vector<4x16x1xf32> to vector<4x16x32xf32>
      %39 = arith.mulf %38, %37 : vector<4x16x32xf32>
      %40 = arith.truncf %30 : vector<4x16x16xf32> to vector<4x16x16xbf16>
      %c0_29 = arith.constant 0 : index
      %c0_30 = arith.constant 0 : index
      %c0_31 = arith.constant 0 : index
      %41 = vector.load %arg6[%c0_29, %c0_30, %c0_31] : memref<4x16x32xbf16, #tpu.memory_space<vmem>>, vector<4x16x32xbf16>
      "tpu.trace_start"() <{level = 10 : i32, message = "htk,hkc->htc"}> : () -> ()
      %cst_32 = arith.constant dense<0.000000e+00> : vector<4x16x32xf32>
      %42 = tpu.matmul %40, %41, %cst_32 {dimension_numbers = #tpu.dot_dimension_numbers<[2], [1], [1], [2], [0, 0, 0, 1, 1, 2], [0], [0]>} : vector<4x16x16xbf16>, vector<4x16x32xbf16>, vector<4x16x32xf32> -> vector<4x16x32xf32>
      "tpu.trace_stop"() : () -> ()
      %43 = arith.addf %39, %42 : vector<4x16x32xf32>
      %c0_33 = arith.constant 0 : index
      %c0_34 = arith.constant 0 : index
      %c0_35 = arith.constant 0 : index
      %44 = vector.load %arg16[%c0_33, %c0_34, %c0_35] : memref<4x16x32xf32, #tpu.memory_space<vmem>>, vector<4x16x32xf32>
      tpu.vector_store %arg16[%c0_33, %c0_34, %c0_35], %43 {strides = array<i32>} : memref<4x16x32xf32, #tpu.memory_space<vmem>>, vector<4x16x32xf32>,
      %c0_36 = arith.constant 0 : index
      %c0_37 = arith.constant 0 : index
      %c0_38 = arith.constant 0 : index
      %45 = vector.load %arg14[%c0_36, %c0_37, %c0_38] : memref<4x16x1xf32, #tpu.memory_space<vmem>>, vector<4x16x1xf32>
      tpu.vector_store %arg14[%c0_36, %c0_37, %c0_38], %21 {strides = array<i32>} : memref<4x16x1xf32, #tpu.memory_space<vmem>>, vector<4x16x1xf32>,
    } else {
    }
    %c0_i32_3 = arith.constant 0 : i32
    %10 = arith.cmpi eq, %arg1, %c0_i32_3 : i32
    %11 = arith.extui %10 : i1 to i32
    %c0_i32_4 = arith.constant 0 : i32
    %12 = arith.cmpi ne, %11, %c0_i32_4 : i32
    scf.if %12 {
      %c0 = arith.constant 0 : index
      %c0_5 = arith.constant 0 : index
      %c0_6 = arith.constant 0 : index
      %13 = vector.load %arg15[%c0, %c0_5, %c0_6] : memref<4x16x1xf32, #tpu.memory_space<vmem>>, vector<4x16x1xf32>
      %cst = arith.constant 9.99999968E-21 : f32
      %14 = vector.broadcast %cst : f32 to vector<4x16x1xf32>
      %15 = arith.maximumf %13, %14 : vector<4x16x1xf32>
      %16 = tpu.reciprocal %15 {approx = true} : vector<4x16x1xf32> -> vector<4x16x1xf32>
      %c0_7 = arith.constant 0 : index
      %c0_8 = arith.constant 0 : index
      %c0_9 = arith.constant 0 : index
      %17 = vector.load %arg16[%c0_7, %c0_8, %c0_9] : memref<4x16x32xf32, #tpu.memory_space<vmem>>, vector<4x16x32xf32>
      %18 = vector.broadcast %16 : vector<4x16x1xf32> to vector<4x16x32xf32>
      %19 = arith.mulf %17, %18 : vector<4x16x32xf32>
      %20 = vector.extract_strided_slice %19 {offsets = [0, 0, 0], sizes = [1, 16, 32], strides = [1, 1, 1]} : vector<4x16x32xf32> to vector<1x16x32xf32>
      %21 = vector.shape_cast %20 : vector<1x16x32xf32> to vector<16x32xf32>
      %22 = vector.extract_strided_slice %19 {offsets = [1, 0, 0], sizes = [1, 16, 32], strides = [1, 1, 1]} : vector<4x16x32xf32> to vector<1x16x32xf32>
      %23 = vector.shape_cast %22 : vector<1x16x32xf32> to vector<16x32xf32>
      %24 = vector.extract_strided_slice %19 {offsets = [2, 0, 0], sizes = [1, 16, 32], strides = [1, 1, 1]} : vector<4x16x32xf32> to vector<1x16x32xf32>
      %25 = vector.shape_cast %24 : vector<1x16x32xf32> to vector<16x32xf32>
      %26 = vector.extract_strided_slice %19 {offsets = [3, 0, 0], sizes = [1, 16, 32], strides = [1, 1, 1]} : vector<4x16x32xf32> to vector<1x16x32xf32>
      %27 = vector.shape_cast %26 : vector<1x16x32xf32> to vector<16x32xf32>
      %28 = tpu.concatenate %21, %23, %25, %27 in 1 : vector<16x32xf32>, vector<16x32xf32>, vector<16x32xf32>, vector<16x32xf32> -> vector<16x128xf32>
      %c0_10 = arith.constant 0 : index
      %c0_11 = arith.constant 0 : index
      %29 = vector.load %arg13[%c0_10, %c0_11] : memref<16x128xf32, #tpu.memory_space<vmem>>, vector<16x128xf32>
      %30 = arith.addf %28, %29 : vector<16x128xf32>
      %cst_12 = arith.constant 0.000000e+00 : f32
      %31 = vector.broadcast %cst_12 : f32 to vector<16x128xf32>
      %32 = arith.cmpf ogt, %30, %31 : vector<16x128xf32>
      %cst_13 = arith.constant 0.000000e+00 : f32
      %33 = vector.broadcast %cst_13 : f32 to vector<16x128xf32>
      %34 = arith.minimumf %30, %33 : vector<16x128xf32>
      %35 = math.exp %34 : vector<16x128xf32>
      %cst_14 = arith.constant 1.000000e+00 : f32
      %36 = vector.broadcast %cst_14 : f32 to vector<16x128xf32>
      %37 = arith.subf %35, %36 : vector<16x128xf32>
      %38 = arith.select %32, %30, %37 : vector<16x128xi1>, vector<16x128xf32>
      %39 = arith.truncf %38 : vector<16x128xf32> to vector<16x128xbf16>
      %c0_15 = arith.constant 0 : index
      %c0_16 = arith.constant 0 : index
      %40 = vector.load %arg11[%c0_15, %c0_16] : memref<16x128xbf16, #tpu.memory_space<vmem>>, vector<16x128xbf16>
      tpu.vector_store %arg11[%c0_15, %c0_16], %39 {strides = array<i32>} : memref<16x128xbf16, #tpu.memory_space<vmem>>, vector<16x128xbf16>,
    } else {
    }
    return
  }
  func.func @transform_0(%arg0: i32, %arg1: i32, %arg2: memref<1xi32, #tpu.memory_space<smem>>) -> (i32, i32) {
    %c0_i32 = arith.constant 0 : i32
    %c0_i32_0 = arith.constant 0 : i32
    return %arg0, %c0_i32 : i32, i32
  }
  func.func @transform_1(%arg0: i32, %arg1: i32, %arg2: memref<1xi32, #tpu.memory_space<smem>>) -> (i32, i32) {
    %c0_i32 = arith.constant 0 : i32
    return %arg0, %arg1 : i32, i32
  }
  func.func @transform_2(%arg0: i32, %arg1: i32, %arg2: memref<1xi32, #tpu.memory_space<smem>>) -> (i32, i32, i32) {
    %c0_i32 = arith.constant 0 : i32
    %c0_i32_0 = arith.constant 0 : i32
    %c0_i32_1 = arith.constant 0 : i32
    return %c0_i32, %c0_i32_0, %arg1 : i32, i32, i32
  }
  func.func @transform_3(%arg0: i32, %arg1: i32, %arg2: memref<1xi32, #tpu.memory_space<smem>>) -> (i32, i32, i32) {
    %c0_i32 = arith.constant 0 : i32
    %c0_i32_0 = arith.constant 0 : i32
    %c0_i32_1 = arith.constant 0 : i32
    return %c0_i32, %arg1, %c0_i32_0 : i32, i32, i32
  }
  func.func @transform_4(%arg0: i32, %arg1: i32, %arg2: memref<1xi32, #tpu.memory_space<smem>>) -> (i32, i32, i32) {
    %c0_i32 = arith.constant 0 : i32
    %c0_i32_0 = arith.constant 0 : i32
    %c0_i32_1 = arith.constant 0 : i32
    %c0_i32_2 = arith.constant 0 : i32
    return %c0_i32, %c0_i32_0, %c0_i32_1 : i32, i32, i32
  }
  func.func @transform_5(%arg0: i32, %arg1: i32, %arg2: memref<1xi32, #tpu.memory_space<smem>>) -> (i32, i32, i32) {
    %c0_i32 = arith.constant 0 : i32
    %c0_i32_0 = arith.constant 0 : i32
    %c0_i32_1 = arith.constant 0 : i32
    %c0_i32_2 = arith.constant 0 : i32
    return %c0_i32, %c0_i32_0, %c0_i32_1 : i32, i32, i32
  }
  func.func @transform_6(%arg0: i32, %arg1: i32, %arg2: memref<1xi32, #tpu.memory_space<smem>>) -> (i32, i32) {
    %c0_i32 = arith.constant 0 : i32
    %c0_i32_0 = arith.constant 0 : i32
    %c0_i32_1 = arith.constant 0 : i32
    return %c0_i32, %c0_i32_0 : i32, i32
  }
  func.func @transform_7(%arg0: i32, %arg1: i32, %arg2: memref<1xi32, #tpu.memory_space<smem>>) -> (i32, i32) {
    %c0_i32 = arith.constant 0 : i32
    %c0_i32_0 = arith.constant 0 : i32
    %c0_i32_1 = arith.constant 0 : i32
    return %c0_i32, %c0_i32_0 : i32, i32
  }
  func.func @transform_8(%arg0: i32, %arg1: i32, %arg2: memref<1xi32, #tpu.memory_space<smem>>) -> (i32, i32) {
    %c0_i32 = arith.constant 0 : i32
    %c0_i32_0 = arith.constant 0 : i32
    return %arg0, %c0_i32 : i32, i32
  }
}

module attributes {stable_mosaic.version = 11 : i64} {
  func.func @kv_proj_kernel(%arg0: i32, %arg1: memref<16x128xbf16, #tpu.memory_space<vmem>>, %arg2: memref<4x32x128xbf16, #tpu.memory_space<vmem>>, %arg3: memref<4x32x1xf32, #tpu.memory_space<vmem>>, %arg4: memref<4x128x32xbf16, #tpu.memory_space<vmem>>, %arg5: memref<4x1x32xf32, #tpu.memory_space<vmem>>, %arg6: memref<4x32x16xbf16, #tpu.memory_space<vmem>>, %arg7: memref<4x16x32xbf16, #tpu.memory_space<vmem>>) attributes {dimension_semantics = [#tpu.dimension_semantics<parallel>], iteration_bounds = array<i64: 1>, scalar_prefetch = 0 : i64, scratch_operands = 0 : i64, tpu.core_type = #tpu.core_type<tc>, window_params = [{transform_indices = @transform_0, window_bounds = array<i64: 16, 128>}, {pipeline_mode = #tpu.pipeline_mode<synchronous>, transform_indices = @transform_1, window_bounds = array<i64: 4, 32, 128>}, {pipeline_mode = #tpu.pipeline_mode<synchronous>, transform_indices = @transform_2, window_bounds = array<i64: 4, 32, 1>}, {pipeline_mode = #tpu.pipeline_mode<synchronous>, transform_indices = @transform_3, window_bounds = array<i64: 4, 128, 32>}, {pipeline_mode = #tpu.pipeline_mode<synchronous>, transform_indices = @transform_4, window_bounds = array<i64: 4, 1, 32>}, {transform_indices = @transform_5, window_bounds = array<i64: 4, 32, 16>}, {transform_indices = @transform_6, window_bounds = array<i64: 4, 16, 32>}]} {
    %c0 = arith.constant 0 : index
    %c0_0 = arith.constant 0 : index
    %0 = vector.load %arg1[%c0, %c0_0] : memref<16x128xbf16, #tpu.memory_space<vmem>>, vector<16x128xbf16>
    %c0_1 = arith.constant 0 : index
    %c0_2 = arith.constant 0 : index
    %c0_3 = arith.constant 0 : index
    %1 = vector.load %arg2[%c0_1, %c0_2, %c0_3] : memref<4x32x128xbf16, #tpu.memory_space<vmem>>, vector<1x32x128xbf16>
    %2 = vector.shape_cast %1 : vector<1x32x128xbf16> to vector<32x128xbf16>
    "tpu.trace_start"() <{level = 10 : i32, message = "cd,td->ct"}> : () -> ()
    %cst = arith.constant dense<0.000000e+00> : vector<32x16xf32>
    %3 = tpu.matmul %2, %0, %cst {dimension_numbers = #tpu.dot_dimension_numbers<[1], [1], [0], [0], [0, 0, 1, 0], [], []>} : vector<32x128xbf16>, vector<16x128xbf16>, vector<32x16xf32> -> vector<32x16xf32>
    "tpu.trace_stop"() : () -> ()
    %c0_4 = arith.constant 0 : index
    %c0_5 = arith.constant 0 : index
    %c0_6 = arith.constant 0 : index
    %4 = vector.load %arg3[%c0_4, %c0_5, %c0_6] : memref<4x32x1xf32, #tpu.memory_space<vmem>>, vector<1x32x1xf32>
    %5 = vector.shape_cast %4 : vector<1x32x1xf32> to vector<32x1xf32>
    %6 = vector.broadcast %5 : vector<32x1xf32> to vector<32x16xf32>
    %7 = arith.addf %3, %6 : vector<32x16xf32>
    %8 = arith.truncf %7 : vector<32x16xf32> to vector<32x16xbf16>
    %c0_7 = arith.constant 0 : index
    %c0_8 = arith.constant 0 : index
    %c0_9 = arith.constant 0 : index
    %9 = vector.load %arg6[%c0_7, %c0_8, %c0_9] : memref<4x32x16xbf16, #tpu.memory_space<vmem>>, vector<1x32x16xbf16>
    %10 = vector.shape_cast %9 : vector<1x32x16xbf16> to vector<32x16xbf16>
    %11 = vector.shape_cast %8 : vector<32x16xbf16> to vector<1x32x16xbf16>
    tpu.vector_store %arg6[%c0_7, %c0_8, %c0_9], %11 {strides = array<i32>} : memref<4x32x16xbf16, #tpu.memory_space<vmem>>, vector<1x32x16xbf16>,
    %c0_10 = arith.constant 0 : index
    %c0_11 = arith.constant 0 : index
    %c0_12 = arith.constant 0 : index
    %12 = vector.load %arg4[%c0_10, %c0_11, %c0_12] : memref<4x128x32xbf16, #tpu.memory_space<vmem>>, vector<1x128x32xbf16>
    %13 = vector.shape_cast %12 : vector<1x128x32xbf16> to vector<128x32xbf16>
    %cst_13 = arith.constant dense<0.000000e+00> : vector<16x32xf32>
    %14 = tpu.matmul %0, %13, %cst_13 {dimension_numbers = #tpu.dot_dimension_numbers<[1], [0], [0], [1], [0, 0, 1, 1], [], []>} : vector<16x128xbf16>, vector<128x32xbf16>, vector<16x32xf32> -> vector<16x32xf32>
    %c0_14 = arith.constant 0 : index
    %c0_15 = arith.constant 0 : index
    %c0_16 = arith.constant 0 : index
    %15 = vector.load %arg5[%c0_14, %c0_15, %c0_16] : memref<4x1x32xf32, #tpu.memory_space<vmem>>, vector<1x1x32xf32>
    %16 = vector.shape_cast %15 : vector<1x1x32xf32> to vector<1x32xf32>
    %17 = vector.broadcast %16 : vector<1x32xf32> to vector<16x32xf32>
    %18 = arith.addf %14, %17 : vector<16x32xf32>
    %19 = arith.truncf %18 : vector<16x32xf32> to vector<16x32xbf16>
    %c0_17 = arith.constant 0 : index
    %c0_18 = arith.constant 0 : index
    %c0_19 = arith.constant 0 : index
    %20 = vector.load %arg7[%c0_17, %c0_18, %c0_19] : memref<4x16x32xbf16, #tpu.memory_space<vmem>>, vector<1x16x32xbf16>
    %21 = vector.shape_cast %20 : vector<1x16x32xbf16> to vector<16x32xbf16>
    %22 = vector.shape_cast %19 : vector<16x32xbf16> to vector<1x16x32xbf16>
    tpu.vector_store %arg7[%c0_17, %c0_18, %c0_19], %22 {strides = array<i32>} : memref<4x16x32xbf16, #tpu.memory_space<vmem>>, vector<1x16x32xbf16>,
    %c1 = arith.constant 1 : index
    %c0_20 = arith.constant 0 : index
    %c0_21 = arith.constant 0 : index
    %23 = vector.load %arg2[%c1, %c0_20, %c0_21] : memref<4x32x128xbf16, #tpu.memory_space<vmem>>, vector<1x32x128xbf16>
    %24 = vector.shape_cast %23 : vector<1x32x128xbf16> to vector<32x128xbf16>
    "tpu.trace_start"() <{level = 10 : i32, message = "cd,td->ct"}> : () -> ()
    %cst_22 = arith.constant dense<0.000000e+00> : vector<32x16xf32>
    %25 = tpu.matmul %24, %0, %cst_22 {dimension_numbers = #tpu.dot_dimension_numbers<[1], [1], [0], [0], [0, 0, 1, 0], [], []>} : vector<32x128xbf16>, vector<16x128xbf16>, vector<32x16xf32> -> vector<32x16xf32>
    "tpu.trace_stop"() : () -> ()
    %c1_23 = arith.constant 1 : index
    %c0_24 = arith.constant 0 : index
    %c0_25 = arith.constant 0 : index
    %26 = vector.load %arg3[%c1_23, %c0_24, %c0_25] : memref<4x32x1xf32, #tpu.memory_space<vmem>>, vector<1x32x1xf32>
    %27 = vector.shape_cast %26 : vector<1x32x1xf32> to vector<32x1xf32>
    %28 = vector.broadcast %27 : vector<32x1xf32> to vector<32x16xf32>
    %29 = arith.addf %25, %28 : vector<32x16xf32>
    %30 = arith.truncf %29 : vector<32x16xf32> to vector<32x16xbf16>
    %c1_26 = arith.constant 1 : index
    %c0_27 = arith.constant 0 : index
    %c0_28 = arith.constant 0 : index
    %31 = vector.load %arg6[%c1_26, %c0_27, %c0_28] : memref<4x32x16xbf16, #tpu.memory_space<vmem>>, vector<1x32x16xbf16>
    %32 = vector.shape_cast %31 : vector<1x32x16xbf16> to vector<32x16xbf16>
    %33 = vector.shape_cast %30 : vector<32x16xbf16> to vector<1x32x16xbf16>
    tpu.vector_store %arg6[%c1_26, %c0_27, %c0_28], %33 {strides = array<i32>} : memref<4x32x16xbf16, #tpu.memory_space<vmem>>, vector<1x32x16xbf16>,
    %c1_29 = arith.constant 1 : index
    %c0_30 = arith.constant 0 : index
    %c0_31 = arith.constant 0 : index
    %34 = vector.load %arg4[%c1_29, %c0_30, %c0_31] : memref<4x128x32xbf16, #tpu.memory_space<vmem>>, vector<1x128x32xbf16>
    %35 = vector.shape_cast %34 : vector<1x128x32xbf16> to vector<128x32xbf16>
    %cst_32 = arith.constant dense<0.000000e+00> : vector<16x32xf32>
    %36 = tpu.matmul %0, %35, %cst_32 {dimension_numbers = #tpu.dot_dimension_numbers<[1], [0], [0], [1], [0, 0, 1, 1], [], []>} : vector<16x128xbf16>, vector<128x32xbf16>, vector<16x32xf32> -> vector<16x32xf32>
    %c1_33 = arith.constant 1 : index
    %c0_34 = arith.constant 0 : index
    %c0_35 = arith.constant 0 : index
    %37 = vector.load %arg5[%c1_33, %c0_34, %c0_35] : memref<4x1x32xf32, #tpu.memory_space<vmem>>, vector<1x1x32xf32>
    %38 = vector.shape_cast %37 : vector<1x1x32xf32> to vector<1x32xf32>
    %39 = vector.broadcast %38 : vector<1x32xf32> to vector<16x32xf32>
    %40 = arith.addf %36, %39 : vector<16x32xf32>
    %41 = arith.truncf %40 : vector<16x32xf32> to vector<16x32xbf16>
    %c1_36 = arith.constant 1 : index
    %c0_37 = arith.constant 0 : index
    %c0_38 = arith.constant 0 : index
    %42 = vector.load %arg7[%c1_36, %c0_37, %c0_38] : memref<4x16x32xbf16, #tpu.memory_space<vmem>>, vector<1x16x32xbf16>
    %43 = vector.shape_cast %42 : vector<1x16x32xbf16> to vector<16x32xbf16>
    %44 = vector.shape_cast %41 : vector<16x32xbf16> to vector<1x16x32xbf16>
    tpu.vector_store %arg7[%c1_36, %c0_37, %c0_38], %44 {strides = array<i32>} : memref<4x16x32xbf16, #tpu.memory_space<vmem>>, vector<1x16x32xbf16>,
    %c2 = arith.constant 2 : index
    %c0_39 = arith.constant 0 : index
    %c0_40 = arith.constant 0 : index
    %45 = vector.load %arg2[%c2, %c0_39, %c0_40] : memref<4x32x128xbf16, #tpu.memory_space<vmem>>, vector<1x32x128xbf16>
    %46 = vector.shape_cast %45 : vector<1x32x128xbf16> to vector<32x128xbf16>
    "tpu.trace_start"() <{level = 10 : i32, message = "cd,td->ct"}> : () -> ()
    %cst_41 = arith.constant dense<0.000000e+00> : vector<32x16xf32>
    %47 = tpu.matmul %46, %0, %cst_41 {dimension_numbers = #tpu.dot_dimension_numbers<[1], [1], [0], [0], [0, 0, 1, 0], [], []>} : vector<32x128xbf16>, vector<16x128xbf16>, vector<32x16xf32> -> vector<32x16xf32>
    "tpu.trace_stop"() : () -> ()
    %c2_42 = arith.constant 2 : index
    %c0_43 = arith.constant 0 : index
    %c0_44 = arith.constant 0 : index
    %48 = vector.load %arg3[%c2_42, %c0_43, %c0_44] : memref<4x32x1xf32, #tpu.memory_space<vmem>>, vector<1x32x1xf32>
    %49 = vector.shape_cast %48 : vector<1x32x1xf32> to vector<32x1xf32>
    %50 = vector.broadcast %49 : vector<32x1xf32> to vector<32x16xf32>
    %51 = arith.addf %47, %50 : vector<32x16xf32>
    %52 = arith.truncf %51 : vector<32x16xf32> to vector<32x16xbf16>
    %c2_45 = arith.constant 2 : index
    %c0_46 = arith.constant 0 : index
    %c0_47 = arith.constant 0 : index
    %53 = vector.load %arg6[%c2_45, %c0_46, %c0_47] : memref<4x32x16xbf16, #tpu.memory_space<vmem>>, vector<1x32x16xbf16>
    %54 = vector.shape_cast %53 : vector<1x32x16xbf16> to vector<32x16xbf16>
    %55 = vector.shape_cast %52 : vector<32x16xbf16> to vector<1x32x16xbf16>
    tpu.vector_store %arg6[%c2_45, %c0_46, %c0_47], %55 {strides = array<i32>} : memref<4x32x16xbf16, #tpu.memory_space<vmem>>, vector<1x32x16xbf16>,
    %c2_48 = arith.constant 2 : index
    %c0_49 = arith.constant 0 : index
    %c0_50 = arith.constant 0 : index
    %56 = vector.load %arg4[%c2_48, %c0_49, %c0_50] : memref<4x128x32xbf16, #tpu.memory_space<vmem>>, vector<1x128x32xbf16>
    %57 = vector.shape_cast %56 : vector<1x128x32xbf16> to vector<128x32xbf16>
    %cst_51 = arith.constant dense<0.000000e+00> : vector<16x32xf32>
    %58 = tpu.matmul %0, %57, %cst_51 {dimension_numbers = #tpu.dot_dimension_numbers<[1], [0], [0], [1], [0, 0, 1, 1], [], []>} : vector<16x128xbf16>, vector<128x32xbf16>, vector<16x32xf32> -> vector<16x32xf32>
    %c2_52 = arith.constant 2 : index
    %c0_53 = arith.constant 0 : index
    %c0_54 = arith.constant 0 : index
    %59 = vector.load %arg5[%c2_52, %c0_53, %c0_54] : memref<4x1x32xf32, #tpu.memory_space<vmem>>, vector<1x1x32xf32>
    %60 = vector.shape_cast %59 : vector<1x1x32xf32> to vector<1x32xf32>
    %61 = vector.broadcast %60 : vector<1x32xf32> to vector<16x32xf32>
    %62 = arith.addf %58, %61 : vector<16x32xf32>
    %63 = arith.truncf %62 : vector<16x32xf32> to vector<16x32xbf16>
    %c2_55 = arith.constant 2 : index
    %c0_56 = arith.constant 0 : index
    %c0_57 = arith.constant 0 : index
    %64 = vector.load %arg7[%c2_55, %c0_56, %c0_57] : memref<4x16x32xbf16, #tpu.memory_space<vmem>>, vector<1x16x32xbf16>
    %65 = vector.shape_cast %64 : vector<1x16x32xbf16> to vector<16x32xbf16>
    %66 = vector.shape_cast %63 : vector<16x32xbf16> to vector<1x16x32xbf16>
    tpu.vector_store %arg7[%c2_55, %c0_56, %c0_57], %66 {strides = array<i32>} : memref<4x16x32xbf16, #tpu.memory_space<vmem>>, vector<1x16x32xbf16>,
    %c3 = arith.constant 3 : index
    %c0_58 = arith.constant 0 : index
    %c0_59 = arith.constant 0 : index
    %67 = vector.load %arg2[%c3, %c0_58, %c0_59] : memref<4x32x128xbf16, #tpu.memory_space<vmem>>, vector<1x32x128xbf16>
    %68 = vector.shape_cast %67 : vector<1x32x128xbf16> to vector<32x128xbf16>
    "tpu.trace_start"() <{level = 10 : i32, message = "cd,td->ct"}> : () -> ()
    %cst_60 = arith.constant dense<0.000000e+00> : vector<32x16xf32>
    %69 = tpu.matmul %68, %0, %cst_60 {dimension_numbers = #tpu.dot_dimension_numbers<[1], [1], [0], [0], [0, 0, 1, 0], [], []>} : vector<32x128xbf16>, vector<16x128xbf16>, vector<32x16xf32> -> vector<32x16xf32>
    "tpu.trace_stop"() : () -> ()
    %c3_61 = arith.constant 3 : index
    %c0_62 = arith.constant 0 : index
    %c0_63 = arith.constant 0 : index
    %70 = vector.load %arg3[%c3_61, %c0_62, %c0_63] : memref<4x32x1xf32, #tpu.memory_space<vmem>>, vector<1x32x1xf32>
    %71 = vector.shape_cast %70 : vector<1x32x1xf32> to vector<32x1xf32>
    %72 = vector.broadcast %71 : vector<32x1xf32> to vector<32x16xf32>
    %73 = arith.addf %69, %72 : vector<32x16xf32>
    %74 = arith.truncf %73 : vector<32x16xf32> to vector<32x16xbf16>
    %c3_64 = arith.constant 3 : index
    %c0_65 = arith.constant 0 : index
    %c0_66 = arith.constant 0 : index
    %75 = vector.load %arg6[%c3_64, %c0_65, %c0_66] : memref<4x32x16xbf16, #tpu.memory_space<vmem>>, vector<1x32x16xbf16>
    %76 = vector.shape_cast %75 : vector<1x32x16xbf16> to vector<32x16xbf16>
    %77 = vector.shape_cast %74 : vector<32x16xbf16> to vector<1x32x16xbf16>
    tpu.vector_store %arg6[%c3_64, %c0_65, %c0_66], %77 {strides = array<i32>} : memref<4x32x16xbf16, #tpu.memory_space<vmem>>, vector<1x32x16xbf16>,
    %c3_67 = arith.constant 3 : index
    %c0_68 = arith.constant 0 : index
    %c0_69 = arith.constant 0 : index
    %78 = vector.load %arg4[%c3_67, %c0_68, %c0_69] : memref<4x128x32xbf16, #tpu.memory_space<vmem>>, vector<1x128x32xbf16>
    %79 = vector.shape_cast %78 : vector<1x128x32xbf16> to vector<128x32xbf16>
    %cst_70 = arith.constant dense<0.000000e+00> : vector<16x32xf32>
    %80 = tpu.matmul %0, %79, %cst_70 {dimension_numbers = #tpu.dot_dimension_numbers<[1], [0], [0], [1], [0, 0, 1, 1], [], []>} : vector<16x128xbf16>, vector<128x32xbf16>, vector<16x32xf32> -> vector<16x32xf32>
    %c3_71 = arith.constant 3 : index
    %c0_72 = arith.constant 0 : index
    %c0_73 = arith.constant 0 : index
    %81 = vector.load %arg5[%c3_71, %c0_72, %c0_73] : memref<4x1x32xf32, #tpu.memory_space<vmem>>, vector<1x1x32xf32>
    %82 = vector.shape_cast %81 : vector<1x1x32xf32> to vector<1x32xf32>
    %83 = vector.broadcast %82 : vector<1x32xf32> to vector<16x32xf32>
    %84 = arith.addf %80, %83 : vector<16x32xf32>
    %85 = arith.truncf %84 : vector<16x32xf32> to vector<16x32xbf16>
    %c3_74 = arith.constant 3 : index
    %c0_75 = arith.constant 0 : index
    %c0_76 = arith.constant 0 : index
    %86 = vector.load %arg7[%c3_74, %c0_75, %c0_76] : memref<4x16x32xbf16, #tpu.memory_space<vmem>>, vector<1x16x32xbf16>
    %87 = vector.shape_cast %86 : vector<1x16x32xbf16> to vector<16x32xbf16>
    %88 = vector.shape_cast %85 : vector<16x32xbf16> to vector<1x16x32xbf16>
    tpu.vector_store %arg7[%c3_74, %c0_75, %c0_76], %88 {strides = array<i32>} : memref<4x16x32xbf16, #tpu.memory_space<vmem>>, vector<1x16x32xbf16>,
    return
  }
  func.func @transform_0(%arg0: i32) -> (i32, i32) {
    %c0_i32 = arith.constant 0 : i32
    %c0_i32_0 = arith.constant 0 : i32
    return %arg0, %c0_i32 : i32, i32
  }
  func.func @transform_1(%arg0: i32) -> (i32, i32, i32) {
    %c0_i32 = arith.constant 0 : i32
    %c0_i32_0 = arith.constant 0 : i32
    %c0_i32_1 = arith.constant 0 : i32
    %c0_i32_2 = arith.constant 0 : i32
    return %c0_i32, %c0_i32_0, %c0_i32_1 : i32, i32, i32
  }
  func.func @transform_2(%arg0: i32) -> (i32, i32, i32) {
    %c0_i32 = arith.constant 0 : i32
    %c0_i32_0 = arith.constant 0 : i32
    %c0_i32_1 = arith.constant 0 : i32
    %c0_i32_2 = arith.constant 0 : i32
    return %c0_i32, %c0_i32_0, %c0_i32_1 : i32, i32, i32
  }
  func.func @transform_3(%arg0: i32) -> (i32, i32, i32) {
    %c0_i32 = arith.constant 0 : i32
    %c0_i32_0 = arith.constant 0 : i32
    %c0_i32_1 = arith.constant 0 : i32
    %c0_i32_2 = arith.constant 0 : i32
    return %c0_i32, %c0_i32_0, %c0_i32_1 : i32, i32, i32
  }
  func.func @transform_4(%arg0: i32) -> (i32, i32, i32) {
    %c0_i32 = arith.constant 0 : i32
    %c0_i32_0 = arith.constant 0 : i32
    %c0_i32_1 = arith.constant 0 : i32
    %c0_i32_2 = arith.constant 0 : i32
    return %c0_i32, %c0_i32_0, %c0_i32_1 : i32, i32, i32
  }
  func.func @transform_5(%arg0: i32) -> (i32, i32, i32) {
    %c0_i32 = arith.constant 0 : i32
    %c0_i32_0 = arith.constant 0 : i32
    %c0_i32_1 = arith.constant 0 : i32
    return %c0_i32, %c0_i32_0, %arg0 : i32, i32, i32
  }
  func.func @transform_6(%arg0: i32) -> (i32, i32, i32) {
    %c0_i32 = arith.constant 0 : i32
    %c0_i32_0 = arith.constant 0 : i32
    %c0_i32_1 = arith.constant 0 : i32
    return %c0_i32, %arg0, %c0_i32_0 : i32, i32, i32
  }
}

module attributes {stable_mosaic.version = 11 : i64} {
  func.func @attn_kernel(%arg0: i32, %arg1: i32, %arg2: memref<1xi32, #tpu.memory_space<smem>>, %arg3: memref<16x128xbf16, #tpu.memory_space<vmem>>, %arg4: memref<16x16xi8, #tpu.memory_space<vmem>>, %arg5: memref<4x32x16xbf16, #tpu.memory_space<vmem>>, %arg6: memref<4x16x32xbf16, #tpu.memory_space<vmem>>, %arg7: memref<4x128x32xbf16, #tpu.memory_space<vmem>>, %arg8: memref<4x1x32xf32, #tpu.memory_space<vmem>>, %arg9: memref<128x128xbf16, #tpu.memory_space<vmem>>, %arg10: memref<1x128xf32, #tpu.memory_space<vmem>>, %arg11: memref<16x128xbf16, #tpu.memory_space<vmem>>, %arg12: memref<4x16x32xbf16, #tpu.memory_space<vmem>>, %arg13: memref<16x128xf32, #tpu.memory_space<vmem>>, %arg14: memref<4x16x1xf32, #tpu.memory_space<vmem>>, %arg15: memref<4x16x1xf32, #tpu.memory_space<vmem>>, %arg16: memref<4x16x32xf32, #tpu.memory_space<vmem>>) attributes {dimension_semantics = [#tpu.dimension_semantics<parallel>, #tpu.dimension_semantics<arbitrary>], iteration_bounds = array<i64: 1, 1>, scalar_prefetch = 1 : i64, scratch_operands = 5 : i64, tpu.core_type = #tpu.core_type<tc>, window_params = [{transform_indices = @transform_0, window_bounds = array<i64: 16, 128>}, {transform_indices = @transform_1, window_bounds = array<i64: 16, 16>}, {transform_indices = @transform_2, window_bounds = array<i64: 4, 32, 16>}, {transform_indices = @transform_3, window_bounds = array<i64: 4, 16, 32>}, {pipeline_mode = #tpu.pipeline_mode<synchronous>, transform_indices = @transform_4, window_bounds = array<i64: 4, 128, 32>}, {pipeline_mode = #tpu.pipeline_mode<synchronous>, transform_indices = @transform_5, window_bounds = array<i64: 4, 1, 32>}, {pipeline_mode = #tpu.pipeline_mode<synchronous>, transform_indices = @transform_6, window_bounds = array<i64: 128, 128>}, {pipeline_mode = #tpu.pipeline_mode<synchronous>, transform_indices = @transform_7, window_bounds = array<i64: 1, 128>}, {transform_indices = @transform_8, window_bounds = array<i64: 16, 128>}]} {
    %c0_i32 = arith.constant 0 : i32
    %0 = arith.cmpi eq, %arg1, %c0_i32 : i32
    %1 = arith.extui %0 : i1 to i32
    %c0_i32_0 = arith.constant 0 : i32
    %2 = arith.cmpi ne, %1, %c0_i32_0 : i32
    scf.if %2 {
      %c0 = arith.constant 0 : index
      %c0_5 = arith.constant 0 : index
      %13 = vector.load %arg3[%c0, %c0_5] : memref<16x128xbf16, #tpu.memory_space<vmem>>, vector<16x128xbf16>
      %c0_6 = arith.constant 0 : index
      %c0_7 = arith.constant 0 : index
      %c0_8 = arith.constant 0 : index
      %14 = vector.load %arg7[%c0_6, %c0_7, %c0_8] : memref<4x128x32xbf16, #tpu.memory_space<vmem>>, vector<1x128x32xbf16>
      %15 = vector.shape_cast %14 : vector<1x128x32xbf16> to vector<128x32xbf16>
      %cst = arith.constant dense<0.000000e+00> : vector<16x32xf32>
      %16 = tpu.matmul %13, %15, %cst {dimension_numbers = #tpu.dot_dimension_numbers<[1], [0], [0], [1], [0, 0, 1, 1], [], []>} : vector<16x128xbf16>, vector<128x32xbf16>, vector<16x32xf32> -> vector<16x32xf32>
      %c0_9 = arith.constant 0 : index
      %c0_10 = arith.constant 0 : index
      %c0_11 = arith.constant 0 : index
      %17 = vector.load %arg8[%c0_9, %c0_10, %c0_11] : memref<4x1x32xf32, #tpu.memory_space<vmem>>, vector<1x1x32xf32>
      %18 = vector.shape_cast %17 : vector<1x1x32xf32> to vector<1x32xf32>
      %19 = vector.broadcast %18 : vector<1x32xf32> to vector<16x32xf32>
      %20 = arith.addf %16, %19 : vector<16x32xf32>
      %21 = arith.truncf %20 : vector<16x32xf32> to vector<16x32xbf16>
      %c0_12 = arith.constant 0 : index
      %c0_13 = arith.constant 0 : index
      %c0_14 = arith.constant 0 : index
      %22 = vector.load %arg12[%c0_12, %c0_13, %c0_14] : memref<4x16x32xbf16, #tpu.memory_space<vmem>>, vector<1x16x32xbf16>
      %23 = vector.shape_cast %22 : vector<1x16x32xbf16> to vector<16x32xbf16>
      %24 = vector.shape_cast %21 : vector<16x32xbf16> to vector<1x16x32xbf16>
      tpu.vector_store %arg12[%c0_12, %c0_13, %c0_14], %24 {strides = array<i32>} : memref<4x16x32xbf16, #tpu.memory_space<vmem>>, vector<1x16x32xbf16>,
      %c1 = arith.constant 1 : index
      %c0_15 = arith.constant 0 : index
      %c0_16 = arith.constant 0 : index
      %25 = vector.load %arg7[%c1, %c0_15, %c0_16] : memref<4x128x32xbf16, #tpu.memory_space<vmem>>, vector<1x128x32xbf16>
      %26 = vector.shape_cast %25 : vector<1x128x32xbf16> to vector<128x32xbf16>
      %cst_17 = arith.constant dense<0.000000e+00> : vector<16x32xf32>
      %27 = tpu.matmul %13, %26, %cst_17 {dimension_numbers = #tpu.dot_dimension_numbers<[1], [0], [0], [1], [0, 0, 1, 1], [], []>} : vector<16x128xbf16>, vector<128x32xbf16>, vector<16x32xf32> -> vector<16x32xf32>
      %c1_18 = arith.constant 1 : index
      %c0_19 = arith.constant 0 : index
      %c0_20 = arith.constant 0 : index
      %28 = vector.load %arg8[%c1_18, %c0_19, %c0_20] : memref<4x1x32xf32, #tpu.memory_space<vmem>>, vector<1x1x32xf32>
      %29 = vector.shape_cast %28 : vector<1x1x32xf32> to vector<1x32xf32>
      %30 = vector.broadcast %29 : vector<1x32xf32> to vector<16x32xf32>
      %31 = arith.addf %27, %30 : vector<16x32xf32>
      %32 = arith.truncf %31 : vector<16x32xf32> to vector<16x32xbf16>
      %c1_21 = arith.constant 1 : index
      %c0_22 = arith.constant 0 : index
      %c0_23 = arith.constant 0 : index
      %33 = vector.load %arg12[%c1_21, %c0_22, %c0_23] : memref<4x16x32xbf16, #tpu.memory_space<vmem>>, vector<1x16x32xbf16>
      %34 = vector.shape_cast %33 : vector<1x16x32xbf16> to vector<16x32xbf16>
      %35 = vector.shape_cast %32 : vector<16x32xbf16> to vector<1x16x32xbf16>
      tpu.vector_store %arg12[%c1_21, %c0_22, %c0_23], %35 {strides = array<i32>} : memref<4x16x32xbf16, #tpu.memory_space<vmem>>, vector<1x16x32xbf16>,
      %c2 = arith.constant 2 : index
      %c0_24 = arith.constant 0 : index
      %c0_25 = arith.constant 0 : index
      %36 = vector.load %arg7[%c2, %c0_24, %c0_25] : memref<4x128x32xbf16, #tpu.memory_space<vmem>>, vector<1x128x32xbf16>
      %37 = vector.shape_cast %36 : vector<1x128x32xbf16> to vector<128x32xbf16>
      %cst_26 = arith.constant dense<0.000000e+00> : vector<16x32xf32>
      %38 = tpu.matmul %13, %37, %cst_26 {dimension_numbers = #tpu.dot_dimension_numbers<[1], [0], [0], [1], [0, 0, 1, 1], [], []>} : vector<16x128xbf16>, vector<128x32xbf16>, vector<16x32xf32> -> vector<16x32xf32>
      %c2_27 = arith.constant 2 : index
      %c0_28 = arith.constant 0 : index
      %c0_29 = arith.constant 0 : index
      %39 = vector.load %arg8[%c2_27, %c0_28, %c0_29] : memref<4x1x32xf32, #tpu.memory_space<vmem>>, vector<1x1x32xf32>
      %40 = vector.shape_cast %39 : vector<1x1x32xf32> to vector<1x32xf32>
      %41 = vector.broadcast %40 : vector<1x32xf32> to vector<16x32xf32>
      %42 = arith.addf %38, %41 : vector<16x32xf32>
      %43 = arith.truncf %42 : vector<16x32xf32> to vector<16x32xbf16>
      %c2_30 = arith.constant 2 : index
      %c0_31 = arith.constant 0 : index
      %c0_32 = arith.constant 0 : index
      %44 = vector.load %arg12[%c2_30, %c0_31, %c0_32] : memref<4x16x32xbf16, #tpu.memory_space<vmem>>, vector<1x16x32xbf16>
      %45 = vector.shape_cast %44 : vector<1x16x32xbf16> to vector<16x32xbf16>
      %46 = vector.shape_cast %43 : vector<16x32xbf16> to vector<1x16x32xbf16>
      tpu.vector_store %arg12[%c2_30, %c0_31, %c0_32], %46 {strides = array<i32>} : memref<4x16x32xbf16, #tpu.memory_space<vmem>>, vector<1x16x32xbf16>,
      %c3 = arith.constant 3 : index
      %c0_33 = arith.constant 0 : index
      %c0_34 = arith.constant 0 : index
      %47 = vector.load %arg7[%c3, %c0_33, %c0_34] : memref<4x128x32xbf16, #tpu.memory_space<vmem>>, vector<1x128x32xbf16>
      %48 = vector.shape_cast %47 : vector<1x128x32xbf16> to vector<128x32xbf16>
      %cst_35 = arith.constant dense<0.000000e+00> : vector<16x32xf32>
      %49 = tpu.matmul %13, %48, %cst_35 {dimension_numbers = #tpu.dot_dimension_numbers<[1], [0], [0], [1], [0, 0, 1, 1], [], []>} : vector<16x128xbf16>, vector<128x32xbf16>, vector<16x32xf32> -> vector<16x32xf32>
      %c3_36 = arith.constant 3 : index
      %c0_37 = arith.constant 0 : index
      %c0_38 = arith.constant 0 : index
      %50 = vector.load %arg8[%c3_36, %c0_37, %c0_38] : memref<4x1x32xf32, #tpu.memory_space<vmem>>, vector<1x1x32xf32>
      %51 = vector.shape_cast %50 : vector<1x1x32xf32> to vector<1x32xf32>
      %52 = vector.broadcast %51 : vector<1x32xf32> to vector<16x32xf32>
      %53 = arith.addf %49, %52 : vector<16x32xf32>
      %54 = arith.truncf %53 : vector<16x32xf32> to vector<16x32xbf16>
      %c3_39 = arith.constant 3 : index
      %c0_40 = arith.constant 0 : index
      %c0_41 = arith.constant 0 : index
      %55 = vector.load %arg12[%c3_39, %c0_40, %c0_41] : memref<4x16x32xbf16, #tpu.memory_space<vmem>>, vector<1x16x32xbf16>
      %56 = vector.shape_cast %55 : vector<1x16x32xbf16> to vector<16x32xbf16>
      %57 = vector.shape_cast %54 : vector<16x32xbf16> to vector<1x16x32xbf16>
      tpu.vector_store %arg12[%c3_39, %c0_40, %c0_41], %57 {strides = array<i32>} : memref<4x16x32xbf16, #tpu.memory_space<vmem>>, vector<1x16x32xbf16>,
      %c0_42 = arith.constant 0 : index
      %c0_43 = arith.constant 0 : index
      %58 = vector.load %arg9[%c0_42, %c0_43] : memref<128x128xbf16, #tpu.memory_space<vmem>>, vector<128x128xbf16>
      %cst_44 = arith.constant dense<0.000000e+00> : vector<16x128xf32>
      %59 = tpu.matmul %13, %58, %cst_44 {dimension_numbers = #tpu.dot_dimension_numbers<[1], [0], [0], [1], [0, 0, 1, 1], [], []>} : vector<16x128xbf16>, vector<128x128xbf16>, vector<16x128xf32> -> vector<16x128xf32>
      %c0_45 = arith.constant 0 : index
      %c0_46 = arith.constant 0 : index
      %60 = vector.load %arg10[%c0_45, %c0_46] : memref<1x128xf32, #tpu.memory_space<vmem>>, vector<1x128xf32>
      %61 = vector.broadcast %60 : vector<1x128xf32> to vector<16x128xf32>
      %62 = arith.addf %59, %61 : vector<16x128xf32>
      %c0_47 = arith.constant 0 : index
      %c0_48 = arith.constant 0 : index
      %63 = vector.load %arg13[%c0_47, %c0_48] : memref<16x128xf32, #tpu.memory_space<vmem>>, vector<16x128xf32>
      tpu.vector_store %arg13[%c0_47, %c0_48], %62 {strides = array<i32>} : memref<16x128xf32, #tpu.memory_space<vmem>>, vector<16x128xf32>,
      %cst_49 = arith.constant -1.000000e+30 : f32
      %64 = vector.broadcast %cst_49 : f32 to vector<4x16x1xf32>
      %c0_50 = arith.constant 0 : index
      %c0_51 = arith.constant 0 : index
      %c0_52 = arith.constant 0 : index
      %65 = vector.load %arg14[%c0_50, %c0_51, %c0_52] : memref<4x16x1xf32, #tpu.memory_space<vmem>>, vector<4x16x1xf32>
      tpu.vector_store %arg14[%c0_50, %c0_51, %c0_52], %64 {strides = array<i32>} : memref<4x16x1xf32, #tpu.memory_space<vmem>>, vector<4x16x1xf32>,
      %cst_53 = arith.constant 0.000000e+00 : f32
      %66 = vector.broadcast %cst_53 : f32 to vector<4x16x1xf32>
      %c0_54 = arith.constant 0 : index
      %c0_55 = arith.constant 0 : index
      %c0_56 = arith.constant 0 : index
      %67 = vector.load %arg15[%c0_54, %c0_55, %c0_56] : memref<4x16x1xf32, #tpu.memory_space<vmem>>, vector<4x16x1xf32>
      tpu.vector_store %arg15[%c0_54, %c0_55, %c0_56], %66 {strides = array<i32>} : memref<4x16x1xf32, #tpu.memory_space<vmem>>, vector<4x16x1xf32>,
      %cst_57 = arith.constant 0.000000e+00 : f32
      %68 = vector.broadcast %cst_57 : f32 to vector<4x16x32xf32>
      %c0_58 = arith.constant 0 : index
      %c0_59 = arith.constant 0 : index
      %c0_60 = arith.constant 0 : index
      %69 = vector.load %arg16[%c0_58, %c0_59, %c0_60] : memref<4x16x32xf32, #tpu.memory_space<vmem>>, vector<4x16x32xf32>
      tpu.vector_store %arg16[%c0_58, %c0_59, %c0_60], %68 {strides = array<i32>} : memref<4x16x32xf32, #tpu.memory_space<vmem>>, vector<4x16x32xf32>,
    } else {
    }
    %c1_i32 = arith.constant 1 : i32
    %3 = arith.muli %arg0, %c1_i32 : i32
    %4 = arith.addi %3, %arg1 : i32
    %5 = arith.index_cast %4 : i32 to index
    %6 = memref.load %arg2[%5] : memref<1xi32, #tpu.memory_space<smem>>
    %c0_i32_1 = arith.constant 0 : i32
    %7 = arith.cmpi ne, %6, %c0_i32_1 : i32
    %8 = arith.extui %7 : i1 to i32
    %c0_i32_2 = arith.constant 0 : i32
    %9 = arith.cmpi ne, %8, %c0_i32_2 : i32
    scf.if %9 {
      %c0 = arith.constant 0 : index
      %c0_5 = arith.constant 0 : index
      %13 = vector.load %arg4[%c0, %c0_5] : memref<16x16xi8, #tpu.memory_space<vmem>>, vector<16x16xi8>
      %14 = arith.sitofp %13 : vector<16x16xi8> to vector<16x16xf32>
      %c0_6 = arith.constant 0 : index
      %c0_7 = arith.constant 0 : index
      %c0_8 = arith.constant 0 : index
      %15 = vector.load %arg12[%c0_6, %c0_7, %c0_8] : memref<4x16x32xbf16, #tpu.memory_space<vmem>>, vector<4x16x32xbf16>
      %c0_9 = arith.constant 0 : index
      %c0_10 = arith.constant 0 : index
      %c0_11 = arith.constant 0 : index
      %16 = vector.load %arg5[%c0_9, %c0_10, %c0_11] : memref<4x32x16xbf16, #tpu.memory_space<vmem>>, vector<4x32x16xbf16>
      "tpu.trace_start"() <{level = 10 : i32, message = "htc,hck->htk"}> : () -> ()
      %cst = arith.constant dense<0.000000e+00> : vector<4x16x16xf32>
      %17 = tpu.matmul %15, %16, %cst {dimension_numbers = #tpu.dot_dimension_numbers<[2], [1], [1], [2], [0, 0, 0, 1, 1, 2], [0], [0]>} : vector<4x16x32xbf16>, vector<4x32x16xbf16>, vector<4x16x16xf32> -> vector<4x16x16xf32>
      "tpu.trace_stop"() : () -> ()
      %c0_12 = arith.constant 0 : index
      %c0_13 = arith.constant 0 : index
      %c0_14 = arith.constant 0 : index
      %18 = vector.load %arg14[%c0_12, %c0_13, %c0_14] : memref<4x16x1xf32, #tpu.memory_space<vmem>>, vector<4x16x1xf32>
      %cst_15 = arith.constant dense<0xFF800000> : vector<4x16xf32>
      %19 = vector.multi_reduction <maximumf>, %17, %cst_15 [2] : vector<4x16x16xf32> to vector<4x16xf32>
      %20 = vector.shape_cast %19 : vector<4x16xf32> to vector<4x16x1xf32>
      %21 = arith.maximumf %18, %20 : vector<4x16x1xf32>
      %c0_16 = arith.constant 0 : index
      %c0_17 = arith.constant 0 : index
      %c0_18 = arith.constant 0 : index
      %22 = vector.load %arg14[%c0_16, %c0_17, %c0_18] : memref<4x16x1xf32, #tpu.memory_space<vmem>>, vector<4x16x1xf32>
      %23 = arith.subf %22, %21 : vector<4x16x1xf32>
      %24 = math.exp %23 : vector<4x16x1xf32>
      %25 = vector.broadcast %21 : vector<4x16x1xf32> to vector<4x16x16xf32>
      %26 = arith.subf %17, %25 : vector<4x16x16xf32>
      %27 = math.exp %26 : vector<4x16x16xf32>
      %28 = vector.shape_cast %14 : vector<16x16xf32> to vector<1x16x16xf32>
      %29 = vector.broadcast %28 : vector<1x16x16xf32> to vector<4x16x16xf32>
      %30 = arith.mulf %27, %29 : vector<4x16x16xf32>
      %c0_19 = arith.constant 0 : index
      %c0_20 = arith.constant 0 : index
      %c0_21 = arith.constant 0 : index
      %31 = vector.load %arg15[%c0_19, %c0_20, %c0_21] : memref<4x16x1xf32, #tpu.memory_space<vmem>>, vector<4x16x1xf32>
      %32 = arith.mulf %24, %31 : vector<4x16x1xf32>
      %cst_22 = arith.constant dense<0.000000e+00> : vector<4x16xf32>
      %33 = vector.multi_reduction <add>, %30, %cst_22 [2] : vector<4x16x16xf32> to vector<4x16xf32>
      %34 = vector.shape_cast %33 : vector<4x16xf32> to vector<4x16x1xf32>
      %35 = arith.addf %32, %34 : vector<4x16x1xf32>
      %c0_23 = arith.constant 0 : index
      %c0_24 = arith.constant 0 : index
      %c0_25 = arith.constant 0 : index
      %36 = vector.load %arg15[%c0_23, %c0_24, %c0_25] : memref<4x16x1xf32, #tpu.memory_space<vmem>>, vector<4x16x1xf32>
      tpu.vector_store %arg15[%c0_23, %c0_24, %c0_25], %35 {strides = array<i32>} : memref<4x16x1xf32, #tpu.memory_space<vmem>>, vector<4x16x1xf32>,
      %c0_26 = arith.constant 0 : index
      %c0_27 = arith.constant 0 : index
      %c0_28 = arith.constant 0 : index
      %37 = vector.load %arg16[%c0_26, %c0_27, %c0_28] : memref<4x16x32xf32, #tpu.memory_space<vmem>>, vector<4x16x32xf32>
      %38 = vector.broadcast %24 : vector<4x16x1xf32> to vector<4x16x32xf32>
      %39 = arith.mulf %38, %37 : vector<4x16x32xf32>
      %40 = arith.truncf %30 : vector<4x16x16xf32> to vector<4x16x16xbf16>
      %c0_29 = arith.constant 0 : index
      %c0_30 = arith.constant 0 : index
      %c0_31 = arith.constant 0 : index
      %41 = vector.load %arg6[%c0_29, %c0_30, %c0_31] : memref<4x16x32xbf16, #tpu.memory_space<vmem>>, vector<4x16x32xbf16>
      "tpu.trace_start"() <{level = 10 : i32, message = "htk,hkc->htc"}> : () -> ()
      %cst_32 = arith.constant dense<0.000000e+00> : vector<4x16x32xf32>
      %42 = tpu.matmul %40, %41, %cst_32 {dimension_numbers = #tpu.dot_dimension_numbers<[2], [1], [1], [2], [0, 0, 0, 1, 1, 2], [0], [0]>} : vector<4x16x16xbf16>, vector<4x16x32xbf16>, vector<4x16x32xf32> -> vector<4x16x32xf32>
      "tpu.trace_stop"() : () -> ()
      %43 = arith.addf %39, %42 : vector<4x16x32xf32>
      %c0_33 = arith.constant 0 : index
      %c0_34 = arith.constant 0 : index
      %c0_35 = arith.constant 0 : index
      %44 = vector.load %arg16[%c0_33, %c0_34, %c0_35] : memref<4x16x32xf32, #tpu.memory_space<vmem>>, vector<4x16x32xf32>
      tpu.vector_store %arg16[%c0_33, %c0_34, %c0_35], %43 {strides = array<i32>} : memref<4x16x32xf32, #tpu.memory_space<vmem>>, vector<4x16x32xf32>,
      %c0_36 = arith.constant 0 : index
      %c0_37 = arith.constant 0 : index
      %c0_38 = arith.constant 0 : index
      %45 = vector.load %arg14[%c0_36, %c0_37, %c0_38] : memref<4x16x1xf32, #tpu.memory_space<vmem>>, vector<4x16x1xf32>
      tpu.vector_store %arg14[%c0_36, %c0_37, %c0_38], %21 {strides = array<i32>} : memref<4x16x1xf32, #tpu.memory_space<vmem>>, vector<4x16x1xf32>,
    } else {
    }
    %c0_i32_3 = arith.constant 0 : i32
    %10 = arith.cmpi eq, %arg1, %c0_i32_3 : i32
    %11 = arith.extui %10 : i1 to i32
    %c0_i32_4 = arith.constant 0 : i32
    %12 = arith.cmpi ne, %11, %c0_i32_4 : i32
    scf.if %12 {
      %c0 = arith.constant 0 : index
      %c0_5 = arith.constant 0 : index
      %c0_6 = arith.constant 0 : index
      %13 = vector.load %arg15[%c0, %c0_5, %c0_6] : memref<4x16x1xf32, #tpu.memory_space<vmem>>, vector<4x16x1xf32>
      %cst = arith.constant 9.99999968E-21 : f32
      %14 = vector.broadcast %cst : f32 to vector<4x16x1xf32>
      %15 = arith.maximumf %13, %14 : vector<4x16x1xf32>
      %16 = tpu.reciprocal %15 {approx = true} : vector<4x16x1xf32> -> vector<4x16x1xf32>
      %c0_7 = arith.constant 0 : index
      %c0_8 = arith.constant 0 : index
      %c0_9 = arith.constant 0 : index
      %17 = vector.load %arg16[%c0_7, %c0_8, %c0_9] : memref<4x16x32xf32, #tpu.memory_space<vmem>>, vector<4x16x32xf32>
      %18 = vector.broadcast %16 : vector<4x16x1xf32> to vector<4x16x32xf32>
      %19 = arith.mulf %17, %18 : vector<4x16x32xf32>
      %20 = vector.extract_strided_slice %19 {offsets = [0, 0, 0], sizes = [1, 16, 32], strides = [1, 1, 1]} : vector<4x16x32xf32> to vector<1x16x32xf32>
      %21 = vector.shape_cast %20 : vector<1x16x32xf32> to vector<16x32xf32>
      %22 = vector.extract_strided_slice %19 {offsets = [1, 0, 0], sizes = [1, 16, 32], strides = [1, 1, 1]} : vector<4x16x32xf32> to vector<1x16x32xf32>
      %23 = vector.shape_cast %22 : vector<1x16x32xf32> to vector<16x32xf32>
      %24 = vector.extract_strided_slice %19 {offsets = [2, 0, 0], sizes = [1, 16, 32], strides = [1, 1, 1]} : vector<4x16x32xf32> to vector<1x16x32xf32>
      %25 = vector.shape_cast %24 : vector<1x16x32xf32> to vector<16x32xf32>
      %26 = vector.extract_strided_slice %19 {offsets = [3, 0, 0], sizes = [1, 16, 32], strides = [1, 1, 1]} : vector<4x16x32xf32> to vector<1x16x32xf32>
      %27 = vector.shape_cast %26 : vector<1x16x32xf32> to vector<16x32xf32>
      %28 = tpu.concatenate %21, %23, %25, %27 in 1 : vector<16x32xf32>, vector<16x32xf32>, vector<16x32xf32>, vector<16x32xf32> -> vector<16x128xf32>
      %c0_10 = arith.constant 0 : index
      %c0_11 = arith.constant 0 : index
      %29 = vector.load %arg13[%c0_10, %c0_11] : memref<16x128xf32, #tpu.memory_space<vmem>>, vector<16x128xf32>
      %30 = arith.addf %28, %29 : vector<16x128xf32>
      %31 = arith.truncf %30 : vector<16x128xf32> to vector<16x128xbf16>
      %c0_12 = arith.constant 0 : index
      %c0_13 = arith.constant 0 : index
      %32 = vector.load %arg11[%c0_12, %c0_13] : memref<16x128xbf16, #tpu.memory_space<vmem>>, vector<16x128xbf16>
      tpu.vector_store %arg11[%c0_12, %c0_13], %31 {strides = array<i32>} : memref<16x128xbf16, #tpu.memory_space<vmem>>, vector<16x128xbf16>,
    } else {
    }
    return
  }
  func.func @transform_0(%arg0: i32, %arg1: i32, %arg2: memref<1xi32, #tpu.memory_space<smem>>) -> (i32, i32) {
    %c0_i32 = arith.constant 0 : i32
    %c0_i32_0 = arith.constant 0 : i32
    return %arg0, %c0_i32 : i32, i32
  }
  func.func @transform_1(%arg0: i32, %arg1: i32, %arg2: memref<1xi32, #tpu.memory_space<smem>>) -> (i32, i32) {
    %c0_i32 = arith.constant 0 : i32
    return %arg0, %arg1 : i32, i32
  }
  func.func @transform_2(%arg0: i32, %arg1: i32, %arg2: memref<1xi32, #tpu.memory_space<smem>>) -> (i32, i32, i32) {
    %c0_i32 = arith.constant 0 : i32
    %c0_i32_0 = arith.constant 0 : i32
    %c0_i32_1 = arith.constant 0 : i32
    return %c0_i32, %c0_i32_0, %arg1 : i32, i32, i32
  }
  func.func @transform_3(%arg0: i32, %arg1: i32, %arg2: memref<1xi32, #tpu.memory_space<smem>>) -> (i32, i32, i32) {
    %c0_i32 = arith.constant 0 : i32
    %c0_i32_0 = arith.constant 0 : i32
    %c0_i32_1 = arith.constant 0 : i32
    return %c0_i32, %arg1, %c0_i32_0 : i32, i32, i32
  }
  func.func @transform_4(%arg0: i32, %arg1: i32, %arg2: memref<1xi32, #tpu.memory_space<smem>>) -> (i32, i32, i32) {
    %c0_i32 = arith.constant 0 : i32
    %c0_i32_0 = arith.constant 0 : i32
    %c0_i32_1 = arith.constant 0 : i32
    %c0_i32_2 = arith.constant 0 : i32
    return %c0_i32, %c0_i32_0, %c0_i32_1 : i32, i32, i32
  }
  func.func @transform_5(%arg0: i32, %arg1: i32, %arg2: memref<1xi32, #tpu.memory_space<smem>>) -> (i32, i32, i32) {
    %c0_i32 = arith.constant 0 : i32
    %c0_i32_0 = arith.constant 0 : i32
    %c0_i32_1 = arith.constant 0 : i32
    %c0_i32_2 = arith.constant 0 : i32
    return %c0_i32, %c0_i32_0, %c0_i32_1 : i32, i32, i32
  }
  func.func @transform_6(%arg0: i32, %arg1: i32, %arg2: memref<1xi32, #tpu.memory_space<smem>>) -> (i32, i32) {
    %c0_i32 = arith.constant 0 : i32
    %c0_i32_0 = arith.constant 0 : i32
    %c0_i32_1 = arith.constant 0 : i32
    return %c0_i32, %c0_i32_0 : i32, i32
  }
  func.func @transform_7(%arg0: i32, %arg1: i32, %arg2: memref<1xi32, #tpu.memory_space<smem>>) -> (i32, i32) {
    %c0_i32 = arith.constant 0 : i32
    %c0_i32_0 = arith.constant 0 : i32
    %c0_i32_1 = arith.constant 0 : i32
    return %c0_i32, %c0_i32_0 : i32, i32
  }
  func.func @transform_8(%arg0: i32, %arg1: i32, %arg2: memref<1xi32, #tpu.memory_space<smem>>) -> (i32, i32) {
    %c0_i32 = arith.constant 0 : i32
    %c0_i32_0 = arith.constant 0 : i32
    return %arg0, %c0_i32 : i32, i32
  }
}

module attributes {stable_mosaic.version = 11 : i64} {
  func.func @head_kernel(%arg0: i32, %arg1: memref<16x128xbf16, #tpu.memory_space<vmem>>, %arg2: memref<128x128xbf16, #tpu.memory_space<vmem>>, %arg3: memref<1x128xf32, #tpu.memory_space<vmem>>, %arg4: memref<16x128xf32, #tpu.memory_space<vmem>>) attributes {dimension_semantics = [#tpu.dimension_semantics<parallel>], iteration_bounds = array<i64: 1>, scalar_prefetch = 0 : i64, scratch_operands = 0 : i64, tpu.core_type = #tpu.core_type<tc>, window_params = [{transform_indices = @transform_0, window_bounds = array<i64: 16, 128>}, {pipeline_mode = #tpu.pipeline_mode<synchronous>, transform_indices = @transform_1, window_bounds = array<i64: 128, 128>}, {pipeline_mode = #tpu.pipeline_mode<synchronous>, transform_indices = @transform_2, window_bounds = array<i64: 1, 128>}, {transform_indices = @transform_3, window_bounds = array<i64: 16, 128>}]} {
    %c0 = arith.constant 0 : index
    %c0_0 = arith.constant 0 : index
    %0 = vector.load %arg1[%c0, %c0_0] : memref<16x128xbf16, #tpu.memory_space<vmem>>, vector<16x128xbf16>
    %c0_1 = arith.constant 0 : index
    %c0_2 = arith.constant 0 : index
    %1 = vector.load %arg2[%c0_1, %c0_2] : memref<128x128xbf16, #tpu.memory_space<vmem>>, vector<128x128xbf16>
    %cst = arith.constant dense<0.000000e+00> : vector<16x128xf32>
    %2 = tpu.matmul %0, %1, %cst {dimension_numbers = #tpu.dot_dimension_numbers<[1], [0], [0], [1], [0, 0, 1, 1], [], []>} : vector<16x128xbf16>, vector<128x128xbf16>, vector<16x128xf32> -> vector<16x128xf32>
    %c0_3 = arith.constant 0 : index
    %c0_4 = arith.constant 0 : index
    %3 = vector.load %arg3[%c0_3, %c0_4] : memref<1x128xf32, #tpu.memory_space<vmem>>, vector<1x128xf32>
    %4 = vector.broadcast %3 : vector<1x128xf32> to vector<16x128xf32>
    %5 = arith.addf %2, %4 : vector<16x128xf32>
    %cst_5 = arith.constant dense<0xFF800000> : vector<16xf32>
    %6 = vector.multi_reduction <maximumf>, %5, %cst_5 [1] : vector<16x128xf32> to vector<16xf32>
    %7 = vector.shape_cast %6 : vector<16xf32> to vector<16x1xf32>
    %8 = vector.broadcast %7 : vector<16x1xf32> to vector<16x128xf32>
    %9 = arith.subf %5, %8 : vector<16x128xf32>
    %10 = math.exp %9 : vector<16x128xf32>
    %cst_6 = arith.constant dense<0.000000e+00> : vector<16xf32>
    %11 = vector.multi_reduction <add>, %10, %cst_6 [1] : vector<16x128xf32> to vector<16xf32>
    %12 = vector.shape_cast %11 : vector<16xf32> to vector<16x1xf32>
    %13 = math.log %12 : vector<16x1xf32>
    %14 = arith.addf %13, %7 : vector<16x1xf32>
    %15 = vector.broadcast %14 : vector<16x1xf32> to vector<16x128xf32>
    %16 = arith.subf %5, %15 : vector<16x128xf32>
    %c0_7 = arith.constant 0 : index
    %c0_8 = arith.constant 0 : index
    %17 = vector.load %arg4[%c0_7, %c0_8] : memref<16x128xf32, #tpu.memory_space<vmem>>, vector<16x128xf32>
    tpu.vector_store %arg4[%c0_7, %c0_8], %16 {strides = array<i32>} : memref<16x128xf32, #tpu.memory_space<vmem>>, vector<16x128xf32>,
    return
  }
  func.func @transform_0(%arg0: i32) -> (i32, i32) {
    %c0_i32 = arith.constant 0 : i32
    %c0_i32_0 = arith.constant 0 : i32
    return %arg0, %c0_i32 : i32, i32
  }
  func.func @transform_1(%arg0: i32) -> (i32, i32) {
    %c0_i32 = arith.constant 0 : i32
    %c0_i32_0 = arith.constant 0 : i32
    %c0_i32_1 = arith.constant 0 : i32
    return %c0_i32, %c0_i32_0 : i32, i32
  }
  func.func @transform_2(%arg0: i32) -> (i32, i32) {
    %c0_i32 = arith.constant 0 : i32
    %c0_i32_0 = arith.constant 0 : i32
    %c0_i32_1 = arith.constant 0 : i32
    return %c0_i32, %c0_i32_0 : i32, i32
  }
  func.func @transform_3(%arg0: i32) -> (i32, i32) {
    %c0_i32 = arith.constant 0 : i32
    %c0_i32_0 = arith.constant 0 : i32
    return %arg0, %c0_i32 : i32, i32
  }
}

</mosaic_0001>

<llo_original>
// kernel: deepgt_forward.6
$region0: #{deepgt_forward.6}
  #allocation0 [shape = 'u32[]', space=smem, size = 0x4, offset = 0x4, fixed_abs, tag = 'smem constant byte address 0x4 - core index']
  #allocation1 [shape = 'u32[144,128]{1,0:T(1,128)}', space=vmem, size = 0x12000, scoped, tag = 'internal scratch']
  %s0 = inlined_call_operand.vmem [shape: f32[16,16], index: 0, kind: input, shape index: {}]
  %s1 = inlined_call_operand.vmem [shape: bf16[16,32], index: 1, kind: input, shape index: {}]
  %s2 = inlined_call_operand.vmem [shape: f32[1,32], index: 2, kind: input, shape index: {}]
  %s3 = inlined_call_operand.vmem [shape: bf16[16,32], index: 3, kind: output, shape index: {}]
  %s4 = sld [smem:[#allocation0]]
  $region22: #{deepgt_forward.6} parent=0
    _
  %s6 = ssub.s32 1, %s4
  %s7 = scalar_select 0, %s6, %s4
  // Predicated region
  $region2: #{deepgt_forward.6} parent=0 // pred_check
    _
  $region3: #{deepgt_forward.6} parent=0 // pred_check_branch
    %9 = sbr.rel (0) target = $region5
  $region4: #{deepgt_forward.6} parent=0 // pred_region
    _
  $region5: #{deepgt_forward.6} parent=0 // pred_fallthru
    _
  // Predicated region
  $region6: #{deepgt_forward.6} parent=0 // pred_check
    _
  $region7: #{deepgt_forward.6} parent=0 // pred_check_branch
    %11 = sbr.rel (0) target = $region9
  $region8: #{deepgt_forward.6} parent=0 // pred_region
    _
  $region9: #{deepgt_forward.6} parent=0 // pred_fallthru
    _
  // Predicated region
  $region10: #{deepgt_forward.6} parent=0 // pred_check
    _
  $region11: #{deepgt_forward.6} parent=0 // pred_check_branch
    %13 = sbr.rel (0) target = $region13
  $region12: #{deepgt_forward.6} parent=0 // pred_region
    _
  $region13: #{deepgt_forward.6} parent=0 // pred_fallthru
    _
  %v15 = vld [vmem:[%s0] sm:$0xff]
  %v16 = vld [vmem:[%s0 + $0x8] sm:$0xff]
  %v17 = vpack.c.bf16 %v16, %v15
  %v18 = vld [vmem:[%s1] sm:$0xf]
  %v19 = vld [vmem:[%s1 + $0x4] sm:$0xf]
  %v20 = vld [vmem:[%s2] sm:$0x1]
  %v22 = vlaneseq
  %v23 = vshrl.u32 %v22, 7
  %v24 = vsub.s32 0, %v23
  %v25 = vrot.slane %v20, %v24
  %v29 = vunpack.c.l.b16 %v18
  %v30 = vunpack.c.l.b16 %v19
  %v31 = vpack.c.b16 %v30, %v29
  %vm33 = vcmask 130048
  %v35 = vsel %vm33, %v17, 0
  %37 = vmatprep.subr.bf16.mxu0 0
  %38 = vmatpush1.bf16.msra.mxu0 %v31
  %39 = vmatprep.subr.bf16.mxu0 0
  %40 = vmatpush1.bf16.msra.mxu0 0
  %41 = vmatprep.subr.bf16.mxu0 0
  %42 = vmatpush1.bf16.msra.mxu0 0
  %43 = vmatprep.subr.bf16.mxu0 0
  %44 = vmatpush1.bf16.msra.mxu0 0
  %45 = vmatprep.subr.bf16.mxu0 0
  %46 = vmatpush1.bf16.msra.mxu0 0
  %47 = vmatprep.subr.bf16.mxu0 0
  %48 = vmatpush1.bf16.msra.mxu0 0
  %49 = vmatprep.subr.bf16.mxu0 0
  %50 = vmatpush1.bf16.msra.mxu0 0
  %51 = vmatprep.subr.bf16.mxu0 0
  %52 = vmatpush1.bf16.msra.mxu0 0
  %53 = vmatprep.subr.bf16.mxu0 0
  %54 = vmatpush1.bf16.msra.mxu0 0
  %55 = vmatprep.subr.bf16.mxu0 0
  %56 = vmatpush1.bf16.msra.mxu0 0
  %57 = vmatprep.subr.bf16.mxu0 0
  %58 = vmatpush1.bf16.msra.mxu0 0
  %59 = vmatprep.subr.bf16.mxu0 0
  %60 = vmatpush1.bf16.msra.mxu0 0
  %61 = vmatprep.subr.bf16.mxu0 0
  %62 = vmatpush1.bf16.msra.mxu0 0
  %63 = vmatprep.subr.bf16.mxu0 0
  %64 = vmatpush1.bf16.msra.mxu0 0
  %65 = vmatprep.subr.bf16.mxu0 0
  %66 = vmatpush1.bf16.msra.mxu0 0
  %67 = vmatprep.subr.bf16.mxu0 0
  %68 = vmatpush1.bf16.msra.mxu0 0
  %69 = vmatprep.mubr.bf16.mxu0 0
  %70 = vmatmul.mubr.bf16.gmra.mrb[0].mxu0 %v35
  %v71 = vpop.f32.mrb[0].mxu0
  %v72 = vadd.f32 %v25, %v71
  %v73 = vpop.f32.mrb[0].mxu0
  %v74 = vpop.f32.mrb[0].mxu0
  %v75 = vadd.f32 %v25, %v74
  %v76 = vpop.f32.mrb[0].mxu0
  %77 = vdwg.mxu0
  %v78 = vpack.c.bf16 %v75, %v72
  %v80 = vunpack.c.l.b16 %v78
  %v81 = vunpack.c.h.b16 %v78
  %v82 = vpack.c.b16 %v80, %v80
  %v83 = vpack.c.b16 %v81, %v81
  %vm86 = vcmask 257024
  %87 = vst.msk [vmem:[%s3] sm:$0xf] %vm86, %v82
  %88 = vst.msk [vmem:[%s3 + $0x4] sm:$0xf] %vm86, %v83
  // Predicated region
  $region14: #{deepgt_forward.6} parent=0 // pred_check
    _
  $region15: #{deepgt_forward.6} parent=0 // pred_check_branch
    %90 = sbr.rel (0) target = $region17
  $region16: #{deepgt_forward.6} parent=0 // pred_region
    _
  $region17: #{deepgt_forward.6} parent=0 // pred_fallthru
    _
  // Predicated region
  $region18: #{deepgt_forward.6} parent=0 // pred_check
    _
  $region19: #{deepgt_forward.6} parent=0 // pred_check_branch
    %92 = sbr.rel (0) target = $region21
  $region20: #{deepgt_forward.6} parent=0 // pred_region
    _
  $region21: #{deepgt_forward.6} parent=0 // pred_fallthru
    _

// kernel: deepgt_forward.7
$region0: #{deepgt_forward.7}
  #allocation0 [shape = 'u32[]', space=smem, size = 0x4, offset = 0x4, fixed_abs, tag = 'smem constant byte address 0x4 - core index']
  #allocation1 [shape = 'u32[144,128]{1,0:T(1,128)}', space=vmem, size = 0x12000, scoped, tag = 'internal scratch']
  %s0 = inlined_call_operand.vmem [shape: bf16[16,32], index: 0, kind: input, shape index: {}]
  %s1 = inlined_call_operand.vmem [shape: bf16[4,32,32], index: 1, kind: input, shape index: {}]
  %s2 = inlined_call_operand.vmem [shape: f32[4,32,1], index: 2, kind: input, shape index: {}]
  %s3 = inlined_call_operand.vmem [shape: bf16[4,32,32], index: 3, kind: input, shape index: {}]
  %s4 = inlined_call_operand.vmem [shape: f32[4,1,32], index: 4, kind: input, shape index: {}]
  %s5 = inlined_call_operand.vmem [shape: bf16[4,32,16], index: 5, kind: output, shape index: {0}]
  %s6 = inlined_call_operand.vmem [shape: bf16[4,16,32], index: 6, kind: output, shape index: {1}]
  %7 = xla_tuple %s5, %s6
  %s8 = sld [smem:[#allocation0]]
  $region38: #{deepgt_forward.7} parent=0
    _
  %s10 = ssub.s32 1, %s8
  %s11 = scalar_select 0, %s10, %s8
  // Predicated region
  $region2: #{deepgt_forward.7} parent=0 // pred_check
    _
  $region3: #{deepgt_forward.7} parent=0 // pred_check_branch
    %13 = sbr.rel (0) target = $region5
  $region4: #{deepgt_forward.7} parent=0 // pred_region
    _
  $region5: #{deepgt_forward.7} parent=0 // pred_fallthru
    _
  // Predicated region
  $region6: #{deepgt_forward.7} parent=0 // pred_check
    _
  $region7: #{deepgt_forward.7} parent=0 // pred_check_branch
    %15 = sbr.rel (0) target = $region9
  $region8: #{deepgt_forward.7} parent=0 // pred_region
    _
  $region9: #{deepgt_forward.7} parent=0 // pred_fallthru
    _
  // Predicated region
  $region10: #{deepgt_forward.7} parent=0 // pred_check
    _
  $region11: #{deepgt_forward.7} parent=0 // pred_check_branch
    %17 = sbr.rel (0) target = $region13
  $region12: #{deepgt_forward.7} parent=0 // pred_region
    _
  $region13: #{deepgt_forward.7} parent=0 // pred_fallthru
    _
  // Predicated region
  $region14: #{deepgt_forward.7} parent=0 // pred_check
    _
  $region15: #{deepgt_forward.7} parent=0 // pred_check_branch
    %19 = sbr.rel (0) target = $region17
  $region16: #{deepgt_forward.7} parent=0 // pred_region
    _
  $region17: #{deepgt_forward.7} parent=0 // pred_fallthru
    _
  // Predicated region
  $region18: #{deepgt_forward.7} parent=0 // pred_check
    _
  $region19: #{deepgt_forward.7} parent=0 // pred_check_branch
    %21 = sbr.rel (0) target = $region21
  $region20: #{deepgt_forward.7} parent=0 // pred_region
    _
  $region21: #{deepgt_forward.7} parent=0 // pred_fallthru
    _
  %v23 = vld [vmem:[%s0] sm:$0xf]
  %v24 = vld [vmem:[%s0 + $0x4] sm:$0xf]
  %v25 = vld [vmem:[%s1] sm:$0xf]
  %v26 = vld [vmem:[%s1 + $0x4] sm:$0xf]
  %v27 = vld [vmem:[%s1 + $0x8] sm:$0xf]
  %v28 = vld [vmem:[%s1 + $0xc] sm:$0xf]
  %v29 = vld [vmem:[%s2] sm:$0xff]
  %v30 = vld [vmem:[%s2 + $0x8] sm:$0xff]
  %v31 = vld [vmem:[%s2 + $0x10] sm:$0xff]
  %v32 = vld [vmem:[%s2 + $0x18] sm:$0xff]
  %34 = vset.pattern.permute.xlu0 0
  %35 = vperm.xlu0 %34, %v29
  %v36 = vpop.permute.xlu0 %35
  %39 = vset.pattern.permute.xlu0 0
  %40 = vperm.xlu0 %39, %v30
  %v41 = vpop.permute.xlu0 %40
  %44 = vset.pattern.permute.xlu0 0
  %45 = vperm.xlu0 %44, %v31
  %v46 = vpop.permute.xlu0 %45
  %49 = vset.pattern.permute.xlu0 0
  %50 = vperm.xlu0 %49, %v32
  %v51 = vpop.permute.xlu0 %50
  %v57 = vunpack.c.l.b16 %v25
  %v58 = vunpack.c.l.b16 %v26
  %v59 = vunpack.c.l.b16 %v27
  %v60 = vunpack.c.l.b16 %v28
  %v61 = vpack.c.b16 %v58, %v57
  %v62 = vpack.c.b16 %v60, %v59
  %v65 = vunpack.c.l.b16 %v23
  %v66 = vunpack.c.l.b16 %v24
  %v67 = vpack.c.b16 %v66, %v65
  %vm68 = vcmask 261120
  %v70 = vsel %vm68, %v61, 0
  %v73 = vsel %vm68, %v62, 0
  %v76 = vsel %vm68, %v67, 0
  %78 = vmatprep.subr.bf16.mxu0 0
  %79 = vmatpush1.bf16.xpose.msra.mxu0 %v76
  %80 = vmatprep.subr.bf16.mxu0 0
  %81 = vmatpush1.bf16.xpose.msra.mxu0 0
  %82 = vmatprep.subr.bf16.mxu0 0
  %83 = vmatpush1.bf16.xpose.msra.mxu0 0
  %84 = vmatprep.subr.bf16.mxu0 0
  %85 = vmatpush1.bf16.xpose.msra.mxu0 0
  %86 = vmatprep.subr.bf16.mxu0 0
  %87 = vmatpush1.bf16.xpose.msra.mxu0 0
  %88 = vmatprep.subr.bf16.mxu0 0
  %89 = vmatpush1.bf16.xpose.msra.mxu0 0
  %90 = vmatprep.subr.bf16.mxu0 0
  %91 = vmatpush1.bf16.xpose.msra.mxu0 0
  %92 = vmatprep.subr.bf16.mxu0 0
  %93 = vmatpush1.bf16.xpose.msra.mxu0 0
  %94 = vmatprep.subr.bf16.mxu0 0
  %95 = vmatpush1.bf16.xpose.msra.mxu0 0
  %96 = vmatprep.subr.bf16.mxu0 0
  %97 = vmatpush1.bf16.xpose.msra.mxu0 0
  %98 = vmatprep.subr.bf16.mxu0 0
  %99 = vmatpush1.bf16.xpose.msra.mxu0 0
  %100 = vmatprep.subr.bf16.mxu0 0
  %101 = vmatpush1.bf16.xpose.msra.mxu0 0
  %102 = vmatprep.subr.bf16.mxu0 0
  %103 = vmatpush1.bf16.xpose.msra.mxu0 0
  %104 = vmatprep.subr.bf16.mxu0 0
  %105 = vmatpush1.bf16.xpose.msra.mxu0 0
  %106 = vmatprep.subr.bf16.mxu0 0
  %107 = vmatpush1.bf16.xpose.msra.mxu0 0
  %108 = vmatprep.subr.bf16.mxu0 0
  %109 = vmatpush1.bf16.xpose.msra.mxu0 0
  %110 = vmatprep.mubr.bf16.mxu0 0
  %111 = vmatmul.mubr.bf16.gmra.mrb[0].mxu0 %v70
  %v112 = vpop.f32.mrb[0].mxu0
  %v113 = vadd.f32 %v36, %v112
  %v114 = vpop.f32.mrb[0].mxu0
  %v115 = vpop.f32.mrb[0].mxu0
  %v116 = vadd.f32 %v41, %v115
  %v117 = vpop.f32.mrb[0].mxu0
  %118 = vmatprep.mubr.bf16.mxu0 0
  %119 = vmatmul.mubr.bf16.gmra.mrb[0].mxu0 %v73
  %v120 = vpop.f32.mrb[0].mxu0
  %v121 = vadd.f32 %v46, %v120
  %v122 = vpop.f32.mrb[0].mxu0
  %v123 = vpop.f32.mrb[0].mxu0
  %v124 = vadd.f32 %v51, %v123
  %v125 = vpop.f32.mrb[0].mxu0
  %126 = vdwg.mxu0
  %v127 = vpack.c.bf16 %v116, %v113
  %v128 = vpack.c.bf16 %v124, %v121
  %v131 = vunpack.c.l.b16 %v127
  %v132 = vunpack.c.h.b16 %v127
  %v133 = vunpack.c.l.b16 %v128
  %v134 = vunpack.c.h.b16 %v128
  %v135 = vpack.c.b16 %v131, %v131
  %v136 = vpack.c.b16 %v132, %v132
  %v137 = vpack.c.b16 %v133, %v133
  %v138 = vpack.c.b16 %v134, %v134
  %vm143 = vcmask 125952
  %144 = vst.msk [vmem:[%s5] sm:$0xf] %vm143, %v135
  %145 = vst.msk [vmem:[%s5 + $0x4] sm:$0xf] %vm143, %v136
  %146 = vst.msk [vmem:[%s5 + $0x8] sm:$0xf] %vm143, %v137
  %147 = vst.msk [vmem:[%s5 + $0xc] sm:$0xf] %vm143, %v138
  %v148 = vld [vmem:[%s3] sm:$0xf]
  %v149 = vld [vmem:[%s3 + $0x4] sm:$0xf]
  %v150 = vld [vmem:[%s3 + $0x8] sm:$0xf]
  %v151 = vld [vmem:[%s3 + $0xc] sm:$0xf]
  %v152 = vld [vmem:[%s4] sm:$0x1]
  %v154 = vlaneseq
  %v155 = vshrl.u32 %v154, 7
  %v156 = vsub.s32 0, %v155
  %v157 = vrot.slane %v152, %v156
  %v163 = vunpack.c.l.b16 %v148
  %v164 = vunpack.c.l.b16 %v149
  %v165 = vunpack.c.l.b16 %v150
  %v166 = vunpack.c.l.b16 %v151
  %v167 = vpack.c.b16 %v164, %v163
  %v168 = vpack.c.b16 %v166, %v165
  %171 = vmatprep.subr.bf16.mxu0 0
  %172 = vmatpush1.bf16.msra.mxu0 %v167
  %173 = vmatprep.subr.bf16.mxu0 0
  %174 = vmatpush1.bf16.msra.mxu0 %v168
  %175 = vmatprep.subr.bf16.mxu0 0
  %176 = vmatpush1.bf16.msra.mxu0 0
  %177 = vmatprep.subr.bf16.mxu0 0
  %178 = vmatpush1.bf16.msra.mxu0 0
  %179 = vmatprep.subr.bf16.mxu0 0
  %180 = vmatpush1.bf16.msra.mxu0 0
  %181 = vmatprep.subr.bf16.mxu0 0
  %182 = vmatpush1.bf16.msra.mxu0 0
  %183 = vmatprep.subr.bf16.mxu0 0
  %184 = vmatpush1.bf16.msra.mxu0 0
  %185 = vmatprep.subr.bf16.mxu0 0
  %186 = vmatpush1.bf16.msra.mxu0 0
  %187 = vmatprep.subr.bf16.mxu0 0
  %188 = vmatpush1.bf16.msra.mxu0 0
  %189 = vmatprep.subr.bf16.mxu0 0
  %190 = vmatpush1.bf16.msra.mxu0 0
  %191 = vmatprep.subr.bf16.mxu0 0
  %192 = vmatpush1.bf16.msra.mxu0 0
  %193 = vmatprep.subr.bf16.mxu0 0
  %194 = vmatpush1.bf16.msra.mxu0 0
  %195 = vmatprep.subr.bf16.mxu0 0
  %196 = vmatpush1.bf16.msra.mxu0 0
  %197 = vmatprep.subr.bf16.mxu0 0
  %198 = vmatpush1.bf16.msra.mxu0 0
  %199 = vmatprep.subr.bf16.mxu0 0
  %200 = vmatpush1.bf16.msra.mxu0 0
  %201 = vmatprep.subr.bf16.mxu0 0
  %202 = vmatpush1.bf16.msra.mxu0 0
  %203 = vmatprep.mubr.bf16.mxu0 0
  %204 = vmatmul.mubr.bf16.gmra.mrb[0].mxu0 %v76
  %v205 = vpop.f32.mrb[0].mxu0
  %v206 = vadd.f32 %v157, %v205
  %v207 = vpop.f32.mrb[0].mxu0
  %v208 = vpop.f32.mrb[0].mxu0
  %v209 = vadd.f32 %v157, %v208
  %v210 = vpop.f32.mrb[0].mxu0
  %211 = vdwg.mxu0
  %v212 = vpack.c.bf16 %v209, %v206
  %v214 = vunpack.c.l.b16 %v212
  %v215 = vunpack.c.h.b16 %v212
  %v216 = vpack.c.b16 %v214, %v214
  %v217 = vpack.c.b16 %v215, %v215
  %vm220 = vcmask 257024
  %221 = vst.msk [vmem:[%s6] sm:$0xf] %vm220, %v216
  %222 = vst.msk [vmem:[%s6 + $0x4] sm:$0xf] %vm220, %v217
  %s223 = scalar_lea.vmem %s1, 16
  %v224 = vld [vmem:[%s223] sm:$0xf]
  %v225 = vld [vmem:[%s223 + $0x4] sm:$0xf]
  %v226 = vld [vmem:[%s223 + $0x8] sm:$0xf]
  %v227 = vld [vmem:[%s223 + $0xc] sm:$0xf]
  %s228 = scalar_lea.vmem %s2, 32
  %v229 = vld [vmem:[%s228] sm:$0xff]
  %v230 = vld [vmem:[%s228 + $0x8] sm:$0xff]
  %v231 = vld [vmem:[%s228 + $0x10] sm:$0xff]
  %v232 = vld [vmem:[%s228 + $0x18] sm:$0xff]
  %234 = vset.pattern.permute.xlu0 0
  %235 = vperm.xlu0 %234, %v229
  %v236 = vpop.permute.xlu0 %235
  %239 = vset.pattern.permute.xlu0 0
  %240 = vperm.xlu0 %239, %v230
  %v241 = vpop.permute.xlu0 %240
  %244 = vset.pattern.permute.xlu0 0
  %245 = vperm.xlu0 %244, %v231
  %v246 = vpop.permute.xlu0 %245
  %249 = vset.pattern.permute.xlu0 0
  %250 = vperm.xlu0 %249, %v232
  %v251 = vpop.permute.xlu0 %250
  %v257 = vunpack.c.l.b16 %v224
  %v258 = vunpack.c.l.b16 %v225
  %v259 = vunpack.c.l.b16 %v226
  %v260 = vunpack.c.l.b16 %v227
  %v261 = vpack.c.b16 %v258, %v257
  %v262 = vpack.c.b16 %v260, %v259
  %v264 = vsel %vm68, %v261, 0
  %v267 = vsel %vm68, %v262, 0
  %269 = vmatprep.subr.bf16.mxu0 0
  %270 = vmatpush1.bf16.xpose.msra.mxu0 %v76
  %271 = vmatprep.subr.bf16.mxu0 0
  %272 = vmatpush1.bf16.xpose.msra.mxu0 0
  %273 = vmatprep.subr.bf16.mxu0 0
  %274 = vmatpush1.bf16.xpose.msra.mxu0 0
  %275 = vmatprep.subr.bf16.mxu0 0
  %276 = vmatpush1.bf16.xpose.msra.mxu0 0
  %277 = vmatprep.subr.bf16.mxu0 0
  %278 = vmatpush1.bf16.xpose.msra.mxu0 0
  %279 = vmatprep.subr.bf16.mxu0 0
  %280 = vmatpush1.bf16.xpose.msra.mxu0 0
  %281 = vmatprep.subr.bf16.mxu0 0
  %282 = vmatpush1.bf16.xpose.msra.mxu0 0
  %283 = vmatprep.subr.bf16.mxu0 0
  %284 = vmatpush1.bf16.xpose.msra.mxu0 0
  %285 = vmatprep.subr.bf16.mxu0 0
  %286 = vmatpush1.bf16.xpose.msra.mxu0 0
  %287 = vmatprep.subr.bf16.mxu0 0
  %288 = vmatpush1.bf16.xpose.msra.mxu0 0
  %289 = vmatprep.subr.bf16.mxu0 0
  %290 = vmatpush1.bf16.xpose.msra.mxu0 0
  %291 = vmatprep.subr.bf16.mxu0 0
  %292 = vmatpush1.bf16.xpose.msra.mxu0 0
  %293 = vmatprep.subr.bf16.mxu0 0
  %294 = vmatpush1.bf16.xpose.msra.mxu0 0
  %295 = vmatprep.subr.bf16.mxu0 0
  %296 = vmatpush1.bf16.xpose.msra.mxu0 0
  %297 = vmatprep.subr.bf16.mxu0 0
  %298 = vmatpush1.bf16.xpose.msra.mxu0 0
  %299 = vmatprep.subr.bf16.mxu0 0
  %300 = vmatpush1.bf16.xpose.msra.mxu0 0
  %301 = vmatprep.mubr.bf16.mxu0 0
  %302 = vmatmul.mubr.bf16.gmra.mrb[0].mxu0 %v264
  %v303 = vpop.f32.mrb[0].mxu0
  %v304 = vadd.f32 %v236, %v303
  %v305 = vpop.f32.mrb[0].mxu0
  %v306 = vpop.f32.mrb[0].mxu0
  %v307 = vadd.f32 %v241, %v306
  %v308 = vpop.f32.mrb[0].mxu0
  %309 = vmatprep.mubr.bf16.mxu0 0
  %310 = vmatmul.mubr.bf16.gmra.mrb[0].mxu0 %v267
  %v311 = vpop.f32.mrb[0].mxu0
  %v312 = vadd.f32 %v246, %v311
  %v313 = vpop.f32.mrb[0].mxu0
  %v314 = vpop.f32.mrb[0].mxu0
  %v315 = vadd.f32 %v251, %v314
  %v316 = vpop.f32.mrb[0].mxu0
  %317 = vdwg.mxu0
  %v318 = vpack.c.bf16 %v307, %v304
  %v319 = vpack.c.bf16 %v315, %v312
  %v322 = vunpack.c.l.b16 %v318
  %v323 = vunpack.c.h.b16 %v318
  %v324 = vunpack.c.l.b16 %v319
  %v325 = vunpack.c.h.b16 %v319
  %v326 = vpack.c.b16 %v322, %v322
  %v327 = vpack.c.b16 %v323, %v323
  %v328 = vpack.c.b16 %v324, %v324
  %v329 = vpack.c.b16 %v325, %v325
  %s334 = scalar_lea.vmem %s5, 16
  %335 = vst.msk [vmem:[%s334] sm:$0xf] %vm143, %v326
  %336 = vst.msk [vmem:[%s334 + $0x4] sm:$0xf] %vm143, %v327
  %337 = vst.msk [vmem:[%s334 + $0x8] sm:$0xf] %vm143, %v328
  %338 = vst.msk [vmem:[%s334 + $0xc] sm:$0xf] %vm143, %v329
  %s339 = scalar_lea.vmem %s3, 16
  %v340 = vld [vmem:[%s339] sm:$0xf]
  %v341 = vld [vmem:[%s339 + $0x4] sm:$0xf]
  %v342 = vld [vmem:[%s339 + $0x8] sm:$0xf]
  %v343 = vld [vmem:[%s339 + $0xc] sm:$0xf]
  %s344 = scalar_lea.vmem %s4, 1
  %v345 = vld [vmem:[%s344] sm:$0x1]
  %v347 = vlaneseq
  %v348 = vshrl.u32 %v347, 7
  %v349 = vsub.s32 0, %v348
  %v350 = vrot.slane %v345, %v349
  %v356 = vunpack.c.l.b16 %v340
  %v357 = vunpack.c.l.b16 %v341
  %v358 = vunpack.c.l.b16 %v342
  %v359 = vunpack.c.l.b16 %v343
  %v360 = vpack.c.b16 %v357, %v356
  %v361 = vpack.c.b16 %v359, %v358
  %364 = vmatprep.subr.bf16.mxu0 0
  %365 = vmatpush1.bf16.msra.mxu0 %v360
  %366 = vmatprep.subr.bf16.mxu0 0
  %367 = vmatpush1.bf16.msra.mxu0 %v361
  %368 = vmatprep.subr.bf16.mxu0 0
  %369 = vmatpush1.bf16.msra.mxu0 0
  %370 = vmatprep.subr.bf16.mxu0 0
  %371 = vmatpush1.bf16.msra.mxu0 0
  %372 = vmatprep.subr.bf16.mxu0 0
  %373 = vmatpush1.bf16.msra.mxu0 0
  %374 = vmatprep.subr.bf16.mxu0 0
  %375 = vmatpush1.bf16.msra.mxu0 0
  %376 = vmatprep.subr.bf16.mxu0 0
  %377 = vmatpush1.bf16.msra.mxu0 0
  %378 = vmatprep.subr.bf16.mxu0 0
  %379 = vmatpush1.bf16.msra.mxu0 0
  %380 = vmatprep.subr.bf16.mxu0 0
  %381 = vmatpush1.bf16.msra.mxu0 0
  %382 = vmatprep.subr.bf16.mxu0 0
  %383 = vmatpush1.bf16.msra.mxu0 0
  %384 = vmatprep.subr.bf16.mxu0 0
  %385 = vmatpush1.bf16.msra.mxu0 0
  %386 = vmatprep.subr.bf16.mxu0 0
  %387 = vmatpush1.bf16.msra.mxu0 0
  %388 = vmatprep.subr.bf16.mxu0 0
  %389 = vmatpush1.bf16.msra.mxu0 0
  %390 = vmatprep.subr.bf16.mxu0 0
  %391 = vmatpush1.bf16.msra.mxu0 0
  %392 = vmatprep.subr.bf16.mxu0 0
  %393 = vmatpush1.bf16.msra.mxu0 0
  %394 = vmatprep.subr.bf16.mxu0 0
  %395 = vmatpush1.bf16.msra.mxu0 0
  %396 = vmatprep.mubr.bf16.mxu0 0
  %397 = vmatmul.mubr.bf16.gmra.mrb[0].mxu0 %v76
  %v398 = vpop.f32.mrb[0].mxu0
  %v399 = vadd.f32 %v350, %v398
  %v400 = vpop.f32.mrb[0].mxu0
  %v401 = vpop.f32.mrb[0].mxu0
  %v402 = vadd.f32 %v350, %v401
  %v403 = vpop.f32.mrb[0].mxu0
  %404 = vdwg.mxu0
  %v405 = vpack.c.bf16 %v402, %v399
  %v407 = vunpack.c.l.b16 %v405
  %v408 = vunpack.c.h.b16 %v405
  %v409 = vpack.c.b16 %v407, %v407
  %v410 = vpack.c.b16 %v408, %v408
  %s413 = scalar_lea.vmem %s6, 8
  %414 = vst.msk [vmem:[%s413] sm:$0xf] %vm220, %v409
  %415 = vst.msk [vmem:[%s413 + $0x4] sm:$0xf] %vm220, %v410
  %s416 = scalar_lea.vmem %s1, 32
  %v417 = vld [vmem:[%s416] sm:$0xf]
  %v418 = vld [vmem:[%s416 + $0x4] sm:$0xf]
  %v419 = vld [vmem:[%s416 + $0x8] sm:$0xf]
  %v420 = vld [vmem:[%s416 + $0xc] sm:$0xf]
  %s421 = scalar_lea.vmem %s2, 64
  %v422 = vld [vmem:[%s421] sm:$0xff]
  %v423 = vld [vmem:[%s421 + $0x8] sm:$0xff]
  %v424 = vld [vmem:[%s421 + $0x10] sm:$0xff]
  %v425 = vld [vmem:[%s421 + $0x18] sm:$0xff]
  %427 = vset.pattern.permute.xlu0 0
  %428 = vperm.xlu0 %427, %v422
  %v429 = vpop.permute.xlu0 %428
  %432 = vset.pattern.permute.xlu0 0
  %433 = vperm.xlu0 %432, %v423
  %v434 = vpop.permute.xlu0 %433
  %437 = vset.pattern.permute.xlu0 0
  %438 = vperm.xlu0 %437, %v424
  %v439 = vpop.permute.xlu0 %438
  %442 = vset.pattern.permute.xlu0 0
  %443 = vperm.xlu0 %442, %v425
  %v444 = vpop.permute.xlu0 %443
  %v450 = vunpack.c.l.b16 %v417
  %v451 = vunpack.c.l.b16 %v418
  %v452 = vunpack.c.l.b16 %v419
  %v453 = vunpack.c.l.b16 %v420
  %v454 = vpack.c.b16 %v451, %v450
  %v455 = vpack.c.b16 %v453, %v452
  %v457 = vsel %vm68, %v454, 0
  %v460 = vsel %vm68, %v455, 0
  %462 = vmatprep.subr.bf16.mxu0 0
  %463 = vmatpush1.bf16.xpose.msra.mxu0 %v76
  %464 = vmatprep.subr.bf16.mxu0 0
  %465 = vmatpush1.bf16.xpose.msra.mxu0 0
  %466 = vmatprep.subr.bf16.mxu0 0
  %467 = vmatpush1.bf16.xpose.msra.mxu0 0
  %468 = vmatprep.subr.bf16.mxu0 0
  %469 = vmatpush1.bf16.xpose.msra.mxu0 0
  %470 = vmatprep.subr.bf16.mxu0 0
  %471 = vmatpush1.bf16.xpose.msra.mxu0 0
  %472 = vmatprep.subr.bf16.mxu0 0
  %473 = vmatpush1.bf16.xpose.msra.mxu0 0
  %474 = vmatprep.subr.bf16.mxu0 0
  %475 = vmatpush1.bf16.xpose.msra.mxu0 0
  %476 = vmatprep.subr.bf16.mxu0 0
  %477 = vmatpush1.bf16.xpose.msra.mxu0 0
  %478 = vmatprep.subr.bf16.mxu0 0
  %479 = vmatpush1.bf16.xpose.msra.mxu0 0
  %480 = vmatprep.subr.bf16.mxu0 0
  %481 = vmatpush1.bf16.xpose.msra.mxu0 0
  %482 = vmatprep.subr.bf16.mxu0 0
  %483 = vmatpush1.bf16.xpose.msra.mxu0 0
  %484 = vmatprep.subr.bf16.mxu0 0
  %485 = vmatpush1.bf16.xpose.msra.mxu0 0
  %486 = vmatprep.subr.bf16.mxu0 0
  %487 = vmatpush1.bf16.xpose.msra.mxu0 0
  %488 = vmatprep.subr.bf16.mxu0 0
  %489 = vmatpush1.bf16.xpose.msra.mxu0 0
  %490 = vmatprep.subr.bf16.mxu0 0
  %491 = vmatpush1.bf16.xpose.msra.mxu0 0
  %492 = vmatprep.subr.bf16.mxu0 0
  %493 = vmatpush1.bf16.xpose.msra.mxu0 0
  %494 = vmatprep.mubr.bf16.mxu0 0
  %495 = vmatmul.mubr.bf16.gmra.mrb[0].mxu0 %v457
  %v496 = vpop.f32.mrb[0].mxu0
  %v497 = vadd.f32 %v429, %v496
  %v498 = vpop.f32.mrb[0].mxu0
  %v499 = vpop.f32.mrb[0].mxu0
  %v500 = vadd.f32 %v434, %v499
  %v501 = vpop.f32.mrb[0].mxu0
  %502 = vmatprep.mubr.bf16.mxu0 0
  %503 = vmatmul.mubr.bf16.gmra.mrb[0].mxu0 %v460
  %v504 = vpop.f32.mrb[0].mxu0
  %v505 = vadd.f32 %v439, %v504
  %v506 = vpop.f32.mrb[0].mxu0
  %v507 = vpop.f32.mrb[0].mxu0
  %v508 = vadd.f32 %v444, %v507
  %v509 = vpop.f32.mrb[0].mxu0
  %510 = vdwg.mxu0
  %v511 = vpack.c.bf16 %v500, %v497
  %v512 = vpack.c.bf16 %v508, %v505
  %v515 = vunpack.c.l.b16 %v511
  %v516 = vunpack.c.h.b16 %v511
  %v517 = vunpack.c.l.b16 %v512
  %v518 = vunpack.c.h.b16 %v512
  %v519 = vpack.c.b16 %v515, %v515
  %v520 = vpack.c.b16 %v516, %v516
  %v521 = vpack.c.b16 %v517, %v517
  %v522 = vpack.c.b16 %v518, %v518
  %s527 = scalar_lea.vmem %s5, 32
  %528 = vst.msk [vmem:[%s527] sm:$0xf] %vm143, %v519
  %529 = vst.msk [vmem:[%s527 + $0x4] sm:$0xf] %vm143, %v520
  %530 = vst.msk [vmem:[%s527 + $0x8] sm:$0xf] %vm143, %v521
  %531 = vst.msk [vmem:[%s527 + $0xc] sm:$0xf] %vm143, %v522
  %s532 = scalar_lea.vmem %s3, 32
  %v533 = vld [vmem:[%s532] sm:$0xf]
  %v534 = vld [vmem:[%s532 + $0x4] sm:$0xf]
  %v535 = vld [vmem:[%s532 + $0x8] sm:$0xf]
  %v536 = vld [vmem:[%s532 + $0xc] sm:$0xf]
  %s537 = scalar_lea.vmem %s4, 2
  %v538 = vld [vmem:[%s537] sm:$0x1]
  %v540 = vlaneseq
  %v541 = vshrl.u32 %v540, 7
  %v542 = vsub.s32 0, %v541
  %v543 = vrot.slane %v538, %v542
  %v549 = vunpack.c.l.b16 %v533
  %v550 = vunpack.c.l.b16 %v534
  %v551 = vunpack.c.l.b16 %v535
  %v552 = vunpack.c.l.b16 %v536
  %v553 = vpack.c.b16 %v550, %v549
  %v554 = vpack.c.b16 %v552, %v551
  %557 = vmatprep.subr.bf16.mxu0 0
  %558 = vmatpush1.bf16.msra.mxu0 %v553
  %559 = vmatprep.subr.bf16.mxu0 0
  %560 = vmatpush1.bf16.msra.mxu0 %v554
  %561 = vmatprep.subr.bf16.mxu0 0
  %562 = vmatpush1.bf16.msra.mxu0 0
  %563 = vmatprep.subr.bf16.mxu0 0
  %564 = vmatpush1.bf16.msra.mxu0 0
  %565 = vmatprep.subr.bf16.mxu0 0
  %566 = vmatpush1.bf16.msra.mxu0 0
  %567 = vmatprep.subr.bf16.mxu0 0
  %568 = vmatpush1.bf16.msra.mxu0 0
  %569 = vmatprep.subr.bf16.mxu0 0
  %570 = vmatpush1.bf16.msra.mxu0 0
  %571 = vmatprep.subr.bf16.mxu0 0
  %572 = vmatpush1.bf16.msra.mxu0 0
  %573 = vmatprep.subr.bf16.mxu0 0
  %574 = vmatpush1.bf16.msra.mxu0 0
  %575 = vmatprep.subr.bf16.mxu0 0
  %576 = vmatpush1.bf16.msra.mxu0 0
  %577 = vmatprep.subr.bf16.mxu0 0
  %578 = vmatpush1.bf16.msra.mxu0 0
  %579 = vmatprep.subr.bf16.mxu0 0
  %580 = vmatpush1.bf16.msra.mxu0 0
  %581 = vmatprep.subr.bf16.mxu0 0
  %582 = vmatpush1.bf16.msra.mxu0 0
  %583 = vmatprep.subr.bf16.mxu0 0
  %584 = vmatpush1.bf16.msra.mxu0 0
  %585 = vmatprep.subr.bf16.mxu0 0
  %586 = vmatpush1.bf16.msra.mxu0 0
  %587 = vmatprep.subr.bf16.mxu0 0
  %588 = vmatpush1.bf16.msra.mxu0 0
  %589 = vmatprep.mubr.bf16.mxu0 0
  %590 = vmatmul.mubr.bf16.gmra.mrb[0].mxu0 %v76
  %v591 = vpop.f32.mrb[0].mxu0
  %v592 = vadd.f32 %v543, %v591
  %v593 = vpop.f32.mrb[0].mxu0
  %v594 = vpop.f32.mrb[0].mxu0
  %v595 = vadd.f32 %v543, %v594
  %v596 = vpop.f32.mrb[0].mxu0
  %597 = vdwg.mxu0
  %v598 = vpack.c.bf16 %v595, %v592
  %v600 = vunpack.c.l.b16 %v598
  %v601 = vunpack.c.h.b16 %v598
  %v602 = vpack.c.b16 %v600, %v600
  %v603 = vpack.c.b16 %v601, %v601
  %s606 = scalar_lea.vmem %s6, 16
  %607 = vst.msk [vmem:[%s606] sm:$0xf] %vm220, %v602
  %608 = vst.msk [vmem:[%s606 + $0x4] sm:$0xf] %vm220, %v603
  %s609 = scalar_lea.vmem %s1, 48
  %v610 = vld [vmem:[%s609] sm:$0xf]
  %v611 = vld [vmem:[%s609 + $0x4] sm:$0xf]
  %v612 = vld [vmem:[%s609 + $0x8] sm:$0xf]
  %v613 = vld [vmem:[%s609 + $0xc] sm:$0xf]
  %s614 = scalar_lea.vmem %s2, 96
  %v615 = vld [vmem:[%s614] sm:$0xff]
  %v616 = vld [vmem:[%s614 + $0x8] sm:$0xff]
  %v617 = vld [vmem:[%s614 + $0x10] sm:$0xff]
  %v618 = vld [vmem:[%s614 + $0x18] sm:$0xff]
  %620 = vset.pattern.permute.xlu0 0
  %621 = vperm.xlu0 %620, %v615
  %v622 = vpop.permute.xlu0 %621
  %625 = vset.pattern.permute.xlu0 0
  %626 = vperm.xlu0 %625, %v616
  %v627 = vpop.permute.xlu0 %626
  %630 = vset.pattern.permute.xlu0 0
  %631 = vperm.xlu0 %630, %v617
  %v632 = vpop.permute.xlu0 %631
  %635 = vset.pattern.permute.xlu0 0
  %636 = vperm.xlu0 %635, %v618
  %v637 = vpop.permute.xlu0 %636
  %v643 = vunpack.c.l.b16 %v610
  %v644 = vunpack.c.l.b16 %v611
  %v645 = vunpack.c.l.b16 %v612
  %v646 = vunpack.c.l.b16 %v613
  %v647 = vpack.c.b16 %v644, %v643
  %v648 = vpack.c.b16 %v646, %v645
  %v650 = vsel %vm68, %v647, 0
  %v653 = vsel %vm68, %v648, 0
  %655 = vmatprep.subr.bf16.mxu0 0
  %656 = vmatpush1.bf16.xpose.msra.mxu0 %v76
  %657 = vmatprep.subr.bf16.mxu0 0
  %658 = vmatpush1.bf16.xpose.msra.mxu0 0
  %659 = vmatprep.subr.bf16.mxu0 0
  %660 = vmatpush1.bf16.xpose.msra.mxu0 0
  %661 = vmatprep.subr.bf16.mxu0 0
  %662 = vmatpush1.bf16.xpose.msra.mxu0 0
  %663 = vmatprep.subr.bf16.mxu0 0
  %664 = vmatpush1.bf16.xpose.msra.mxu0 0
  %665 = vmatprep.subr.bf16.mxu0 0
  %666 = vmatpush1.bf16.xpose.msra.mxu0 0
  %667 = vmatprep.subr.bf16.mxu0 0
  %668 = vmatpush1.bf16.xpose.msra.mxu0 0
  %669 = vmatprep.subr.bf16.mxu0 0
  %670 = vmatpush1.bf16.xpose.msra.mxu0 0
  %671 = vmatprep.subr.bf16.mxu0 0
  %672 = vmatpush1.bf16.xpose.msra.mxu0 0
  %673 = vmatprep.subr.bf16.mxu0 0
  %674 = vmatpush1.bf16.xpose.msra.mxu0 0
  %675 = vmatprep.subr.bf16.mxu0 0
  %676 = vmatpush1.bf16.xpose.msra.mxu0 0
  %677 = vmatprep.subr.bf16.mxu0 0
  %678 = vmatpush1.bf16.xpose.msra.mxu0 0
  %679 = vmatprep.subr.bf16.mxu0 0
  %680 = vmatpush1.bf16.xpose.msra.mxu0 0
  %681 = vmatprep.subr.bf16.mxu0 0
  %682 = vmatpush1.bf16.xpose.msra.mxu0 0
  %683 = vmatprep.subr.bf16.mxu0 0
  %684 = vmatpush1.bf16.xpose.msra.mxu0 0
  %685 = vmatprep.subr.bf16.mxu0 0
  %686 = vmatpush1.bf16.xpose.msra.mxu0 0
  %687 = vmatprep.mubr.bf16.mxu0 0
  %688 = vmatmul.mubr.bf16.gmra.mrb[0].mxu0 %v650
  %v689 = vpop.f32.mrb[0].mxu0
  %v690 = vadd.f32 %v622, %v689
  %v691 = vpop.f32.mrb[0].mxu0
  %v692 = vpop.f32.mrb[0].mxu0
  %v693 = vadd.f32 %v627, %v692
  %v694 = vpop.f32.mrb[0].mxu0
  %695 = vmatprep.mubr.bf16.mxu0 0
  %696 = vmatmul.mubr.bf16.gmra.mrb[0].mxu0 %v653
  %v697 = vpop.f32.mrb[0].mxu0
  %v698 = vadd.f32 %v632, %v697
  %v699 = vpop.f32.mrb[0].mxu0
  %v700 = vpop.f32.mrb[0].mxu0
  %v701 = vadd.f32 %v637, %v700
  %v702 = vpop.f32.mrb[0].mxu0
  %703 = vdwg.mxu0
  %v704 = vpack.c.bf16 %v693, %v690
  %v705 = vpack.c.bf16 %v701, %v698
  %v708 = vunpack.c.l.b16 %v704
  %v709 = vunpack.c.h.b16 %v704
  %v710 = vunpack.c.l.b16 %v705
  %v711 = vunpack.c.h.b16 %v705
  %v712 = vpack.c.b16 %v708, %v708
  %v713 = vpack.c.b16 %v709, %v709
  %v714 = vpack.c.b16 %v710, %v710
  %v715 = vpack.c.b16 %v711, %v711
  %s720 = scalar_lea.vmem %s5, 48
  %721 = vst.msk [vmem:[%s720] sm:$0xf] %vm143, %v712
  %722 = vst.msk [vmem:[%s720 + $0x4] sm:$0xf] %vm143, %v713
  %723 = vst.msk [vmem:[%s720 + $0x8] sm:$0xf] %vm143, %v714
  %724 = vst.msk [vmem:[%s720 + $0xc] sm:$0xf] %vm143, %v715
  %s725 = scalar_lea.vmem %s3, 48
  %v726 = vld [vmem:[%s725] sm:$0xf]
  %v727 = vld [vmem:[%s725 + $0x4] sm:$0xf]
  %v728 = vld [vmem:[%s725 + $0x8] sm:$0xf]
  %v729 = vld [vmem:[%s725 + $0xc] sm:$0xf]
  %s730 = scalar_lea.vmem %s4, 3
  %v731 = vld [vmem:[%s730] sm:$0x1]
  %v733 = vlaneseq
  %v734 = vshrl.u32 %v733, 7
  %v735 = vsub.s32 0, %v734
  %v736 = vrot.slane %v731, %v735
  %v742 = vunpack.c.l.b16 %v726
  %v743 = vunpack.c.l.b16 %v727
  %v744 = vunpack.c.l.b16 %v728
  %v745 = vunpack.c.l.b16 %v729
  %v746 = vpack.c.b16 %v743, %v742
  %v747 = vpack.c.b16 %v745, %v744
  %750 = vmatprep.subr.bf16.mxu0 0
  %751 = vmatpush1.bf16.msra.mxu0 %v746
  %752 = vmatprep.subr.bf16.mxu0 0
  %753 = vmatpush1.bf16.msra.mxu0 %v747
  %754 = vmatprep.subr.bf16.mxu0 0
  %755 = vmatpush1.bf16.msra.mxu0 0
  %756 = vmatprep.subr.bf16.mxu0 0
  %757 = vmatpush1.bf16.msra.mxu0 0
  %758 = vmatprep.subr.bf16.mxu0 0
  %759 = vmatpush1.bf16.msra.mxu0 0
  %760 = vmatprep.subr.bf16.mxu0 0
  %761 = vmatpush1.bf16.msra.mxu0 0
  %762 = vmatprep.subr.bf16.mxu0 0
  %763 = vmatpush1.bf16.msra.mxu0 0
  %764 = vmatprep.subr.bf16.mxu0 0
  %765 = vmatpush1.bf16.msra.mxu0 0
  %766 = vmatprep.subr.bf16.mxu0 0
  %767 = vmatpush1.bf16.msra.mxu0 0
  %768 = vmatprep.subr.bf16.mxu0 0
  %769 = vmatpush1.bf16.msra.mxu0 0
  %770 = vmatprep.subr.bf16.mxu0 0
  %771 = vmatpush1.bf16.msra.mxu0 0
  %772 = vmatprep.subr.bf16.mxu0 0
  %773 = vmatpush1.bf16.msra.mxu0 0
  %774 = vmatprep.subr.bf16.mxu0 0
  %775 = vmatpush1.bf16.msra.mxu0 0
  %776 = vmatprep.subr.bf16.mxu0 0
  %777 = vmatpush1.bf16.msra.mxu0 0
  %778 = vmatprep.subr.bf16.mxu0 0
  %779 = vmatpush1.bf16.msra.mxu0 0
  %780 = vmatprep.subr.bf16.mxu0 0
  %781 = vmatpush1.bf16.msra.mxu0 0
  %782 = vmatprep.mubr.bf16.mxu0 0
  %783 = vmatmul.mubr.bf16.gmra.mrb[0].mxu0 %v76
  %v784 = vpop.f32.mrb[0].mxu0
  %v785 = vadd.f32 %v736, %v784
  %v786 = vpop.f32.mrb[0].mxu0
  %v787 = vpop.f32.mrb[0].mxu0
  %v788 = vadd.f32 %v736, %v787
  %v789 = vpop.f32.mrb[0].mxu0
  %790 = vdwg.mxu0
  %v791 = vpack.c.bf16 %v788, %v785
  %v793 = vunpack.c.l.b16 %v791
  %v794 = vunpack.c.h.b16 %v791
  %v795 = vpack.c.b16 %v793, %v793
  %v796 = vpack.c.b16 %v794, %v794
  %s799 = scalar_lea.vmem %s6, 24
  %800 = vst.msk [vmem:[%s799] sm:$0xf] %vm220, %v795
  %801 = vst.msk [vmem:[%s799 + $0x4] sm:$0xf] %vm220, %v796
  // Predicated region
  $region22: #{deepgt_forward.7} parent=0 // pred_check
    _
  $region23: #{deepgt_forward.7} parent=0 // pred_check_branch
    %803 = sbr.rel (0) target = $region25
  $region24: #{deepgt_forward.7} parent=0 // pred_region
    _
  $region25: #{deepgt_forward.7} parent=0 // pred_fallthru
    _
  // Predicated region
  $region26: #{deepgt_forward.7} parent=0 // pred_check
    _
  $region27: #{deepgt_forward.7} parent=0 // pred_check_branch
    %805 = sbr.rel (0) target = $region29
  $region28: #{deepgt_forward.7} parent=0 // pred_region
    _
  $region29: #{deepgt_forward.7} parent=0 // pred_fallthru
    _
  // Predicated region
  $region30: #{deepgt_forward.7} parent=0 // pred_check
    _
  $region31: #{deepgt_forward.7} parent=0 // pred_check_branch
    %807 = sbr.rel (0) target = $region33
  $region32: #{deepgt_forward.7} parent=0 // pred_region
    _
  $region33: #{deepgt_forward.7} parent=0 // pred_fallthru
    _
  // Predicated region
  $region34: #{deepgt_forward.7} parent=0 // pred_check
    _
  $region35: #{deepgt_forward.7} parent=0 // pred_check_branch
    %809 = sbr.rel (0) target = $region37
  $region36: #{deepgt_forward.7} parent=0 // pred_region
    _
  $region37: #{deepgt_forward.7} parent=0 // pred_fallthru
    _

// kernel: deepgt_forward.9
$region0: #{deepgt_forward.9}
  #allocation0 [shape = 'u32[]', space=smem, size = 0x4, offset = 0x4, fixed_abs, tag = 'smem constant byte address 0x4 - core index']
  #allocation1 [shape = 'u32[144,128]{1,0:T(1,128)}', space=vmem, size = 0x12000, scoped, tag = 'internal scratch']
  %s0 = inlined_call_operand.vmem [shape: bf16[16,128], index: 0, kind: input, shape index: {}]
  %s1 = inlined_call_operand.vmem [shape: bf16[4,32,128], index: 1, kind: input, shape index: {}]
  %s2 = inlined_call_operand.vmem [shape: f32[4,32,1], index: 2, kind: input, shape index: {}]
  %s3 = inlined_call_operand.vmem [shape: bf16[4,128,32], index: 3, kind: input, shape index: {}]
  %s4 = inlined_call_operand.vmem [shape: f32[4,1,32], index: 4, kind: input, shape index: {}]
  %s5 = inlined_call_operand.vmem [shape: bf16[4,32,16], index: 5, kind: output, shape index: {0}]
  %s6 = inlined_call_operand.vmem [shape: bf16[4,16,32], index: 6, kind: output, shape index: {1}]
  %7 = xla_tuple %s5, %s6
  %s8 = sld [smem:[#allocation0]]
  $region38: #{deepgt_forward.9} parent=0
    _
  %s10 = ssub.s32 1, %s8
  %s11 = scalar_select 0, %s10, %s8
  // Predicated region
  $region2: #{deepgt_forward.9} parent=0 // pred_check
    _
  $region3: #{deepgt_forward.9} parent=0 // pred_check_branch
    %13 = sbr.rel (0) target = $region5
  $region4: #{deepgt_forward.9} parent=0 // pred_region
    _
  $region5: #{deepgt_forward.9} parent=0 // pred_fallthru
    _
  // Predicated region
  $region6: #{deepgt_forward.9} parent=0 // pred_check
    _
  $region7: #{deepgt_forward.9} parent=0 // pred_check_branch
    %15 = sbr.rel (0) target = $region9
  $region8: #{deepgt_forward.9} parent=0 // pred_region
    _
  $region9: #{deepgt_forward.9} parent=0 // pred_fallthru
    _
  // Predicated region
  $region10: #{deepgt_forward.9} parent=0 // pred_check
    _
  $region11: #{deepgt_forward.9} parent=0 // pred_check_branch
    %17 = sbr.rel (0) target = $region13
  $region12: #{deepgt_forward.9} parent=0 // pred_region
    _
  $region13: #{deepgt_forward.9} parent=0 // pred_fallthru
    _
  // Predicated region
  $region14: #{deepgt_forward.9} parent=0 // pred_check
    _
  $region15: #{deepgt_forward.9} parent=0 // pred_check_branch
    %19 = sbr.rel (0) target = $region17
  $region16: #{deepgt_forward.9} parent=0 // pred_region
    _
  $region17: #{deepgt_forward.9} parent=0 // pred_fallthru
    _
  // Predicated region
  $region18: #{deepgt_forward.9} parent=0 // pred_check
    _
  $region19: #{deepgt_forward.9} parent=0 // pred_check_branch
    %21 = sbr.rel (0) target = $region21
  $region20: #{deepgt_forward.9} parent=0 // pred_region
    _
  $region21: #{deepgt_forward.9} parent=0 // pred_fallthru
    _
  %v23 = vld [vmem:[%s0] sm:$0xf]
  %v24 = vld [vmem:[%s0 + $0x4] sm:$0xf]
  %v25 = vld [vmem:[%s1] sm:$0xf]
  %v26 = vld [vmem:[%s1 + $0x4] sm:$0xf]
  %v27 = vld [vmem:[%s1 + $0x8] sm:$0xf]
  %v28 = vld [vmem:[%s1 + $0xc] sm:$0xf]
  %v29 = vld [vmem:[%s2] sm:$0xff]
  %v30 = vld [vmem:[%s2 + $0x8] sm:$0xff]
  %v31 = vld [vmem:[%s2 + $0x10] sm:$0xff]
  %v32 = vld [vmem:[%s2 + $0x18] sm:$0xff]
  %34 = vset.pattern.permute.xlu0 0
  %35 = vperm.xlu0 %34, %v29
  %v36 = vpop.permute.xlu0 %35
  %39 = vset.pattern.permute.xlu0 0
  %40 = vperm.xlu0 %39, %v30
  %v41 = vpop.permute.xlu0 %40
  %44 = vset.pattern.permute.xlu0 0
  %45 = vperm.xlu0 %44, %v31
  %v46 = vpop.permute.xlu0 %45
  %49 = vset.pattern.permute.xlu0 0
  %50 = vperm.xlu0 %49, %v32
  %v51 = vpop.permute.xlu0 %50
  %v57 = vunpack.c.l.b16 %v25
  %v58 = vunpack.c.l.b16 %v26
  %v59 = vunpack.c.l.b16 %v27
  %v60 = vunpack.c.l.b16 %v28
  %v61 = vpack.c.b16 %v58, %v57
  %v62 = vpack.c.b16 %v60, %v59
  %v67 = vunpack.c.l.b16 %v23
  %v68 = vunpack.c.l.b16 %v24
  %v69 = vpack.c.b16 %v68, %v67
  %71 = vmatprep.subr.bf16.mxu0 0
  %72 = vmatpush1.bf16.xpose.msra.mxu0 %v69
  %73 = vmatprep.subr.bf16.mxu0 0
  %74 = vmatpush1.bf16.xpose.msra.mxu0 0
  %75 = vmatprep.subr.bf16.mxu0 0
  %76 = vmatpush1.bf16.xpose.msra.mxu0 0
  %77 = vmatprep.subr.bf16.mxu0 0
  %78 = vmatpush1.bf16.xpose.msra.mxu0 0
  %79 = vmatprep.subr.bf16.mxu0 0
  %80 = vmatpush1.bf16.xpose.msra.mxu0 0
  %81 = vmatprep.subr.bf16.mxu0 0
  %82 = vmatpush1.bf16.xpose.msra.mxu0 0
  %83 = vmatprep.subr.bf16.mxu0 0
  %84 = vmatpush1.bf16.xpose.msra.mxu0 0
  %85 = vmatprep.subr.bf16.mxu0 0
  %86 = vmatpush1.bf16.xpose.msra.mxu0 0
  %87 = vmatprep.subr.bf16.mxu0 0
  %88 = vmatpush1.bf16.xpose.msra.mxu0 0
  %89 = vmatprep.subr.bf16.mxu0 0
  %90 = vmatpush1.bf16.xpose.msra.mxu0 0
  %91 = vmatprep.subr.bf16.mxu0 0
  %92 = vmatpush1.bf16.xpose.msra.mxu0 0
  %93 = vmatprep.subr.bf16.mxu0 0
  %94 = vmatpush1.bf16.xpose.msra.mxu0 0
  %95 = vmatprep.subr.bf16.mxu0 0
  %96 = vmatpush1.bf16.xpose.msra.mxu0 0
  %97 = vmatprep.subr.bf16.mxu0 0
  %98 = vmatpush1.bf16.xpose.msra.mxu0 0
  %99 = vmatprep.subr.bf16.mxu0 0
  %100 = vmatpush1.bf16.xpose.msra.mxu0 0
  %101 = vmatprep.subr.bf16.mxu0 0
  %102 = vmatpush1.bf16.xpose.msra.mxu0 0
  %103 = vmatprep.mubr.bf16.mxu0 0
  %104 = vmatmul.mubr.bf16.gmra.mrb[0].mxu0 %v61
  %v105 = vpop.f32.mrb[0].mxu0
  %v106 = vadd.f32 %v36, %v105
  %v107 = vpop.f32.mrb[0].mxu0
  %v108 = vpop.f32.mrb[0].mxu0
  %v109 = vadd.f32 %v41, %v108
  %v110 = vpop.f32.mrb[0].mxu0
  %111 = vmatprep.mubr.bf16.mxu0 0
  %112 = vmatmul.mubr.bf16.gmra.mrb[0].mxu0 %v62
  %v113 = vpop.f32.mrb[0].mxu0
  %v114 = vadd.f32 %v46, %v113
  %v115 = vpop.f32.mrb[0].mxu0
  %v116 = vpop.f32.mrb[0].mxu0
  %v117 = vadd.f32 %v51, %v116
  %v118 = vpop.f32.mrb[0].mxu0
  %119 = vdwg.mxu0
  %v120 = vpack.c.bf16 %v109, %v106
  %v121 = vpack.c.bf16 %v117, %v114
  %v124 = vunpack.c.l.b16 %v120
  %v125 = vunpack.c.h.b16 %v120
  %v126 = vunpack.c.l.b16 %v121
  %v127 = vunpack.c.h.b16 %v121
  %v128 = vpack.c.b16 %v124, %v124
  %v129 = vpack.c.b16 %v125, %v125
  %v130 = vpack.c.b16 %v126, %v126
  %v131 = vpack.c.b16 %v127, %v127
  %vm136 = vcmask 125952
  %137 = vst.msk [vmem:[%s5] sm:$0xf] %vm136, %v128
  %138 = vst.msk [vmem:[%s5 + $0x4] sm:$0xf] %vm136, %v129
  %139 = vst.msk [vmem:[%s5 + $0x8] sm:$0xf] %vm136, %v130
  %140 = vst.msk [vmem:[%s5 + $0xc] sm:$0xf] %vm136, %v131
  %v141 = vld [vmem:[%s3] sm:$0xf]
  %v142 = vld [vmem:[%s3 + $0x4] sm:$0xf]
  %v143 = vld [vmem:[%s3 + $0x8] sm:$0xf]
  %v144 = vld [vmem:[%s3 + $0xc] sm:$0xf]
  %v145 = vld [vmem:[%s3 + $0x10] sm:$0xf]
  %v146 = vld [vmem:[%s3 + $0x14] sm:$0xf]
  %v147 = vld [vmem:[%s3 + $0x18] sm:$0xf]
  %v148 = vld [vmem:[%s3 + $0x1c] sm:$0xf]
  %v149 = vld [vmem:[%s3 + $0x20] sm:$0xf]
  %v150 = vld [vmem:[%s3 + $0x24] sm:$0xf]
  %v151 = vld [vmem:[%s3 + $0x28] sm:$0xf]
  %v152 = vld [vmem:[%s3 + $0x2c] sm:$0xf]
  %v153 = vld [vmem:[%s3 + $0x30] sm:$0xf]
  %v154 = vld [vmem:[%s3 + $0x34] sm:$0xf]
  %v155 = vld [vmem:[%s3 + $0x38] sm:$0xf]
  %v156 = vld [vmem:[%s3 + $0x3c] sm:$0xf]
  %v157 = vld [vmem:[%s4] sm:$0x1]
  %v159 = vlaneseq
  %v160 = vshrl.u32 %v159, 7
  %v161 = vsub.s32 0, %v160
  %v162 = vrot.slane %v157, %v161
  %v180 = vunpack.c.l.b16 %v141
  %v181 = vunpack.c.l.b16 %v142
  %v182 = vunpack.c.l.b16 %v143
  %v183 = vunpack.c.l.b16 %v144
  %v184 = vunpack.c.l.b16 %v145
  %v185 = vunpack.c.l.b16 %v146
  %v186 = vunpack.c.l.b16 %v147
  %v187 = vunpack.c.l.b16 %v148
  %v188 = vunpack.c.l.b16 %v149
  %v189 = vunpack.c.l.b16 %v150
  %v190 = vunpack.c.l.b16 %v151
  %v191 = vunpack.c.l.b16 %v152
  %v192 = vunpack.c.l.b16 %v153
  %v193 = vunpack.c.l.b16 %v154
  %v194 = vunpack.c.l.b16 %v155
  %v195 = vunpack.c.l.b16 %v156
  %v196 = vpack.c.b16 %v181, %v180
  %v197 = vpack.c.b16 %v183, %v182
  %v198 = vpack.c.b16 %v185, %v184
  %v199 = vpack.c.b16 %v187, %v186
  %v200 = vpack.c.b16 %v189, %v188
  %v201 = vpack.c.b16 %v191, %v190
  %v202 = vpack.c.b16 %v193, %v192
  %v203 = vpack.c.b16 %v195, %v194
  %212 = vmatprep.subr.bf16.mxu0 0
  %213 = vmatpush1.bf16.msra.mxu0 %v196
  %214 = vmatprep.subr.bf16.mxu0 0
  %215 = vmatpush1.bf16.msra.mxu0 %v197
  %216 = vmatprep.subr.bf16.mxu0 0
  %217 = vmatpush1.bf16.msra.mxu0 %v198
  %218 = vmatprep.subr.bf16.mxu0 0
  %219 = vmatpush1.bf16.msra.mxu0 %v199
  %220 = vmatprep.subr.bf16.mxu0 0
  %221 = vmatpush1.bf16.msra.mxu0 %v200
  %222 = vmatprep.subr.bf16.mxu0 0
  %223 = vmatpush1.bf16.msra.mxu0 %v201
  %224 = vmatprep.subr.bf16.mxu0 0
  %225 = vmatpush1.bf16.msra.mxu0 %v202
  %226 = vmatprep.subr.bf16.mxu0 0
  %227 = vmatpush1.bf16.msra.mxu0 %v203
  %228 = vmatprep.subr.bf16.mxu0 0
  %229 = vmatpush1.bf16.msra.mxu0 0
  %230 = vmatprep.subr.bf16.mxu0 0
  %231 = vmatpush1.bf16.msra.mxu0 0
  %232 = vmatprep.subr.bf16.mxu0 0
  %233 = vmatpush1.bf16.msra.mxu0 0
  %234 = vmatprep.subr.bf16.mxu0 0
  %235 = vmatpush1.bf16.msra.mxu0 0
  %236 = vmatprep.subr.bf16.mxu0 0
  %237 = vmatpush1.bf16.msra.mxu0 0
  %238 = vmatprep.subr.bf16.mxu0 0
  %239 = vmatpush1.bf16.msra.mxu0 0
  %240 = vmatprep.subr.bf16.mxu0 0
  %241 = vmatpush1.bf16.msra.mxu0 0
  %242 = vmatprep.subr.bf16.mxu0 0
  %243 = vmatpush1.bf16.msra.mxu0 0
  %244 = vmatprep.mubr.bf16.mxu0 0
  %245 = vmatmul.mubr.bf16.gmra.mrb[0].mxu0 %v69
  %v246 = vpop.f32.mrb[0].mxu0
  %v247 = vadd.f32 %v162, %v246
  %v248 = vpop.f32.mrb[0].mxu0
  %v249 = vpop.f32.mrb[0].mxu0
  %v250 = vadd.f32 %v162, %v249
  %v251 = vpop.f32.mrb[0].mxu0
  %252 = vdwg.mxu0
  %v253 = vpack.c.bf16 %v250, %v247
  %v255 = vunpack.c.l.b16 %v253
  %v256 = vunpack.c.h.b16 %v253
  %v257 = vpack.c.b16 %v255, %v255
  %v258 = vpack.c.b16 %v256, %v256
  %vm261 = vcmask 257024
  %262 = vst.msk [vmem:[%s6] sm:$0xf] %vm261, %v257
  %263 = vst.msk [vmem:[%s6 + $0x4] sm:$0xf] %vm261, %v258
  %s264 = scalar_lea.vmem %s1, 16
  %v265 = vld [vmem:[%s264] sm:$0xf]
  %v266 = vld [vmem:[%s264 + $0x4] sm:$0xf]
  %v267 = vld [vmem:[%s264 + $0x8] sm:$0xf]
  %v268 = vld [vmem:[%s264 + $0xc] sm:$0xf]
  %s269 = scalar_lea.vmem %s2, 32
  %v270 = vld [vmem:[%s269] sm:$0xff]
  %v271 = vld [vmem:[%s269 + $0x8] sm:$0xff]
  %v272 = vld [vmem:[%s269 + $0x10] sm:$0xff]
  %v273 = vld [vmem:[%s269 + $0x18] sm:$0xff]
  %275 = vset.pattern.permute.xlu0 0
  %276 = vperm.xlu0 %275, %v270
  %v277 = vpop.permute.xlu0 %276
  %280 = vset.pattern.permute.xlu0 0
  %281 = vperm.xlu0 %280, %v271
  %v282 = vpop.permute.xlu0 %281
  %285 = vset.pattern.permute.xlu0 0
  %286 = vperm.xlu0 %285, %v272
  %v287 = vpop.permute.xlu0 %286
  %290 = vset.pattern.permute.xlu0 0
  %291 = vperm.xlu0 %290, %v273
  %v292 = vpop.permute.xlu0 %291
  %v298 = vunpack.c.l.b16 %v265
  %v299 = vunpack.c.l.b16 %v266
  %v300 = vunpack.c.l.b16 %v267
  %v301 = vunpack.c.l.b16 %v268
  %v302 = vpack.c.b16 %v299, %v298
  %v303 = vpack.c.b16 %v301, %v300
  %306 = vmatprep.subr.bf16.mxu0 0
  %307 = vmatpush1.bf16.xpose.msra.mxu0 %v69
  %308 = vmatprep.subr.bf16.mxu0 0
  %309 = vmatpush1.bf16.xpose.msra.mxu0 0
  %310 = vmatprep.subr.bf16.mxu0 0
  %311 = vmatpush1.bf16.xpose.msra.mxu0 0
  %312 = vmatprep.subr.bf16.mxu0 0
  %313 = vmatpush1.bf16.xpose.msra.mxu0 0
  %314 = vmatprep.subr.bf16.mxu0 0
  %315 = vmatpush1.bf16.xpose.msra.mxu0 0
  %316 = vmatprep.subr.bf16.mxu0 0
  %317 = vmatpush1.bf16.xpose.msra.mxu0 0
  %318 = vmatprep.subr.bf16.mxu0 0
  %319 = vmatpush1.bf16.xpose.msra.mxu0 0
  %320 = vmatprep.subr.bf16.mxu0 0
  %321 = vmatpush1.bf16.xpose.msra.mxu0 0
  %322 = vmatprep.subr.bf16.mxu0 0
  %323 = vmatpush1.bf16.xpose.msra.mxu0 0
  %324 = vmatprep.subr.bf16.mxu0 0
  %325 = vmatpush1.bf16.xpose.msra.mxu0 0
  %326 = vmatprep.subr.bf16.mxu0 0
  %327 = vmatpush1.bf16.xpose.msra.mxu0 0
  %328 = vmatprep.subr.bf16.mxu0 0
  %329 = vmatpush1.bf16.xpose.msra.mxu0 0
  %330 = vmatprep.subr.bf16.mxu0 0
  %331 = vmatpush1.bf16.xpose.msra.mxu0 0
  %332 = vmatprep.subr.bf16.mxu0 0
  %333 = vmatpush1.bf16.xpose.msra.mxu0 0
  %334 = vmatprep.subr.bf16.mxu0 0
  %335 = vmatpush1.bf16.xpose.msra.mxu0 0
  %336 = vmatprep.subr.bf16.mxu0 0
  %337 = vmatpush1.bf16.xpose.msra.mxu0 0
  %338 = vmatprep.mubr.bf16.mxu0 0
  %339 = vmatmul.mubr.bf16.gmra.mrb[0].mxu0 %v302
  %v340 = vpop.f32.mrb[0].mxu0
  %v341 = vadd.f32 %v277, %v340
  %v342 = vpop.f32.mrb[0].mxu0
  %v343 = vpop.f32.mrb[0].mxu0
  %v344 = vadd.f32 %v282, %v343
  %v345 = vpop.f32.mrb[0].mxu0
  %346 = vmatprep.mubr.bf16.mxu0 0
  %347 = vmatmul.mubr.bf16.gmra.mrb[0].mxu0 %v303
  %v348 = vpop.f32.mrb[0].mxu0
  %v349 = vadd.f32 %v287, %v348
  %v350 = vpop.f32.mrb[0].mxu0
  %v351 = vpop.f32.mrb[0].mxu0
  %v352 = vadd.f32 %v292, %v351
  %v353 = vpop.f32.mrb[0].mxu0
  %354 = vdwg.mxu0
  %v355 = vpack.c.bf16 %v344, %v341
  %v356 = vpack.c.bf16 %v352, %v349
  %v359 = vunpack.c.l.b16 %v355
  %v360 = vunpack.c.h.b16 %v355
  %v361 = vunpack.c.l.b16 %v356
  %v362 = vunpack.c.h.b16 %v356
  %v363 = vpack.c.b16 %v359, %v359
  %v364 = vpack.c.b16 %v360, %v360
  %v365 = vpack.c.b16 %v361, %v361
  %v366 = vpack.c.b16 %v362, %v362
  %s371 = scalar_lea.vmem %s5, 16
  %372 = vst.msk [vmem:[%s371] sm:$0xf] %vm136, %v363
  %373 = vst.msk [vmem:[%s371 + $0x4] sm:$0xf] %vm136, %v364
  %374 = vst.msk [vmem:[%s371 + $0x8] sm:$0xf] %vm136, %v365
  %375 = vst.msk [vmem:[%s371 + $0xc] sm:$0xf] %vm136, %v366
  %s376 = scalar_lea.vmem %s3, 64
  %v377 = vld [vmem:[%s376] sm:$0xf]
  %v378 = vld [vmem:[%s376 + $0x4] sm:$0xf]
  %v379 = vld [vmem:[%s376 + $0x8] sm:$0xf]
  %v380 = vld [vmem:[%s376 + $0xc] sm:$0xf]
  %v381 = vld [vmem:[%s376 + $0x10] sm:$0xf]
  %v382 = vld [vmem:[%s376 + $0x14] sm:$0xf]
  %v383 = vld [vmem:[%s376 + $0x18] sm:$0xf]
  %v384 = vld [vmem:[%s376 + $0x1c] sm:$0xf]
  %v385 = vld [vmem:[%s376 + $0x20] sm:$0xf]
  %v386 = vld [vmem:[%s376 + $0x24] sm:$0xf]
  %v387 = vld [vmem:[%s376 + $0x28] sm:$0xf]
  %v388 = vld [vmem:[%s376 + $0x2c] sm:$0xf]
  %v389 = vld [vmem:[%s376 + $0x30] sm:$0xf]
  %v390 = vld [vmem:[%s376 + $0x34] sm:$0xf]
  %v391 = vld [vmem:[%s376 + $0x38] sm:$0xf]
  %v392 = vld [vmem:[%s376 + $0x3c] sm:$0xf]
  %s393 = scalar_lea.vmem %s4, 1
  %v394 = vld [vmem:[%s393] sm:$0x1]
  %v396 = vlaneseq
  %v397 = vshrl.u32 %v396, 7
  %v398 = vsub.s32 0, %v397
  %v399 = vrot.slane %v394, %v398
  %v417 = vunpack.c.l.b16 %v377
  %v418 = vunpack.c.l.b16 %v378
  %v419 = vunpack.c.l.b16 %v379
  %v420 = vunpack.c.l.b16 %v380
  %v421 = vunpack.c.l.b16 %v381
  %v422 = vunpack.c.l.b16 %v382
  %v423 = vunpack.c.l.b16 %v383
  %v424 = vunpack.c.l.b16 %v384
  %v425 = vunpack.c.l.b16 %v385
  %v426 = vunpack.c.l.b16 %v386
  %v427 = vunpack.c.l.b16 %v387
  %v428 = vunpack.c.l.b16 %v388
  %v429 = vunpack.c.l.b16 %v389
  %v430 = vunpack.c.l.b16 %v390
  %v431 = vunpack.c.l.b16 %v391
  %v432 = vunpack.c.l.b16 %v392
  %v433 = vpack.c.b16 %v418, %v417
  %v434 = vpack.c.b16 %v420, %v419
  %v435 = vpack.c.b16 %v422, %v421
  %v436 = vpack.c.b16 %v424, %v423
  %v437 = vpack.c.b16 %v426, %v425
  %v438 = vpack.c.b16 %v428, %v427
  %v439 = vpack.c.b16 %v430, %v429
  %v440 = vpack.c.b16 %v432, %v431
  %449 = vmatprep.subr.bf16.mxu0 0
  %450 = vmatpush1.bf16.msra.mxu0 %v433
  %451 = vmatprep.subr.bf16.mxu0 0
  %452 = vmatpush1.bf16.msra.mxu0 %v434
  %453 = vmatprep.subr.bf16.mxu0 0
  %454 = vmatpush1.bf16.msra.mxu0 %v435
  %455 = vmatprep.subr.bf16.mxu0 0
  %456 = vmatpush1.bf16.msra.mxu0 %v436
  %457 = vmatprep.subr.bf16.mxu0 0
  %458 = vmatpush1.bf16.msra.mxu0 %v437
  %459 = vmatprep.subr.bf16.mxu0 0
  %460 = vmatpush1.bf16.msra.mxu0 %v438
  %461 = vmatprep.subr.bf16.mxu0 0
  %462 = vmatpush1.bf16.msra.mxu0 %v439
  %463 = vmatprep.subr.bf16.mxu0 0
  %464 = vmatpush1.bf16.msra.mxu0 %v440
  %465 = vmatprep.subr.bf16.mxu0 0
  %466 = vmatpush1.bf16.msra.mxu0 0
  %467 = vmatprep.subr.bf16.mxu0 0
  %468 = vmatpush1.bf16.msra.mxu0 0
  %469 = vmatprep.subr.bf16.mxu0 0
  %470 = vmatpush1.bf16.msra.mxu0 0
  %471 = vmatprep.subr.bf16.mxu0 0
  %472 = vmatpush1.bf16.msra.mxu0 0
  %473 = vmatprep.subr.bf16.mxu0 0
  %474 = vmatpush1.bf16.msra.mxu0 0
  %475 = vmatprep.subr.bf16.mxu0 0
  %476 = vmatpush1.bf16.msra.mxu0 0
  %477 = vmatprep.subr.bf16.mxu0 0
  %478 = vmatpush1.bf16.msra.mxu0 0
  %479 = vmatprep.subr.bf16.mxu0 0
  %480 = vmatpush1.bf16.msra.mxu0 0
  %481 = vmatprep.mubr.bf16.mxu0 0
  %482 = vmatmul.mubr.bf16.gmra.mrb[0].mxu0 %v69
  %v483 = vpop.f32.mrb[0].mxu0
  %v484 = vadd.f32 %v399, %v483
  %v485 = vpop.f32.mrb[0].mxu0
  %v486 = vpop.f32.mrb[0].mxu0
  %v487 = vadd.f32 %v399, %v486
  %v488 = vpop.f32.mrb[0].mxu0
  %489 = vdwg.mxu0
  %v490 = vpack.c.bf16 %v487, %v484
  %v492 = vunpack.c.l.b16 %v490
  %v493 = vunpack.c.h.b16 %v490
  %v494 = vpack.c.b16 %v492, %v492
  %v495 = vpack.c.b16 %v493, %v493
  %s498 = scalar_lea.vmem %s6, 8
  %499 = vst.msk [vmem:[%s498] sm:$0xf] %vm261, %v494
  %500 = vst.msk [vmem:[%s498 + $0x4] sm:$0xf] %vm261, %v495
  %s501 = scalar_lea.vmem %s1, 32
  %v502 = vld [vmem:[%s501] sm:$0xf]
  %v503 = vld [vmem:[%s501 + $0x4] sm:$0xf]
  %v504 = vld [vmem:[%s501 + $0x8] sm:$0xf]
  %v505 = vld [vmem:[%s501 + $0xc] sm:$0xf]
  %s506 = scalar_lea.vmem %s2, 64
  %v507 = vld [vmem:[%s506] sm:$0xff]
  %v508 = vld [vmem:[%s506 + $0x8] sm:$0xff]
  %v509 = vld [vmem:[%s506 + $0x10] sm:$0xff]
  %v510 = vld [vmem:[%s506 + $0x18] sm:$0xff]
  %512 = vset.pattern.permute.xlu0 0
  %513 = vperm.xlu0 %512, %v507
  %v514 = vpop.permute.xlu0 %513
  %517 = vset.pattern.permute.xlu0 0
  %518 = vperm.xlu0 %517, %v508
  %v519 = vpop.permute.xlu0 %518
  %522 = vset.pattern.permute.xlu0 0
  %523 = vperm.xlu0 %522, %v509
  %v524 = vpop.permute.xlu0 %523
  %527 = vset.pattern.permute.xlu0 0
  %528 = vperm.xlu0 %527, %v510
  %v529 = vpop.permute.xlu0 %528
  %v535 = vunpack.c.l.b16 %v502
  %v536 = vunpack.c.l.b16 %v503
  %v537 = vunpack.c.l.b16 %v504
  %v538 = vunpack.c.l.b16 %v505
  %v539 = vpack.c.b16 %v536, %v535
  %v540 = vpack.c.b16 %v538, %v537
  %543 = vmatprep.subr.bf16.mxu0 0
  %544 = vmatpush1.bf16.xpose.msra.mxu0 %v69
  %545 = vmatprep.subr.bf16.mxu0 0
  %546 = vmatpush1.bf16.xpose.msra.mxu0 0
  %547 = vmatprep.subr.bf16.mxu0 0
  %548 = vmatpush1.bf16.xpose.msra.mxu0 0
  %549 = vmatprep.subr.bf16.mxu0 0
  %550 = vmatpush1.bf16.xpose.msra.mxu0 0
  %551 = vmatprep.subr.bf16.mxu0 0
  %552 = vmatpush1.bf16.xpose.msra.mxu0 0
  %553 = vmatprep.subr.bf16.mxu0 0
  %554 = vmatpush1.bf16.xpose.msra.mxu0 0
  %555 = vmatprep.subr.bf16.mxu0 0
  %556 = vmatpush1.bf16.xpose.msra.mxu0 0
  %557 = vmatprep.subr.bf16.mxu0 0
  %558 = vmatpush1.bf16.xpose.msra.mxu0 0
  %559 = vmatprep.subr.bf16.mxu0 0
  %560 = vmatpush1.bf16.xpose.msra.mxu0 0
  %561 = vmatprep.subr.bf16.mxu0 0
  %562 = vmatpush1.bf16.xpose.msra.mxu0 0
  %563 = vmatprep.subr.bf16.mxu0 0
  %564 = vmatpush1.bf16.xpose.msra.mxu0 0
  %565 = vmatprep.subr.bf16.mxu0 0
  %566 = vmatpush1.bf16.xpose.msra.mxu0 0
  %567 = vmatprep.subr.bf16.mxu0 0
  %568 = vmatpush1.bf16.xpose.msra.mxu0 0
  %569 = vmatprep.subr.bf16.mxu0 0
  %570 = vmatpush1.bf16.xpose.msra.mxu0 0
  %571 = vmatprep.subr.bf16.mxu0 0
  %572 = vmatpush1.bf16.xpose.msra.mxu0 0
  %573 = vmatprep.subr.bf16.mxu0 0
  %574 = vmatpush1.bf16.xpose.msra.mxu0 0
  %575 = vmatprep.mubr.bf16.mxu0 0
  %576 = vmatmul.mubr.bf16.gmra.mrb[0].mxu0 %v539
  %v577 = vpop.f32.mrb[0].mxu0
  %v578 = vadd.f32 %v514, %v577
  %v579 = vpop.f32.mrb[0].mxu0
  %v580 = vpop.f32.mrb[0].mxu0
  %v581 = vadd.f32 %v519, %v580
  %v582 = vpop.f32.mrb[0].mxu0
  %583 = vmatprep.mubr.bf16.mxu0 0
  %584 = vmatmul.mubr.bf16.gmra.mrb[0].mxu0 %v540
  %v585 = vpop.f32.mrb[0].mxu0
  %v586 = vadd.f32 %v524, %v585
  %v587 = vpop.f32.mrb[0].mxu0
  %v588 = vpop.f32.mrb[0].mxu0
  %v589 = vadd.f32 %v529, %v588
  %v590 = vpop.f32.mrb[0].mxu0
  %591 = vdwg.mxu0
  %v592 = vpack.c.bf16 %v581, %v578
  %v593 = vpack.c.bf16 %v589, %v586
  %v596 = vunpack.c.l.b16 %v592
  %v597 = vunpack.c.h.b16 %v592
  %v598 = vunpack.c.l.b16 %v593
  %v599 = vunpack.c.h.b16 %v593
  %v600 = vpack.c.b16 %v596, %v596
  %v601 = vpack.c.b16 %v597, %v597
  %v602 = vpack.c.b16 %v598, %v598
  %v603 = vpack.c.b16 %v599, %v599
  %s608 = scalar_lea.vmem %s5, 32
  %609 = vst.msk [vmem:[%s608] sm:$0xf] %vm136, %v600
  %610 = vst.msk [vmem:[%s608 + $0x4] sm:$0xf] %vm136, %v601
  %611 = vst.msk [vmem:[%s608 + $0x8] sm:$0xf] %vm136, %v602
  %612 = vst.msk [vmem:[%s608 + $0xc] sm:$0xf] %vm136, %v603
  %s613 = scalar_lea.vmem %s3, 128
  %v614 = vld [vmem:[%s613] sm:$0xf]
  %v615 = vld [vmem:[%s613 + $0x4] sm:$0xf]
  %v616 = vld [vmem:[%s613 + $0x8] sm:$0xf]
  %v617 = vld [vmem:[%s613 + $0xc] sm:$0xf]
  %v618 = vld [vmem:[%s613 + $0x10] sm:$0xf]
  %v619 = vld [vmem:[%s613 + $0x14] sm:$0xf]
  %v620 = vld [vmem:[%s613 + $0x18] sm:$0xf]
  %v621 = vld [vmem:[%s613 + $0x1c] sm:$0xf]
  %v622 = vld [vmem:[%s613 + $0x20] sm:$0xf]
  %v623 = vld [vmem:[%s613 + $0x24] sm:$0xf]
  %v624 = vld [vmem:[%s613 + $0x28] sm:$0xf]
  %v625 = vld [vmem:[%s613 + $0x2c] sm:$0xf]
  %v626 = vld [vmem:[%s613 + $0x30] sm:$0xf]
  %v627 = vld [vmem:[%s613 + $0x34] sm:$0xf]
  %v628 = vld [vmem:[%s613 + $0x38] sm:$0xf]
  %v629 = vld [vmem:[%s613 + $0x3c] sm:$0xf]
  %s630 = scalar_lea.vmem %s4, 2
  %v631 = vld [vmem:[%s630] sm:$0x1]
  %v633 = vlaneseq
  %v634 = vshrl.u32 %v633, 7
  %v635 = vsub.s32 0, %v634
  %v636 = vrot.slane %v631, %v635
  %v654 = vunpack.c.l.b16 %v614
  %v655 = vunpack.c.l.b16 %v615
  %v656 = vunpack.c.l.b16 %v616
  %v657 = vunpack.c.l.b16 %v617
  %v658 = vunpack.c.l.b16 %v618
  %v659 = vunpack.c.l.b16 %v619
  %v660 = vunpack.c.l.b16 %v620
  %v661 = vunpack.c.l.b16 %v621
  %v662 = vunpack.c.l.b16 %v622
  %v663 = vunpack.c.l.b16 %v623
  %v664 = vunpack.c.l.b16 %v624
  %v665 = vunpack.c.l.b16 %v625
  %v666 = vunpack.c.l.b16 %v626
  %v667 = vunpack.c.l.b16 %v627
  %v668 = vunpack.c.l.b16 %v628
  %v669 = vunpack.c.l.b16 %v629
  %v670 = vpack.c.b16 %v655, %v654
  %v671 = vpack.c.b16 %v657, %v656
  %v672 = vpack.c.b16 %v659, %v658
  %v673 = vpack.c.b16 %v661, %v660
  %v674 = vpack.c.b16 %v663, %v662
  %v675 = vpack.c.b16 %v665, %v664
  %v676 = vpack.c.b16 %v667, %v666
  %v677 = vpack.c.b16 %v669, %v668
  %686 = vmatprep.subr.bf16.mxu0 0
  %687 = vmatpush1.bf16.msra.mxu0 %v670
  %688 = vmatprep.subr.bf16.mxu0 0
  %689 = vmatpush1.bf16.msra.mxu0 %v671
  %690 = vmatprep.subr.bf16.mxu0 0
  %691 = vmatpush1.bf16.msra.mxu0 %v672
  %692 = vmatprep.subr.bf16.mxu0 0
  %693 = vmatpush1.bf16.msra.mxu0 %v673
  %694 = vmatprep.subr.bf16.mxu0 0
  %695 = vmatpush1.bf16.msra.mxu0 %v674
  %696 = vmatprep.subr.bf16.mxu0 0
  %697 = vmatpush1.bf16.msra.mxu0 %v675
  %698 = vmatprep.subr.bf16.mxu0 0
  %699 = vmatpush1.bf16.msra.mxu0 %v676
  %700 = vmatprep.subr.bf16.mxu0 0
  %701 = vmatpush1.bf16.msra.mxu0 %v677
  %702 = vmatprep.subr.bf16.mxu0 0
  %703 = vmatpush1.bf16.msra.mxu0 0
  %704 = vmatprep.subr.bf16.mxu0 0
  %705 = vmatpush1.bf16.msra.mxu0 0
  %706 = vmatprep.subr.bf16.mxu0 0
  %707 = vmatpush1.bf16.msra.mxu0 0
  %708 = vmatprep.subr.bf16.mxu0 0
  %709 = vmatpush1.bf16.msra.mxu0 0
  %710 = vmatprep.subr.bf16.mxu0 0
  %711 = vmatpush1.bf16.msra.mxu0 0
  %712 = vmatprep.subr.bf16.mxu0 0
  %713 = vmatpush1.bf16.msra.mxu0 0
  %714 = vmatprep.subr.bf16.mxu0 0
  %715 = vmatpush1.bf16.msra.mxu0 0
  %716 = vmatprep.subr.bf16.mxu0 0
  %717 = vmatpush1.bf16.msra.mxu0 0
  %718 = vmatprep.mubr.bf16.mxu0 0
  %719 = vmatmul.mubr.bf16.gmra.mrb[0].mxu0 %v69
  %v720 = vpop.f32.mrb[0].mxu0
  %v721 = vadd.f32 %v636, %v720
  %v722 = vpop.f32.mrb[0].mxu0
  %v723 = vpop.f32.mrb[0].mxu0
  %v724 = vadd.f32 %v636, %v723
  %v725 = vpop.f32.mrb[0].mxu0
  %726 = vdwg.mxu0
  %v727 = vpack.c.bf16 %v724, %v721
  %v729 = vunpack.c.l.b16 %v727
  %v730 = vunpack.c.h.b16 %v727
  %v731 = vpack.c.b16 %v729, %v729
  %v732 = vpack.c.b16 %v730, %v730
  %s735 = scalar_lea.vmem %s6, 16
  %736 = vst.msk [vmem:[%s735] sm:$0xf] %vm261, %v731
  %737 = vst.msk [vmem:[%s735 + $0x4] sm:$0xf] %vm261, %v732
  %s738 = scalar_lea.vmem %s1, 48
  %v739 = vld [vmem:[%s738] sm:$0xf]
  %v740 = vld [vmem:[%s738 + $0x4] sm:$0xf]
  %v741 = vld [vmem:[%s738 + $0x8] sm:$0xf]
  %v742 = vld [vmem:[%s738 + $0xc] sm:$0xf]
  %s743 = scalar_lea.vmem %s2, 96
  %v744 = vld [vmem:[%s743] sm:$0xff]
  %v745 = vld [vmem:[%s743 + $0x8] sm:$0xff]
  %v746 = vld [vmem:[%s743 + $0x10] sm:$0xff]
  %v747 = vld [vmem:[%s743 + $0x18] sm:$0xff]
  %749 = vset.pattern.permute.xlu0 0
  %750 = vperm.xlu0 %749, %v744
  %v751 = vpop.permute.xlu0 %750
  %754 = vset.pattern.permute.xlu0 0
  %755 = vperm.xlu0 %754, %v745
  %v756 = vpop.permute.xlu0 %755
  %759 = vset.pattern.permute.xlu0 0
  %760 = vperm.xlu0 %759, %v746
  %v761 = vpop.permute.xlu0 %760
  %764 = vset.pattern.permute.xlu0 0
  %765 = vperm.xlu0 %764, %v747
  %v766 = vpop.permute.xlu0 %765
  %v772 = vunpack.c.l.b16 %v739
  %v773 = vunpack.c.l.b16 %v740
  %v774 = vunpack.c.l.b16 %v741
  %v775 = vunpack.c.l.b16 %v742
  %v776 = vpack.c.b16 %v773, %v772
  %v777 = vpack.c.b16 %v775, %v774
  %780 = vmatprep.subr.bf16.mxu0 0
  %781 = vmatpush1.bf16.xpose.msra.mxu0 %v69
  %782 = vmatprep.subr.bf16.mxu0 0
  %783 = vmatpush1.bf16.xpose.msra.mxu0 0
  %784 = vmatprep.subr.bf16.mxu0 0
  %785 = vmatpush1.bf16.xpose.msra.mxu0 0
  %786 = vmatprep.subr.bf16.mxu0 0
  %787 = vmatpush1.bf16.xpose.msra.mxu0 0
  %788 = vmatprep.subr.bf16.mxu0 0
  %789 = vmatpush1.bf16.xpose.msra.mxu0 0
  %790 = vmatprep.subr.bf16.mxu0 0
  %791 = vmatpush1.bf16.xpose.msra.mxu0 0
  %792 = vmatprep.subr.bf16.mxu0 0
  %793 = vmatpush1.bf16.xpose.msra.mxu0 0
  %794 = vmatprep.subr.bf16.mxu0 0
  %795 = vmatpush1.bf16.xpose.msra.mxu0 0
  %796 = vmatprep.subr.bf16.mxu0 0
  %797 = vmatpush1.bf16.xpose.msra.mxu0 0
  %798 = vmatprep.subr.bf16.mxu0 0
  %799 = vmatpush1.bf16.xpose.msra.mxu0 0
  %800 = vmatprep.subr.bf16.mxu0 0
  %801 = vmatpush1.bf16.xpose.msra.mxu0 0
  %802 = vmatprep.subr.bf16.mxu0 0
  %803 = vmatpush1.bf16.xpose.msra.mxu0 0
  %804 = vmatprep.subr.bf16.mxu0 0
  %805 = vmatpush1.bf16.xpose.msra.mxu0 0
  %806 = vmatprep.subr.bf16.mxu0 0
  %807 = vmatpush1.bf16.xpose.msra.mxu0 0
  %808 = vmatprep.subr.bf16.mxu0 0
  %809 = vmatpush1.bf16.xpose.msra.mxu0 0
  %810 = vmatprep.subr.bf16.mxu0 0
  %811 = vmatpush1.bf16.xpose.msra.mxu0 0
  %812 = vmatprep.mubr.bf16.mxu0 0
  %813 = vmatmul.mubr.bf16.gmra.mrb[0].mxu0 %v776
  %v814 = vpop.f32.mrb[0].mxu0
  %v815 = vadd.f32 %v751, %v814
  %v816 = vpop.f32.mrb[0].mxu0
  %v817 = vpop.f32.mrb[0].mxu0
  %v818 = vadd.f32 %v756, %v817
  %v819 = vpop.f32.mrb[0].mxu0
  %820 = vmatprep.mubr.bf16.mxu0 0
  %821 = vmatmul.mubr.bf16.gmra.mrb[0].mxu0 %v777
  %v822 = vpop.f32.mrb[0].mxu0
  %v823 = vadd.f32 %v761, %v822
  %v824 = vpop.f32.mrb[0].mxu0
  %v825 = vpop.f32.mrb[0].mxu0
  %v826 = vadd.f32 %v766, %v825
  %v827 = vpop.f32.mrb[0].mxu0
  %828 = vdwg.mxu0
  %v829 = vpack.c.bf16 %v818, %v815
  %v830 = vpack.c.bf16 %v826, %v823
  %v833 = vunpack.c.l.b16 %v829
  %v834 = vunpack.c.h.b16 %v829
  %v835 = vunpack.c.l.b16 %v830
  %v836 = vunpack.c.h.b16 %v830
  %v837 = vpack.c.b16 %v833, %v833
  %v838 = vpack.c.b16 %v834, %v834
  %v839 = vpack.c.b16 %v835, %v835
  %v840 = vpack.c.b16 %v836, %v836
  %s845 = scalar_lea.vmem %s5, 48
  %846 = vst.msk [vmem:[%s845] sm:$0xf] %vm136, %v837
  %847 = vst.msk [vmem:[%s845 + $0x4] sm:$0xf] %vm136, %v838
  %848 = vst.msk [vmem:[%s845 + $0x8] sm:$0xf] %vm136, %v839
  %849 = vst.msk [vmem:[%s845 + $0xc] sm:$0xf] %vm136, %v840
  %s850 = scalar_lea.vmem %s3, 192
  %v851 = vld [vmem:[%s850] sm:$0xf]
  %v852 = vld [vmem:[%s850 + $0x4] sm:$0xf]
  %v853 = vld [vmem:[%s850 + $0x8] sm:$0xf]
  %v854 = vld [vmem:[%s850 + $0xc] sm:$0xf]
  %v855 = vld [vmem:[%s850 + $0x10] sm:$0xf]
  %v856 = vld [vmem:[%s850 + $0x14] sm:$0xf]
  %v857 = vld [vmem:[%s850 + $0x18] sm:$0xf]
  %v858 = vld [vmem:[%s850 + $0x1c] sm:$0xf]
  %v859 = vld [vmem:[%s850 + $0x20] sm:$0xf]
  %v860 = vld [vmem:[%s850 + $0x24] sm:$0xf]
  %v861 = vld [vmem:[%s850 + $0x28] sm:$0xf]
  %v862 = vld [vmem:[%s850 + $0x2c] sm:$0xf]
  %v863 = vld [vmem:[%s850 + $0x30] sm:$0xf]
  %v864 = vld [vmem:[%s850 + $0x34] sm:$0xf]
  %v865 = vld [vmem:[%s850 + $0x38] sm:$0xf]
  %v866 = vld [vmem:[%s850 + $0x3c] sm:$0xf]
  %s867 = scalar_lea.vmem %s4, 3
  %v868 = vld [vmem:[%s867] sm:$0x1]
  %v870 = vlaneseq
  %v871 = vshrl.u32 %v870, 7
  %v872 = vsub.s32 0, %v871
  %v873 = vrot.slane %v868, %v872
  %v891 = vunpack.c.l.b16 %v851
  %v892 = vunpack.c.l.b16 %v852
  %v893 = vunpack.c.l.b16 %v853
  %v894 = vunpack.c.l.b16 %v854
  %v895 = vunpack.c.l.b16 %v855
  %v896 = vunpack.c.l.b16 %v856
  %v897 = vunpack.c.l.b16 %v857
  %v898 = vunpack.c.l.b16 %v858
  %v899 = vunpack.c.l.b16 %v859
  %v900 = vunpack.c.l.b16 %v860
  %v901 = vunpack.c.l.b16 %v861
  %v902 = vunpack.c.l.b16 %v862
  %v903 = vunpack.c.l.b16 %v863
  %v904 = vunpack.c.l.b16 %v864
  %v905 = vunpack.c.l.b16 %v865
  %v906 = vunpack.c.l.b16 %v866
  %v907 = vpack.c.b16 %v892, %v891
  %v908 = vpack.c.b16 %v894, %v893
  %v909 = vpack.c.b16 %v896, %v895
  %v910 = vpack.c.b16 %v898, %v897
  %v911 = vpack.c.b16 %v900, %v899
  %v912 = vpack.c.b16 %v902, %v901
  %v913 = vpack.c.b16 %v904, %v903
  %v914 = vpack.c.b16 %v906, %v905
  %923 = vmatprep.subr.bf16.mxu0 0
  %924 = vmatpush1.bf16.msra.mxu0 %v907
  %925 = vmatprep.subr.bf16.mxu0 0
  %926 = vmatpush1.bf16.msra.mxu0 %v908
  %927 = vmatprep.subr.bf16.mxu0 0
  %928 = vmatpush1.bf16.msra.mxu0 %v909
  %929 = vmatprep.subr.bf16.mxu0 0
  %930 = vmatpush1.bf16.msra.mxu0 %v910
  %931 = vmatprep.subr.bf16.mxu0 0
  %932 = vmatpush1.bf16.msra.mxu0 %v911
  %933 = vmatprep.subr.bf16.mxu0 0
  %934 = vmatpush1.bf16.msra.mxu0 %v912
  %935 = vmatprep.subr.bf16.mxu0 0
  %936 = vmatpush1.bf16.msra.mxu0 %v913
  %937 = vmatprep.subr.bf16.mxu0 0
  %938 = vmatpush1.bf16.msra.mxu0 %v914
  %939 = vmatprep.subr.bf16.mxu0 0
  %940 = vmatpush1.bf16.msra.mxu0 0
  %941 = vmatprep.subr.bf16.mxu0 0
  %942 = vmatpush1.bf16.msra.mxu0 0
  %943 = vmatprep.subr.bf16.mxu0 0
  %944 = vmatpush1.bf16.msra.mxu0 0
  %945 = vmatprep.subr.bf16.mxu0 0
  %946 = vmatpush1.bf16.msra.mxu0 0
  %947 = vmatprep.subr.bf16.mxu0 0
  %948 = vmatpush1.bf16.msra.mxu0 0
  %949 = vmatprep.subr.bf16.mxu0 0
  %950 = vmatpush1.bf16.msra.mxu0 0
  %951 = vmatprep.subr.bf16.mxu0 0
  %952 = vmatpush1.bf16.msra.mxu0 0
  %953 = vmatprep.subr.bf16.mxu0 0
  %954 = vmatpush1.bf16.msra.mxu0 0
  %955 = vmatprep.mubr.bf16.mxu0 0
  %956 = vmatmul.mubr.bf16.gmra.mrb[0].mxu0 %v69
  %v957 = vpop.f32.mrb[0].mxu0
  %v958 = vadd.f32 %v873, %v957
  %v959 = vpop.f32.mrb[0].mxu0
  %v960 = vpop.f32.mrb[0].mxu0
  %v961 = vadd.f32 %v873, %v960
  %v962 = vpop.f32.mrb[0].mxu0
  %963 = vdwg.mxu0
  %v964 = vpack.c.bf16 %v961, %v958
  %v966 = vunpack.c.l.b16 %v964
  %v967 = vunpack.c.h.b16 %v964
  %v968 = vpack.c.b16 %v966, %v966
  %v969 = vpack.c.b16 %v967, %v967
  %s972 = scalar_lea.vmem %s6, 24
  %973 = vst.msk [vmem:[%s972] sm:$0xf] %vm261, %v968
  %974 = vst.msk [vmem:[%s972 + $0x4] sm:$0xf] %vm261, %v969
  // Predicated region
  $region22: #{deepgt_forward.9} parent=0 // pred_check
    _
  $region23: #{deepgt_forward.9} parent=0 // pred_check_branch
    %976 = sbr.rel (0) target = $region25
  $region24: #{deepgt_forward.9} parent=0 // pred_region
    _
  $region25: #{deepgt_forward.9} parent=0 // pred_fallthru
    _
  // Predicated region
  $region26: #{deepgt_forward.9} parent=0 // pred_check
    _
  $region27: #{deepgt_forward.9} parent=0 // pred_check_branch
    %978 = sbr.rel (0) target = $region29
  $region28: #{deepgt_forward.9} parent=0 // pred_region
    _
  $region29: #{deepgt_forward.9} parent=0 // pred_fallthru
    _
  // Predicated region
  $region30: #{deepgt_forward.9} parent=0 // pred_check
    _
  $region31: #{deepgt_forward.9} parent=0 // pred_check_branch
    %980 = sbr.rel (0) target = $region33
  $region32: #{deepgt_forward.9} parent=0 // pred_region
    _
  $region33: #{deepgt_forward.9} parent=0 // pred_fallthru
    _
  // Predicated region
  $region34: #{deepgt_forward.9} parent=0 // pred_check
    _
  $region35: #{deepgt_forward.9} parent=0 // pred_check_branch
    %982 = sbr.rel (0) target = $region37
  $region36: #{deepgt_forward.9} parent=0 // pred_region
    _
  $region37: #{deepgt_forward.9} parent=0 // pred_fallthru
    _

// kernel: deepgt_forward.11
$region0: #{deepgt_forward.11}
  #allocation0 [shape = 'u32[]', space=smem, size = 0x4, offset = 0x4, fixed_abs, tag = 'smem constant byte address 0x4 - core index']
  #allocation1 [shape = 'u32[144,128]{1,0:T(1,128)}', space=vmem, size = 0x12000, scoped, tag = 'internal scratch']
  %s0 = inlined_call_operand.vmem [shape: bf16[16,128], index: 0, kind: input, shape index: {}]
  %s1 = inlined_call_operand.vmem [shape: bf16[128,128], index: 1, kind: input, shape index: {}]
  %s2 = inlined_call_operand.vmem [shape: f32[1,128], index: 2, kind: input, shape index: {}]
  %s3 = inlined_call_operand.vmem [shape: f32[16,128], index: 3, kind: output, shape index: {}]
  %s4 = sld [smem:[#allocation0]]
  $region22: #{deepgt_forward.11} parent=0
    _
  %s6 = ssub.s32 1, %s4
  %s7 = scalar_select 0, %s6, %s4
  // Predicated region
  $region2: #{deepgt_forward.11} parent=0 // pred_check
    _
  $region3: #{deepgt_forward.11} parent=0 // pred_check_branch
    %9 = sbr.rel (0) target = $region5
  $region4: #{deepgt_forward.11} parent=0 // pred_region
    _
  $region5: #{deepgt_forward.11} parent=0 // pred_fallthru
    _
  // Predicated region
  $region6: #{deepgt_forward.11} parent=0 // pred_check
    _
  $region7: #{deepgt_forward.11} parent=0 // pred_check_branch
    %11 = sbr.rel (0) target = $region9
  $region8: #{deepgt_forward.11} parent=0 // pred_region
    _
  $region9: #{deepgt_forward.11} parent=0 // pred_fallthru
    _
  // Predicated region
  $region10: #{deepgt_forward.11} parent=0 // pred_check
    _
  $region11: #{deepgt_forward.11} parent=0 // pred_check_branch
    %13 = sbr.rel (0) target = $region13
  $region12: #{deepgt_forward.11} parent=0 // pred_region
    _
  $region13: #{deepgt_forward.11} parent=0 // pred_fallthru
    _
  %v15 = vld [vmem:[%s0] sm:$0xf]
  %v16 = vld [vmem:[%s0 + $0x4] sm:$0xf]
  %v17 = vld [vmem:[%s1] sm:$0xf]
  %v18 = vld [vmem:[%s1 + $0x4] sm:$0xf]
  %v19 = vld [vmem:[%s1 + $0x8] sm:$0xf]
  %v20 = vld [vmem:[%s1 + $0xc] sm:$0xf]
  %v21 = vld [vmem:[%s1 + $0x10] sm:$0xf]
  %v22 = vld [vmem:[%s1 + $0x14] sm:$0xf]
  %v23 = vld [vmem:[%s1 + $0x18] sm:$0xf]
  %v24 = vld [vmem:[%s1 + $0x1c] sm:$0xf]
  %v25 = vld [vmem:[%s1 + $0x20] sm:$0xf]
  %v26 = vld [vmem:[%s1 + $0x24] sm:$0xf]
  %v27 = vld [vmem:[%s1 + $0x28] sm:$0xf]
  %v28 = vld [vmem:[%s1 + $0x2c] sm:$0xf]
  %v29 = vld [vmem:[%s1 + $0x30] sm:$0xf]
  %v30 = vld [vmem:[%s1 + $0x34] sm:$0xf]
  %v31 = vld [vmem:[%s1 + $0x38] sm:$0xf]
  %v32 = vld [vmem:[%s1 + $0x3c] sm:$0xf]
  %v33 = vld [vmem:[%s2] sm:$0x1]
  %v35 = vlaneseq
  %v36 = vshrl.u32 %v35, 7
  %v37 = vsub.s32 0, %v36
  %v38 = vrot.slane %v33, %v37
  %v42 = vunpack.c.l.b16 %v15
  %v43 = vunpack.c.l.b16 %v16
  %v44 = vpack.c.b16 %v43, %v42
  %v62 = vunpack.c.l.b16 %v17
  %v63 = vunpack.c.l.b16 %v18
  %v64 = vunpack.c.l.b16 %v19
  %v65 = vunpack.c.l.b16 %v20
  %v66 = vunpack.c.l.b16 %v21
  %v67 = vunpack.c.l.b16 %v22
  %v68 = vunpack.c.l.b16 %v23
  %v69 = vunpack.c.l.b16 %v24
  %v70 = vunpack.c.l.b16 %v25
  %v71 = vunpack.c.l.b16 %v26
  %v72 = vunpack.c.l.b16 %v27
  %v73 = vunpack.c.l.b16 %v28
  %v74 = vunpack.c.l.b16 %v29
  %v75 = vunpack.c.l.b16 %v30
  %v76 = vunpack.c.l.b16 %v31
  %v77 = vunpack.c.l.b16 %v32
  %v78 = vpack.c.b16 %v63, %v62
  %v79 = vpack.c.b16 %v65, %v64
  %v80 = vpack.c.b16 %v67, %v66
  %v81 = vpack.c.b16 %v69, %v68
  %v82 = vpack.c.b16 %v71, %v70
  %v83 = vpack.c.b16 %v73, %v72
  %v84 = vpack.c.b16 %v75, %v74
  %v85 = vpack.c.b16 %v77, %v76
  %94 = vmatprep.subr.bf16.mxu0 0
  %95 = vmatpush1.bf16.msra.mxu0 %v78
  %96 = vmatprep.subr.bf16.mxu0 0
  %97 = vmatpush1.bf16.msra.mxu0 %v79
  %98 = vmatprep.subr.bf16.mxu0 0
  %99 = vmatpush1.bf16.msra.mxu0 %v80
  %100 = vmatprep.subr.bf16.mxu0 0
  %101 = vmatpush1.bf16.msra.mxu0 %v81
  %102 = vmatprep.subr.bf16.mxu0 0
  %103 = vmatpush1.bf16.msra.mxu0 %v82
  %104 = vmatprep.subr.bf16.mxu0 0
  %105 = vmatpush1.bf16.msra.mxu0 %v83
  %106 = vmatprep.subr.bf16.mxu0 0
  %107 = vmatpush1.bf16.msra.mxu0 %v84
  %108 = vmatprep.subr.bf16.mxu0 0
  %109 = vmatpush1.bf16.msra.mxu0 %v85
  %110 = vmatprep.subr.bf16.mxu0 0
  %111 = vmatpush1.bf16.msra.mxu0 0
  %112 = vmatprep.subr.bf16.mxu0 0
  %113 = vmatpush1.bf16.msra.mxu0 0
  %114 = vmatprep.subr.bf16.mxu0 0
  %115 = vmatpush1.bf16.msra.mxu0 0
  %116 = vmatprep.subr.bf16.mxu0 0
  %117 = vmatpush1.bf16.msra.mxu0 0
  %118 = vmatprep.subr.bf16.mxu0 0
  %119 = vmatpush1.bf16.msra.mxu0 0
  %120 = vmatprep.subr.bf16.mxu0 0
  %121 = vmatpush1.bf16.msra.mxu0 0
  %122 = vmatprep.subr.bf16.mxu0 0
  %123 = vmatpush1.bf16.msra.mxu0 0
  %124 = vmatprep.subr.bf16.mxu0 0
  %125 = vmatpush1.bf16.msra.mxu0 0
  %126 = vmatprep.mubr.bf16.mxu0 0
  %127 = vmatmul.mubr.bf16.gmra.mrb[0].mxu0 %v44
  %v128 = vpop.f32.mrb[0].mxu0
  %v129 = vadd.f32 %v38, %v128
  %v130 = vpop.f32.mrb[0].mxu0
  %v131 = vpop.f32.mrb[0].mxu0
  %v132 = vadd.f32 %v38, %v131
  %v133 = vpop.f32.mrb[0].mxu0
  %134 = vdwg.mxu0
  %135 = vmax.xlane.f32.xlu0 %v129
  %v136 = vpop.xlane.xlu0 %135
  %137 = vmax.xlane.f32.xlu0 %v132
  %v138 = vpop.xlane.xlu0 %137
  %v139 = vsub.f32 %v129, %v136
  %v140 = vsub.f32 %v132, %v138
  %v141 = vmul.f32 %v139, 1.442695
  %v142 = vpow.pop %v141
  %v143 = vmul.f32 %v140, 1.442695
  %v144 = vpow.pop %v143
  %145 = vadd.xlane.f32.xlu0 %v142
  %v146 = vpop.xlane.xlu0 %145
  %147 = vadd.xlane.f32.xlu0 %v144
  %v148 = vpop.xlane.xlu0 %147
  %v149 = vlog2.pop %v146
  %v150 = vmul.f32 %v149, 0.6931472
  %v151 = vlog2.pop %v148
  %v152 = vmul.f32 %v151, 0.6931472
  %v153 = vadd.f32 %v150, %v136
  %v154 = vadd.f32 %v152, %v138
  %v155 = vsub.f32 %v129, %v153
  %v156 = vsub.f32 %v132, %v154
  %157 = vst [vmem:[%s3] sm:$0xff] %v155
  %158 = vst [vmem:[%s3 + $0x8] sm:$0xff] %v156
  // Predicated region
  $region14: #{deepgt_forward.11} parent=0 // pred_check
    _
  $region15: #{deepgt_forward.11} parent=0 // pred_check_branch
    %160 = sbr.rel (0) target = $region17
  $region16: #{deepgt_forward.11} parent=0 // pred_region
    _
  $region17: #{deepgt_forward.11} parent=0 // pred_fallthru
    _
  // Predicated region
  $region18: #{deepgt_forward.11} parent=0 // pred_check
    _
  $region19: #{deepgt_forward.11} parent=0 // pred_check_branch
    %162 = sbr.rel (0) target = $region21
  $region20: #{deepgt_forward.11} parent=0 // pred_region
    _
  $region21: #{deepgt_forward.11} parent=0 // pred_fallthru
    _

// kernel: deepgt_forward.8
$region0: #{deepgt_forward.8}
  #allocation0 [shape = 'u32[]', space=smem, size = 0x4, offset = 0x4, fixed_abs, tag = 'smem constant byte address 0x4 - core index']
  #allocation1 [shape = 'u32[144,128]{1,0:T(1,128)}', space=vmem, size = 0x12000, scoped, tag = 'internal scratch']
  #allocation2 [shape = 'bf16[4,16,32]{2,1,0:T(16,128)(2,1)}', space=vmem, size = 0x4000, scoped, tag = 'scratch operand']
  #allocation3 [shape = 'f32[16,128]{1,0:T(8,128)}', space=vmem, size = 0x2000, scoped, tag = 'scratch operand']
  #allocation4 [shape = 'f32[4,16,1]{2,1,0:T(8,128)}', space=vmem, size = 0x8000, scoped, tag = 'scratch operand']
  #allocation5 [shape = 'f32[4,16,1]{2,1,0:T(8,128)}', space=vmem, size = 0x8000, scoped, tag = 'scratch operand']
  #allocation6 [shape = 'f32[4,16,32]{2,1,0:T(8,128)}', space=vmem, size = 0x8000, scoped, tag = 'scratch operand']
  #allocation7 [shape = 's32[1]{0}', space=sflag, size = 0x4, scoped, tag = 'scoped memory for deepgt_forward.8']
  #allocation8 [shape = 's32[1]{0:T(128)S(6)}', space=smem, size = 0x200, scoped, tag = 'prefetched SMEM operand 0']
  %s0 = inlined_call_operand.<no memory space> [shape: s32[1], index: 0, kind: input, shape index: {}]
  %s1 = inlined_call_operand.vmem [shape: bf16[16,32], index: 1, kind: input, shape index: {}]
  %s2 = inlined_call_operand.vmem [shape: s8[16,16], index: 2, kind: input, shape index: {}]
  %s3 = inlined_call_operand.vmem [shape: bf16[4,32,16], index: 3, kind: input, shape index: {}]
  %s4 = inlined_call_operand.vmem [shape: bf16[4,16,32], index: 4, kind: input, shape index: {}]
  %s5 = inlined_call_operand.vmem [shape: bf16[4,32,32], index: 5, kind: input, shape index: {}]
  %s6 = inlined_call_operand.vmem [shape: f32[4,1,32], index: 6, kind: input, shape index: {}]
  %s7 = inlined_call_operand.vmem [shape: bf16[32,128], index: 7, kind: input, shape index: {}]
  %s8 = inlined_call_operand.vmem [shape: f32[1,128], index: 8, kind: input, shape index: {}]
  %s9 = inlined_call_operand.vmem [shape: bf16[16,128], index: 9, kind: output, shape index: {}]
  %s10 = sld [smem:[#allocation0]]
  $region54: #{deepgt_forward.8} parent=0
    _
  %s12 = ssub.s32 1, %s10
  %s13 = scalar_select 0, %s12, %s10
  %14 = sst [smem:[#allocation8]] %s0
  // Predicated region
  $region2: #{deepgt_forward.8} parent=0 // pred_check
    _
  $region3: #{deepgt_forward.8} parent=0 // pred_check_branch
    %16 = sbr.rel (0) target = $region5
  $region4: #{deepgt_forward.8} parent=0 // pred_region
    _
  $region5: #{deepgt_forward.8} parent=0 // pred_fallthru
    _
  // Predicated region
  $region6: #{deepgt_forward.8} parent=0 // pred_check
    _
  $region7: #{deepgt_forward.8} parent=0 // pred_check_branch
    %18 = sbr.rel (0) target = $region9
  $region8: #{deepgt_forward.8} parent=0 // pred_region
    _
  $region9: #{deepgt_forward.8} parent=0 // pred_fallthru
    _
  // Predicated region
  $region10: #{deepgt_forward.8} parent=0 // pred_check
    _
  $region11: #{deepgt_forward.8} parent=0 // pred_check_branch
    %20 = sbr.rel (0) target = $region13
  $region12: #{deepgt_forward.8} parent=0 // pred_region
    _
  $region13: #{deepgt_forward.8} parent=0 // pred_fallthru
    _
  // Predicated region
  $region14: #{deepgt_forward.8} parent=0 // pred_check
    _
  $region15: #{deepgt_forward.8} parent=0 // pred_check_branch
    %22 = sbr.rel (0) target = $region17
  $region16: #{deepgt_forward.8} parent=0 // pred_region
    _
  $region17: #{deepgt_forward.8} parent=0 // pred_fallthru
    _
  // Predicated region
  $region18: #{deepgt_forward.8} parent=0 // pred_check
    _
  $region19: #{deepgt_forward.8} parent=0 // pred_check_branch
    %24 = sbr.rel (0) target = $region21
  $region20: #{deepgt_forward.8} parent=0 // pred_region
    _
  $region21: #{deepgt_forward.8} parent=0 // pred_fallthru
    _
  // Predicated region
  $region22: #{deepgt_forward.8} parent=0 // pred_check
    _
  $region23: #{deepgt_forward.8} parent=0 // pred_check_branch
    %26 = sbr.rel (0) target = $region25
  $region24: #{deepgt_forward.8} parent=0 // pred_region
    _
  $region25: #{deepgt_forward.8} parent=0 // pred_fallthru
    _
  // Predicated region
  $region26: #{deepgt_forward.8} parent=0 // pred_check
    _
  $region27: #{deepgt_forward.8} parent=0 // pred_check_branch
    %28 = sbr.rel (0) target = $region29
  $region28: #{deepgt_forward.8} parent=0 // pred_region
    _
  $region29: #{deepgt_forward.8} parent=0 // pred_fallthru
    _
  // Predicated region
  $region30: #{deepgt_forward.8} parent=0 // pred_check
    _
  $region31: #{deepgt_forward.8} parent=0 // pred_check_branch
    %30 = sbr.rel (0) target = $region33
  $region32: #{deepgt_forward.8} parent=0 // pred_region
    _
  $region33: #{deepgt_forward.8} parent=0 // pred_fallthru
    _
  %p32 = scmp.eq.s32.totalorder 0, 0
  // Predicated region
  $region34: #{deepgt_forward.8} parent=0 // pred_check
    %p33 = pneg %p32
  $region35: #{deepgt_forward.8} parent=0 // pred_check_branch
    %35 = sbr.rel (%p33) target = $region37
  $region36: #{deepgt_forward.8} parent=0 // pred_region
    %v36 = vld [vmem:[%s1] sm:$0xf]
    %v37 = vld [vmem:[%s1 + $0x4] sm:$0xf]
    %v38 = vld [vmem:[%s5] sm:$0xf]
    %v39 = vld [vmem:[%s5 + $0x4] sm:$0xf]
    %v40 = vld [vmem:[%s5 + $0x8] sm:$0xf]
    %v41 = vld [vmem:[%s5 + $0xc] sm:$0xf]
    %v42 = vld [vmem:[%s6] sm:$0x1]
    %v44 = vlaneseq
    %v45 = vshrl.u32 %v44, 7
    %v46 = vsub.s32 0, %v45
    %v47 = vrot.slane %v42, %v46
    %v51 = vunpack.c.l.b16 %v36
    %v52 = vunpack.c.l.b16 %v37
    %v53 = vpack.c.b16 %v52, %v51
    %v58 = vunpack.c.l.b16 %v38
    %v59 = vunpack.c.l.b16 %v39
    %v60 = vunpack.c.l.b16 %v40
    %v61 = vunpack.c.l.b16 %v41
    %v62 = vpack.c.b16 %v59, %v58
    %v63 = vpack.c.b16 %v61, %v60
    %vm66 = vcmask 261120
    %v68 = vsel %vm66, %v53, 0
    %70 = vmatprep.subr.bf16.mxu0 0
    %71 = vmatpush1.bf16.msra.mxu0 %v62
    %72 = vmatprep.subr.bf16.mxu0 0
    %73 = vmatpush1.bf16.msra.mxu0 %v63
    %74 = vmatprep.subr.bf16.mxu0 0
    %75 = vmatpush1.bf16.msra.mxu0 0
    %76 = vmatprep.subr.bf16.mxu0 0
    %77 = vmatpush1.bf16.msra.mxu0 0
    %78 = vmatprep.subr.bf16.mxu0 0
    %79 = vmatpush1.bf16.msra.mxu0 0
    %80 = vmatprep.subr.bf16.mxu0 0
    %81 = vmatpush1.bf16.msra.mxu0 0
    %82 = vmatprep.subr.bf16.mxu0 0
    %83 = vmatpush1.bf16.msra.mxu0 0
    %84 = vmatprep.subr.bf16.mxu0 0
    %85 = vmatpush1.bf16.msra.mxu0 0
    %86 = vmatprep.subr.bf16.mxu0 0
    %87 = vmatpush1.bf16.msra.mxu0 0
    %88 = vmatprep.subr.bf16.mxu0 0
    %89 = vmatpush1.bf16.msra.mxu0 0
    %90 = vmatprep.subr.bf16.mxu0 0
    %91 = vmatpush1.bf16.msra.mxu0 0
    %92 = vmatprep.subr.bf16.mxu0 0
    %93 = vmatpush1.bf16.msra.mxu0 0
    %94 = vmatprep.subr.bf16.mxu0 0
    %95 = vmatpush1.bf16.msra.mxu0 0
    %96 = vmatprep.subr.bf16.mxu0 0
    %97 = vmatpush1.bf16.msra.mxu0 0
    %98 = vmatprep.subr.bf16.mxu0 0
    %99 = vmatpush1.bf16.msra.mxu0 0
    %100 = vmatprep.subr.bf16.mxu0 0
    %101 = vmatpush1.bf16.msra.mxu0 0
    %102 = vmatprep.mubr.bf16.mxu0 0
    %103 = vmatmul.mubr.bf16.gmra.mrb[0].mxu0 %v68
    %v104 = vpop.f32.mrb[0].mxu0
    %v105 = vadd.f32 %v47, %v104
    %v106 = vpop.f32.mrb[0].mxu0
    %v107 = vpop.f32.mrb[0].mxu0
    %v108 = vadd.f32 %v47, %v107
    %v109 = vpop.f32.mrb[0].mxu0
    %110 = vdwg.mxu0
    %v111 = vpack.c.bf16 %v108, %v105
    %112 = vst.msk [vmem:[#allocation2] sm:$0xff] %vm66, %v111
    %s113 = scalar_lea.vmem %s5, 16
    %v114 = vld [vmem:[%s113] sm:$0xf]
    %v115 = vld [vmem:[%s113 + $0x4] sm:$0xf]
    %v116 = vld [vmem:[%s113 + $0x8] sm:$0xf]
    %v117 = vld [vmem:[%s113 + $0xc] sm:$0xf]
    %s118 = scalar_lea.vmem %s6, 1
    %v119 = vld [vmem:[%s118] sm:$0x1]
    %v121 = vlaneseq
    %v122 = vshrl.u32 %v121, 7
    %v123 = vsub.s32 0, %v122
    %v124 = vrot.slane %v119, %v123
    %v130 = vunpack.c.l.b16 %v114
    %v131 = vunpack.c.l.b16 %v115
    %v132 = vunpack.c.l.b16 %v116
    %v133 = vunpack.c.l.b16 %v117
    %v134 = vpack.c.b16 %v131, %v130
    %v135 = vpack.c.b16 %v133, %v132
    %138 = vmatprep.subr.bf16.mxu0 0
    %139 = vmatpush1.bf16.msra.mxu0 %v134
    %140 = vmatprep.subr.bf16.mxu0 0
    %141 = vmatpush1.bf16.msra.mxu0 %v135
    %142 = vmatprep.subr.bf16.mxu0 0
    %143 = vmatpush1.bf16.msra.mxu0 0
    %144 = vmatprep.subr.bf16.mxu0 0
    %145 = vmatpush1.bf16.msra.mxu0 0
    %146 = vmatprep.subr.bf16.mxu0 0
    %147 = vmatpush1.bf16.msra.mxu0 0
    %148 = vmatprep.subr.bf16.mxu0 0
    %149 = vmatpush1.bf16.msra.mxu0 0
    %150 = vmatprep.subr.bf16.mxu0 0
    %151 = vmatpush1.bf16.msra.mxu0 0
    %152 = vmatprep.subr.bf16.mxu0 0
    %153 = vmatpush1.bf16.msra.mxu0 0
    %154 = vmatprep.subr.bf16.mxu0 0
    %155 = vmatpush1.bf16.msra.mxu0 0
    %156 = vmatprep.subr.bf16.mxu0 0
    %157 = vmatpush1.bf16.msra.mxu0 0
    %158 = vmatprep.subr.bf16.mxu0 0
    %159 = vmatpush1.bf16.msra.mxu0 0
    %160 = vmatprep.subr.bf16.mxu0 0
    %161 = vmatpush1.bf16.msra.mxu0 0
    %162 = vmatprep.subr.bf16.mxu0 0
    %163 = vmatpush1.bf16.msra.mxu0 0
    %164 = vmatprep.subr.bf16.mxu0 0
    %165 = vmatpush1.bf16.msra.mxu0 0
    %166 = vmatprep.subr.bf16.mxu0 0
    %167 = vmatpush1.bf16.msra.mxu0 0
    %168 = vmatprep.subr.bf16.mxu0 0
    %169 = vmatpush1.bf16.msra.mxu0 0
    %170 = vmatprep.mubr.bf16.mxu0 0
    %171 = vmatmul.mubr.bf16.gmra.mrb[0].mxu0 %v68
    %v172 = vpop.f32.mrb[0].mxu0
    %v173 = vadd.f32 %v124, %v172
    %v174 = vpop.f32.mrb[0].mxu0
    %v175 = vpop.f32.mrb[0].mxu0
    %v176 = vadd.f32 %v124, %v175
    %v177 = vpop.f32.mrb[0].mxu0
    %178 = vdwg.mxu0
    %v179 = vpack.c.bf16 %v176, %v173
    %s180 = scalar_lea.vmem [#allocation2], 8
    %181 = vst.msk [vmem:[%s180] sm:$0xff] %vm66, %v179
    %s182 = scalar_lea.vmem %s5, 32
    %v183 = vld [vmem:[%s182] sm:$0xf]
    %v184 = vld [vmem:[%s182 + $0x4] sm:$0xf]
    %v185 = vld [vmem:[%s182 + $0x8] sm:$0xf]
    %v186 = vld [vmem:[%s182 + $0xc] sm:$0xf]
    %s187 = scalar_lea.vmem %s6, 2
    %v188 = vld [vmem:[%s187] sm:$0x1]
    %v190 = vlaneseq
    %v191 = vshrl.u32 %v190, 7
    %v192 = vsub.s32 0, %v191
    %v193 = vrot.slane %v188, %v192
    %v199 = vunpack.c.l.b16 %v183
    %v200 = vunpack.c.l.b16 %v184
    %v201 = vunpack.c.l.b16 %v185
    %v202 = vunpack.c.l.b16 %v186
    %v203 = vpack.c.b16 %v200, %v199
    %v204 = vpack.c.b16 %v202, %v201
    %207 = vmatprep.subr.bf16.mxu0 0
    %208 = vmatpush1.bf16.msra.mxu0 %v203
    %209 = vmatprep.subr.bf16.mxu0 0
    %210 = vmatpush1.bf16.msra.mxu0 %v204
    %211 = vmatprep.subr.bf16.mxu0 0
    %212 = vmatpush1.bf16.msra.mxu0 0
    %213 = vmatprep.subr.bf16.mxu0 0
    %214 = vmatpush1.bf16.msra.mxu0 0
    %215 = vmatprep.subr.bf16.mxu0 0
    %216 = vmatpush1.bf16.msra.mxu0 0
    %217 = vmatprep.subr.bf16.mxu0 0
    %218 = vmatpush1.bf16.msra.mxu0 0
    %219 = vmatprep.subr.bf16.mxu0 0
    %220 = vmatpush1.bf16.msra.mxu0 0
    %221 = vmatprep.subr.bf16.mxu0 0
    %222 = vmatpush1.bf16.msra.mxu0 0
    %223 = vmatprep.subr.bf16.mxu0 0
    %224 = vmatpush1.bf16.msra.mxu0 0
    %225 = vmatprep.subr.bf16.mxu0 0
    %226 = vmatpush1.bf16.msra.mxu0 0
    %227 = vmatprep.subr.bf16.mxu0 0
    %228 = vmatpush1.bf16.msra.mxu0 0
    %229 = vmatprep.subr.bf16.mxu0 0
    %230 = vmatpush1.bf16.msra.mxu0 0
    %231 = vmatprep.subr.bf16.mxu0 0
    %232 = vmatpush1.bf16.msra.mxu0 0
    %233 = vmatprep.subr.bf16.mxu0 0
    %234 = vmatpush1.bf16.msra.mxu0 0
    %235 = vmatprep.subr.bf16.mxu0 0
    %236 = vmatpush1.bf16.msra.mxu0 0
    %237 = vmatprep.subr.bf16.mxu0 0
    %238 = vmatpush1.bf16.msra.mxu0 0
    %239 = vmatprep.mubr.bf16.mxu0 0
    %240 = vmatmul.mubr.bf16.gmra.mrb[0].mxu0 %v68
    %v241 = vpop.f32.mrb[0].mxu0
    %v242 = vadd.f32 %v193, %v241
    %v243 = vpop.f32.mrb[0].mxu0
    %v244 = vpop.f32.mrb[0].mxu0
    %v245 = vadd.f32 %v193, %v244
    %v246 = vpop.f32.mrb[0].mxu0
    %247 = vdwg.mxu0
    %v248 = vpack.c.bf16 %v245, %v242
    %s249 = scalar_lea.vmem [#allocation2], 16
    %250 = vst.msk [vmem:[%s249] sm:$0xff] %vm66, %v248
    %s251 = scalar_lea.vmem %s5, 48
    %v252 = vld [vmem:[%s251] sm:$0xf]
    %v253 = vld [vmem:[%s251 + $0x4] sm:$0xf]
    %v254 = vld [vmem:[%s251 + $0x8] sm:$0xf]
    %v255 = vld [vmem:[%s251 + $0xc] sm:$0xf]
    %s256 = scalar_lea.vmem %s6, 3
    %v257 = vld [vmem:[%s256] sm:$0x1]
    %v259 = vlaneseq
    %v260 = vshrl.u32 %v259, 7
    %v261 = vsub.s32 0, %v260
    %v262 = vrot.slane %v257, %v261
    %v268 = vunpack.c.l.b16 %v252
    %v269 = vunpack.c.l.b16 %v253
    %v270 = vunpack.c.l.b16 %v254
    %v271 = vunpack.c.l.b16 %v255
    %v272 = vpack.c.b16 %v269, %v268
    %v273 = vpack.c.b16 %v271, %v270
    %276 = vmatprep.subr.bf16.mxu0 0
    %277 = vmatpush1.bf16.msra.mxu0 %v272
    %278 = vmatprep.subr.bf16.mxu0 0
    %279 = vmatpush1.bf16.msra.mxu0 %v273
    %280 = vmatprep.subr.bf16.mxu0 0
    %281 = vmatpush1.bf16.msra.mxu0 0
    %282 = vmatprep.subr.bf16.mxu0 0
    %283 = vmatpush1.bf16.msra.mxu0 0
    %284 = vmatprep.subr.bf16.mxu0 0
    %285 = vmatpush1.bf16.msra.mxu0 0
    %286 = vmatprep.subr.bf16.mxu0 0
    %287 = vmatpush1.bf16.msra.mxu0 0
    %288 = vmatprep.subr.bf16.mxu0 0
    %289 = vmatpush1.bf16.msra.mxu0 0
    %290 = vmatprep.subr.bf16.mxu0 0
    %291 = vmatpush1.bf16.msra.mxu0 0
    %292 = vmatprep.subr.bf16.mxu0 0
    %293 = vmatpush1.bf16.msra.mxu0 0
    %294 = vmatprep.subr.bf16.mxu0 0
    %295 = vmatpush1.bf16.msra.mxu0 0
    %296 = vmatprep.subr.bf16.mxu0 0
    %297 = vmatpush1.bf16.msra.mxu0 0
    %298 = vmatprep.subr.bf16.mxu0 0
    %299 = vmatpush1.bf16.msra.mxu0 0
    %300 = vmatprep.subr.bf16.mxu0 0
    %301 = vmatpush1.bf16.msra.mxu0 0
    %302 = vmatprep.subr.bf16.mxu0 0
    %303 = vmatpush1.bf16.msra.mxu0 0
    %304 = vmatprep.subr.bf16.mxu0 0
    %305 = vmatpush1.bf16.msra.mxu0 0
    %306 = vmatprep.subr.bf16.mxu0 0
    %307 = vmatpush1.bf16.msra.mxu0 0
    %308 = vmatprep.mubr.bf16.mxu0 0
    %309 = vmatmul.mubr.bf16.gmra.mrb[0].mxu0 %v68
    %v310 = vpop.f32.mrb[0].mxu0
    %v311 = vadd.f32 %v262, %v310
    %v312 = vpop.f32.mrb[0].mxu0
    %v313 = vpop.f32.mrb[0].mxu0
    %v314 = vadd.f32 %v262, %v313
    %v315 = vpop.f32.mrb[0].mxu0
    %316 = vdwg.mxu0
    %v317 = vpack.c.bf16 %v314, %v311
    %s318 = scalar_lea.vmem [#allocation2], 24
    %319 = vst.msk [vmem:[%s318] sm:$0xff] %vm66, %v317
    %v320 = vld [vmem:[%s7] sm:$0xf]
    %v321 = vld [vmem:[%s7 + $0x4] sm:$0xf]
    %v322 = vld [vmem:[%s7 + $0x8] sm:$0xf]
    %v323 = vld [vmem:[%s7 + $0xc] sm:$0xf]
    %v324 = vld [vmem:[%s8] sm:$0x1]
    %v326 = vlaneseq
    %v327 = vshrl.u32 %v326, 7
    %v328 = vsub.s32 0, %v327
    %v329 = vrot.slane %v324, %v328
    %v335 = vunpack.c.l.b16 %v320
    %v336 = vunpack.c.l.b16 %v321
    %v337 = vunpack.c.l.b16 %v322
    %v338 = vunpack.c.l.b16 %v323
    %v339 = vpack.c.b16 %v336, %v335
    %v340 = vpack.c.b16 %v338, %v337
    %343 = vmatprep.subr.bf16.mxu0 0
    %344 = vmatpush1.bf16.msra.mxu0 %v339
    %345 = vmatprep.subr.bf16.mxu0 0
    %346 = vmatpush1.bf16.msra.mxu0 %v340
    %347 = vmatprep.subr.bf16.mxu0 0
    %348 = vmatpush1.bf16.msra.mxu0 0
    %349 = vmatprep.subr.bf16.mxu0 0
    %350 = vmatpush1.bf16.msra.mxu0 0
    %351 = vmatprep.subr.bf16.mxu0 0
    %352 = vmatpush1.bf16.msra.mxu0 0
    %353 = vmatprep.subr.bf16.mxu0 0
    %354 = vmatpush1.bf16.msra.mxu0 0
    %355 = vmatprep.subr.bf16.mxu0 0
    %356 = vmatpush1.bf16.msra.mxu0 0
    %357 = vmatprep.subr.bf16.mxu0 0
    %358 = vmatpush1.bf16.msra.mxu0 0
    %359 = vmatprep.subr.bf16.mxu0 0
    %360 = vmatpush1.bf16.msra.mxu0 0
    %361 = vmatprep.subr.bf16.mxu0 0
    %362 = vmatpush1.bf16.msra.mxu0 0
    %363 = vmatprep.subr.bf16.mxu0 0
    %364 = vmatpush1.bf16.msra.mxu0 0
    %365 = vmatprep.subr.bf16.mxu0 0
    %366 = vmatpush1.bf16.msra.mxu0 0
    %367 = vmatprep.subr.bf16.mxu0 0
    %368 = vmatpush1.bf16.msra.mxu0 0
    %369 = vmatprep.subr.bf16.mxu0 0
    %370 = vmatpush1.bf16.msra.mxu0 0
    %371 = vmatprep.subr.bf16.mxu0 0
    %372 = vmatpush1.bf16.msra.mxu0 0
    %373 = vmatprep.subr.bf16.mxu0 0
    %374 = vmatpush1.bf16.msra.mxu0 0
    %375 = vmatprep.mubr.bf16.mxu0 0
    %376 = vmatmul.mubr.bf16.gmra.mrb[0].mxu0 %v68
    %v377 = vpop.f32.mrb[0].mxu0
    %v378 = vadd.f32 %v329, %v377
    %v379 = vpop.f32.mrb[0].mxu0
    %v380 = vpop.f32.mrb[0].mxu0
    %v381 = vadd.f32 %v329, %v380
    %v382 = vpop.f32.mrb[0].mxu0
    %383 = vdwg.mxu0
    %384 = vst [vmem:[#allocation3] sm:$0xff] %v378
    %385 = vst [vmem:[#allocation3 + $0x8] sm:$0xff] %v381
    %vm386 = vcmask 7168
    %387 = vst.msk [vmem:[#allocation4] sm:$0xff] %vm386, -1e+30
    %388 = vst.msk [vmem:[#allocation4 + $0x8] sm:$0xff] %vm386, -1e+30
    %389 = vst.msk [vmem:[#allocation4 + $0x10] sm:$0xff] %vm386, -1e+30
    %390 = vst.msk [vmem:[#allocation4 + $0x18] sm:$0xff] %vm386, -1e+30
    %391 = vst.msk [vmem:[#allocation4 + $0x20] sm:$0xff] %vm386, -1e+30
    %392 = vst.msk [vmem:[#allocation4 + $0x28] sm:$0xff] %vm386, -1e+30
    %393 = vst.msk [vmem:[#allocation4 + $0x30] sm:$0xff] %vm386, -1e+30
    %394 = vst.msk [vmem:[#allocation4 + $0x38] sm:$0xff] %vm386, -1e+30
    %395 = vst.msk [vmem:[#allocation5] sm:$0xff] %vm386, 0.0
    %396 = vst.msk [vmem:[#allocation5 + $0x8] sm:$0xff] %vm386, 0.0
    %397 = vst.msk [vmem:[#allocation5 + $0x10] sm:$0xff] %vm386, 0.0
    %398 = vst.msk [vmem:[#allocation5 + $0x18] sm:$0xff] %vm386, 0.0
    %399 = vst.msk [vmem:[#allocation5 + $0x20] sm:$0xff] %vm386, 0.0
    %400 = vst.msk [vmem:[#allocation5 + $0x28] sm:$0xff] %vm386, 0.0
    %401 = vst.msk [vmem:[#allocation5 + $0x30] sm:$0xff] %vm386, 0.0
    %402 = vst.msk [vmem:[#allocation5 + $0x38] sm:$0xff] %vm386, 0.0
    %403 = vst.msk [vmem:[#allocation6] sm:$0xff] %vm66, 0.0
    %404 = vst.msk [vmem:[#allocation6 + $0x8] sm:$0xff] %vm66, 0.0
    %405 = vst.msk [vmem:[#allocation6 + $0x10] sm:$0xff] %vm66, 0.0
    %406 = vst.msk [vmem:[#allocation6 + $0x18] sm:$0xff] %vm66, 0.0
    %407 = vst.msk [vmem:[#allocation6 + $0x20] sm:$0xff] %vm66, 0.0
    %408 = vst.msk [vmem:[#allocation6 + $0x28] sm:$0xff] %vm66, 0.0
    %409 = vst.msk [vmem:[#allocation6 + $0x30] sm:$0xff] %vm66, 0.0
    %410 = vst.msk [vmem:[#allocation6 + $0x38] sm:$0xff] %vm66, 0.0
  $region37: #{deepgt_forward.8} parent=0 // pred_fallthru
    _
  %s411 = sadd.s32 0, 0
  %s412 = sld [smem:[#allocation8 + %s411]]
  %p413 = scmp.ne.s32.totalorder %s412, 0
  // Predicated region
  $region38: #{deepgt_forward.8} parent=0 // pred_check
    %p414 = pneg %p413
  $region39: #{deepgt_forward.8} parent=0 // pred_check_branch
    %416 = sbr.rel (%p414) target = $region41
  $region40: #{deepgt_forward.8} parent=0 // pred_region
    %v417 = vld [vmem:[%s2] sm:$0x3]
    %v418 = vld [vmem:[%s2 + $0x2] sm:$0x3]
    %v419 = vunpack.c.0.s8 %v417
    %v420 = vunpack.c.0.s8 %v418
    %v421 = vcvt.s32.f32 %v419
    %v422 = vcvt.s32.f32 %v420
    %v423 = vld [vmem:[#allocation2] sm:$0xff]
    %v424 = vld [vmem:[#allocation2 + $0x8] sm:$0xff]
    %v425 = vld [vmem:[#allocation2 + $0x10] sm:$0xff]
    %v426 = vld [vmem:[#allocation2 + $0x18] sm:$0xff]
    %v427 = vld [vmem:[%s3] sm:$0xf]
    %v428 = vld [vmem:[%s3 + $0x4] sm:$0xf]
    %v429 = vld [vmem:[%s3 + $0x8] sm:$0xf]
    %v430 = vld [vmem:[%s3 + $0xc] sm:$0xf]
    %v431 = vld [vmem:[%s3 + $0x10] sm:$0xf]
    %v432 = vld [vmem:[%s3 + $0x14] sm:$0xf]
    %v433 = vld [vmem:[%s3 + $0x18] sm:$0xf]
    %v434 = vld [vmem:[%s3 + $0x1c] sm:$0xf]
    %v435 = vld [vmem:[%s3 + $0x20] sm:$0xf]
    %v436 = vld [vmem:[%s3 + $0x24] sm:$0xf]
    %v437 = vld [vmem:[%s3 + $0x28] sm:$0xf]
    %v438 = vld [vmem:[%s3 + $0x2c] sm:$0xf]
    %v439 = vld [vmem:[%s3 + $0x30] sm:$0xf]
    %v440 = vld [vmem:[%s3 + $0x34] sm:$0xf]
    %v441 = vld [vmem:[%s3 + $0x38] sm:$0xf]
    %v442 = vld [vmem:[%s3 + $0x3c] sm:$0xf]
    %v447 = vunpack.c.l.b16 %v427
    %v448 = vunpack.c.l.b16 %v428
    %v449 = vunpack.c.l.b16 %v429
    %v450 = vunpack.c.l.b16 %v430
    %v451 = vpack.c.b16 %v448, %v447
    %v452 = vpack.c.b16 %v450, %v449
    %vm455 = vcmask 261120
    %v457 = vsel %vm455, %v423, 0
    %459 = vmatprep.subr.bf16.mxu0 0
    %460 = vmatpush1.bf16.msra.mxu0 %v451
    %461 = vmatprep.subr.bf16.mxu0 0
    %462 = vmatpush1.bf16.msra.mxu0 %v452
    %463 = vmatprep.subr.bf16.mxu0 0
    %464 = vmatpush1.bf16.msra.mxu0 0
    %465 = vmatprep.subr.bf16.mxu0 0
    %466 = vmatpush1.bf16.msra.mxu0 0
    %467 = vmatprep.subr.bf16.mxu0 0
    %468 = vmatpush1.bf16.msra.mxu0 0
    %469 = vmatprep.subr.bf16.mxu0 0
    %470 = vmatpush1.bf16.msra.mxu0 0
    %471 = vmatprep.subr.bf16.mxu0 0
    %472 = vmatpush1.bf16.msra.mxu0 0
    %473 = vmatprep.subr.bf16.mxu0 0
    %474 = vmatpush1.bf16.msra.mxu0 0
    %475 = vmatprep.subr.bf16.mxu0 0
    %476 = vmatpush1.bf16.msra.mxu0 0
    %477 = vmatprep.subr.bf16.mxu0 0
    %478 = vmatpush1.bf16.msra.mxu0 0
    %479 = vmatprep.subr.bf16.mxu0 0
    %480 = vmatpush1.bf16.msra.mxu0 0
    %481 = vmatprep.subr.bf16.mxu0 0
    %482 = vmatpush1.bf16.msra.mxu0 0
    %483 = vmatprep.subr.bf16.mxu0 0
    %484 = vmatpush1.bf16.msra.mxu0 0
    %485 = vmatprep.subr.bf16.mxu0 0
    %486 = vmatpush1.bf16.msra.mxu0 0
    %487 = vmatprep.subr.bf16.mxu0 0
    %488 = vmatpush1.bf16.msra.mxu0 0
    %489 = vmatprep.subr.bf16.mxu0 0
    %490 = vmatpush1.bf16.msra.mxu0 0
    %491 = vmatprep.mubr.bf16.mxu0 0
    %492 = vmatmul.mubr.bf16.gmra.mrb[0].mxu0 %v457
    %v493 = vpop.f32.mrb[0].mxu0
    %v494 = vadd.f32 0.0, %v493
    %v495 = vpop.f32.mrb[0].mxu0
    %v496 = vpop.f32.mrb[0].mxu0
    %v497 = vadd.f32 0.0, %v496
    %v498 = vpop.f32.mrb[0].mxu0
    %499 = vdwg.mxu0
    %v504 = vunpack.c.l.b16 %v431
    %v505 = vunpack.c.l.b16 %v432
    %v506 = vunpack.c.l.b16 %v433
    %v507 = vunpack.c.l.b16 %v434
    %v508 = vpack.c.b16 %v505, %v504
    %v509 = vpack.c.b16 %v507, %v506
    %v513 = vsel %vm455, %v424, 0
    %515 = vmatprep.subr.bf16.mxu0 0
    %516 = vmatpush1.bf16.msra.mxu0 %v508
    %517 = vmatprep.subr.bf16.mxu0 0
    %518 = vmatpush1.bf16.msra.mxu0 %v509
    %519 = vmatprep.subr.bf16.mxu0 0
    %520 = vmatpush1.bf16.msra.mxu0 0
    %521 = vmatprep.subr.bf16.mxu0 0
    %522 = vmatpush1.bf16.msra.mxu0 0
    %523 = vmatprep.subr.bf16.mxu0 0
    %524 = vmatpush1.bf16.msra.mxu0 0
    %525 = vmatprep.subr.bf16.mxu0 0
    %526 = vmatpush1.bf16.msra.mxu0 0
    %527 = vmatprep.subr.bf16.mxu0 0
    %528 = vmatpush1.bf16.msra.mxu0 0
    %529 = vmatprep.subr.bf16.mxu0 0
    %530 = vmatpush1.bf16.msra.mxu0 0
    %531 = vmatprep.subr.bf16.mxu0 0
    %532 = vmatpush1.bf16.msra.mxu0 0
    %533 = vmatprep.subr.bf16.mxu0 0
    %534 = vmatpush1.bf16.msra.mxu0 0
    %535 = vmatprep.subr.bf16.mxu0 0
    %536 = vmatpush1.bf16.msra.mxu0 0
    %537 = vmatprep.subr.bf16.mxu0 0
    %538 = vmatpush1.bf16.msra.mxu0 0
    %539 = vmatprep.subr.bf16.mxu0 0
    %540 = vmatpush1.bf16.msra.mxu0 0
    %541 = vmatprep.subr.bf16.mxu0 0
    %542 = vmatpush1.bf16.msra.mxu0 0
    %543 = vmatprep.subr.bf16.mxu0 0
    %544 = vmatpush1.bf16.msra.mxu0 0
    %545 = vmatprep.subr.bf16.mxu0 0
    %546 = vmatpush1.bf16.msra.mxu0 0
    %547 = vmatprep.mubr.bf16.mxu0 0
    %548 = vmatmul.mubr.bf16.gmra.mrb[0].mxu0 %v513
    %v549 = vpop.f32.mrb[0].mxu0
    %v550 = vadd.f32 0.0, %v549
    %v551 = vpop.f32.mrb[0].mxu0
    %v552 = vpop.f32.mrb[0].mxu0
    %v553 = vadd.f32 0.0, %v552
    %v554 = vpop.f32.mrb[0].mxu0
    %555 = vdwg.mxu0
    %v560 = vunpack.c.l.b16 %v435
    %v561 = vunpack.c.l.b16 %v436
    %v562 = vunpack.c.l.b16 %v437
    %v563 = vunpack.c.l.b16 %v438
    %v564 = vpack.c.b16 %v561, %v560
    %v565 = vpack.c.b16 %v563, %v562
    %v569 = vsel %vm455, %v425, 0
    %571 = vmatprep.subr.bf16.mxu0 0
    %572 = vmatpush1.bf16.msra.mxu0 %v564
    %573 = vmatprep.subr.bf16.mxu0 0
    %574 = vmatpush1.bf16.msra.mxu0 %v565
    %575 = vmatprep.subr.bf16.mxu0 0
    %576 = vmatpush1.bf16.msra.mxu0 0
    %577 = vmatprep.subr.bf16.mxu0 0
    %578 = vmatpush1.bf16.msra.mxu0 0
    %579 = vmatprep.subr.bf16.mxu0 0
    %580 = vmatpush1.bf16.msra.mxu0 0
    %581 = vmatprep.subr.bf16.mxu0 0
    %582 = vmatpush1.bf16.msra.mxu0 0
    %583 = vmatprep.subr.bf16.mxu0 0
    %584 = vmatpush1.bf16.msra.mxu0 0
    %585 = vmatprep.subr.bf16.mxu0 0
    %586 = vmatpush1.bf16.msra.mxu0 0
    %587 = vmatprep.subr.bf16.mxu0 0
    %588 = vmatpush1.bf16.msra.mxu0 0
    %589 = vmatprep.subr.bf16.mxu0 0
    %590 = vmatpush1.bf16.msra.mxu0 0
    %591 = vmatprep.subr.bf16.mxu0 0
    %592 = vmatpush1.bf16.msra.mxu0 0
    %593 = vmatprep.subr.bf16.mxu0 0
    %594 = vmatpush1.bf16.msra.mxu0 0
    %595 = vmatprep.subr.bf16.mxu0 0
    %596 = vmatpush1.bf16.msra.mxu0 0
    %597 = vmatprep.subr.bf16.mxu0 0
    %598 = vmatpush1.bf16.msra.mxu0 0
    %599 = vmatprep.subr.bf16.mxu0 0
    %600 = vmatpush1.bf16.msra.mxu0 0
    %601 = vmatprep.subr.bf16.mxu0 0
    %602 = vmatpush1.bf16.msra.mxu0 0
    %603 = vmatprep.mubr.bf16.mxu0 0
    %604 = vmatmul.mubr.bf16.gmra.mrb[0].mxu0 %v569
    %v605 = vpop.f32.mrb[0].mxu0
    %v606 = vadd.f32 0.0, %v605
    %v607 = vpop.f32.mrb[0].mxu0
    %v608 = vpop.f32.mrb[0].mxu0
    %v609 = vadd.f32 0.0, %v608
    %v610 = vpop.f32.mrb[0].mxu0
    %611 = vdwg.mxu0
    %v616 = vunpack.c.l.b16 %v439
    %v617 = vunpack.c.l.b16 %v440
    %v618 = vunpack.c.l.b16 %v441
    %v619 = vunpack.c.l.b16 %v442
    %v620 = vpack.c.b16 %v617, %v616
    %v621 = vpack.c.b16 %v619, %v618
    %v625 = vsel %vm455, %v426, 0
    %627 = vmatprep.subr.bf16.mxu0 0
    %628 = vmatpush1.bf16.msra.mxu0 %v620
    %629 = vmatprep.subr.bf16.mxu0 0
    %630 = vmatpush1.bf16.msra.mxu0 %v621
    %631 = vmatprep.subr.bf16.mxu0 0
    %632 = vmatpush1.bf16.msra.mxu0 0
    %633 = vmatprep.subr.bf16.mxu0 0
    %634 = vmatpush1.bf16.msra.mxu0 0
    %635 = vmatprep.subr.bf16.mxu0 0
    %636 = vmatpush1.bf16.msra.mxu0 0
    %637 = vmatprep.subr.bf16.mxu0 0
    %638 = vmatpush1.bf16.msra.mxu0 0
    %639 = vmatprep.subr.bf16.mxu0 0
    %640 = vmatpush1.bf16.msra.mxu0 0
    %641 = vmatprep.subr.bf16.mxu0 0
    %642 = vmatpush1.bf16.msra.mxu0 0
    %643 = vmatprep.subr.bf16.mxu0 0
    %644 = vmatpush1.bf16.msra.mxu0 0
    %645 = vmatprep.subr.bf16.mxu0 0
    %646 = vmatpush1.bf16.msra.mxu0 0
    %647 = vmatprep.subr.bf16.mxu0 0
    %648 = vmatpush1.bf16.msra.mxu0 0
    %649 = vmatprep.subr.bf16.mxu0 0
    %650 = vmatpush1.bf16.msra.mxu0 0
    %651 = vmatprep.subr.bf16.mxu0 0
    %652 = vmatpush1.bf16.msra.mxu0 0
    %653 = vmatprep.subr.bf16.mxu0 0
    %654 = vmatpush1.bf16.msra.mxu0 0
    %655 = vmatprep.subr.bf16.mxu0 0
    %656 = vmatpush1.bf16.msra.mxu0 0
    %657 = vmatprep.subr.bf16.mxu0 0
    %658 = vmatpush1.bf16.msra.mxu0 0
    %659 = vmatprep.mubr.bf16.mxu0 0
    %660 = vmatmul.mubr.bf16.gmra.mrb[0].mxu0 %v625
    %v661 = vpop.f32.mrb[0].mxu0
    %v662 = vadd.f32 0.0, %v661
    %v663 = vpop.f32.mrb[0].mxu0
    %v664 = vpop.f32.mrb[0].mxu0
    %v665 = vadd.f32 0.0, %v664
    %v666 = vpop.f32.mrb[0].mxu0
    %667 = vdwg.mxu0
    %v668 = vld [vmem:[#allocation4] sm:$0xff]
    %v669 = vld [vmem:[#allocation4 + $0x8] sm:$0xff]
    %v670 = vld [vmem:[#allocation4 + $0x10] sm:$0xff]
    %v671 = vld [vmem:[#allocation4 + $0x18] sm:$0xff]
    %v672 = vld [vmem:[#allocation4 + $0x20] sm:$0xff]
    %v673 = vld [vmem:[#allocation4 + $0x28] sm:$0xff]
    %v674 = vld [vmem:[#allocation4 + $0x30] sm:$0xff]
    %v675 = vld [vmem:[#allocation4 + $0x38] sm:$0xff]
    %vm676 = vcmask 130048
    %v677 = vsel %vm676, %v494, -inf
    %678 = vmax.xlane.f32.xlu0 %v677
    %v679 = vpop.xlane.xlu0 %678
    %v680 = vsel %vm676, %v497, -inf
    %681 = vmax.xlane.f32.xlu0 %v680
    %v682 = vpop.xlane.xlu0 %681
    %v683 = vsel %vm676, %v550, -inf
    %684 = vmax.xlane.f32.xlu0 %v683
    %v685 = vpop.xlane.xlu0 %684
    %v686 = vsel %vm676, %v553, -inf
    %687 = vmax.xlane.f32.xlu0 %v686
    %v688 = vpop.xlane.xlu0 %687
    %v689 = vsel %vm676, %v606, -inf
    %690 = vmax.xlane.f32.xlu0 %v689
    %v691 = vpop.xlane.xlu0 %690
    %v692 = vsel %vm676, %v609, -inf
    %693 = vmax.xlane.f32.xlu0 %v692
    %v694 = vpop.xlane.xlu0 %693
    %v695 = vsel %vm676, %v662, -inf
    %696 = vmax.xlane.f32.xlu0 %v695
    %v697 = vpop.xlane.xlu0 %696
    %v698 = vsel %vm676, %v665, -inf
    %699 = vmax.xlane.f32.xlu0 %v698
    %v700 = vpop.xlane.xlu0 %699
    %v701 = vmax.f32 %v668, %v679
    %v702 = vmax.f32 %v669, %v682
    %v703 = vmax.f32 %v670, %v685
    %v704 = vmax.f32 %v671, %v688
    %v705 = vmax.f32 %v672, %v691
    %v706 = vmax.f32 %v673, %v694
    %v707 = vmax.f32 %v674, %v697
    %v708 = vmax.f32 %v675, %v700
    %v709 = vsub.f32 %v668, %v701
    %v710 = vsub.f32 %v669, %v702
    %v711 = vsub.f32 %v670, %v703
    %v712 = vsub.f32 %v671, %v704
    %v713 = vsub.f32 %v672, %v705
    %v714 = vsub.f32 %v673, %v706
    %v715 = vsub.f32 %v674, %v707
    %v716 = vsub.f32 %v675, %v708
    %v717 = vmul.f32 %v709, 1.442695
    %v718 = vpow.pop %v717
    %v719 = vmul.f32 %v710, 1.442695
    %v720 = vpow.pop %v719
    %v721 = vmul.f32 %v711, 1.442695
    %v722 = vpow.pop %v721
    %v723 = vmul.f32 %v712, 1.442695
    %v724 = vpow.pop %v723
    %v725 = vmul.f32 %v713, 1.442695
    %v726 = vpow.pop %v725
    %v727 = vmul.f32 %v714, 1.442695
    %v728 = vpow.pop %v727
    %v729 = vmul.f32 %v715, 1.442695
    %v730 = vpow.pop %v729
    %v731 = vmul.f32 %v716, 1.442695
    %v732 = vpow.pop %v731
    %734 = vset.pattern.permute.xlu0 0
    %735 = vperm.xlu0 %734, %v701
    %v736 = vpop.permute.xlu0 %735
    %739 = vset.pattern.permute.xlu0 0
    %740 = vperm.xlu0 %739, %v702
    %v741 = vpop.permute.xlu0 %740
    %744 = vset.pattern.permute.xlu0 0
    %745 = vperm.xlu0 %744, %v703
    %v746 = vpop.permute.xlu0 %745
    %749 = vset.pattern.permute.xlu0 0
    %750 = vperm.xlu0 %749, %v704
    %v751 = vpop.permute.xlu0 %750
    %754 = vset.pattern.permute.xlu0 0
    %755 = vperm.xlu0 %754, %v705
    %v756 = vpop.permute.xlu0 %755
    %759 = vset.pattern.permute.xlu0 0
    %760 = vperm.xlu0 %759, %v706
    %v761 = vpop.permute.xlu0 %760
    %764 = vset.pattern.permute.xlu0 0
    %765 = vperm.xlu0 %764, %v707
    %v766 = vpop.permute.xlu0 %765
    %769 = vset.pattern.permute.xlu0 0
    %770 = vperm.xlu0 %769, %v708
    %v771 = vpop.permute.xlu0 %770
    %v773 = vsub.f32 %v494, %v736
    %v774 = vsub.f32 %v497, %v741
    %v775 = vsub.f32 %v550, %v746
    %v776 = vsub.f32 %v553, %v751
    %v777 = vsub.f32 %v606, %v756
    %v778 = vsub.f32 %v609, %v761
    %v779 = vsub.f32 %v662, %v766
    %v780 = vsub.f32 %v665, %v771
    %v781 = vmul.f32 %v773, 1.442695
    %v782 = vpow.pop %v781
    %v783 = vmul.f32 %v774, 1.442695
    %v784 = vpow.pop %v783
    %v785 = vmul.f32 %v775, 1.442695
    %v786 = vpow.pop %v785
    %v787 = vmul.f32 %v776, 1.442695
    %v788 = vpow.pop %v787
    %v789 = vmul.f32 %v777, 1.442695
    %v790 = vpow.pop %v789
    %v791 = vmul.f32 %v778, 1.442695
    %v792 = vpow.pop %v791
    %v793 = vmul.f32 %v779, 1.442695
    %v794 = vpow.pop %v793
    %v795 = vmul.f32 %v780, 1.442695
    %v796 = vpow.pop %v795
    %v797 = vmul.f32 %v782, %v421
    %v798 = vmul.f32 %v784, %v422
    %v799 = vmul.f32 %v786, %v421
    %v800 = vmul.f32 %v788, %v422
    %v801 = vmul.f32 %v790, %v421
    %v802 = vmul.f32 %v792, %v422
    %v803 = vmul.f32 %v794, %v421
    %v804 = vmul.f32 %v796, %v422
    %v805 = vld [vmem:[#allocation5] sm:$0xff]
    %v806 = vld [vmem:[#allocation5 + $0x8] sm:$0xff]
    %v807 = vld [vmem:[#allocation5 + $0x10] sm:$0xff]
    %v808 = vld [vmem:[#allocation5 + $0x18] sm:$0xff]
    %v809 = vld [vmem:[#allocation5 + $0x20] sm:$0xff]
    %v810 = vld [vmem:[#allocation5 + $0x28] sm:$0xff]
    %v811 = vld [vmem:[#allocation5 + $0x30] sm:$0xff]
    %v812 = vld [vmem:[#allocation5 + $0x38] sm:$0xff]
    %v813 = vmul.f32 %v718, %v805
    %v814 = vmul.f32 %v720, %v806
    %v815 = vmul.f32 %v722, %v807
    %v816 = vmul.f32 %v724, %v808
    %v817 = vmul.f32 %v726, %v809
    %v818 = vmul.f32 %v728, %v810
    %v819 = vmul.f32 %v730, %v811
    %v820 = vmul.f32 %v732, %v812
    %v821 = vsel %vm676, %v797, 0.0
    %822 = vadd.xlane.f32.xlu0 %v821
    %v823 = vpop.xlane.xlu0 %822
    %v824 = vsel %vm676, %v798, 0.0
    %825 = vadd.xlane.f32.xlu0 %v824
    %v826 = vpop.xlane.xlu0 %825
    %v827 = vsel %vm676, %v799, 0.0
    %828 = vadd.xlane.f32.xlu0 %v827
    %v829 = vpop.xlane.xlu0 %828
    %v830 = vsel %vm676, %v800, 0.0
    %831 = vadd.xlane.f32.xlu0 %v830
    %v832 = vpop.xlane.xlu0 %831
    %v833 = vsel %vm676, %v801, 0.0
    %834 = vadd.xlane.f32.xlu0 %v833
    %v835 = vpop.xlane.xlu0 %834
    %v836 = vsel %vm676, %v802, 0.0
    %837 = vadd.xlane.f32.xlu0 %v836
    %v838 = vpop.xlane.xlu0 %837
    %v839 = vsel %vm676, %v803, 0.0
    %840 = vadd.xlane.f32.xlu0 %v839
    %v841 = vpop.xlane.xlu0 %840
    %v842 = vsel %vm676, %v804, 0.0
    %843 = vadd.xlane.f32.xlu0 %v842
    %v844 = vpop.xlane.xlu0 %843
    %v845 = vadd.f32 %v813, %v823
    %v846 = vadd.f32 %v814, %v826
    %v847 = vadd.f32 %v815, %v829
    %v848 = vadd.f32 %v816, %v832
    %v849 = vadd.f32 %v817, %v835
    %v850 = vadd.f32 %v818, %v838
    %v851 = vadd.f32 %v819, %v841
    %v852 = vadd.f32 %v820, %v844
    %vm853 = vcmask 7168
    %854 = vst.msk [vmem:[#allocation5] sm:$0xff] %vm853, %v845
    %855 = vst.msk [vmem:[#allocation5 + $0x8] sm:$0xff] %vm853, %v846
    %856 = vst.msk [vmem:[#allocation5 + $0x10] sm:$0xff] %vm853, %v847
    %857 = vst.msk [vmem:[#allocation5 + $0x18] sm:$0xff] %vm853, %v848
    %858 = vst.msk [vmem:[#allocation5 + $0x20] sm:$0xff] %vm853, %v849
    %859 = vst.msk [vmem:[#allocation5 + $0x28] sm:$0xff] %vm853, %v850
    %860 = vst.msk [vmem:[#allocation5 + $0x30] sm:$0xff] %vm853, %v851
    %861 = vst.msk [vmem:[#allocation5 + $0x38] sm:$0xff] %vm853, %v852
    %v862 = vld [vmem:[#allocation6] sm:$0xff]
    %v863 = vld [vmem:[#allocation6 + $0x8] sm:$0xff]
    %v864 = vld [vmem:[#allocation6 + $0x10] sm:$0xff]
    %v865 = vld [vmem:[#allocation6 + $0x18] sm:$0xff]
    %v866 = vld [vmem:[#allocation6 + $0x20] sm:$0xff]
    %v867 = vld [vmem:[#allocation6 + $0x28] sm:$0xff]
    %v868 = vld [vmem:[#allocation6 + $0x30] sm:$0xff]
    %v869 = vld [vmem:[#allocation6 + $0x38] sm:$0xff]
    %871 = vset.pattern.permute.xlu0 0
    %872 = vperm.xlu0 %871, %v718
    %v873 = vpop.permute.xlu0 %872
    %876 = vset.pattern.permute.xlu0 0
    %877 = vperm.xlu0 %876, %v720
    %v878 = vpop.permute.xlu0 %877
    %881 = vset.pattern.permute.xlu0 0
    %882 = vperm.xlu0 %881, %v722
    %v883 = vpop.permute.xlu0 %882
    %886 = vset.pattern.permute.xlu0 0
    %887 = vperm.xlu0 %886, %v724
    %v888 = vpop.permute.xlu0 %887
    %891 = vset.pattern.permute.xlu0 0
    %892 = vperm.xlu0 %891, %v726
    %v893 = vpop.permute.xlu0 %892
    %896 = vset.pattern.permute.xlu0 0
    %897 = vperm.xlu0 %896, %v728
    %v898 = vpop.permute.xlu0 %897
    %901 = vset.pattern.permute.xlu0 0
    %902 = vperm.xlu0 %901, %v730
    %v903 = vpop.permute.xlu0 %902
    %906 = vset.pattern.permute.xlu0 0
    %907 = vperm.xlu0 %906, %v732
    %v908 = vpop.permute.xlu0 %907
    %v910 = vmul.f32 %v873, %v862
    %v911 = vmul.f32 %v878, %v863
    %v912 = vmul.f32 %v883, %v864
    %v913 = vmul.f32 %v888, %v865
    %v914 = vmul.f32 %v893, %v866
    %v915 = vmul.f32 %v898, %v867
    %v916 = vmul.f32 %v903, %v868
    %v917 = vmul.f32 %v908, %v869
    %v918 = vpack.c.bf16 %v798, %v797
    %v919 = vpack.c.bf16 %v800, %v799
    %v920 = vpack.c.bf16 %v802, %v801
    %v921 = vpack.c.bf16 %v804, %v803
    %v922 = vld [vmem:[%s4] sm:$0xf]
    %v923 = vld [vmem:[%s4 + $0x4] sm:$0xf]
    %v924 = vld [vmem:[%s4 + $0x8] sm:$0xf]
    %v925 = vld [vmem:[%s4 + $0xc] sm:$0xf]
    %v926 = vld [vmem:[%s4 + $0x10] sm:$0xf]
    %v927 = vld [vmem:[%s4 + $0x14] sm:$0xf]
    %v928 = vld [vmem:[%s4 + $0x18] sm:$0xf]
    %v929 = vld [vmem:[%s4 + $0x1c] sm:$0xf]
    %v932 = vunpack.c.l.b16 %v922
    %v933 = vunpack.c.l.b16 %v923
    %v934 = vpack.c.b16 %v933, %v932
    %v937 = vsel %vm676, %v918, 0
    %939 = vmatprep.subr.bf16.mxu0 0
    %940 = vmatpush1.bf16.msra.mxu0 %v934
    %941 = vmatprep.subr.bf16.mxu0 0
    %942 = vmatpush1.bf16.msra.mxu0 0
    %943 = vmatprep.subr.bf16.mxu0 0
    %944 = vmatpush1.bf16.msra.mxu0 0
    %945 = vmatprep.subr.bf16.mxu0 0
    %946 = vmatpush1.bf16.msra.mxu0 0
    %947 = vmatprep.subr.bf16.mxu0 0
    %948 = vmatpush1.bf16.msra.mxu0 0
    %949 = vmatprep.subr.bf16.mxu0 0
    %950 = vmatpush1.bf16.msra.mxu0 0
    %951 = vmatprep.subr.bf16.mxu0 0
    %952 = vmatpush1.bf16.msra.mxu0 0
    %953 = vmatprep.subr.bf16.mxu0 0
    %954 = vmatpush1.bf16.msra.mxu0 0
    %955 = vmatprep.subr.bf16.mxu0 0
    %956 = vmatpush1.bf16.msra.mxu0 0
    %957 = vmatprep.subr.bf16.mxu0 0
    %958 = vmatpush1.bf16.msra.mxu0 0
    %959 = vmatprep.subr.bf16.mxu0 0
    %960 = vmatpush1.bf16.msra.mxu0 0
    %961 = vmatprep.subr.bf16.mxu0 0
    %962 = vmatpush1.bf16.msra.mxu0 0
    %963 = vmatprep.subr.bf16.mxu0 0
    %964 = vmatpush1.bf16.msra.mxu0 0
    %965 = vmatprep.subr.bf16.mxu0 0
    %966 = vmatpush1.bf16.msra.mxu0 0
    %967 = vmatprep.subr.bf16.mxu0 0
    %968 = vmatpush1.bf16.msra.mxu0 0
    %969 = vmatprep.subr.bf16.mxu0 0
    %970 = vmatpush1.bf16.msra.mxu0 0
    %971 = vmatprep.mubr.bf16.mxu0 0
    %972 = vmatmul.mubr.bf16.gmra.mrb[0].mxu0 %v937
    %v973 = vpop.f32.mrb[0].mxu0
    %v974 = vadd.f32 0.0, %v973
    %v975 = vpop.f32.mrb[0].mxu0
    %v976 = vpop.f32.mrb[0].mxu0
    %v977 = vadd.f32 0.0, %v976
    %v978 = vpop.f32.mrb[0].mxu0
    %979 = vdwg.mxu0
    %v982 = vunpack.c.l.b16 %v924
    %v983 = vunpack.c.l.b16 %v925
    %v984 = vpack.c.b16 %v983, %v982
    %v987 = vsel %vm676, %v919, 0
    %989 = vmatprep.subr.bf16.mxu0 0
    %990 = vmatpush1.bf16.msra.mxu0 %v984
    %991 = vmatprep.subr.bf16.mxu0 0
    %992 = vmatpush1.bf16.msra.mxu0 0
    %993 = vmatprep.subr.bf16.mxu0 0
    %994 = vmatpush1.bf16.msra.mxu0 0
    %995 = vmatprep.subr.bf16.mxu0 0
    %996 = vmatpush1.bf16.msra.mxu0 0
    %997 = vmatprep.subr.bf16.mxu0 0
    %998 = vmatpush1.bf16.msra.mxu0 0
    %999 = vmatprep.subr.bf16.mxu0 0
    %1000 = vmatpush1.bf16.msra.mxu0 0
    %1001 = vmatprep.subr.bf16.mxu0 0
    %1002 = vmatpush1.bf16.msra.mxu0 0
    %1003 = vmatprep.subr.bf16.mxu0 0
    %1004 = vmatpush1.bf16.msra.mxu0 0
    %1005 = vmatprep.subr.bf16.mxu0 0
    %1006 = vmatpush1.bf16.msra.mxu0 0
    %1007 = vmatprep.subr.bf16.mxu0 0
    %1008 = vmatpush1.bf16.msra.mxu0 0
    %1009 = vmatprep.subr.bf16.mxu0 0
    %1010 = vmatpush1.bf16.msra.mxu0 0
    %1011 = vmatprep.subr.bf16.mxu0 0
    %1012 = vmatpush1.bf16.msra.mxu0 0
    %1013 = vmatprep.subr.bf16.mxu0 0
    %1014 = vmatpush1.bf16.msra.mxu0 0
    %1015 = vmatprep.subr.bf16.mxu0 0
    %1016 = vmatpush1.bf16.msra.mxu0 0
    %1017 = vmatprep.subr.bf16.mxu0 0
    %1018 = vmatpush1.bf16.msra.mxu0 0
    %1019 = vmatprep.subr.bf16.mxu0 0
    %1020 = vmatpush1.bf16.msra.mxu0 0
    %1021 = vmatprep.mubr.bf16.mxu0 0
    %1022 = vmatmul.mubr.bf16.gmra.mrb[0].mxu0 %v987
    %v1023 = vpop.f32.mrb[0].mxu0
    %v1024 = vadd.f32 0.0, %v1023
    %v1025 = vpop.f32.mrb[0].mxu0
    %v1026 = vpop.f32.mrb[0].mxu0
    %v1027 = vadd.f32 0.0, %v1026
    %v1028 = vpop.f32.mrb[0].mxu0
    %1029 = vdwg.mxu0
    %v1032 = vunpack.c.l.b16 %v926
    %v1033 = vunpack.c.l.b16 %v927
    %v1034 = vpack.c.b16 %v1033, %v1032
    %v1037 = vsel %vm676, %v920, 0
    %1039 = vmatprep.subr.bf16.mxu0 0
    %1040 = vmatpush1.bf16.msra.mxu0 %v1034
    %1041 = vmatprep.subr.bf16.mxu0 0
    %1042 = vmatpush1.bf16.msra.mxu0 0
    %1043 = vmatprep.subr.bf16.mxu0 0
    %1044 = vmatpush1.bf16.msra.mxu0 0
    %1045 = vmatprep.subr.bf16.mxu0 0
    %1046 = vmatpush1.bf16.msra.mxu0 0
    %1047 = vmatprep.subr.bf16.mxu0 0
    %1048 = vmatpush1.bf16.msra.mxu0 0
    %1049 = vmatprep.subr.bf16.mxu0 0
    %1050 = vmatpush1.bf16.msra.mxu0 0
    %1051 = vmatprep.subr.bf16.mxu0 0
    %1052 = vmatpush1.bf16.msra.mxu0 0
    %1053 = vmatprep.subr.bf16.mxu0 0
    %1054 = vmatpush1.bf16.msra.mxu0 0
    %1055 = vmatprep.subr.bf16.mxu0 0
    %1056 = vmatpush1.bf16.msra.mxu0 0
    %1057 = vmatprep.subr.bf16.mxu0 0
    %1058 = vmatpush1.bf16.msra.mxu0 0
    %1059 = vmatprep.subr.bf16.mxu0 0
    %1060 = vmatpush1.bf16.msra.mxu0 0
    %1061 = vmatprep.subr.bf16.mxu0 0
    %1062 = vmatpush1.bf16.msra.mxu0 0
    %1063 = vmatprep.subr.bf16.mxu0 0
    %1064 = vmatpush1.bf16.msra.mxu0 0
    %1065 = vmatprep.subr.bf16.mxu0 0
    %1066 = vmatpush1.bf16.msra.mxu0 0
    %1067 = vmatprep.subr.bf16.mxu0 0
    %1068 = vmatpush1.bf16.msra.mxu0 0
    %1069 = vmatprep.subr.bf16.mxu0 0
    %1070 = vmatpush1.bf16.msra.mxu0 0
    %1071 = vmatprep.mubr.bf16.mxu0 0
    %1072 = vmatmul.mubr.bf16.gmra.mrb[0].mxu0 %v1037
    %v1073 = vpop.f32.mrb[0].mxu0
    %v1074 = vadd.f32 0.0, %v1073
    %v1075 = vpop.f32.mrb[0].mxu0
    %v1076 = vpop.f32.mrb[0].mxu0
    %v1077 = vadd.f32 0.0, %v1076
    %v1078 = vpop.f32.mrb[0].mxu0
    %1079 = vdwg.mxu0
    %v1082 = vunpack.c.l.b16 %v928
    %v1083 = vunpack.c.l.b16 %v929
    %v1084 = vpack.c.b16 %v1083, %v1082
    %v1087 = vsel %vm676, %v921, 0
    %1089 = vmatprep.subr.bf16.mxu0 0
    %1090 = vmatpush1.bf16.msra.mxu0 %v1084
    %1091 = vmatprep.subr.bf16.mxu0 0
    %1092 = vmatpush1.bf16.msra.mxu0 0
    %1093 = vmatprep.subr.bf16.mxu0 0
    %1094 = vmatpush1.bf16.msra.mxu0 0
    %1095 = vmatprep.subr.bf16.mxu0 0
    %1096 = vmatpush1.bf16.msra.mxu0 0
    %1097 = vmatprep.subr.bf16.mxu0 0
    %1098 = vmatpush1.bf16.msra.mxu0 0
    %1099 = vmatprep.subr.bf16.mxu0 0
    %1100 = vmatpush1.bf16.msra.mxu0 0
    %1101 = vmatprep.subr.bf16.mxu0 0
    %1102 = vmatpush1.bf16.msra.mxu0 0
    %1103 = vmatprep.subr.bf16.mxu0 0
    %1104 = vmatpush1.bf16.msra.mxu0 0
    %1105 = vmatprep.subr.bf16.mxu0 0
    %1106 = vmatpush1.bf16.msra.mxu0 0
    %1107 = vmatprep.subr.bf16.mxu0 0
    %1108 = vmatpush1.bf16.msra.mxu0 0
    %1109 = vmatprep.subr.bf16.mxu0 0
    %1110 = vmatpush1.bf16.msra.mxu0 0
    %1111 = vmatprep.subr.bf16.mxu0 0
    %1112 = vmatpush1.bf16.msra.mxu0 0
    %1113 = vmatprep.subr.bf16.mxu0 0
    %1114 = vmatpush1.bf16.msra.mxu0 0
    %1115 = vmatprep.subr.bf16.mxu0 0
    %1116 = vmatpush1.bf16.msra.mxu0 0
    %1117 = vmatprep.subr.bf16.mxu0 0
    %1118 = vmatpush1.bf16.msra.mxu0 0
    %1119 = vmatprep.subr.bf16.mxu0 0
    %1120 = vmatpush1.bf16.msra.mxu0 0
    %1121 = vmatprep.mubr.bf16.mxu0 0
    %1122 = vmatmul.mubr.bf16.gmra.mrb[0].mxu0 %v1087
    %v1123 = vpop.f32.mrb[0].mxu0
    %v1124 = vadd.f32 0.0, %v1123
    %v1125 = vpop.f32.mrb[0].mxu0
    %v1126 = vpop.f32.mrb[0].mxu0
    %v1127 = vadd.f32 0.0, %v1126
    %v1128 = vpop.f32.mrb[0].mxu0
    %1129 = vdwg.mxu0
    %v1130 = vadd.f32 %v910, %v974
    %v1131 = vadd.f32 %v911, %v977
    %v1132 = vadd.f32 %v912, %v1024
    %v1133 = vadd.f32 %v913, %v1027
    %v1134 = vadd.f32 %v914, %v1074
    %v1135 = vadd.f32 %v915, %v1077
    %v1136 = vadd.f32 %v916, %v1124
    %v1137 = vadd.f32 %v917, %v1127
    %1138 = vst.msk [vmem:[#allocation6] sm:$0xff] %vm455, %v1130
    %1139 = vst.msk [vmem:[#allocation6 + $0x8] sm:$0xff] %vm455, %v1131
    %1140 = vst.msk [vmem:[#allocation6 + $0x10] sm:$0xff] %vm455, %v1132
    %1141 = vst.msk [vmem:[#allocation6 + $0x18] sm:$0xff] %vm455, %v1133
    %1142 = vst.msk [vmem:[#allocation6 + $0x20] sm:$0xff] %vm455, %v1134
    %1143 = vst.msk [vmem:[#allocation6 + $0x28] sm:$0xff] %vm455, %v1135
    %1144 = vst.msk [vmem:[#allocation6 + $0x30] sm:$0xff] %vm455, %v1136
    %1145 = vst.msk [vmem:[#allocation6 + $0x38] sm:$0xff] %vm455, %v1137
    %1146 = vst.msk [vmem:[#allocation4] sm:$0xff] %vm853, %v701
    %1147 = vst.msk [vmem:[#allocation4 + $0x8] sm:$0xff] %vm853, %v702
    %1148 = vst.msk [vmem:[#allocation4 + $0x10] sm:$0xff] %vm853, %v703
    %1149 = vst.msk [vmem:[#allocation4 + $0x18] sm:$0xff] %vm853, %v704
    %1150 = vst.msk [vmem:[#allocation4 + $0x20] sm:$0xff] %vm853, %v705
    %1151 = vst.msk [vmem:[#allocation4 + $0x28] sm:$0xff] %vm853, %v706
    %1152 = vst.msk [vmem:[#allocation4 + $0x30] sm:$0xff] %vm853, %v707
    %1153 = vst.msk [vmem:[#allocation4 + $0x38] sm:$0xff] %vm853, %v708
  $region41: #{deepgt_forward.8} parent=0 // pred_fallthru
    _
  // Predicated region
  $region42: #{deepgt_forward.8} parent=0 // pred_check
    %p1154 = pneg %p32
  $region43: #{deepgt_forward.8} parent=0 // pred_check_branch
    %1156 = sbr.rel (%p1154) target = $region45
  $region44: #{deepgt_forward.8} parent=0 // pred_region
    %v1157 = vld [vmem:[#allocation5] sm:$0xff]
    %v1158 = vld [vmem:[#allocation5 + $0x8] sm:$0xff]
    %v1159 = vld [vmem:[#allocation5 + $0x10] sm:$0xff]
    %v1160 = vld [vmem:[#allocation5 + $0x18] sm:$0xff]
    %v1161 = vld [vmem:[#allocation5 + $0x20] sm:$0xff]
    %v1162 = vld [vmem:[#allocation5 + $0x28] sm:$0xff]
    %v1163 = vld [vmem:[#allocation5 + $0x30] sm:$0xff]
    %v1164 = vld [vmem:[#allocation5 + $0x38] sm:$0xff]
    %v1165 = vmax.f32 %v1157, 1e-20
    %v1166 = vmax.f32 %v1158, 1e-20
    %v1167 = vmax.f32 %v1159, 1e-20
    %v1168 = vmax.f32 %v1160, 1e-20
    %v1169 = vmax.f32 %v1161, 1e-20
    %v1170 = vmax.f32 %v1162, 1e-20
    %v1171 = vmax.f32 %v1163, 1e-20
    %v1172 = vmax.f32 %v1164, 1e-20
    %v1173 = vrcp.pop %v1165
    %v1174 = vrcp.pop %v1166
    %v1175 = vrcp.pop %v1167
    %v1176 = vrcp.pop %v1168
    %v1177 = vrcp.pop %v1169
    %v1178 = vrcp.pop %v1170
    %v1179 = vrcp.pop %v1171
    %v1180 = vrcp.pop %v1172
    %v1181 = vld [vmem:[#allocation6] sm:$0xff]
    %v1182 = vld [vmem:[#allocation6 + $0x8] sm:$0xff]
    %v1183 = vld [vmem:[#allocation6 + $0x10] sm:$0xff]
    %v1184 = vld [vmem:[#allocation6 + $0x18] sm:$0xff]
    %v1185 = vld [vmem:[#allocation6 + $0x20] sm:$0xff]
    %v1186 = vld [vmem:[#allocation6 + $0x28] sm:$0xff]
    %v1187 = vld [vmem:[#allocation6 + $0x30] sm:$0xff]
    %v1188 = vld [vmem:[#allocation6 + $0x38] sm:$0xff]
    %1190 = vset.pattern.permute.xlu0 0
    %1191 = vperm.xlu0 %1190, %v1173
    %v1192 = vpop.permute.xlu0 %1191
    %1195 = vset.pattern.permute.xlu0 0
    %1196 = vperm.xlu0 %1195, %v1174
    %v1197 = vpop.permute.xlu0 %1196
    %1200 = vset.pattern.permute.xlu0 0
    %1201 = vperm.xlu0 %1200, %v1175
    %v1202 = vpop.permute.xlu0 %1201
    %1205 = vset.pattern.permute.xlu0 0
    %1206 = vperm.xlu0 %1205, %v1176
    %v1207 = vpop.permute.xlu0 %1206
    %1210 = vset.pattern.permute.xlu0 0
    %1211 = vperm.xlu0 %1210, %v1177
    %v1212 = vpop.permute.xlu0 %1211
    %1215 = vset.pattern.permute.xlu0 0
    %1216 = vperm.xlu0 %1215, %v1178
    %v1217 = vpop.permute.xlu0 %1216
    %1220 = vset.pattern.permute.xlu0 0
    %1221 = vperm.xlu0 %1220, %v1179
    %v1222 = vpop.permute.xlu0 %1221
    %1225 = vset.pattern.permute.xlu0 0
    %1226 = vperm.xlu0 %1225, %v1180
    %v1227 = vpop.permute.xlu0 %1226
    %v1229 = vmul.f32 %v1181, %v1192
    %v1230 = vmul.f32 %v1182, %v1197
    %v1231 = vmul.f32 %v1183, %v1202
    %v1232 = vmul.f32 %v1184, %v1207
    %v1233 = vmul.f32 %v1185, %v1212
    %v1234 = vmul.f32 %v1186, %v1217
    %v1235 = vmul.f32 %v1187, %v1222
    %v1236 = vmul.f32 %v1188, %v1227
    %1239 = vrot.lane.b32.xlu0 %v1231, 32
    %v1240 = vpop.permute.xlu0 %1239
    %1241 = vrot.lane.b32.xlu0 %v1232, 32
    %v1242 = vpop.permute.xlu0 %1241
    %1247 = vrot.lane.b32.xlu0 %v1233, 64
    %v1248 = vpop.permute.xlu0 %1247
    %1249 = vrot.lane.b32.xlu0 %v1234, 64
    %v1250 = vpop.permute.xlu0 %1249
    %1255 = vrot.lane.b32.xlu0 %v1235, 96
    %v1256 = vpop.permute.xlu0 %1255
    %1257 = vrot.lane.b32.xlu0 %v1236, 96
    %v1258 = vpop.permute.xlu0 %1257
    %vm1261 = vcmask 261120
    %v1262 = vsel %vm1261, %v1229, %v1240
    %v1263 = vsel %vm1261, %v1230, %v1242
    %vm1264 = vcmask 523264
    %v1265 = vsel %vm1264, %v1262, %v1248
    %v1266 = vsel %vm1264, %v1263, %v1250
    %vm1267 = vcmask 785408
    %v1268 = vsel %vm1267, %v1265, %v1256
    %v1269 = vsel %vm1267, %v1266, %v1258
    %v1270 = vld [vmem:[#allocation3] sm:$0xff]
    %v1271 = vld [vmem:[#allocation3 + $0x8] sm:$0xff]
    %v1272 = vadd.f32 %v1268, %v1270
    %v1273 = vadd.f32 %v1269, %v1271
    %vm1274 = vcmp.gt.f32.partialorder %v1272, 0.0
    %vm1275 = vcmp.gt.f32.partialorder %v1273, 0.0
    %v1276 = vmin.f32 %v1272, 0.0
    %v1277 = vmin.f32 %v1273, 0.0
    %v1278 = vmul.f32 %v1276, 1.442695
    %v1279 = vpow.pop %v1278
    %v1280 = vmul.f32 %v1277, 1.442695
    %v1281 = vpow.pop %v1280
    %v1282 = vsub.f32 %v1279, 1.0
    %v1283 = vsub.f32 %v1281, 1.0
    %v1284 = vsel %vm1274, %v1272, %v1282
    %v1285 = vsel %vm1275, %v1273, %v1283
    %v1286 = vpack.c.bf16 %v1285, %v1284
    %v1288 = vunpack.c.l.b16 %v1286
    %v1289 = vunpack.c.h.b16 %v1286
    %v1290 = vpack.c.b16 %v1288, %v1288
    %v1291 = vpack.c.b16 %v1289, %v1289
    %1294 = vst [vmem:[%s9] sm:$0xf] %v1290
    %1295 = vst [vmem:[%s9 + $0x4] sm:$0xf] %v1291
  $region45: #{deepgt_forward.8} parent=0 // pred_fallthru
    _
  // Predicated region
  $region46: #{deepgt_forward.8} parent=0 // pred_check
    _
  $region47: #{deepgt_forward.8} parent=0 // pred_check_branch
    %1297 = sbr.rel (0) target = $region49
  $region48: #{deepgt_forward.8} parent=0 // pred_region
    _
  $region49: #{deepgt_forward.8} parent=0 // pred_fallthru
    _
  // Predicated region
  $region50: #{deepgt_forward.8} parent=0 // pred_check
    _
  $region51: #{deepgt_forward.8} parent=0 // pred_check_branch
    %1299 = sbr.rel (0) target = $region53
  $region52: #{deepgt_forward.8} parent=0 // pred_region
    _
  $region53: #{deepgt_forward.8} parent=0 // pred_fallthru
    _

// kernel: deepgt_forward.10
$region0: #{deepgt_forward.10}
  #allocation0 [shape = 'u32[]', space=smem, size = 0x4, offset = 0x4, fixed_abs, tag = 'smem constant byte address 0x4 - core index']
  #allocation1 [shape = 'u32[144,128]{1,0:T(1,128)}', space=vmem, size = 0x12000, scoped, tag = 'internal scratch']
  #allocation2 [shape = 'bf16[4,16,32]{2,1,0:T(16,128)(2,1)}', space=vmem, size = 0x4000, scoped, tag = 'scratch operand']
  #allocation3 [shape = 'f32[16,128]{1,0:T(8,128)}', space=vmem, size = 0x2000, scoped, tag = 'scratch operand']
  #allocation4 [shape = 'f32[4,16,1]{2,1,0:T(8,128)}', space=vmem, size = 0x8000, scoped, tag = 'scratch operand']
  #allocation5 [shape = 'f32[4,16,1]{2,1,0:T(8,128)}', space=vmem, size = 0x8000, scoped, tag = 'scratch operand']
  #allocation6 [shape = 'f32[4,16,32]{2,1,0:T(8,128)}', space=vmem, size = 0x8000, scoped, tag = 'scratch operand']
  #allocation7 [shape = 's32[1]{0}', space=sflag, size = 0x4, scoped, tag = 'scoped memory for deepgt_forward.10']
  #allocation8 [shape = 's32[1]{0:T(128)S(6)}', space=smem, size = 0x200, scoped, tag = 'prefetched SMEM operand 0']
  %s0 = inlined_call_operand.<no memory space> [shape: s32[1], index: 0, kind: input, shape index: {}]
  %s1 = inlined_call_operand.vmem [shape: bf16[16,128], index: 1, kind: input, shape index: {}]
  %s2 = inlined_call_operand.vmem [shape: s8[16,16], index: 2, kind: input, shape index: {}]
  %s3 = inlined_call_operand.vmem [shape: bf16[4,32,16], index: 3, kind: input, shape index: {}]
  %s4 = inlined_call_operand.vmem [shape: bf16[4,16,32], index: 4, kind: input, shape index: {}]
  %s5 = inlined_call_operand.vmem [shape: bf16[4,128,32], index: 5, kind: input, shape index: {}]
  %s6 = inlined_call_operand.vmem [shape: f32[4,1,32], index: 6, kind: input, shape index: {}]
  %s7 = inlined_call_operand.vmem [shape: bf16[128,128], index: 7, kind: input, shape index: {}]
  %s8 = inlined_call_operand.vmem [shape: f32[1,128], index: 8, kind: input, shape index: {}]
  %s9 = inlined_call_operand.vmem [shape: bf16[16,128], index: 9, kind: output, shape index: {}]
  %s10 = sld [smem:[#allocation0]]
  $region54: #{deepgt_forward.10} parent=0
    _
  %s12 = ssub.s32 1, %s10
  %s13 = scalar_select 0, %s12, %s10
  %14 = sst [smem:[#allocation8]] %s0
  // Predicated region
  $region2: #{deepgt_forward.10} parent=0 // pred_check
    _
  $region3: #{deepgt_forward.10} parent=0 // pred_check_branch
    %16 = sbr.rel (0) target = $region5
  $region4: #{deepgt_forward.10} parent=0 // pred_region
    _
  $region5: #{deepgt_forward.10} parent=0 // pred_fallthru
    _
  // Predicated region
  $region6: #{deepgt_forward.10} parent=0 // pred_check
    _
  $region7: #{deepgt_forward.10} parent=0 // pred_check_branch
    %18 = sbr.rel (0) target = $region9
  $region8: #{deepgt_forward.10} parent=0 // pred_region
    _
  $region9: #{deepgt_forward.10} parent=0 // pred_fallthru
    _
  // Predicated region
  $region10: #{deepgt_forward.10} parent=0 // pred_check
    _
  $region11: #{deepgt_forward.10} parent=0 // pred_check_branch
    %20 = sbr.rel (0) target = $region13
  $region12: #{deepgt_forward.10} parent=0 // pred_region
    _
  $region13: #{deepgt_forward.10} parent=0 // pred_fallthru
    _
  // Predicated region
  $region14: #{deepgt_forward.10} parent=0 // pred_check
    _
  $region15: #{deepgt_forward.10} parent=0 // pred_check_branch
    %22 = sbr.rel (0) target = $region17
  $region16: #{deepgt_forward.10} parent=0 // pred_region
    _
  $region17: #{deepgt_forward.10} parent=0 // pred_fallthru
    _
  // Predicated region
  $region18: #{deepgt_forward.10} parent=0 // pred_check
    _
  $region19: #{deepgt_forward.10} parent=0 // pred_check_branch
    %24 = sbr.rel (0) target = $region21
  $region20: #{deepgt_forward.10} parent=0 // pred_region
    _
  $region21: #{deepgt_forward.10} parent=0 // pred_fallthru
    _
  // Predicated region
  $region22: #{deepgt_forward.10} parent=0 // pred_check
    _
  $region23: #{deepgt_forward.10} parent=0 // pred_check_branch
    %26 = sbr.rel (0) target = $region25
  $region24: #{deepgt_forward.10} parent=0 // pred_region
    _
  $region25: #{deepgt_forward.10} parent=0 // pred_fallthru
    _
  // Predicated region
  $region26: #{deepgt_forward.10} parent=0 // pred_check
    _
  $region27: #{deepgt_forward.10} parent=0 // pred_check_branch
    %28 = sbr.rel (0) target = $region29
  $region28: #{deepgt_forward.10} parent=0 // pred_region
    _
  $region29: #{deepgt_forward.10} parent=0 // pred_fallthru
    _
  // Predicated region
  $region30: #{deepgt_forward.10} parent=0 // pred_check
    _
  $region31: #{deepgt_forward.10} parent=0 // pred_check_branch
    %30 = sbr.rel (0) target = $region33
  $region32: #{deepgt_forward.10} parent=0 // pred_region
    _
  $region33: #{deepgt_forward.10} parent=0 // pred_fallthru
    _
  %p32 = scmp.eq.s32.totalorder 0, 0
  // Predicated region
  $region34: #{deepgt_forward.10} parent=0 // pred_check
    %p33 = pneg %p32
  $region35: #{deepgt_forward.10} parent=0 // pred_check_branch
    %35 = sbr.rel (%p33) target = $region37
  $region36: #{deepgt_forward.10} parent=0 // pred_region
    %v36 = vld [vmem:[%s1] sm:$0xf]
    %v37 = vld [vmem:[%s1 + $0x4] sm:$0xf]
    %v38 = vld [vmem:[%s5] sm:$0xf]
    %v39 = vld [vmem:[%s5 + $0x4] sm:$0xf]
    %v40 = vld [vmem:[%s5 + $0x8] sm:$0xf]
    %v41 = vld [vmem:[%s5 + $0xc] sm:$0xf]
    %v42 = vld [vmem:[%s5 + $0x10] sm:$0xf]
    %v43 = vld [vmem:[%s5 + $0x14] sm:$0xf]
    %v44 = vld [vmem:[%s5 + $0x18] sm:$0xf]
    %v45 = vld [vmem:[%s5 + $0x1c] sm:$0xf]
    %v46 = vld [vmem:[%s5 + $0x20] sm:$0xf]
    %v47 = vld [vmem:[%s5 + $0x24] sm:$0xf]
    %v48 = vld [vmem:[%s5 + $0x28] sm:$0xf]
    %v49 = vld [vmem:[%s5 + $0x2c] sm:$0xf]
    %v50 = vld [vmem:[%s5 + $0x30] sm:$0xf]
    %v51 = vld [vmem:[%s5 + $0x34] sm:$0xf]
    %v52 = vld [vmem:[%s5 + $0x38] sm:$0xf]
    %v53 = vld [vmem:[%s5 + $0x3c] sm:$0xf]
    %v54 = vld [vmem:[%s6] sm:$0x1]
    %v56 = vlaneseq
    %v57 = vshrl.u32 %v56, 7
    %v58 = vsub.s32 0, %v57
    %v59 = vrot.slane %v54, %v58
    %v63 = vunpack.c.l.b16 %v36
    %v64 = vunpack.c.l.b16 %v37
    %v65 = vpack.c.b16 %v64, %v63
    %v83 = vunpack.c.l.b16 %v38
    %v84 = vunpack.c.l.b16 %v39
    %v85 = vunpack.c.l.b16 %v40
    %v86 = vunpack.c.l.b16 %v41
    %v87 = vunpack.c.l.b16 %v42
    %v88 = vunpack.c.l.b16 %v43
    %v89 = vunpack.c.l.b16 %v44
    %v90 = vunpack.c.l.b16 %v45
    %v91 = vunpack.c.l.b16 %v46
    %v92 = vunpack.c.l.b16 %v47
    %v93 = vunpack.c.l.b16 %v48
    %v94 = vunpack.c.l.b16 %v49
    %v95 = vunpack.c.l.b16 %v50
    %v96 = vunpack.c.l.b16 %v51
    %v97 = vunpack.c.l.b16 %v52
    %v98 = vunpack.c.l.b16 %v53
    %v99 = vpack.c.b16 %v84, %v83
    %v100 = vpack.c.b16 %v86, %v85
    %v101 = vpack.c.b16 %v88, %v87
    %v102 = vpack.c.b16 %v90, %v89
    %v103 = vpack.c.b16 %v92, %v91
    %v104 = vpack.c.b16 %v94, %v93
    %v105 = vpack.c.b16 %v96, %v95
    %v106 = vpack.c.b16 %v98, %v97
    %115 = vmatprep.subr.bf16.mxu0 0
    %116 = vmatpush1.bf16.msra.mxu0 %v99
    %117 = vmatprep.subr.bf16.mxu0 0
    %118 = vmatpush1.bf16.msra.mxu0 %v100
    %119 = vmatprep.subr.bf16.mxu0 0
    %120 = vmatpush1.bf16.msra.mxu0 %v101
    %121 = vmatprep.subr.bf16.mxu0 0
    %122 = vmatpush1.bf16.msra.mxu0 %v102
    %123 = vmatprep.subr.bf16.mxu0 0
    %124 = vmatpush1.bf16.msra.mxu0 %v103
    %125 = vmatprep.subr.bf16.mxu0 0
    %126 = vmatpush1.bf16.msra.mxu0 %v104
    %127 = vmatprep.subr.bf16.mxu0 0
    %128 = vmatpush1.bf16.msra.mxu0 %v105
    %129 = vmatprep.subr.bf16.mxu0 0
    %130 = vmatpush1.bf16.msra.mxu0 %v106
    %131 = vmatprep.subr.bf16.mxu0 0
    %132 = vmatpush1.bf16.msra.mxu0 0
    %133 = vmatprep.subr.bf16.mxu0 0
    %134 = vmatpush1.bf16.msra.mxu0 0
    %135 = vmatprep.subr.bf16.mxu0 0
    %136 = vmatpush1.bf16.msra.mxu0 0
    %137 = vmatprep.subr.bf16.mxu0 0
    %138 = vmatpush1.bf16.msra.mxu0 0
    %139 = vmatprep.subr.bf16.mxu0 0
    %140 = vmatpush1.bf16.msra.mxu0 0
    %141 = vmatprep.subr.bf16.mxu0 0
    %142 = vmatpush1.bf16.msra.mxu0 0
    %143 = vmatprep.subr.bf16.mxu0 0
    %144 = vmatpush1.bf16.msra.mxu0 0
    %145 = vmatprep.subr.bf16.mxu0 0
    %146 = vmatpush1.bf16.msra.mxu0 0
    %147 = vmatprep.mubr.bf16.mxu0 0
    %148 = vmatmul.mubr.bf16.gmra.mrb[0].mxu0 %v65
    %v149 = vpop.f32.mrb[0].mxu0
    %v150 = vadd.f32 %v59, %v149
    %v151 = vpop.f32.mrb[0].mxu0
    %v152 = vpop.f32.mrb[0].mxu0
    %v153 = vadd.f32 %v59, %v152
    %v154 = vpop.f32.mrb[0].mxu0
    %155 = vdwg.mxu0
    %v156 = vpack.c.bf16 %v153, %v150
    %vm157 = vcmask 261120
    %158 = vst.msk [vmem:[#allocation2] sm:$0xff] %vm157, %v156
    %s159 = scalar_lea.vmem %s5, 64
    %v160 = vld [vmem:[%s159] sm:$0xf]
    %v161 = vld [vmem:[%s159 + $0x4] sm:$0xf]
    %v162 = vld [vmem:[%s159 + $0x8] sm:$0xf]
    %v163 = vld [vmem:[%s159 + $0xc] sm:$0xf]
    %v164 = vld [vmem:[%s159 + $0x10] sm:$0xf]
    %v165 = vld [vmem:[%s159 + $0x14] sm:$0xf]
    %v166 = vld [vmem:[%s159 + $0x18] sm:$0xf]
    %v167 = vld [vmem:[%s159 + $0x1c] sm:$0xf]
    %v168 = vld [vmem:[%s159 + $0x20] sm:$0xf]
    %v169 = vld [vmem:[%s159 + $0x24] sm:$0xf]
    %v170 = vld [vmem:[%s159 + $0x28] sm:$0xf]
    %v171 = vld [vmem:[%s159 + $0x2c] sm:$0xf]
    %v172 = vld [vmem:[%s159 + $0x30] sm:$0xf]
    %v173 = vld [vmem:[%s159 + $0x34] sm:$0xf]
    %v174 = vld [vmem:[%s159 + $0x38] sm:$0xf]
    %v175 = vld [vmem:[%s159 + $0x3c] sm:$0xf]
    %s176 = scalar_lea.vmem %s6, 1
    %v177 = vld [vmem:[%s176] sm:$0x1]
    %v179 = vlaneseq
    %v180 = vshrl.u32 %v179, 7
    %v181 = vsub.s32 0, %v180
    %v182 = vrot.slane %v177, %v181
    %v200 = vunpack.c.l.b16 %v160
    %v201 = vunpack.c.l.b16 %v161
    %v202 = vunpack.c.l.b16 %v162
    %v203 = vunpack.c.l.b16 %v163
    %v204 = vunpack.c.l.b16 %v164
    %v205 = vunpack.c.l.b16 %v165
    %v206 = vunpack.c.l.b16 %v166
    %v207 = vunpack.c.l.b16 %v167
    %v208 = vunpack.c.l.b16 %v168
    %v209 = vunpack.c.l.b16 %v169
    %v210 = vunpack.c.l.b16 %v170
    %v211 = vunpack.c.l.b16 %v171
    %v212 = vunpack.c.l.b16 %v172
    %v213 = vunpack.c.l.b16 %v173
    %v214 = vunpack.c.l.b16 %v174
    %v215 = vunpack.c.l.b16 %v175
    %v216 = vpack.c.b16 %v201, %v200
    %v217 = vpack.c.b16 %v203, %v202
    %v218 = vpack.c.b16 %v205, %v204
    %v219 = vpack.c.b16 %v207, %v206
    %v220 = vpack.c.b16 %v209, %v208
    %v221 = vpack.c.b16 %v211, %v210
    %v222 = vpack.c.b16 %v213, %v212
    %v223 = vpack.c.b16 %v215, %v214
    %232 = vmatprep.subr.bf16.mxu0 0
    %233 = vmatpush1.bf16.msra.mxu0 %v216
    %234 = vmatprep.subr.bf16.mxu0 0
    %235 = vmatpush1.bf16.msra.mxu0 %v217
    %236 = vmatprep.subr.bf16.mxu0 0
    %237 = vmatpush1.bf16.msra.mxu0 %v218
    %238 = vmatprep.subr.bf16.mxu0 0
    %239 = vmatpush1.bf16.msra.mxu0 %v219
    %240 = vmatprep.subr.bf16.mxu0 0
    %241 = vmatpush1.bf16.msra.mxu0 %v220
    %242 = vmatprep.subr.bf16.mxu0 0
    %243 = vmatpush1.bf16.msra.mxu0 %v221
    %244 = vmatprep.subr.bf16.mxu0 0
    %245 = vmatpush1.bf16.msra.mxu0 %v222
    %246 = vmatprep.subr.bf16.mxu0 0
    %247 = vmatpush1.bf16.msra.mxu0 %v223
    %248 = vmatprep.subr.bf16.mxu0 0
    %249 = vmatpush1.bf16.msra.mxu0 0
    %250 = vmatprep.subr.bf16.mxu0 0
    %251 = vmatpush1.bf16.msra.mxu0 0
    %252 = vmatprep.subr.bf16.mxu0 0
    %253 = vmatpush1.bf16.msra.mxu0 0
    %254 = vmatprep.subr.bf16.mxu0 0
    %255 = vmatpush1.bf16.msra.mxu0 0
    %256 = vmatprep.subr.bf16.mxu0 0
    %257 = vmatpush1.bf16.msra.mxu0 0
    %258 = vmatprep.subr.bf16.mxu0 0
    %259 = vmatpush1.bf16.msra.mxu0 0
    %260 = vmatprep.subr.bf16.mxu0 0
    %261 = vmatpush1.bf16.msra.mxu0 0
    %262 = vmatprep.subr.bf16.mxu0 0
    %263 = vmatpush1.bf16.msra.mxu0 0
    %264 = vmatprep.mubr.bf16.mxu0 0
    %265 = vmatmul.mubr.bf16.gmra.mrb[0].mxu0 %v65
    %v266 = vpop.f32.mrb[0].mxu0
    %v267 = vadd.f32 %v182, %v266
    %v268 = vpop.f32.mrb[0].mxu0
    %v269 = vpop.f32.mrb[0].mxu0
    %v270 = vadd.f32 %v182, %v269
    %v271 = vpop.f32.mrb[0].mxu0
    %272 = vdwg.mxu0
    %v273 = vpack.c.bf16 %v270, %v267
    %s274 = scalar_lea.vmem [#allocation2], 8
    %275 = vst.msk [vmem:[%s274] sm:$0xff] %vm157, %v273
    %s276 = scalar_lea.vmem %s5, 128
    %v277 = vld [vmem:[%s276] sm:$0xf]
    %v278 = vld [vmem:[%s276 + $0x4] sm:$0xf]
    %v279 = vld [vmem:[%s276 + $0x8] sm:$0xf]
    %v280 = vld [vmem:[%s276 + $0xc] sm:$0xf]
    %v281 = vld [vmem:[%s276 + $0x10] sm:$0xf]
    %v282 = vld [vmem:[%s276 + $0x14] sm:$0xf]
    %v283 = vld [vmem:[%s276 + $0x18] sm:$0xf]
    %v284 = vld [vmem:[%s276 + $0x1c] sm:$0xf]
    %v285 = vld [vmem:[%s276 + $0x20] sm:$0xf]
    %v286 = vld [vmem:[%s276 + $0x24] sm:$0xf]
    %v287 = vld [vmem:[%s276 + $0x28] sm:$0xf]
    %v288 = vld [vmem:[%s276 + $0x2c] sm:$0xf]
    %v289 = vld [vmem:[%s276 + $0x30] sm:$0xf]
    %v290 = vld [vmem:[%s276 + $0x34] sm:$0xf]
    %v291 = vld [vmem:[%s276 + $0x38] sm:$0xf]
    %v292 = vld [vmem:[%s276 + $0x3c] sm:$0xf]
    %s293 = scalar_lea.vmem %s6, 2
    %v294 = vld [vmem:[%s293] sm:$0x1]
    %v296 = vlaneseq
    %v297 = vshrl.u32 %v296, 7
    %v298 = vsub.s32 0, %v297
    %v299 = vrot.slane %v294, %v298
    %v317 = vunpack.c.l.b16 %v277
    %v318 = vunpack.c.l.b16 %v278
    %v319 = vunpack.c.l.b16 %v279
    %v320 = vunpack.c.l.b16 %v280
    %v321 = vunpack.c.l.b16 %v281
    %v322 = vunpack.c.l.b16 %v282
    %v323 = vunpack.c.l.b16 %v283
    %v324 = vunpack.c.l.b16 %v284
    %v325 = vunpack.c.l.b16 %v285
    %v326 = vunpack.c.l.b16 %v286
    %v327 = vunpack.c.l.b16 %v287
    %v328 = vunpack.c.l.b16 %v288
    %v329 = vunpack.c.l.b16 %v289
    %v330 = vunpack.c.l.b16 %v290
    %v331 = vunpack.c.l.b16 %v291
    %v332 = vunpack.c.l.b16 %v292
    %v333 = vpack.c.b16 %v318, %v317
    %v334 = vpack.c.b16 %v320, %v319
    %v335 = vpack.c.b16 %v322, %v321
    %v336 = vpack.c.b16 %v324, %v323
    %v337 = vpack.c.b16 %v326, %v325
    %v338 = vpack.c.b16 %v328, %v327
    %v339 = vpack.c.b16 %v330, %v329
    %v340 = vpack.c.b16 %v332, %v331
    %349 = vmatprep.subr.bf16.mxu0 0
    %350 = vmatpush1.bf16.msra.mxu0 %v333
    %351 = vmatprep.subr.bf16.mxu0 0
    %352 = vmatpush1.bf16.msra.mxu0 %v334
    %353 = vmatprep.subr.bf16.mxu0 0
    %354 = vmatpush1.bf16.msra.mxu0 %v335
    %355 = vmatprep.subr.bf16.mxu0 0
    %356 = vmatpush1.bf16.msra.mxu0 %v336
    %357 = vmatprep.subr.bf16.mxu0 0
    %358 = vmatpush1.bf16.msra.mxu0 %v337
    %359 = vmatprep.subr.bf16.mxu0 0
    %360 = vmatpush1.bf16.msra.mxu0 %v338
    %361 = vmatprep.subr.bf16.mxu0 0
    %362 = vmatpush1.bf16.msra.mxu0 %v339
    %363 = vmatprep.subr.bf16.mxu0 0
    %364 = vmatpush1.bf16.msra.mxu0 %v340
    %365 = vmatprep.subr.bf16.mxu0 0
    %366 = vmatpush1.bf16.msra.mxu0 0
    %367 = vmatprep.subr.bf16.mxu0 0
    %368 = vmatpush1.bf16.msra.mxu0 0
    %369 = vmatprep.subr.bf16.mxu0 0
    %370 = vmatpush1.bf16.msra.mxu0 0
    %371 = vmatprep.subr.bf16.mxu0 0
    %372 = vmatpush1.bf16.msra.mxu0 0
    %373 = vmatprep.subr.bf16.mxu0 0
    %374 = vmatpush1.bf16.msra.mxu0 0
    %375 = vmatprep.subr.bf16.mxu0 0
    %376 = vmatpush1.bf16.msra.mxu0 0
    %377 = vmatprep.subr.bf16.mxu0 0
    %378 = vmatpush1.bf16.msra.mxu0 0
    %379 = vmatprep.subr.bf16.mxu0 0
    %380 = vmatpush1.bf16.msra.mxu0 0
    %381 = vmatprep.mubr.bf16.mxu0 0
    %382 = vmatmul.mubr.bf16.gmra.mrb[0].mxu0 %v65
    %v383 = vpop.f32.mrb[0].mxu0
    %v384 = vadd.f32 %v299, %v383
    %v385 = vpop.f32.mrb[0].mxu0
    %v386 = vpop.f32.mrb[0].mxu0
    %v387 = vadd.f32 %v299, %v386
    %v388 = vpop.f32.mrb[0].mxu0
    %389 = vdwg.mxu0
    %v390 = vpack.c.bf16 %v387, %v384
    %s391 = scalar_lea.vmem [#allocation2], 16
    %392 = vst.msk [vmem:[%s391] sm:$0xff] %vm157, %v390
    %s393 = scalar_lea.vmem %s5, 192
    %v394 = vld [vmem:[%s393] sm:$0xf]
    %v395 = vld [vmem:[%s393 + $0x4] sm:$0xf]
    %v396 = vld [vmem:[%s393 + $0x8] sm:$0xf]
    %v397 = vld [vmem:[%s393 + $0xc] sm:$0xf]
    %v398 = vld [vmem:[%s393 + $0x10] sm:$0xf]
    %v399 = vld [vmem:[%s393 + $0x14] sm:$0xf]
    %v400 = vld [vmem:[%s393 + $0x18] sm:$0xf]
    %v401 = vld [vmem:[%s393 + $0x1c] sm:$0xf]
    %v402 = vld [vmem:[%s393 + $0x20] sm:$0xf]
    %v403 = vld [vmem:[%s393 + $0x24] sm:$0xf]
    %v404 = vld [vmem:[%s393 + $0x28] sm:$0xf]
    %v405 = vld [vmem:[%s393 + $0x2c] sm:$0xf]
    %v406 = vld [vmem:[%s393 + $0x30] sm:$0xf]
    %v407 = vld [vmem:[%s393 + $0x34] sm:$0xf]
    %v408 = vld [vmem:[%s393 + $0x38] sm:$0xf]
    %v409 = vld [vmem:[%s393 + $0x3c] sm:$0xf]
    %s410 = scalar_lea.vmem %s6, 3
    %v411 = vld [vmem:[%s410] sm:$0x1]
    %v413 = vlaneseq
    %v414 = vshrl.u32 %v413, 7
    %v415 = vsub.s32 0, %v414
    %v416 = vrot.slane %v411, %v415
    %v434 = vunpack.c.l.b16 %v394
    %v435 = vunpack.c.l.b16 %v395
    %v436 = vunpack.c.l.b16 %v396
    %v437 = vunpack.c.l.b16 %v397
    %v438 = vunpack.c.l.b16 %v398
    %v439 = vunpack.c.l.b16 %v399
    %v440 = vunpack.c.l.b16 %v400
    %v441 = vunpack.c.l.b16 %v401
    %v442 = vunpack.c.l.b16 %v402
    %v443 = vunpack.c.l.b16 %v403
    %v444 = vunpack.c.l.b16 %v404
    %v445 = vunpack.c.l.b16 %v405
    %v446 = vunpack.c.l.b16 %v406
    %v447 = vunpack.c.l.b16 %v407
    %v448 = vunpack.c.l.b16 %v408
    %v449 = vunpack.c.l.b16 %v409
    %v450 = vpack.c.b16 %v435, %v434
    %v451 = vpack.c.b16 %v437, %v436
    %v452 = vpack.c.b16 %v439, %v438
    %v453 = vpack.c.b16 %v441, %v440
    %v454 = vpack.c.b16 %v443, %v442
    %v455 = vpack.c.b16 %v445, %v444
    %v456 = vpack.c.b16 %v447, %v446
    %v457 = vpack.c.b16 %v449, %v448
    %466 = vmatprep.subr.bf16.mxu0 0
    %467 = vmatpush1.bf16.msra.mxu0 %v450
    %468 = vmatprep.subr.bf16.mxu0 0
    %469 = vmatpush1.bf16.msra.mxu0 %v451
    %470 = vmatprep.subr.bf16.mxu0 0
    %471 = vmatpush1.bf16.msra.mxu0 %v452
    %472 = vmatprep.subr.bf16.mxu0 0
    %473 = vmatpush1.bf16.msra.mxu0 %v453
    %474 = vmatprep.subr.bf16.mxu0 0
    %475 = vmatpush1.bf16.msra.mxu0 %v454
    %476 = vmatprep.subr.bf16.mxu0 0
    %477 = vmatpush1.bf16.msra.mxu0 %v455
    %478 = vmatprep.subr.bf16.mxu0 0
    %479 = vmatpush1.bf16.msra.mxu0 %v456
    %480 = vmatprep.subr.bf16.mxu0 0
    %481 = vmatpush1.bf16.msra.mxu0 %v457
    %482 = vmatprep.subr.bf16.mxu0 0
    %483 = vmatpush1.bf16.msra.mxu0 0
    %484 = vmatprep.subr.bf16.mxu0 0
    %485 = vmatpush1.bf16.msra.mxu0 0
    %486 = vmatprep.subr.bf16.mxu0 0
    %487 = vmatpush1.bf16.msra.mxu0 0
    %488 = vmatprep.subr.bf16.mxu0 0
    %489 = vmatpush1.bf16.msra.mxu0 0
    %490 = vmatprep.subr.bf16.mxu0 0
    %491 = vmatpush1.bf16.msra.mxu0 0
    %492 = vmatprep.subr.bf16.mxu0 0
    %493 = vmatpush1.bf16.msra.mxu0 0
    %494 = vmatprep.subr.bf16.mxu0 0
    %495 = vmatpush1.bf16.msra.mxu0 0
    %496 = vmatprep.subr.bf16.mxu0 0
    %497 = vmatpush1.bf16.msra.mxu0 0
    %498 = vmatprep.mubr.bf16.mxu0 0
    %499 = vmatmul.mubr.bf16.gmra.mrb[0].mxu0 %v65
    %v500 = vpop.f32.mrb[0].mxu0
    %v501 = vadd.f32 %v416, %v500
    %v502 = vpop.f32.mrb[0].mxu0
    %v503 = vpop.f32.mrb[0].mxu0
    %v504 = vadd.f32 %v416, %v503
    %v505 = vpop.f32.mrb[0].mxu0
    %506 = vdwg.mxu0
    %v507 = vpack.c.bf16 %v504, %v501
    %s508 = scalar_lea.vmem [#allocation2], 24
    %509 = vst.msk [vmem:[%s508] sm:$0xff] %vm157, %v507
    %v510 = vld [vmem:[%s7] sm:$0xf]
    %v511 = vld [vmem:[%s7 + $0x4] sm:$0xf]
    %v512 = vld [vmem:[%s7 + $0x8] sm:$0xf]
    %v513 = vld [vmem:[%s7 + $0xc] sm:$0xf]
    %v514 = vld [vmem:[%s7 + $0x10] sm:$0xf]
    %v515 = vld [vmem:[%s7 + $0x14] sm:$0xf]
    %v516 = vld [vmem:[%s7 + $0x18] sm:$0xf]
    %v517 = vld [vmem:[%s7 + $0x1c] sm:$0xf]
    %v518 = vld [vmem:[%s7 + $0x20] sm:$0xf]
    %v519 = vld [vmem:[%s7 + $0x24] sm:$0xf]
    %v520 = vld [vmem:[%s7 + $0x28] sm:$0xf]
    %v521 = vld [vmem:[%s7 + $0x2c] sm:$0xf]
    %v522 = vld [vmem:[%s7 + $0x30] sm:$0xf]
    %v523 = vld [vmem:[%s7 + $0x34] sm:$0xf]
    %v524 = vld [vmem:[%s7 + $0x38] sm:$0xf]
    %v525 = vld [vmem:[%s7 + $0x3c] sm:$0xf]
    %v526 = vld [vmem:[%s8] sm:$0x1]
    %v528 = vlaneseq
    %v529 = vshrl.u32 %v528, 7
    %v530 = vsub.s32 0, %v529
    %v531 = vrot.slane %v526, %v530
    %v549 = vunpack.c.l.b16 %v510
    %v550 = vunpack.c.l.b16 %v511
    %v551 = vunpack.c.l.b16 %v512
    %v552 = vunpack.c.l.b16 %v513
    %v553 = vunpack.c.l.b16 %v514
    %v554 = vunpack.c.l.b16 %v515
    %v555 = vunpack.c.l.b16 %v516
    %v556 = vunpack.c.l.b16 %v517
    %v557 = vunpack.c.l.b16 %v518
    %v558 = vunpack.c.l.b16 %v519
    %v559 = vunpack.c.l.b16 %v520
    %v560 = vunpack.c.l.b16 %v521
    %v561 = vunpack.c.l.b16 %v522
    %v562 = vunpack.c.l.b16 %v523
    %v563 = vunpack.c.l.b16 %v524
    %v564 = vunpack.c.l.b16 %v525
    %v565 = vpack.c.b16 %v550, %v549
    %v566 = vpack.c.b16 %v552, %v551
    %v567 = vpack.c.b16 %v554, %v553
    %v568 = vpack.c.b16 %v556, %v555
    %v569 = vpack.c.b16 %v558, %v557
    %v570 = vpack.c.b16 %v560, %v559
    %v571 = vpack.c.b16 %v562, %v561
    %v572 = vpack.c.b16 %v564, %v563
    %581 = vmatprep.subr.bf16.mxu0 0
    %582 = vmatpush1.bf16.msra.mxu0 %v565
    %583 = vmatprep.subr.bf16.mxu0 0
    %584 = vmatpush1.bf16.msra.mxu0 %v566
    %585 = vmatprep.subr.bf16.mxu0 0
    %586 = vmatpush1.bf16.msra.mxu0 %v567
    %587 = vmatprep.subr.bf16.mxu0 0
    %588 = vmatpush1.bf16.msra.mxu0 %v568
    %589 = vmatprep.subr.bf16.mxu0 0
    %590 = vmatpush1.bf16.msra.mxu0 %v569
    %591 = vmatprep.subr.bf16.mxu0 0
    %592 = vmatpush1.bf16.msra.mxu0 %v570
    %593 = vmatprep.subr.bf16.mxu0 0
    %594 = vmatpush1.bf16.msra.mxu0 %v571
    %595 = vmatprep.subr.bf16.mxu0 0
    %596 = vmatpush1.bf16.msra.mxu0 %v572
    %597 = vmatprep.subr.bf16.mxu0 0
    %598 = vmatpush1.bf16.msra.mxu0 0
    %599 = vmatprep.subr.bf16.mxu0 0
    %600 = vmatpush1.bf16.msra.mxu0 0
    %601 = vmatprep.subr.bf16.mxu0 0
    %602 = vmatpush1.bf16.msra.mxu0 0
    %603 = vmatprep.subr.bf16.mxu0 0
    %604 = vmatpush1.bf16.msra.mxu0 0
    %605 = vmatprep.subr.bf16.mxu0 0
    %606 = vmatpush1.bf16.msra.mxu0 0
    %607 = vmatprep.subr.bf16.mxu0 0
    %608 = vmatpush1.bf16.msra.mxu0 0
    %609 = vmatprep.subr.bf16.mxu0 0
    %610 = vmatpush1.bf16.msra.mxu0 0
    %611 = vmatprep.subr.bf16.mxu0 0
    %612 = vmatpush1.bf16.msra.mxu0 0
    %613 = vmatprep.mubr.bf16.mxu0 0
    %614 = vmatmul.mubr.bf16.gmra.mrb[0].mxu0 %v65
    %v615 = vpop.f32.mrb[0].mxu0
    %v616 = vadd.f32 %v531, %v615
    %v617 = vpop.f32.mrb[0].mxu0
    %v618 = vpop.f32.mrb[0].mxu0
    %v619 = vadd.f32 %v531, %v618
    %v620 = vpop.f32.mrb[0].mxu0
    %621 = vdwg.mxu0
    %622 = vst [vmem:[#allocation3] sm:$0xff] %v616
    %623 = vst [vmem:[#allocation3 + $0x8] sm:$0xff] %v619
    %vm624 = vcmask 7168
    %625 = vst.msk [vmem:[#allocation4] sm:$0xff] %vm624, -1e+30
    %626 = vst.msk [vmem:[#allocation4 + $0x8] sm:$0xff] %vm624, -1e+30
    %627 = vst.msk [vmem:[#allocation4 + $0x10] sm:$0xff] %vm624, -1e+30
    %628 = vst.msk [vmem:[#allocation4 + $0x18] sm:$0xff] %vm624, -1e+30
    %629 = vst.msk [vmem:[#allocation4 + $0x20] sm:$0xff] %vm624, -1e+30
    %630 = vst.msk [vmem:[#allocation4 + $0x28] sm:$0xff] %vm624, -1e+30
    %631 = vst.msk [vmem:[#allocation4 + $0x30] sm:$0xff] %vm624, -1e+30
    %632 = vst.msk [vmem:[#allocation4 + $0x38] sm:$0xff] %vm624, -1e+30
    %633 = vst.msk [vmem:[#allocation5] sm:$0xff] %vm624, 0.0
    %634 = vst.msk [vmem:[#allocation5 + $0x8] sm:$0xff] %vm624, 0.0
    %635 = vst.msk [vmem:[#allocation5 + $0x10] sm:$0xff] %vm624, 0.0
    %636 = vst.msk [vmem:[#allocation5 + $0x18] sm:$0xff] %vm624, 0.0
    %637 = vst.msk [vmem:[#allocation5 + $0x20] sm:$0xff] %vm624, 0.0
    %638 = vst.msk [vmem:[#allocation5 + $0x28] sm:$0xff] %vm624, 0.0
    %639 = vst.msk [vmem:[#allocation5 + $0x30] sm:$0xff] %vm624, 0.0
    %640 = vst.msk [vmem:[#allocation5 + $0x38] sm:$0xff] %vm624, 0.0
    %641 = vst.msk [vmem:[#allocation6] sm:$0xff] %vm157, 0.0
    %642 = vst.msk [vmem:[#allocation6 + $0x8] sm:$0xff] %vm157, 0.0
    %643 = vst.msk [vmem:[#allocation6 + $0x10] sm:$0xff] %vm157, 0.0
    %644 = vst.msk [vmem:[#allocation6 + $0x18] sm:$0xff] %vm157, 0.0
    %645 = vst.msk [vmem:[#allocation6 + $0x20] sm:$0xff] %vm157, 0.0
    %646 = vst.msk [vmem:[#allocation6 + $0x28] sm:$0xff] %vm157, 0.0
    %647 = vst.msk [vmem:[#allocation6 + $0x30] sm:$0xff] %vm157, 0.0
    %648 = vst.msk [vmem:[#allocation6 + $0x38] sm:$0xff] %vm157, 0.0
  $region37: #{deepgt_forward.10} parent=0 // pred_fallthru
    _
  %s649 = sadd.s32 0, 0
  %s650 = sld [smem:[#allocation8 + %s649]]
  %p651 = scmp.ne.s32.totalorder %s650, 0
  // Predicated region
  $region38: #{deepgt_forward.10} parent=0 // pred_check
    %p652 = pneg %p651
  $region39: #{deepgt_forward.10} parent=0 // pred_check_branch
    %654 = sbr.rel (%p652) target = $region41
  $region40: #{deepgt_forward.10} parent=0 // pred_region
    %v655 = vld [vmem:[%s2] sm:$0x3]
    %v656 = vld [vmem:[%s2 + $0x2] sm:$0x3]
    %v657 = vunpack.c.0.s8 %v655
    %v658 = vunpack.c.0.s8 %v656
    %v659 = vcvt.s32.f32 %v657
    %v660 = vcvt.s32.f32 %v658
    %v661 = vld [vmem:[#allocation2] sm:$0xff]
    %v662 = vld [vmem:[#allocation2 + $0x8] sm:$0xff]
    %v663 = vld [vmem:[#allocation2 + $0x10] sm:$0xff]
    %v664 = vld [vmem:[#allocation2 + $0x18] sm:$0xff]
    %v665 = vld [vmem:[%s3] sm:$0xf]
    %v666 = vld [vmem:[%s3 + $0x4] sm:$0xf]
    %v667 = vld [vmem:[%s3 + $0x8] sm:$0xf]
    %v668 = vld [vmem:[%s3 + $0xc] sm:$0xf]
    %v669 = vld [vmem:[%s3 + $0x10] sm:$0xf]
    %v670 = vld [vmem:[%s3 + $0x14] sm:$0xf]
    %v671 = vld [vmem:[%s3 + $0x18] sm:$0xf]
    %v672 = vld [vmem:[%s3 + $0x1c] sm:$0xf]
    %v673 = vld [vmem:[%s3 + $0x20] sm:$0xf]
    %v674 = vld [vmem:[%s3 + $0x24] sm:$0xf]
    %v675 = vld [vmem:[%s3 + $0x28] sm:$0xf]
    %v676 = vld [vmem:[%s3 + $0x2c] sm:$0xf]
    %v677 = vld [vmem:[%s3 + $0x30] sm:$0xf]
    %v678 = vld [vmem:[%s3 + $0x34] sm:$0xf]
    %v679 = vld [vmem:[%s3 + $0x38] sm:$0xf]
    %v680 = vld [vmem:[%s3 + $0x3c] sm:$0xf]
    %v685 = vunpack.c.l.b16 %v665
    %v686 = vunpack.c.l.b16 %v666
    %v687 = vunpack.c.l.b16 %v667
    %v688 = vunpack.c.l.b16 %v668
    %v689 = vpack.c.b16 %v686, %v685
    %v690 = vpack.c.b16 %v688, %v687
    %vm693 = vcmask 261120
    %v695 = vsel %vm693, %v661, 0
    %697 = vmatprep.subr.bf16.mxu0 0
    %698 = vmatpush1.bf16.msra.mxu0 %v689
    %699 = vmatprep.subr.bf16.mxu0 0
    %700 = vmatpush1.bf16.msra.mxu0 %v690
    %701 = vmatprep.subr.bf16.mxu0 0
    %702 = vmatpush1.bf16.msra.mxu0 0
    %703 = vmatprep.subr.bf16.mxu0 0
    %704 = vmatpush1.bf16.msra.mxu0 0
    %705 = vmatprep.subr.bf16.mxu0 0
    %706 = vmatpush1.bf16.msra.mxu0 0
    %707 = vmatprep.subr.bf16.mxu0 0
    %708 = vmatpush1.bf16.msra.mxu0 0
    %709 = vmatprep.subr.bf16.mxu0 0
    %710 = vmatpush1.bf16.msra.mxu0 0
    %711 = vmatprep.subr.bf16.mxu0 0
    %712 = vmatpush1.bf16.msra.mxu0 0
    %713 = vmatprep.subr.bf16.mxu0 0
    %714 = vmatpush1.bf16.msra.mxu0 0
    %715 = vmatprep.subr.bf16.mxu0 0
    %716 = vmatpush1.bf16.msra.mxu0 0
    %717 = vmatprep.subr.bf16.mxu0 0
    %718 = vmatpush1.bf16.msra.mxu0 0
    %719 = vmatprep.subr.bf16.mxu0 0
    %720 = vmatpush1.bf16.msra.mxu0 0
    %721 = vmatprep.subr.bf16.mxu0 0
    %722 = vmatpush1.bf16.msra.mxu0 0
    %723 = vmatprep.subr.bf16.mxu0 0
    %724 = vmatpush1.bf16.msra.mxu0 0
    %725 = vmatprep.subr.bf16.mxu0 0
    %726 = vmatpush1.bf16.msra.mxu0 0
    %727 = vmatprep.subr.bf16.mxu0 0
    %728 = vmatpush1.bf16.msra.mxu0 0
    %729 = vmatprep.mubr.bf16.mxu0 0
    %730 = vmatmul.mubr.bf16.gmra.mrb[0].mxu0 %v695
    %v731 = vpop.f32.mrb[0].mxu0
    %v732 = vadd.f32 0.0, %v731
    %v733 = vpop.f32.mrb[0].mxu0
    %v734 = vpop.f32.mrb[0].mxu0
    %v735 = vadd.f32 0.0, %v734
    %v736 = vpop.f32.mrb[0].mxu0
    %737 = vdwg.mxu0
    %v742 = vunpack.c.l.b16 %v669
    %v743 = vunpack.c.l.b16 %v670
    %v744 = vunpack.c.l.b16 %v671
    %v745 = vunpack.c.l.b16 %v672
    %v746 = vpack.c.b16 %v743, %v742
    %v747 = vpack.c.b16 %v745, %v744
    %v751 = vsel %vm693, %v662, 0
    %753 = vmatprep.subr.bf16.mxu0 0
    %754 = vmatpush1.bf16.msra.mxu0 %v746
    %755 = vmatprep.subr.bf16.mxu0 0
    %756 = vmatpush1.bf16.msra.mxu0 %v747
    %757 = vmatprep.subr.bf16.mxu0 0
    %758 = vmatpush1.bf16.msra.mxu0 0
    %759 = vmatprep.subr.bf16.mxu0 0
    %760 = vmatpush1.bf16.msra.mxu0 0
    %761 = vmatprep.subr.bf16.mxu0 0
    %762 = vmatpush1.bf16.msra.mxu0 0
    %763 = vmatprep.subr.bf16.mxu0 0
    %764 = vmatpush1.bf16.msra.mxu0 0
    %765 = vmatprep.subr.bf16.mxu0 0
    %766 = vmatpush1.bf16.msra.mxu0 0
    %767 = vmatprep.subr.bf16.mxu0 0
    %768 = vmatpush1.bf16.msra.mxu0 0
    %769 = vmatprep.subr.bf16.mxu0 0
    %770 = vmatpush1.bf16.msra.mxu0 0
    %771 = vmatprep.subr.bf16.mxu0 0
    %772 = vmatpush1.bf16.msra.mxu0 0
    %773 = vmatprep.subr.bf16.mxu0 0
    %774 = vmatpush1.bf16.msra.mxu0 0
    %775 = vmatprep.subr.bf16.mxu0 0
    %776 = vmatpush1.bf16.msra.mxu0 0
    %777 = vmatprep.subr.bf16.mxu0 0
    %778 = vmatpush1.bf16.msra.mxu0 0
    %779 = vmatprep.subr.bf16.mxu0 0
    %780 = vmatpush1.bf16.msra.mxu0 0
    %781 = vmatprep.subr.bf16.mxu0 0
    %782 = vmatpush1.bf16.msra.mxu0 0
    %783 = vmatprep.subr.bf16.mxu0 0
    %784 = vmatpush1.bf16.msra.mxu0 0
    %785 = vmatprep.mubr.bf16.mxu0 0
    %786 = vmatmul.mubr.bf16.gmra.mrb[0].mxu0 %v751
    %v787 = vpop.f32.mrb[0].mxu0
    %v788 = vadd.f32 0.0, %v787
    %v789 = vpop.f32.mrb[0].mxu0
    %v790 = vpop.f32.mrb[0].mxu0
    %v791 = vadd.f32 0.0, %v790
    %v792 = vpop.f32.mrb[0].mxu0
    %793 = vdwg.mxu0
    %v798 = vunpack.c.l.b16 %v673
    %v799 = vunpack.c.l.b16 %v674
    %v800 = vunpack.c.l.b16 %v675
    %v801 = vunpack.c.l.b16 %v676
    %v802 = vpack.c.b16 %v799, %v798
    %v803 = vpack.c.b16 %v801, %v800
    %v807 = vsel %vm693, %v663, 0
    %809 = vmatprep.subr.bf16.mxu0 0
    %810 = vmatpush1.bf16.msra.mxu0 %v802
    %811 = vmatprep.subr.bf16.mxu0 0
    %812 = vmatpush1.bf16.msra.mxu0 %v803
    %813 = vmatprep.subr.bf16.mxu0 0
    %814 = vmatpush1.bf16.msra.mxu0 0
    %815 = vmatprep.subr.bf16.mxu0 0
    %816 = vmatpush1.bf16.msra.mxu0 0
    %817 = vmatprep.subr.bf16.mxu0 0
    %818 = vmatpush1.bf16.msra.mxu0 0
    %819 = vmatprep.subr.bf16.mxu0 0
    %820 = vmatpush1.bf16.msra.mxu0 0
    %821 = vmatprep.subr.bf16.mxu0 0
    %822 = vmatpush1.bf16.msra.mxu0 0
    %823 = vmatprep.subr.bf16.mxu0 0
    %824 = vmatpush1.bf16.msra.mxu0 0
    %825 = vmatprep.subr.bf16.mxu0 0
    %826 = vmatpush1.bf16.msra.mxu0 0
    %827 = vmatprep.subr.bf16.mxu0 0
    %828 = vmatpush1.bf16.msra.mxu0 0
    %829 = vmatprep.subr.bf16.mxu0 0
    %830 = vmatpush1.bf16.msra.mxu0 0
    %831 = vmatprep.subr.bf16.mxu0 0
    %832 = vmatpush1.bf16.msra.mxu0 0
    %833 = vmatprep.subr.bf16.mxu0 0
    %834 = vmatpush1.bf16.msra.mxu0 0
    %835 = vmatprep.subr.bf16.mxu0 0
    %836 = vmatpush1.bf16.msra.mxu0 0
    %837 = vmatprep.subr.bf16.mxu0 0
    %838 = vmatpush1.bf16.msra.mxu0 0
    %839 = vmatprep.subr.bf16.mxu0 0
    %840 = vmatpush1.bf16.msra.mxu0 0
    %841 = vmatprep.mubr.bf16.mxu0 0
    %842 = vmatmul.mubr.bf16.gmra.mrb[0].mxu0 %v807
    %v843 = vpop.f32.mrb[0].mxu0
    %v844 = vadd.f32 0.0, %v843
    %v845 = vpop.f32.mrb[0].mxu0
    %v846 = vpop.f32.mrb[0].mxu0
    %v847 = vadd.f32 0.0, %v846
    %v848 = vpop.f32.mrb[0].mxu0
    %849 = vdwg.mxu0
    %v854 = vunpack.c.l.b16 %v677
    %v855 = vunpack.c.l.b16 %v678
    %v856 = vunpack.c.l.b16 %v679
    %v857 = vunpack.c.l.b16 %v680
    %v858 = vpack.c.b16 %v855, %v854
    %v859 = vpack.c.b16 %v857, %v856
    %v863 = vsel %vm693, %v664, 0
    %865 = vmatprep.subr.bf16.mxu0 0
    %866 = vmatpush1.bf16.msra.mxu0 %v858
    %867 = vmatprep.subr.bf16.mxu0 0
    %868 = vmatpush1.bf16.msra.mxu0 %v859
    %869 = vmatprep.subr.bf16.mxu0 0
    %870 = vmatpush1.bf16.msra.mxu0 0
    %871 = vmatprep.subr.bf16.mxu0 0
    %872 = vmatpush1.bf16.msra.mxu0 0
    %873 = vmatprep.subr.bf16.mxu0 0
    %874 = vmatpush1.bf16.msra.mxu0 0
    %875 = vmatprep.subr.bf16.mxu0 0
    %876 = vmatpush1.bf16.msra.mxu0 0
    %877 = vmatprep.subr.bf16.mxu0 0
    %878 = vmatpush1.bf16.msra.mxu0 0
    %879 = vmatprep.subr.bf16.mxu0 0
    %880 = vmatpush1.bf16.msra.mxu0 0
    %881 = vmatprep.subr.bf16.mxu0 0
    %882 = vmatpush1.bf16.msra.mxu0 0
    %883 = vmatprep.subr.bf16.mxu0 0
    %884 = vmatpush1.bf16.msra.mxu0 0
    %885 = vmatprep.subr.bf16.mxu0 0
    %886 = vmatpush1.bf16.msra.mxu0 0
    %887 = vmatprep.subr.bf16.mxu0 0
    %888 = vmatpush1.bf16.msra.mxu0 0
    %889 = vmatprep.subr.bf16.mxu0 0
    %890 = vmatpush1.bf16.msra.mxu0 0
    %891 = vmatprep.subr.bf16.mxu0 0
    %892 = vmatpush1.bf16.msra.mxu0 0
    %893 = vmatprep.subr.bf16.mxu0 0
    %894 = vmatpush1.bf16.msra.mxu0 0
    %895 = vmatprep.subr.bf16.mxu0 0
    %896 = vmatpush1.bf16.msra.mxu0 0
    %897 = vmatprep.mubr.bf16.mxu0 0
    %898 = vmatmul.mubr.bf16.gmra.mrb[0].mxu0 %v863
    %v899 = vpop.f32.mrb[0].mxu0
    %v900 = vadd.f32 0.0, %v899
    %v901 = vpop.f32.mrb[0].mxu0
    %v902 = vpop.f32.mrb[0].mxu0
    %v903 = vadd.f32 0.0, %v902
    %v904 = vpop.f32.mrb[0].mxu0
    %905 = vdwg.mxu0
    %v906 = vld [vmem:[#allocation4] sm:$0xff]
    %v907 = vld [vmem:[#allocation4 + $0x8] sm:$0xff]
    %v908 = vld [vmem:[#allocation4 + $0x10] sm:$0xff]
    %v909 = vld [vmem:[#allocation4 + $0x18] sm:$0xff]
    %v910 = vld [vmem:[#allocation4 + $0x20] sm:$0xff]
    %v911 = vld [vmem:[#allocation4 + $0x28] sm:$0xff]
    %v912 = vld [vmem:[#allocation4 + $0x30] sm:$0xff]
    %v913 = vld [vmem:[#allocation4 + $0x38] sm:$0xff]
    %vm914 = vcmask 130048
    %v915 = vsel %vm914, %v732, -inf
    %916 = vmax.xlane.f32.xlu0 %v915
    %v917 = vpop.xlane.xlu0 %916
    %v918 = vsel %vm914, %v735, -inf
    %919 = vmax.xlane.f32.xlu0 %v918
    %v920 = vpop.xlane.xlu0 %919
    %v921 = vsel %vm914, %v788, -inf
    %922 = vmax.xlane.f32.xlu0 %v921
    %v923 = vpop.xlane.xlu0 %922
    %v924 = vsel %vm914, %v791, -inf
    %925 = vmax.xlane.f32.xlu0 %v924
    %v926 = vpop.xlane.xlu0 %925
    %v927 = vsel %vm914, %v844, -inf
    %928 = vmax.xlane.f32.xlu0 %v927
    %v929 = vpop.xlane.xlu0 %928
    %v930 = vsel %vm914, %v847, -inf
    %931 = vmax.xlane.f32.xlu0 %v930
    %v932 = vpop.xlane.xlu0 %931
    %v933 = vsel %vm914, %v900, -inf
    %934 = vmax.xlane.f32.xlu0 %v933
    %v935 = vpop.xlane.xlu0 %934
    %v936 = vsel %vm914, %v903, -inf
    %937 = vmax.xlane.f32.xlu0 %v936
    %v938 = vpop.xlane.xlu0 %937
    %v939 = vmax.f32 %v906, %v917
    %v940 = vmax.f32 %v907, %v920
    %v941 = vmax.f32 %v908, %v923
    %v942 = vmax.f32 %v909, %v926
    %v943 = vmax.f32 %v910, %v929
    %v944 = vmax.f32 %v911, %v932
    %v945 = vmax.f32 %v912, %v935
    %v946 = vmax.f32 %v913, %v938
    %v947 = vsub.f32 %v906, %v939
    %v948 = vsub.f32 %v907, %v940
    %v949 = vsub.f32 %v908, %v941
    %v950 = vsub.f32 %v909, %v942
    %v951 = vsub.f32 %v910, %v943
    %v952 = vsub.f32 %v911, %v944
    %v953 = vsub.f32 %v912, %v945
    %v954 = vsub.f32 %v913, %v946
    %v955 = vmul.f32 %v947, 1.442695
    %v956 = vpow.pop %v955
    %v957 = vmul.f32 %v948, 1.442695
    %v958 = vpow.pop %v957
    %v959 = vmul.f32 %v949, 1.442695
    %v960 = vpow.pop %v959
    %v961 = vmul.f32 %v950, 1.442695
    %v962 = vpow.pop %v961
    %v963 = vmul.f32 %v951, 1.442695
    %v964 = vpow.pop %v963
    %v965 = vmul.f32 %v952, 1.442695
    %v966 = vpow.pop %v965
    %v967 = vmul.f32 %v953, 1.442695
    %v968 = vpow.pop %v967
    %v969 = vmul.f32 %v954, 1.442695
    %v970 = vpow.pop %v969
    %972 = vset.pattern.permute.xlu0 0
    %973 = vperm.xlu0 %972, %v939
    %v974 = vpop.permute.xlu0 %973
    %977 = vset.pattern.permute.xlu0 0
    %978 = vperm.xlu0 %977, %v940
    %v979 = vpop.permute.xlu0 %978
    %982 = vset.pattern.permute.xlu0 0
    %983 = vperm.xlu0 %982, %v941
    %v984 = vpop.permute.xlu0 %983
    %987 = vset.pattern.permute.xlu0 0
    %988 = vperm.xlu0 %987, %v942
    %v989 = vpop.permute.xlu0 %988
    %992 = vset.pattern.permute.xlu0 0
    %993 = vperm.xlu0 %992, %v943
    %v994 = vpop.permute.xlu0 %993
    %997 = vset.pattern.permute.xlu0 0
    %998 = vperm.xlu0 %997, %v944
    %v999 = vpop.permute.xlu0 %998
    %1002 = vset.pattern.permute.xlu0 0
    %1003 = vperm.xlu0 %1002, %v945
    %v1004 = vpop.permute.xlu0 %1003
    %1007 = vset.pattern.permute.xlu0 0
    %1008 = vperm.xlu0 %1007, %v946
    %v1009 = vpop.permute.xlu0 %1008
    %v1011 = vsub.f32 %v732, %v974
    %v1012 = vsub.f32 %v735, %v979
    %v1013 = vsub.f32 %v788, %v984
    %v1014 = vsub.f32 %v791, %v989
    %v1015 = vsub.f32 %v844, %v994
    %v1016 = vsub.f32 %v847, %v999
    %v1017 = vsub.f32 %v900, %v1004
    %v1018 = vsub.f32 %v903, %v1009
    %v1019 = vmul.f32 %v1011, 1.442695
    %v1020 = vpow.pop %v1019
    %v1021 = vmul.f32 %v1012, 1.442695
    %v1022 = vpow.pop %v1021
    %v1023 = vmul.f32 %v1013, 1.442695
    %v1024 = vpow.pop %v1023
    %v1025 = vmul.f32 %v1014, 1.442695
    %v1026 = vpow.pop %v1025
    %v1027 = vmul.f32 %v1015, 1.442695
    %v1028 = vpow.pop %v1027
    %v1029 = vmul.f32 %v1016, 1.442695
    %v1030 = vpow.pop %v1029
    %v1031 = vmul.f32 %v1017, 1.442695
    %v1032 = vpow.pop %v1031
    %v1033 = vmul.f32 %v1018, 1.442695
    %v1034 = vpow.pop %v1033
    %v1035 = vmul.f32 %v1020, %v659
    %v1036 = vmul.f32 %v1022, %v660
    %v1037 = vmul.f32 %v1024, %v659
    %v1038 = vmul.f32 %v1026, %v660
    %v1039 = vmul.f32 %v1028, %v659
    %v1040 = vmul.f32 %v1030, %v660
    %v1041 = vmul.f32 %v1032, %v659
    %v1042 = vmul.f32 %v1034, %v660
    %v1043 = vld [vmem:[#allocation5] sm:$0xff]
    %v1044 = vld [vmem:[#allocation5 + $0x8] sm:$0xff]
    %v1045 = vld [vmem:[#allocation5 + $0x10] sm:$0xff]
    %v1046 = vld [vmem:[#allocation5 + $0x18] sm:$0xff]
    %v1047 = vld [vmem:[#allocation5 + $0x20] sm:$0xff]
    %v1048 = vld [vmem:[#allocation5 + $0x28] sm:$0xff]
    %v1049 = vld [vmem:[#allocation5 + $0x30] sm:$0xff]
    %v1050 = vld [vmem:[#allocation5 + $0x38] sm:$0xff]
    %v1051 = vmul.f32 %v956, %v1043
    %v1052 = vmul.f32 %v958, %v1044
    %v1053 = vmul.f32 %v960, %v1045
    %v1054 = vmul.f32 %v962, %v1046
    %v1055 = vmul.f32 %v964, %v1047
    %v1056 = vmul.f32 %v966, %v1048
    %v1057 = vmul.f32 %v968, %v1049
    %v1058 = vmul.f32 %v970, %v1050
    %v1059 = vsel %vm914, %v1035, 0.0
    %1060 = vadd.xlane.f32.xlu0 %v1059
    %v1061 = vpop.xlane.xlu0 %1060
    %v1062 = vsel %vm914, %v1036, 0.0
    %1063 = vadd.xlane.f32.xlu0 %v1062
    %v1064 = vpop.xlane.xlu0 %1063
    %v1065 = vsel %vm914, %v1037, 0.0
    %1066 = vadd.xlane.f32.xlu0 %v1065
    %v1067 = vpop.xlane.xlu0 %1066
    %v1068 = vsel %vm914, %v1038, 0.0
    %1069 = vadd.xlane.f32.xlu0 %v1068
    %v1070 = vpop.xlane.xlu0 %1069
    %v1071 = vsel %vm914, %v1039, 0.0
    %1072 = vadd.xlane.f32.xlu0 %v1071
    %v1073 = vpop.xlane.xlu0 %1072
    %v1074 = vsel %vm914, %v1040, 0.0
    %1075 = vadd.xlane.f32.xlu0 %v1074
    %v1076 = vpop.xlane.xlu0 %1075
    %v1077 = vsel %vm914, %v1041, 0.0
    %1078 = vadd.xlane.f32.xlu0 %v1077
    %v1079 = vpop.xlane.xlu0 %1078
    %v1080 = vsel %vm914, %v1042, 0.0
    %1081 = vadd.xlane.f32.xlu0 %v1080
    %v1082 = vpop.xlane.xlu0 %1081
    %v1083 = vadd.f32 %v1051, %v1061
    %v1084 = vadd.f32 %v1052, %v1064
    %v1085 = vadd.f32 %v1053, %v1067
    %v1086 = vadd.f32 %v1054, %v1070
    %v1087 = vadd.f32 %v1055, %v1073
    %v1088 = vadd.f32 %v1056, %v1076
    %v1089 = vadd.f32 %v1057, %v1079
    %v1090 = vadd.f32 %v1058, %v1082
    %vm1091 = vcmask 7168
    %1092 = vst.msk [vmem:[#allocation5] sm:$0xff] %vm1091, %v1083
    %1093 = vst.msk [vmem:[#allocation5 + $0x8] sm:$0xff] %vm1091, %v1084
    %1094 = vst.msk [vmem:[#allocation5 + $0x10] sm:$0xff] %vm1091, %v1085
    %1095 = vst.msk [vmem:[#allocation5 + $0x18] sm:$0xff] %vm1091, %v1086
    %1096 = vst.msk [vmem:[#allocation5 + $0x20] sm:$0xff] %vm1091, %v1087
    %1097 = vst.msk [vmem:[#allocation5 + $0x28] sm:$0xff] %vm1091, %v1088
    %1098 = vst.msk [vmem:[#allocation5 + $0x30] sm:$0xff] %vm1091, %v1089
    %1099 = vst.msk [vmem:[#allocation5 + $0x38] sm:$0xff] %vm1091, %v1090
    %v1100 = vld [vmem:[#allocation6] sm:$0xff]
    %v1101 = vld [vmem:[#allocation6 + $0x8] sm:$0xff]
    %v1102 = vld [vmem:[#allocation6 + $0x10] sm:$0xff]
    %v1103 = vld [vmem:[#allocation6 + $0x18] sm:$0xff]
    %v1104 = vld [vmem:[#allocation6 + $0x20] sm:$0xff]
    %v1105 = vld [vmem:[#allocation6 + $0x28] sm:$0xff]
    %v1106 = vld [vmem:[#allocation6 + $0x30] sm:$0xff]
    %v1107 = vld [vmem:[#allocation6 + $0x38] sm:$0xff]
    %1109 = vset.pattern.permute.xlu0 0
    %1110 = vperm.xlu0 %1109, %v956
    %v1111 = vpop.permute.xlu0 %1110
    %1114 = vset.pattern.permute.xlu0 0
    %1115 = vperm.xlu0 %1114, %v958
    %v1116 = vpop.permute.xlu0 %1115
    %1119 = vset.pattern.permute.xlu0 0
    %1120 = vperm.xlu0 %1119, %v960
    %v1121 = vpop.permute.xlu0 %1120
    %1124 = vset.pattern.permute.xlu0 0
    %1125 = vperm.xlu0 %1124, %v962
    %v1126 = vpop.permute.xlu0 %1125
    %1129 = vset.pattern.permute.xlu0 0
    %1130 = vperm.xlu0 %1129, %v964
    %v1131 = vpop.permute.xlu0 %1130
    %1134 = vset.pattern.permute.xlu0 0
    %1135 = vperm.xlu0 %1134, %v966
    %v1136 = vpop.permute.xlu0 %1135
    %1139 = vset.pattern.permute.xlu0 0
    %1140 = vperm.xlu0 %1139, %v968
    %v1141 = vpop.permute.xlu0 %1140
    %1144 = vset.pattern.permute.xlu0 0
    %1145 = vperm.xlu0 %1144, %v970
    %v1146 = vpop.permute.xlu0 %1145
    %v1148 = vmul.f32 %v1111, %v1100
    %v1149 = vmul.f32 %v1116, %v1101
    %v1150 = vmul.f32 %v1121, %v1102
    %v1151 = vmul.f32 %v1126, %v1103
    %v1152 = vmul.f32 %v1131, %v1104
    %v1153 = vmul.f32 %v1136, %v1105
    %v1154 = vmul.f32 %v1141, %v1106
    %v1155 = vmul.f32 %v1146, %v1107
    %v1156 = vpack.c.bf16 %v1036, %v1035
    %v1157 = vpack.c.bf16 %v1038, %v1037
    %v1158 = vpack.c.bf16 %v1040, %v1039
    %v1159 = vpack.c.bf16 %v1042, %v1041
    %v1160 = vld [vmem:[%s4] sm:$0xf]
    %v1161 = vld [vmem:[%s4 + $0x4] sm:$0xf]
    %v1162 = vld [vmem:[%s4 + $0x8] sm:$0xf]
    %v1163 = vld [vmem:[%s4 + $0xc] sm:$0xf]
    %v1164 = vld [vmem:[%s4 + $0x10] sm:$0xf]
    %v1165 = vld [vmem:[%s4 + $0x14] sm:$0xf]
    %v1166 = vld [vmem:[%s4 + $0x18] sm:$0xf]
    %v1167 = vld [vmem:[%s4 + $0x1c] sm:$0xf]
    %v1170 = vunpack.c.l.b16 %v1160
    %v1171 = vunpack.c.l.b16 %v1161
    %v1172 = vpack.c.b16 %v1171, %v1170
    %v1175 = vsel %vm914, %v1156, 0
    %1177 = vmatprep.subr.bf16.mxu0 0
    %1178 = vmatpush1.bf16.msra.mxu0 %v1172
    %1179 = vmatprep.subr.bf16.mxu0 0
    %1180 = vmatpush1.bf16.msra.mxu0 0
    %1181 = vmatprep.subr.bf16.mxu0 0
    %1182 = vmatpush1.bf16.msra.mxu0 0
    %1183 = vmatprep.subr.bf16.mxu0 0
    %1184 = vmatpush1.bf16.msra.mxu0 0
    %1185 = vmatprep.subr.bf16.mxu0 0
    %1186 = vmatpush1.bf16.msra.mxu0 0
    %1187 = vmatprep.subr.bf16.mxu0 0
    %1188 = vmatpush1.bf16.msra.mxu0 0
    %1189 = vmatprep.subr.bf16.mxu0 0
    %1190 = vmatpush1.bf16.msra.mxu0 0
    %1191 = vmatprep.subr.bf16.mxu0 0
    %1192 = vmatpush1.bf16.msra.mxu0 0
    %1193 = vmatprep.subr.bf16.mxu0 0
    %1194 = vmatpush1.bf16.msra.mxu0 0
    %1195 = vmatprep.subr.bf16.mxu0 0
    %1196 = vmatpush1.bf16.msra.mxu0 0
    %1197 = vmatprep.subr.bf16.mxu0 0
    %1198 = vmatpush1.bf16.msra.mxu0 0
    %1199 = vmatprep.subr.bf16.mxu0 0
    %1200 = vmatpush1.bf16.msra.mxu0 0
    %1201 = vmatprep.subr.bf16.mxu0 0
    %1202 = vmatpush1.bf16.msra.mxu0 0
    %1203 = vmatprep.subr.bf16.mxu0 0
    %1204 = vmatpush1.bf16.msra.mxu0 0
    %1205 = vmatprep.subr.bf16.mxu0 0
    %1206 = vmatpush1.bf16.msra.mxu0 0
    %1207 = vmatprep.subr.bf16.mxu0 0
    %1208 = vmatpush1.bf16.msra.mxu0 0
    %1209 = vmatprep.mubr.bf16.mxu0 0
    %1210 = vmatmul.mubr.bf16.gmra.mrb[0].mxu0 %v1175
    %v1211 = vpop.f32.mrb[0].mxu0
    %v1212 = vadd.f32 0.0, %v1211
    %v1213 = vpop.f32.mrb[0].mxu0
    %v1214 = vpop.f32.mrb[0].mxu0
    %v1215 = vadd.f32 0.0, %v1214
    %v1216 = vpop.f32.mrb[0].mxu0
    %1217 = vdwg.mxu0
    %v1220 = vunpack.c.l.b16 %v1162
    %v1221 = vunpack.c.l.b16 %v1163
    %v1222 = vpack.c.b16 %v1221, %v1220
    %v1225 = vsel %vm914, %v1157, 0
    %1227 = vmatprep.subr.bf16.mxu0 0
    %1228 = vmatpush1.bf16.msra.mxu0 %v1222
    %1229 = vmatprep.subr.bf16.mxu0 0
    %1230 = vmatpush1.bf16.msra.mxu0 0
    %1231 = vmatprep.subr.bf16.mxu0 0
    %1232 = vmatpush1.bf16.msra.mxu0 0
    %1233 = vmatprep.subr.bf16.mxu0 0
    %1234 = vmatpush1.bf16.msra.mxu0 0
    %1235 = vmatprep.subr.bf16.mxu0 0
    %1236 = vmatpush1.bf16.msra.mxu0 0
    %1237 = vmatprep.subr.bf16.mxu0 0
    %1238 = vmatpush1.bf16.msra.mxu0 0
    %1239 = vmatprep.subr.bf16.mxu0 0
    %1240 = vmatpush1.bf16.msra.mxu0 0
    %1241 = vmatprep.subr.bf16.mxu0 0
    %1242 = vmatpush1.bf16.msra.mxu0 0
    %1243 = vmatprep.subr.bf16.mxu0 0
    %1244 = vmatpush1.bf16.msra.mxu0 0
    %1245 = vmatprep.subr.bf16.mxu0 0
    %1246 = vmatpush1.bf16.msra.mxu0 0
    %1247 = vmatprep.subr.bf16.mxu0 0
    %1248 = vmatpush1.bf16.msra.mxu0 0
    %1249 = vmatprep.subr.bf16.mxu0 0
    %1250 = vmatpush1.bf16.msra.mxu0 0
    %1251 = vmatprep.subr.bf16.mxu0 0
    %1252 = vmatpush1.bf16.msra.mxu0 0
    %1253 = vmatprep.subr.bf16.mxu0 0
    %1254 = vmatpush1.bf16.msra.mxu0 0
    %1255 = vmatprep.subr.bf16.mxu0 0
    %1256 = vmatpush1.bf16.msra.mxu0 0
    %1257 = vmatprep.subr.bf16.mxu0 0
    %1258 = vmatpush1.bf16.msra.mxu0 0
    %1259 = vmatprep.mubr.bf16.mxu0 0
    %1260 = vmatmul.mubr.bf16.gmra.mrb[0].mxu0 %v1225
    %v1261 = vpop.f32.mrb[0].mxu0
    %v1262 = vadd.f32 0.0, %v1261
    %v1263 = vpop.f32.mrb[0].mxu0
    %v1264 = vpop.f32.mrb[0].mxu0
    %v1265 = vadd.f32 0.0, %v1264
    %v1266 = vpop.f32.mrb[0].mxu0
    %1267 = vdwg.mxu0
    %v1270 = vunpack.c.l.b16 %v1164
    %v1271 = vunpack.c.l.b16 %v1165
    %v1272 = vpack.c.b16 %v1271, %v1270
    %v1275 = vsel %vm914, %v1158, 0
    %1277 = vmatprep.subr.bf16.mxu0 0
    %1278 = vmatpush1.bf16.msra.mxu0 %v1272
    %1279 = vmatprep.subr.bf16.mxu0 0
    %1280 = vmatpush1.bf16.msra.mxu0 0
    %1281 = vmatprep.subr.bf16.mxu0 0
    %1282 = vmatpush1.bf16.msra.mxu0 0
    %1283 = vmatprep.subr.bf16.mxu0 0
    %1284 = vmatpush1.bf16.msra.mxu0 0
    %1285 = vmatprep.subr.bf16.mxu0 0
    %1286 = vmatpush1.bf16.msra.mxu0 0
    %1287 = vmatprep.subr.bf16.mxu0 0
    %1288 = vmatpush1.bf16.msra.mxu0 0
    %1289 = vmatprep.subr.bf16.mxu0 0
    %1290 = vmatpush1.bf16.msra.mxu0 0
    %1291 = vmatprep.subr.bf16.mxu0 0
    %1292 = vmatpush1.bf16.msra.mxu0 0
    %1293 = vmatprep.subr.bf16.mxu0 0
    %1294 = vmatpush1.bf16.msra.mxu0 0
    %1295 = vmatprep.subr.bf16.mxu0 0
    %1296 = vmatpush1.bf16.msra.mxu0 0
    %1297 = vmatprep.subr.bf16.mxu0 0
    %1298 = vmatpush1.bf16.msra.mxu0 0
    %1299 = vmatprep.subr.bf16.mxu0 0
    %1300 = vmatpush1.bf16.msra.mxu0 0
    %1301 = vmatprep.subr.bf16.mxu0 0
    %1302 = vmatpush1.bf16.msra.mxu0 0
    %1303 = vmatprep.subr.bf16.mxu0 0
    %1304 = vmatpush1.bf16.msra.mxu0 0
    %1305 = vmatprep.subr.bf16.mxu0 0
    %1306 = vmatpush1.bf16.msra.mxu0 0
    %1307 = vmatprep.subr.bf16.mxu0 0
    %1308 = vmatpush1.bf16.msra.mxu0 0
    %1309 = vmatprep.mubr.bf16.mxu0 0
    %1310 = vmatmul.mubr.bf16.gmra.mrb[0].mxu0 %v1275
    %v1311 = vpop.f32.mrb[0].mxu0
    %v1312 = vadd.f32 0.0, %v1311
    %v1313 = vpop.f32.mrb[0].mxu0
    %v1314 = vpop.f32.mrb[0].mxu0
    %v1315 = vadd.f32 0.0, %v1314
    %v1316 = vpop.f32.mrb[0].mxu0
    %1317 = vdwg.mxu0
    %v1320 = vunpack.c.l.b16 %v1166
    %v1321 = vunpack.c.l.b16 %v1167
    %v1322 = vpack.c.b16 %v1321, %v1320
    %v1325 = vsel %vm914, %v1159, 0
    %1327 = vmatprep.subr.bf16.mxu0 0
    %1328 = vmatpush1.bf16.msra.mxu0 %v1322
    %1329 = vmatprep.subr.bf16.mxu0 0
    %1330 = vmatpush1.bf16.msra.mxu0 0
    %1331 = vmatprep.subr.bf16.mxu0 0
    %1332 = vmatpush1.bf16.msra.mxu0 0
    %1333 = vmatprep.subr.bf16.mxu0 0
    %1334 = vmatpush1.bf16.msra.mxu0 0
    %1335 = vmatprep.subr.bf16.mxu0 0
    %1336 = vmatpush1.bf16.msra.mxu0 0
    %1337 = vmatprep.subr.bf16.mxu0 0
    %1338 = vmatpush1.bf16.msra.mxu0 0
    %1339 = vmatprep.subr.bf16.mxu0 0
    %1340 = vmatpush1.bf16.msra.mxu0 0
    %1341 = vmatprep.subr.bf16.mxu0 0
    %1342 = vmatpush1.bf16.msra.mxu0 0
    %1343 = vmatprep.subr.bf16.mxu0 0
    %1344 = vmatpush1.bf16.msra.mxu0 0
    %1345 = vmatprep.subr.bf16.mxu0 0
    %1346 = vmatpush1.bf16.msra.mxu0 0
    %1347 = vmatprep.subr.bf16.mxu0 0
    %1348 = vmatpush1.bf16.msra.mxu0 0
    %1349 = vmatprep.subr.bf16.mxu0 0
    %1350 = vmatpush1.bf16.msra.mxu0 0
    %1351 = vmatprep.subr.bf16.mxu0 0
    %1352 = vmatpush1.bf16.msra.mxu0 0
    %1353 = vmatprep.subr.bf16.mxu0 0
    %1354 = vmatpush1.bf16.msra.mxu0 0
    %1355 = vmatprep.subr.bf16.mxu0 0
    %1356 = vmatpush1.bf16.msra.mxu0 0
    %1357 = vmatprep.subr.bf16.mxu0 0
    %1358 = vmatpush1.bf16.msra.mxu0 0
    %1359 = vmatprep.mubr.bf16.mxu0 0
    %1360 = vmatmul.mubr.bf16.gmra.mrb[0].mxu0 %v1325
    %v1361 = vpop.f32.mrb[0].mxu0
    %v1362 = vadd.f32 0.0, %v1361
    %v1363 = vpop.f32.mrb[0].mxu0
    %v1364 = vpop.f32.mrb[0].mxu0
    %v1365 = vadd.f32 0.0, %v1364
    %v1366 = vpop.f32.mrb[0].mxu0
    %1367 = vdwg.mxu0
    %v1368 = vadd.f32 %v1148, %v1212
    %v1369 = vadd.f32 %v1149, %v1215
    %v1370 = vadd.f32 %v1150, %v1262
    %v1371 = vadd.f32 %v1151, %v1265
    %v1372 = vadd.f32 %v1152, %v1312
    %v1373 = vadd.f32 %v1153, %v1315
    %v1374 = vadd.f32 %v1154, %v1362
    %v1375 = vadd.f32 %v1155, %v1365
    %1376 = vst.msk [vmem:[#allocation6] sm:$0xff] %vm693, %v1368
    %1377 = vst.msk [vmem:[#allocation6 + $0x8] sm:$0xff] %vm693, %v1369
    %1378 = vst.msk [vmem:[#allocation6 + $0x10] sm:$0xff] %vm693, %v1370
    %1379 = vst.msk [vmem:[#allocation6 + $0x18] sm:$0xff] %vm693, %v1371
    %1380 = vst.msk [vmem:[#allocation6 + $0x20] sm:$0xff] %vm693, %v1372
    %1381 = vst.msk [vmem:[#allocation6 + $0x28] sm:$0xff] %vm693, %v1373
    %1382 = vst.msk [vmem:[#allocation6 + $0x30] sm:$0xff] %vm693, %v1374
    %1383 = vst.msk [vmem:[#allocation6 + $0x38] sm:$0xff] %vm693, %v1375
    %1384 = vst.msk [vmem:[#allocation4] sm:$0xff] %vm1091, %v939
    %1385 = vst.msk [vmem:[#allocation4 + $0x8] sm:$0xff] %vm1091, %v940
    %1386 = vst.msk [vmem:[#allocation4 + $0x10] sm:$0xff] %vm1091, %v941
    %1387 = vst.msk [vmem:[#allocation4 + $0x18] sm:$0xff] %vm1091, %v942
    %1388 = vst.msk [vmem:[#allocation4 + $0x20] sm:$0xff] %vm1091, %v943
    %1389 = vst.msk [vmem:[#allocation4 + $0x28] sm:$0xff] %vm1091, %v944
    %1390 = vst.msk [vmem:[#allocation4 + $0x30] sm:$0xff] %vm1091, %v945
    %1391 = vst.msk [vmem:[#allocation4 + $0x38] sm:$0xff] %vm1091, %v946
  $region41: #{deepgt_forward.10} parent=0 // pred_fallthru
    _
  // Predicated region
  $region42: #{deepgt_forward.10} parent=0 // pred_check
    %p1392 = pneg %p32
  $region43: #{deepgt_forward.10} parent=0 // pred_check_branch
    %1394 = sbr.rel (%p1392) target = $region45
  $region44: #{deepgt_forward.10} parent=0 // pred_region
    %v1395 = vld [vmem:[#allocation5] sm:$0xff]
    %v1396 = vld [vmem:[#allocation5 + $0x8] sm:$0xff]
    %v1397 = vld [vmem:[#allocation5 + $0x10] sm:$0xff]
    %v1398 = vld [vmem:[#allocation5 + $0x18] sm:$0xff]
    %v1399 = vld [vmem:[#allocation5 + $0x20] sm:$0xff]
    %v1400 = vld [vmem:[#allocation5 + $0x28] sm:$0xff]
    %v1401 = vld [vmem:[#allocation5 + $0x30] sm:$0xff]
    %v1402 = vld [vmem:[#allocation5 + $0x38] sm:$0xff]
    %v1403 = vmax.f32 %v1395, 1e-20
    %v1404 = vmax.f32 %v1396, 1e-20
    %v1405 = vmax.f32 %v1397, 1e-20
    %v1406 = vmax.f32 %v1398, 1e-20
    %v1407 = vmax.f32 %v1399, 1e-20
    %v1408 = vmax.f32 %v1400, 1e-20
    %v1409 = vmax.f32 %v1401, 1e-20
    %v1410 = vmax.f32 %v1402, 1e-20
    %v1411 = vrcp.pop %v1403
    %v1412 = vrcp.pop %v1404
    %v1413 = vrcp.pop %v1405
    %v1414 = vrcp.pop %v1406
    %v1415 = vrcp.pop %v1407
    %v1416 = vrcp.pop %v1408
    %v1417 = vrcp.pop %v1409
    %v1418 = vrcp.pop %v1410
    %v1419 = vld [vmem:[#allocation6] sm:$0xff]
    %v1420 = vld [vmem:[#allocation6 + $0x8] sm:$0xff]
    %v1421 = vld [vmem:[#allocation6 + $0x10] sm:$0xff]
    %v1422 = vld [vmem:[#allocation6 + $0x18] sm:$0xff]
    %v1423 = vld [vmem:[#allocation6 + $0x20] sm:$0xff]
    %v1424 = vld [vmem:[#allocation6 + $0x28] sm:$0xff]
    %v1425 = vld [vmem:[#allocation6 + $0x30] sm:$0xff]
    %v1426 = vld [vmem:[#allocation6 + $0x38] sm:$0xff]
    %1428 = vset.pattern.permute.xlu0 0
    %1429 = vperm.xlu0 %1428, %v1411
    %v1430 = vpop.permute.xlu0 %1429
    %1433 = vset.pattern.permute.xlu0 0
    %1434 = vperm.xlu0 %1433, %v1412
    %v1435 = vpop.permute.xlu0 %1434
    %1438 = vset.pattern.permute.xlu0 0
    %1439 = vperm.xlu0 %1438, %v1413
    %v1440 = vpop.permute.xlu0 %1439
    %1443 = vset.pattern.permute.xlu0 0
    %1444 = vperm.xlu0 %1443, %v1414
    %v1445 = vpop.permute.xlu0 %1444
    %1448 = vset.pattern.permute.xlu0 0
    %1449 = vperm.xlu0 %1448, %v1415
    %v1450 = vpop.permute.xlu0 %1449
    %1453 = vset.pattern.permute.xlu0 0
    %1454 = vperm.xlu0 %1453, %v1416
    %v1455 = vpop.permute.xlu0 %1454
    %1458 = vset.pattern.permute.xlu0 0
    %1459 = vperm.xlu0 %1458, %v1417
    %v1460 = vpop.permute.xlu0 %1459
    %1463 = vset.pattern.permute.xlu0 0
    %1464 = vperm.xlu0 %1463, %v1418
    %v1465 = vpop.permute.xlu0 %1464
    %v1467 = vmul.f32 %v1419, %v1430
    %v1468 = vmul.f32 %v1420, %v1435
    %v1469 = vmul.f32 %v1421, %v1440
    %v1470 = vmul.f32 %v1422, %v1445
    %v1471 = vmul.f32 %v1423, %v1450
    %v1472 = vmul.f32 %v1424, %v1455
    %v1473 = vmul.f32 %v1425, %v1460
    %v1474 = vmul.f32 %v1426, %v1465
    %1477 = vrot.lane.b32.xlu0 %v1469, 32
    %v1478 = vpop.permute.xlu0 %1477
    %1479 = vrot.lane.b32.xlu0 %v1470, 32
    %v1480 = vpop.permute.xlu0 %1479
    %1485 = vrot.lane.b32.xlu0 %v1471, 64
    %v1486 = vpop.permute.xlu0 %1485
    %1487 = vrot.lane.b32.xlu0 %v1472, 64
    %v1488 = vpop.permute.xlu0 %1487
    %1493 = vrot.lane.b32.xlu0 %v1473, 96
    %v1494 = vpop.permute.xlu0 %1493
    %1495 = vrot.lane.b32.xlu0 %v1474, 96
    %v1496 = vpop.permute.xlu0 %1495
    %vm1499 = vcmask 261120
    %v1500 = vsel %vm1499, %v1467, %v1478
    %v1501 = vsel %vm1499, %v1468, %v1480
    %vm1502 = vcmask 523264
    %v1503 = vsel %vm1502, %v1500, %v1486
    %v1504 = vsel %vm1502, %v1501, %v1488
    %vm1505 = vcmask 785408
    %v1506 = vsel %vm1505, %v1503, %v1494
    %v1507 = vsel %vm1505, %v1504, %v1496
    %v1508 = vld [vmem:[#allocation3] sm:$0xff]
    %v1509 = vld [vmem:[#allocation3 + $0x8] sm:$0xff]
    %v1510 = vadd.f32 %v1506, %v1508
    %v1511 = vadd.f32 %v1507, %v1509
    %v1512 = vpack.c.bf16 %v1511, %v1510
    %v1514 = vunpack.c.l.b16 %v1512
    %v1515 = vunpack.c.h.b16 %v1512
    %v1516 = vpack.c.b16 %v1514, %v1514
    %v1517 = vpack.c.b16 %v1515, %v1515
    %1520 = vst [vmem:[%s9] sm:$0xf] %v1516
    %1521 = vst [vmem:[%s9 + $0x4] sm:$0xf] %v1517
  $region45: #{deepgt_forward.10} parent=0 // pred_fallthru
    _
  // Predicated region
  $region46: #{deepgt_forward.10} parent=0 // pred_check
    _
  $region47: #{deepgt_forward.10} parent=0 // pred_check_branch
    %1523 = sbr.rel (0) target = $region49
  $region48: #{deepgt_forward.10} parent=0 // pred_region
    _
  $region49: #{deepgt_forward.10} parent=0 // pred_fallthru
    _
  // Predicated region
  $region50: #{deepgt_forward.10} parent=0 // pred_check
    _
  $region51: #{deepgt_forward.10} parent=0 // pred_check_branch
    %1525 = sbr.rel (0) target = $region53
  $region52: #{deepgt_forward.10} parent=0 // pred_region
    _
  $region53: #{deepgt_forward.10} parent=0 // pred_fallthru
    _

</llo_original>
